<compile_context>
chip_gen: v6e
topology: v6e:2x2x1
jax: 0.10.0
libtpu: 0.0.40
codegen_flags: <defaults>
</compile_context>

<pallas_src>
import functools

import jax
import jax.numpy as jnp
from jax.experimental import pallas as pl
from jax.experimental.pallas import tpu as pltpu


# ----------------------------------------------------------------------------
# Pallas kernels
# ----------------------------------------------------------------------------
def _block_stack_kernel(x_ref, g1_ref, b1_ref, wqkv_ref, wo_ref, bo_ref,
                        g2_ref, b2_ref, w1_ref, bf1_ref, w2_ref, bf2_ref,
                        y_ref, x_scr, *, n_head):
    """One transformer block per grid step; grid = (batch, layer).

    The residual stream lives in x_scr (VMEM, f32) across the layer axis, so
    activations never round-trip through HBM between sub-blocks / layers.
    """
    layer = pl.program_id(1)

    @pl.when(layer == 0)
    def _():
        x_scr[...] = x_ref[...]                   # load residual stream once

    t, c = x_scr.shape
    hs = c // n_head

    def layer_norm(z, g, b):                      # torch.nn.LayerNorm, eps=1e-5
        mu = jnp.mean(z, axis=-1, keepdims=True)
        zc = z - mu
        var = jnp.mean(zc * zc, axis=-1, keepdims=True)
        return zc * jax.lax.rsqrt(var + 1e-5) * g + b

    x = x_scr[...]                                              # (T, C) f32

    # ---- self-attention sub-block:  x = x + Wo @ MHA(LN1(x)) + bo ----
    h = layer_norm(x, g1_ref[...], b1_ref[...]).astype(wqkv_ref.dtype)
    qkv = jnp.dot(h, wqkv_ref[...],
                  preferred_element_type=jnp.float32).astype(jnp.bfloat16)
    q = jnp.transpose(qkv[:, :c].reshape(t, n_head, hs), (1, 0, 2))      # (H,T,hs)
    k = jnp.transpose(qkv[:, c:2 * c].reshape(t, n_head, hs), (1, 0, 2))
    v = jnp.transpose(qkv[:, 2 * c:].reshape(t, n_head, hs), (1, 0, 2))
    # All heads in one batched MXU matmul.
    s = jnp.einsum('hqd,hkd->hqk', q, k,
                   preferred_element_type=jnp.float32) * (float(hs) ** -0.5)
    row = jax.lax.broadcasted_iota(jnp.int32, (t, t), 0)
    col = jax.lax.broadcasted_iota(jnp.int32, (t, t), 1)
    s = jnp.where(col <= row, s, -1e30)           # finite causal mask
    s = s - jnp.max(s, axis=-1, keepdims=True)
    p = jnp.exp(s)
    p = p * pl.reciprocal(jnp.sum(p, axis=-1, keepdims=True), approx=True)
    # TODO(synk): nn.Dropout on attention weights / proj is identity (eval).
    o = jnp.einsum('hqk,hkd->hqd', p.astype(jnp.bfloat16), v,
                   preferred_element_type=jnp.float32)                   # (H,T,hs)
    attn = jnp.transpose(o, (1, 0, 2)).reshape(t, c)   # == torch.cat(heads, -1)
    x = x + (jnp.dot(attn.astype(jnp.bfloat16), wo_ref[...],
                     preferred_element_type=jnp.float32) + bo_ref[...])

    # ---- feed-forward sub-block:  x = x + W2 @ relu(W1 @ LN2(x) + b1) + b2 ----
    h2 = layer_norm(x, g2_ref[...], b2_ref[...]).astype(w1_ref.dtype)
    f = jnp.dot(h2, w1_ref[...], preferred_element_type=jnp.float32) + bf1_ref[...]
    f = jnp.maximum(f, 0.0).astype(w2_ref.dtype)
    x = x + (jnp.dot(f, w2_ref[...], preferred_element_type=jnp.float32)
             + bf2_ref[...])
    # TODO(synk): FFN output nn.Dropout is identity (eval mode).

    x_scr[...] = x

    @pl.when(layer == pl.num_programs(1) - 1)
    def _():
        y_ref[...] = x.astype(y_ref.dtype)


def _lnf_lmhead_kernel(x_ref, g_ref, b_ref, w_ref, bias_ref, o_ref):
    """logits = LayerNorm(x) @ W_lm + b_lm   (LN fused into the matmul)."""
    x = x_ref[...]
    mu = jnp.mean(x, axis=-1, keepdims=True)
    xc = x - mu
    var = jnp.mean(xc * xc, axis=-1, keepdims=True)
    h = (xc * jax.lax.rsqrt(var + 1e-5) * g_ref[...]
         + b_ref[...]).astype(w_ref.dtype)
    o_ref[...] = (jnp.dot(h, w_ref[...], preferred_element_type=jnp.float32)
                  + bias_ref[...]).astype(o_ref.dtype)


# ----------------------------------------------------------------------------
# Pallas wrappers
# ----------------------------------------------------------------------------
def pallas_block_stack(x, p, *, n_head):
    """Runs all n_layer transformer blocks in one pallas_call.

    x: (B, T, C) f32.  Per-layer weights are stacked along a leading layer
    axis and streamed one layer per grid step; the residual stream is kept in
    a VMEM f32 scratch for the whole layer loop.
    """
    b, t, c = x.shape
    n_layer = p["wqkv"].shape[0]

    def layer_spec(shape):
        return pl.BlockSpec(shape, lambda i, l: (l, 0, 0))

    return pl.pallas_call(
        functools.partial(_block_stack_kernel, n_head=n_head),
        out_shape=jax.ShapeDtypeStruct((b, t, c), jnp.float32),
        grid=(b, n_layer),
        in_specs=[
            pl.BlockSpec((None, t, c), lambda i, l: (i, 0, 0)),   # x
            layer_spec((None, 1, c)),                             # ln1 gamma
            layer_spec((None, 1, c)),                             # ln1 beta
            layer_spec((None, c, 3 * c)),                         # packed Wqkv
            layer_spec((None, c, c)),                             # Wo
            layer_spec((None, 1, c)),                             # bo
            layer_spec((None, 1, c)),                             # ln2 gamma
            layer_spec((None, 1, c)),                             # ln2 beta
            layer_spec((None, c, 4 * c)),                         # W1
            layer_spec((None, 1, 4 * c)),                         # b1
            layer_spec((None, 4 * c, c)),                         # W2
            layer_spec((None, 1, c)),                             # b2
        ],
        out_specs=pl.BlockSpec((None, t, c), lambda i, l: (i, 0, 0)),
        scratch_shapes=[pltpu.VMEM((t, c), jnp.float32)],
        compiler_params=pltpu.CompilerParams(
            dimension_semantics=("parallel", "arbitrary")),
    )(x, p["ln1_g"], p["ln1_b"], p["wqkv"], p["wo"], p["bo"],
      p["ln2_g"], p["ln2_b"], p["w1"], p["b1"], p["w2"], p["b2"])


def _pick_row_tile(m, cap=512):
    """Largest multiple-of-8 row tile dividing m, preferring >= 2 grid steps
    (so both v7x TensorCores get work)."""
    upper = min(cap, m // 2 if m >= 16 else m)
    upper -= upper % 8
    for tile in range(upper, 7, -8):
        if m % tile == 0:
            return tile
    return m


def pallas_lnf_lmhead(x, gamma, beta, w, bias):
    m, c = x.shape
    _, n = w.shape
    tm = _pick_row_tile(m)
    return pl.pallas_call(
        _lnf_lmhead_kernel,
        out_shape=jax.ShapeDtypeStruct((m, n), jnp.float32),
        grid=(m // tm,),
        in_specs=[
            pl.BlockSpec((tm, c), lambda i: (i, 0)),
            pl.BlockSpec((1, c), lambda i: (0, 0)),
            pl.BlockSpec((1, c), lambda i: (0, 0)),
            pl.BlockSpec((c, n), lambda i: (0, 0)),
            pl.BlockSpec((1, n), lambda i: (0, 0)),
        ],
        out_specs=pl.BlockSpec((tm, n), lambda i: (i, 0)),
        compiler_params=pltpu.CompilerParams(
            dimension_semantics=("parallel",)),
    )(x, gamma, beta, w, bias)


# ----------------------------------------------------------------------------
# Model: parameter init + forward
# ----------------------------------------------------------------------------
def init_params(key, vocab_size, vocab_pad, n_embd, n_layer, block_size):
    """PyTorch-style init: Linear/Embedding weights ~ N(0, 0.02), biases zero."""
    c = n_embd

    def nrm(k, shape, dtype=jnp.float32):
        return (0.02 * jax.random.normal(k, shape, jnp.float32)).astype(dtype)

    ks = jax.random.split(key, 7)
    w_lm = jnp.zeros((c, vocab_pad), jnp.float32)
    w_lm = w_lm.at[:, :vocab_size].set(nrm(ks[2], (c, vocab_size)))
    return {
        "tok_emb": nrm(ks[0], (vocab_size, c)),
        "pos_emb": nrm(ks[1], (block_size, c)),
        "lnf_g": jnp.ones((1, c), jnp.float32),
        "lnf_b": jnp.zeros((1, c), jnp.float32),
        "w_lm": w_lm.astype(jnp.bfloat16),            # vocab padded to 128 lanes
        "b_lm": jnp.zeros((1, vocab_pad), jnp.float32),
        # Per-layer weights stacked along a leading layer axis; streamed by the
        # fused block-stack kernel one layer per grid step.
        "ln1_g": jnp.ones((n_layer, 1, c), jnp.float32),
        "ln1_b": jnp.zeros((n_layer, 1, c), jnp.float32),
        # Per-head q/k/v Linears (bias=False) packed as one (C, 3C) weight.
        "wqkv": nrm(ks[3], (n_layer, c, 3 * c), jnp.bfloat16),
        "wo": nrm(ks[4], (n_layer, c, c), jnp.bfloat16),
        "bo": jnp.zeros((n_layer, 1, c), jnp.float32),
        "ln2_g": jnp.ones((n_layer, 1, c), jnp.float32),
        "ln2_b": jnp.zeros((n_layer, 1, c), jnp.float32),
        "w1": nrm(ks[5], (n_layer, c, 4 * c), jnp.bfloat16),
        "b1": jnp.zeros((n_layer, 1, 4 * c), jnp.float32),
        "w2": nrm(ks[6], (n_layer, 4 * c, c), jnp.bfloat16),
        "b2": jnp.zeros((n_layer, 1, c), jnp.float32),
    }


def gpt_forward(params, idx, *, n_head, vocab_size):
    """Returns logits (B, T, vocab_size); matches targets=None path (loss=None)."""
    b, t = idx.shape
    c = params["tok_emb"].shape[1]

    # Token + positional embedding (XLA glue: one small gather + add).
    # TODO(synk): fuse the gather into the block-stack kernel with
    # PrefetchScalarGridSpec (idx scalar-prefetch) + pl.Element row gather.
    x = jnp.take(params["tok_emb"], idx, axis=0) + params["pos_emb"][None, :t, :]
    x = x.astype(jnp.float32)

    # Whole transformer block stack in one pallas_call (x resident in VMEM).
    x = pallas_block_stack(x, params, n_head=n_head)            # (B, T, C) f32

    # Final LayerNorm fused with the (vocab-padded) lm_head.
    logits = pallas_lnf_lmhead(x.reshape(b * t, c), params["lnf_g"],
                               params["lnf_b"], params["w_lm"], params["b_lm"])
    logits = logits[:, :vocab_size]              # drop lane-padding columns
    return logits.reshape(b, t, vocab_size)
    # TODO(synk): cross-entropy loss path (targets != None) and generate()
    # (multinomial sampling loop) are not implemented.


# ----------------------------------------------------------------------------
if __name__ == "__main__":
    # Small, module-consistent config (n_embd divisible by n_head, T <= block_size).
    VOCAB_SIZE = 65
    VOCAB_PAD = 128                      # pad lm_head to a lane-dense width
    N_EMBD = 128
    N_HEAD = 4
    N_LAYER = 2
    BLOCK_SIZE = 128
    B, T = 2, 64

    key = jax.random.PRNGKey(0)
    pkey, dkey = jax.random.split(key)
    params = init_params(pkey, VOCAB_SIZE, VOCAB_PAD, N_EMBD, N_LAYER, BLOCK_SIZE)
    idx = jax.random.randint(dkey, (B, T), 0, VOCAB_SIZE, dtype=jnp.int32)

    fwd = jax.jit(functools.partial(gpt_forward, n_head=N_HEAD,
                                    vocab_size=VOCAB_SIZE))
    logits = fwd(params, idx)
    jax.block_until_ready(logits)

    assert logits.shape == (B, T, VOCAB_SIZE), logits.shape
    assert bool(jnp.all(jnp.isfinite(logits)))
    print("KERNEL_OK")
</pallas_src>

<mosaic_0001>
module attributes {stable_mosaic.version = 11 : i64} {
  func.func @_lnf_lmhead_kernel(%arg0: i32, %arg1: memref<64x128xf32, #tpu.memory_space<vmem>>, %arg2: memref<1x128xf32, #tpu.memory_space<vmem>>, %arg3: memref<1x128xf32, #tpu.memory_space<vmem>>, %arg4: memref<128x128xbf16, #tpu.memory_space<vmem>>, %arg5: memref<1x128xf32, #tpu.memory_space<vmem>>, %arg6: memref<64x128xf32, #tpu.memory_space<vmem>>) attributes {dimension_semantics = [#tpu.dimension_semantics<parallel>], iteration_bounds = array<i64: 2>, scalar_prefetch = 0 : i64, scratch_operands = 0 : i64, tpu.core_type = #tpu.core_type<tc>, window_params = [{transform_indices = @transform_0, window_bounds = array<i64: 64, 128>}, {pipeline_mode = #tpu.pipeline_mode<synchronous>, transform_indices = @transform_1, window_bounds = array<i64: 1, 128>}, {pipeline_mode = #tpu.pipeline_mode<synchronous>, transform_indices = @transform_2, window_bounds = array<i64: 1, 128>}, {pipeline_mode = #tpu.pipeline_mode<synchronous>, transform_indices = @transform_3, window_bounds = array<i64: 128, 128>}, {pipeline_mode = #tpu.pipeline_mode<synchronous>, transform_indices = @transform_4, window_bounds = array<i64: 1, 128>}, {transform_indices = @transform_5, window_bounds = array<i64: 64, 128>}]} {
    %c0 = arith.constant 0 : index
    %c0_0 = arith.constant 0 : index
    %0 = vector.load %arg1[%c0, %c0_0] : memref<64x128xf32, #tpu.memory_space<vmem>>, vector<64x128xf32>
    %cst = arith.constant dense<0.000000e+00> : vector<64xf32>
    %1 = vector.multi_reduction <add>, %0, %cst [1] : vector<64x128xf32> to vector<64xf32>
    %2 = vector.shape_cast %1 : vector<64xf32> to vector<64x1xf32>
    %cst_1 = arith.constant 1.280000e+02 : f32
    %3 = vector.broadcast %cst_1 : f32 to vector<64x1xf32>
    %4 = arith.divf %2, %3 : vector<64x1xf32>
    %5 = vector.broadcast %4 : vector<64x1xf32> to vector<64x128xf32>
    %6 = arith.subf %0, %5 : vector<64x128xf32>
    %7 = arith.mulf %6, %6 : vector<64x128xf32>
    %cst_2 = arith.constant dense<0.000000e+00> : vector<64xf32>
    %8 = vector.multi_reduction <add>, %7, %cst_2 [1] : vector<64x128xf32> to vector<64xf32>
    %9 = vector.shape_cast %8 : vector<64xf32> to vector<64x1xf32>
    %cst_3 = arith.constant 1.280000e+02 : f32
    %10 = vector.broadcast %cst_3 : f32 to vector<64x1xf32>
    %11 = arith.divf %9, %10 : vector<64x1xf32>
    %cst_4 = arith.constant 9.99999974E-6 : f32
    %12 = vector.broadcast %cst_4 : f32 to vector<64x1xf32>
    %13 = arith.addf %11, %12 : vector<64x1xf32>
    %14 = math.rsqrt %13 : vector<64x1xf32>
    %15 = vector.broadcast %14 : vector<64x1xf32> to vector<64x128xf32>
    %16 = arith.mulf %6, %15 : vector<64x128xf32>
    %c0_5 = arith.constant 0 : index
    %c0_6 = arith.constant 0 : index
    %17 = vector.load %arg2[%c0_5, %c0_6] : memref<1x128xf32, #tpu.memory_space<vmem>>, vector<1x128xf32>
    %18 = vector.broadcast %17 : vector<1x128xf32> to vector<64x128xf32>
    %19 = arith.mulf %16, %18 : vector<64x128xf32>
    %c0_7 = arith.constant 0 : index
    %c0_8 = arith.constant 0 : index
    %20 = vector.load %arg3[%c0_7, %c0_8] : memref<1x128xf32, #tpu.memory_space<vmem>>, vector<1x128xf32>
    %21 = vector.broadcast %20 : vector<1x128xf32> to vector<64x128xf32>
    %22 = arith.addf %19, %21 : vector<64x128xf32>
    %23 = arith.truncf %22 : vector<64x128xf32> to vector<64x128xbf16>
    %c0_9 = arith.constant 0 : index
    %c0_10 = arith.constant 0 : index
    %24 = vector.load %arg4[%c0_9, %c0_10] : memref<128x128xbf16, #tpu.memory_space<vmem>>, vector<128x128xbf16>
    %cst_11 = arith.constant dense<0.000000e+00> : vector<64x128xf32>
    %25 = tpu.matmul %23, %24, %cst_11 {dimension_numbers = #tpu.dot_dimension_numbers<[1], [0], [0], [1], [0, 0, 1, 1], [], []>} : vector<64x128xbf16>, vector<128x128xbf16>, vector<64x128xf32> -> vector<64x128xf32>
    %c0_12 = arith.constant 0 : index
    %c0_13 = arith.constant 0 : index
    %26 = vector.load %arg5[%c0_12, %c0_13] : memref<1x128xf32, #tpu.memory_space<vmem>>, vector<1x128xf32>
    %27 = vector.broadcast %26 : vector<1x128xf32> to vector<64x128xf32>
    %28 = arith.addf %25, %27 : vector<64x128xf32>
    %c0_14 = arith.constant 0 : index
    %c0_15 = arith.constant 0 : index
    %29 = vector.load %arg6[%c0_14, %c0_15] : memref<64x128xf32, #tpu.memory_space<vmem>>, vector<64x128xf32>
    tpu.vector_store %arg6[%c0_14, %c0_15], %28 {strides = array<i32>} : memref<64x128xf32, #tpu.memory_space<vmem>>, vector<64x128xf32>,
    return
  }
  func.func @transform_0(%arg0: i32) -> (i32, i32) {
    %c0_i32 = arith.constant 0 : i32
    %c0_i32_0 = arith.constant 0 : i32
    return %arg0, %c0_i32 : i32, i32
  }
  func.func @transform_1(%arg0: i32) -> (i32, i32) {
    %c0_i32 = arith.constant 0 : i32
    %c0_i32_0 = arith.constant 0 : i32
    %c0_i32_1 = arith.constant 0 : i32
    return %c0_i32, %c0_i32_0 : i32, i32
  }
  func.func @transform_2(%arg0: i32) -> (i32, i32) {
    %c0_i32 = arith.constant 0 : i32
    %c0_i32_0 = arith.constant 0 : i32
    %c0_i32_1 = arith.constant 0 : i32
    return %c0_i32, %c0_i32_0 : i32, i32
  }
  func.func @transform_3(%arg0: i32) -> (i32, i32) {
    %c0_i32 = arith.constant 0 : i32
    %c0_i32_0 = arith.constant 0 : i32
    %c0_i32_1 = arith.constant 0 : i32
    return %c0_i32, %c0_i32_0 : i32, i32
  }
  func.func @transform_4(%arg0: i32) -> (i32, i32) {
    %c0_i32 = arith.constant 0 : i32
    %c0_i32_0 = arith.constant 0 : i32
    %c0_i32_1 = arith.constant 0 : i32
    return %c0_i32, %c0_i32_0 : i32, i32
  }
  func.func @transform_5(%arg0: i32) -> (i32, i32) {
    %c0_i32 = arith.constant 0 : i32
    %c0_i32_0 = arith.constant 0 : i32
    return %arg0, %c0_i32 : i32, i32
  }
}

module attributes {stable_mosaic.version = 11 : i64} {
  func.func @_block_stack_kernel(%arg0: i32, %arg1: i32, %arg2: memref<1x64x128xf32, #tpu.memory_space<vmem>>, %arg3: memref<1x1x128xf32, #tpu.memory_space<vmem>>, %arg4: memref<1x1x128xf32, #tpu.memory_space<vmem>>, %arg5: memref<1x128x384xbf16, #tpu.memory_space<vmem>>, %arg6: memref<1x128x128xbf16, #tpu.memory_space<vmem>>, %arg7: memref<1x1x128xf32, #tpu.memory_space<vmem>>, %arg8: memref<1x1x128xf32, #tpu.memory_space<vmem>>, %arg9: memref<1x1x128xf32, #tpu.memory_space<vmem>>, %arg10: memref<1x128x512xbf16, #tpu.memory_space<vmem>>, %arg11: memref<1x1x512xf32, #tpu.memory_space<vmem>>, %arg12: memref<1x512x128xbf16, #tpu.memory_space<vmem>>, %arg13: memref<1x1x128xf32, #tpu.memory_space<vmem>>, %arg14: memref<1x64x128xf32, #tpu.memory_space<vmem>>, %arg15: memref<64x128xf32, #tpu.memory_space<vmem>>) attributes {dimension_semantics = [#tpu.dimension_semantics<parallel>, #tpu.dimension_semantics<arbitrary>], iteration_bounds = array<i64: 2, 2>, scalar_prefetch = 0 : i64, scratch_operands = 1 : i64, tpu.core_type = #tpu.core_type<tc>, window_params = [{transform_indices = @transform_0, window_bounds = array<i64: 1, 64, 128>}, {transform_indices = @transform_1, window_bounds = array<i64: 1, 1, 128>}, {transform_indices = @transform_2, window_bounds = array<i64: 1, 1, 128>}, {transform_indices = @transform_3, window_bounds = array<i64: 1, 128, 384>}, {transform_indices = @transform_4, window_bounds = array<i64: 1, 128, 128>}, {transform_indices = @transform_5, window_bounds = array<i64: 1, 1, 128>}, {transform_indices = @transform_6, window_bounds = array<i64: 1, 1, 128>}, {transform_indices = @transform_7, window_bounds = array<i64: 1, 1, 128>}, {transform_indices = @transform_8, window_bounds = array<i64: 1, 128, 512>}, {transform_indices = @transform_9, window_bounds = array<i64: 1, 1, 512>}, {transform_indices = @transform_10, window_bounds = array<i64: 1, 512, 128>}, {transform_indices = @transform_11, window_bounds = array<i64: 1, 1, 128>}, {transform_indices = @transform_12, window_bounds = array<i64: 1, 64, 128>}]} {
    %c0_i32 = arith.constant 0 : i32
    %0 = arith.cmpi eq, %arg1, %c0_i32 : i32
    %1 = arith.extui %0 : i1 to i32
    %c0_i32_0 = arith.constant 0 : i32
    %2 = arith.cmpi ne, %1, %c0_i32_0 : i32
    scf.if %2 {
      %c0_58 = arith.constant 0 : index
      %c0_59 = arith.constant 0 : index
      %c0_60 = arith.constant 0 : index
      %122 = vector.load %arg2[%c0_58, %c0_59, %c0_60] : memref<1x64x128xf32, #tpu.memory_space<vmem>>, vector<1x64x128xf32>
      %123 = vector.shape_cast %122 : vector<1x64x128xf32> to vector<64x128xf32>
      %c0_61 = arith.constant 0 : index
      %c0_62 = arith.constant 0 : index
      %124 = vector.load %arg15[%c0_61, %c0_62] : memref<64x128xf32, #tpu.memory_space<vmem>>, vector<64x128xf32>
      tpu.vector_store %arg15[%c0_61, %c0_62], %123 {strides = array<i32>} : memref<64x128xf32, #tpu.memory_space<vmem>>, vector<64x128xf32>,
    } else {
    }
    %c0 = arith.constant 0 : index
    %c0_1 = arith.constant 0 : index
    %3 = vector.load %arg15[%c0, %c0_1] : memref<64x128xf32, #tpu.memory_space<vmem>>, vector<64x128xf32>
    %c0_2 = arith.constant 0 : index
    %c0_3 = arith.constant 0 : index
    %c0_4 = arith.constant 0 : index
    %4 = vector.load %arg3[%c0_2, %c0_3, %c0_4] : memref<1x1x128xf32, #tpu.memory_space<vmem>>, vector<1x1x128xf32>
    %5 = vector.shape_cast %4 : vector<1x1x128xf32> to vector<1x128xf32>
    %c0_5 = arith.constant 0 : index
    %c0_6 = arith.constant 0 : index
    %c0_7 = arith.constant 0 : index
    %6 = vector.load %arg4[%c0_5, %c0_6, %c0_7] : memref<1x1x128xf32, #tpu.memory_space<vmem>>, vector<1x1x128xf32>
    %7 = vector.shape_cast %6 : vector<1x1x128xf32> to vector<1x128xf32>
    %cst = arith.constant dense<0.000000e+00> : vector<64xf32>
    %8 = vector.multi_reduction <add>, %3, %cst [1] : vector<64x128xf32> to vector<64xf32>
    %9 = vector.shape_cast %8 : vector<64xf32> to vector<64x1xf32>
    %cst_8 = arith.constant 1.280000e+02 : f32
    %10 = vector.broadcast %cst_8 : f32 to vector<64x1xf32>
    %11 = arith.divf %9, %10 : vector<64x1xf32>
    %12 = vector.broadcast %11 : vector<64x1xf32> to vector<64x128xf32>
    %13 = arith.subf %3, %12 : vector<64x128xf32>
    %14 = arith.mulf %13, %13 : vector<64x128xf32>
    %cst_9 = arith.constant dense<0.000000e+00> : vector<64xf32>
    %15 = vector.multi_reduction <add>, %14, %cst_9 [1] : vector<64x128xf32> to vector<64xf32>
    %16 = vector.shape_cast %15 : vector<64xf32> to vector<64x1xf32>
    %cst_10 = arith.constant 1.280000e+02 : f32
    %17 = vector.broadcast %cst_10 : f32 to vector<64x1xf32>
    %18 = arith.divf %16, %17 : vector<64x1xf32>
    %cst_11 = arith.constant 9.99999974E-6 : f32
    %19 = vector.broadcast %cst_11 : f32 to vector<64x1xf32>
    %20 = arith.addf %18, %19 : vector<64x1xf32>
    %21 = math.rsqrt %20 : vector<64x1xf32>
    %22 = vector.broadcast %21 : vector<64x1xf32> to vector<64x128xf32>
    %23 = arith.mulf %13, %22 : vector<64x128xf32>
    %24 = vector.broadcast %5 : vector<1x128xf32> to vector<64x128xf32>
    %25 = arith.mulf %23, %24 : vector<64x128xf32>
    %26 = vector.broadcast %7 : vector<1x128xf32> to vector<64x128xf32>
    %27 = arith.addf %25, %26 : vector<64x128xf32>
    %28 = arith.truncf %27 : vector<64x128xf32> to vector<64x128xbf16>
    %c0_12 = arith.constant 0 : index
    %c0_13 = arith.constant 0 : index
    %c0_14 = arith.constant 0 : index
    %29 = vector.load %arg5[%c0_12, %c0_13, %c0_14] : memref<1x128x384xbf16, #tpu.memory_space<vmem>>, vector<1x128x384xbf16>
    %30 = vector.shape_cast %29 : vector<1x128x384xbf16> to vector<128x384xbf16>
    %cst_15 = arith.constant dense<0.000000e+00> : vector<64x384xf32>
    %31 = tpu.matmul %28, %30, %cst_15 {dimension_numbers = #tpu.dot_dimension_numbers<[1], [0], [0], [1], [0, 0, 1, 1], [], []>} : vector<64x128xbf16>, vector<128x384xbf16>, vector<64x384xf32> -> vector<64x384xf32>
    %32 = arith.truncf %31 : vector<64x384xf32> to vector<64x384xbf16>
    %33 = vector.extract_strided_slice %32 {offsets = [0, 0], sizes = [64, 128], strides = [1, 1]} : vector<64x384xbf16> to vector<64x128xbf16>
    %34 = vector.shape_cast %33 : vector<64x128xbf16> to vector<64x4x32xbf16>
    %35 = tpu.transpose %34, [1, 0, 2] : vector<64x4x32xbf16> -> vector<4x64x32xbf16>
    %36 = vector.extract_strided_slice %32 {offsets = [0, 128], sizes = [64, 128], strides = [1, 1]} : vector<64x384xbf16> to vector<64x128xbf16>
    %37 = vector.shape_cast %36 : vector<64x128xbf16> to vector<64x4x32xbf16>
    %38 = tpu.transpose %37, [1, 0, 2] : vector<64x4x32xbf16> -> vector<4x64x32xbf16>
    %39 = vector.extract_strided_slice %32 {offsets = [0, 256], sizes = [64, 128], strides = [1, 1]} : vector<64x384xbf16> to vector<64x128xbf16>
    %40 = vector.shape_cast %39 : vector<64x128xbf16> to vector<64x4x32xbf16>
    %41 = tpu.transpose %40, [1, 0, 2] : vector<64x4x32xbf16> -> vector<4x64x32xbf16>
    "tpu.trace_start"() <{level = 10 : i32, message = "hqd,hkd->hqk"}> : () -> ()
    %cst_16 = arith.constant dense<0.000000e+00> : vector<4x64x64xf32>
    %42 = tpu.matmul %35, %38, %cst_16 {dimension_numbers = #tpu.dot_dimension_numbers<[2], [2], [1], [1], [0, 0, 0, 1, 1, 1], [0], [0]>} : vector<4x64x32xbf16>, vector<4x64x32xbf16>, vector<4x64x64xf32> -> vector<4x64x64xf32>
    "tpu.trace_stop"() : () -> ()
    %cst_17 = arith.constant 0.176776692 : f32
    %43 = vector.broadcast %cst_17 : f32 to vector<4x64x64xf32>
    %44 = arith.mulf %42, %43 : vector<4x64x64xf32>
    %45 = tpu.iota {dimensions = array<i32: 0>} : vector<64x64xi32>
    %46 = tpu.iota {dimensions = array<i32: 1>} : vector<64x64xi32>
    %47 = arith.cmpi sle, %46, %45 : vector<64x64xi32>
    %cst_18 = arith.constant -1.000000e+30 : f32
    %48 = vector.shape_cast %47 : vector<64x64xi1> to vector<1x64x64xi1>
    %49 = vector.broadcast %48 : vector<1x64x64xi1> to vector<4x64x64xi1>
    %50 = vector.broadcast %cst_18 : f32 to vector<4x64x64xf32>
    %51 = arith.select %49, %44, %50 : vector<4x64x64xi1>, vector<4x64x64xf32>
    %cst_19 = arith.constant dense<0xFF800000> : vector<4x64xf32>
    %52 = vector.multi_reduction <maximumf>, %51, %cst_19 [2] : vector<4x64x64xf32> to vector<4x64xf32>
    %53 = vector.shape_cast %52 : vector<4x64xf32> to vector<4x64x1xf32>
    %54 = vector.broadcast %53 : vector<4x64x1xf32> to vector<4x64x64xf32>
    %55 = arith.subf %51, %54 : vector<4x64x64xf32>
    %56 = math.exp %55 : vector<4x64x64xf32>
    %cst_20 = arith.constant dense<0.000000e+00> : vector<4x64xf32>
    %57 = vector.multi_reduction <add>, %56, %cst_20 [2] : vector<4x64x64xf32> to vector<4x64xf32>
    %58 = vector.shape_cast %57 : vector<4x64xf32> to vector<4x64x1xf32>
    %59 = tpu.reciprocal %58 {approx = true} : vector<4x64x1xf32> -> vector<4x64x1xf32>
    %60 = vector.broadcast %59 : vector<4x64x1xf32> to vector<4x64x64xf32>
    %61 = arith.mulf %56, %60 : vector<4x64x64xf32>
    %62 = arith.truncf %61 : vector<4x64x64xf32> to vector<4x64x64xbf16>
    "tpu.trace_start"() <{level = 10 : i32, message = "hqk,hkd->hqd"}> : () -> ()
    %cst_21 = arith.constant dense<0.000000e+00> : vector<4x64x32xf32>
    %63 = tpu.matmul %62, %41, %cst_21 {dimension_numbers = #tpu.dot_dimension_numbers<[2], [1], [1], [2], [0, 0, 0, 1, 1, 2], [0], [0]>} : vector<4x64x64xbf16>, vector<4x64x32xbf16>, vector<4x64x32xf32> -> vector<4x64x32xf32>
    "tpu.trace_stop"() : () -> ()
    %64 = tpu.transpose %63, [1, 0, 2] : vector<4x64x32xf32> -> vector<64x4x32xf32>
    %65 = vector.shape_cast %64 : vector<64x4x32xf32> to vector<64x128xf32>
    %66 = arith.truncf %65 : vector<64x128xf32> to vector<64x128xbf16>
    %c0_22 = arith.constant 0 : index
    %c0_23 = arith.constant 0 : index
    %c0_24 = arith.constant 0 : index
    %67 = vector.load %arg6[%c0_22, %c0_23, %c0_24] : memref<1x128x128xbf16, #tpu.memory_space<vmem>>, vector<1x128x128xbf16>
    %68 = vector.shape_cast %67 : vector<1x128x128xbf16> to vector<128x128xbf16>
    %cst_25 = arith.constant dense<0.000000e+00> : vector<64x128xf32>
    %69 = tpu.matmul %66, %68, %cst_25 {dimension_numbers = #tpu.dot_dimension_numbers<[1], [0], [0], [1], [0, 0, 1, 1], [], []>} : vector<64x128xbf16>, vector<128x128xbf16>, vector<64x128xf32> -> vector<64x128xf32>
    %c0_26 = arith.constant 0 : index
    %c0_27 = arith.constant 0 : index
    %c0_28 = arith.constant 0 : index
    %70 = vector.load %arg7[%c0_26, %c0_27, %c0_28] : memref<1x1x128xf32, #tpu.memory_space<vmem>>, vector<1x1x128xf32>
    %71 = vector.shape_cast %70 : vector<1x1x128xf32> to vector<1x128xf32>
    %72 = vector.broadcast %71 : vector<1x128xf32> to vector<64x128xf32>
    %73 = arith.addf %69, %72 : vector<64x128xf32>
    %74 = arith.addf %3, %73 : vector<64x128xf32>
    %c0_29 = arith.constant 0 : index
    %c0_30 = arith.constant 0 : index
    %c0_31 = arith.constant 0 : index
    %75 = vector.load %arg8[%c0_29, %c0_30, %c0_31] : memref<1x1x128xf32, #tpu.memory_space<vmem>>, vector<1x1x128xf32>
    %76 = vector.shape_cast %75 : vector<1x1x128xf32> to vector<1x128xf32>
    %c0_32 = arith.constant 0 : index
    %c0_33 = arith.constant 0 : index
    %c0_34 = arith.constant 0 : index
    %77 = vector.load %arg9[%c0_32, %c0_33, %c0_34] : memref<1x1x128xf32, #tpu.memory_space<vmem>>, vector<1x1x128xf32>
    %78 = vector.shape_cast %77 : vector<1x1x128xf32> to vector<1x128xf32>
    %cst_35 = arith.constant dense<0.000000e+00> : vector<64xf32>
    %79 = vector.multi_reduction <add>, %74, %cst_35 [1] : vector<64x128xf32> to vector<64xf32>
    %80 = vector.shape_cast %79 : vector<64xf32> to vector<64x1xf32>
    %cst_36 = arith.constant 1.280000e+02 : f32
    %81 = vector.broadcast %cst_36 : f32 to vector<64x1xf32>
    %82 = arith.divf %80, %81 : vector<64x1xf32>
    %83 = vector.broadcast %82 : vector<64x1xf32> to vector<64x128xf32>
    %84 = arith.subf %74, %83 : vector<64x128xf32>
    %85 = arith.mulf %84, %84 : vector<64x128xf32>
    %cst_37 = arith.constant dense<0.000000e+00> : vector<64xf32>
    %86 = vector.multi_reduction <add>, %85, %cst_37 [1] : vector<64x128xf32> to vector<64xf32>
    %87 = vector.shape_cast %86 : vector<64xf32> to vector<64x1xf32>
    %cst_38 = arith.constant 1.280000e+02 : f32
    %88 = vector.broadcast %cst_38 : f32 to vector<64x1xf32>
    %89 = arith.divf %87, %88 : vector<64x1xf32>
    %cst_39 = arith.constant 9.99999974E-6 : f32
    %90 = vector.broadcast %cst_39 : f32 to vector<64x1xf32>
    %91 = arith.addf %89, %90 : vector<64x1xf32>
    %92 = math.rsqrt %91 : vector<64x1xf32>
    %93 = vector.broadcast %92 : vector<64x1xf32> to vector<64x128xf32>
    %94 = arith.mulf %84, %93 : vector<64x128xf32>
    %95 = vector.broadcast %76 : vector<1x128xf32> to vector<64x128xf32>
    %96 = arith.mulf %94, %95 : vector<64x128xf32>
    %97 = vector.broadcast %78 : vector<1x128xf32> to vector<64x128xf32>
    %98 = arith.addf %96, %97 : vector<64x128xf32>
    %99 = arith.truncf %98 : vector<64x128xf32> to vector<64x128xbf16>
    %c0_40 = arith.constant 0 : index
    %c0_41 = arith.constant 0 : index
    %c0_42 = arith.constant 0 : index
    %100 = vector.load %arg10[%c0_40, %c0_41, %c0_42] : memref<1x128x512xbf16, #tpu.memory_space<vmem>>, vector<1x128x512xbf16>
    %101 = vector.shape_cast %100 : vector<1x128x512xbf16> to vector<128x512xbf16>
    %cst_43 = arith.constant dense<0.000000e+00> : vector<64x512xf32>
    %102 = tpu.matmul %99, %101, %cst_43 {dimension_numbers = #tpu.dot_dimension_numbers<[1], [0], [0], [1], [0, 0, 1, 1], [], []>} : vector<64x128xbf16>, vector<128x512xbf16>, vector<64x512xf32> -> vector<64x512xf32>
    %c0_44 = arith.constant 0 : index
    %c0_45 = arith.constant 0 : index
    %c0_46 = arith.constant 0 : index
    %103 = vector.load %arg11[%c0_44, %c0_45, %c0_46] : memref<1x1x512xf32, #tpu.memory_space<vmem>>, vector<1x1x512xf32>
    %104 = vector.shape_cast %103 : vector<1x1x512xf32> to vector<1x512xf32>
    %105 = vector.broadcast %104 : vector<1x512xf32> to vector<64x512xf32>
    %106 = arith.addf %102, %105 : vector<64x512xf32>
    %cst_47 = arith.constant 0.000000e+00 : f32
    %107 = vector.broadcast %cst_47 : f32 to vector<64x512xf32>
    %108 = arith.maximumf %106, %107 : vector<64x512xf32>
    %109 = arith.truncf %108 : vector<64x512xf32> to vector<64x512xbf16>
    %c0_48 = arith.constant 0 : index
    %c0_49 = arith.constant 0 : index
    %c0_50 = arith.constant 0 : index
    %110 = vector.load %arg12[%c0_48, %c0_49, %c0_50] : memref<1x512x128xbf16, #tpu.memory_space<vmem>>, vector<1x512x128xbf16>
    %111 = vector.shape_cast %110 : vector<1x512x128xbf16> to vector<512x128xbf16>
    %cst_51 = arith.constant dense<0.000000e+00> : vector<64x128xf32>
    %112 = tpu.matmul %109, %111, %cst_51 {dimension_numbers = #tpu.dot_dimension_numbers<[1], [0], [0], [1], [0, 0, 1, 1], [], []>} : vector<64x512xbf16>, vector<512x128xbf16>, vector<64x128xf32> -> vector<64x128xf32>
    %c0_52 = arith.constant 0 : index
    %c0_53 = arith.constant 0 : index
    %c0_54 = arith.constant 0 : index
    %113 = vector.load %arg13[%c0_52, %c0_53, %c0_54] : memref<1x1x128xf32, #tpu.memory_space<vmem>>, vector<1x1x128xf32>
    %114 = vector.shape_cast %113 : vector<1x1x128xf32> to vector<1x128xf32>
    %115 = vector.broadcast %114 : vector<1x128xf32> to vector<64x128xf32>
    %116 = arith.addf %112, %115 : vector<64x128xf32>
    %117 = arith.addf %74, %116 : vector<64x128xf32>
    %c0_55 = arith.constant 0 : index
    %c0_56 = arith.constant 0 : index
    %118 = vector.load %arg15[%c0_55, %c0_56] : memref<64x128xf32, #tpu.memory_space<vmem>>, vector<64x128xf32>
    tpu.vector_store %arg15[%c0_55, %c0_56], %117 {strides = array<i32>} : memref<64x128xf32, #tpu.memory_space<vmem>>, vector<64x128xf32>,
    %c1_i32 = arith.constant 1 : i32
    %119 = arith.cmpi eq, %arg1, %c1_i32 : i32
    %120 = arith.extui %119 : i1 to i32
    %c0_i32_57 = arith.constant 0 : i32
    %121 = arith.cmpi ne, %120, %c0_i32_57 : i32
    scf.if %121 {
      %c0_58 = arith.constant 0 : index
      %c0_59 = arith.constant 0 : index
      %c0_60 = arith.constant 0 : index
      %122 = vector.load %arg14[%c0_58, %c0_59, %c0_60] : memref<1x64x128xf32, #tpu.memory_space<vmem>>, vector<1x64x128xf32>
      %123 = vector.shape_cast %122 : vector<1x64x128xf32> to vector<64x128xf32>
      %124 = vector.shape_cast %117 : vector<64x128xf32> to vector<1x64x128xf32>
      tpu.vector_store %arg14[%c0_58, %c0_59, %c0_60], %124 {strides = array<i32>} : memref<1x64x128xf32, #tpu.memory_space<vmem>>, vector<1x64x128xf32>,
    } else {
    }
    return
  }
  func.func @transform_0(%arg0: i32, %arg1: i32) -> (i32, i32, i32) {
    %c0_i32 = arith.constant 0 : i32
    %c0_i32_0 = arith.constant 0 : i32
    %c0_i32_1 = arith.constant 0 : i32
    return %arg0, %c0_i32, %c0_i32_0 : i32, i32, i32
  }
  func.func @transform_1(%arg0: i32, %arg1: i32) -> (i32, i32, i32) {
    %c0_i32 = arith.constant 0 : i32
    %c0_i32_0 = arith.constant 0 : i32
    %c0_i32_1 = arith.constant 0 : i32
    return %arg1, %c0_i32, %c0_i32_0 : i32, i32, i32
  }
  func.func @transform_2(%arg0: i32, %arg1: i32) -> (i32, i32, i32) {
    %c0_i32 = arith.constant 0 : i32
    %c0_i32_0 = arith.constant 0 : i32
    %c0_i32_1 = arith.constant 0 : i32
    return %arg1, %c0_i32, %c0_i32_0 : i32, i32, i32
  }
  func.func @transform_3(%arg0: i32, %arg1: i32) -> (i32, i32, i32) {
    %c0_i32 = arith.constant 0 : i32
    %c0_i32_0 = arith.constant 0 : i32
    %c0_i32_1 = arith.constant 0 : i32
    return %arg1, %c0_i32, %c0_i32_0 : i32, i32, i32
  }
  func.func @transform_4(%arg0: i32, %arg1: i32) -> (i32, i32, i32) {
    %c0_i32 = arith.constant 0 : i32
    %c0_i32_0 = arith.constant 0 : i32
    %c0_i32_1 = arith.constant 0 : i32
    return %arg1, %c0_i32, %c0_i32_0 : i32, i32, i32
  }
  func.func @transform_5(%arg0: i32, %arg1: i32) -> (i32, i32, i32) {
    %c0_i32 = arith.constant 0 : i32
    %c0_i32_0 = arith.constant 0 : i32
    %c0_i32_1 = arith.constant 0 : i32
    return %arg1, %c0_i32, %c0_i32_0 : i32, i32, i32
  }
  func.func @transform_6(%arg0: i32, %arg1: i32) -> (i32, i32, i32) {
    %c0_i32 = arith.constant 0 : i32
    %c0_i32_0 = arith.constant 0 : i32
    %c0_i32_1 = arith.constant 0 : i32
    return %arg1, %c0_i32, %c0_i32_0 : i32, i32, i32
  }
  func.func @transform_7(%arg0: i32, %arg1: i32) -> (i32, i32, i32) {
    %c0_i32 = arith.constant 0 : i32
    %c0_i32_0 = arith.constant 0 : i32
    %c0_i32_1 = arith.constant 0 : i32
    return %arg1, %c0_i32, %c0_i32_0 : i32, i32, i32
  }
  func.func @transform_8(%arg0: i32, %arg1: i32) -> (i32, i32, i32) {
    %c0_i32 = arith.constant 0 : i32
    %c0_i32_0 = arith.constant 0 : i32
    %c0_i32_1 = arith.constant 0 : i32
    return %arg1, %c0_i32, %c0_i32_0 : i32, i32, i32
  }
  func.func @transform_9(%arg0: i32, %arg1: i32) -> (i32, i32, i32) {
    %c0_i32 = arith.constant 0 : i32
    %c0_i32_0 = arith.constant 0 : i32
    %c0_i32_1 = arith.constant 0 : i32
    return %arg1, %c0_i32, %c0_i32_0 : i32, i32, i32
  }
  func.func @transform_10(%arg0: i32, %arg1: i32) -> (i32, i32, i32) {
    %c0_i32 = arith.constant 0 : i32
    %c0_i32_0 = arith.constant 0 : i32
    %c0_i32_1 = arith.constant 0 : i32
    return %arg1, %c0_i32, %c0_i32_0 : i32, i32, i32
  }
  func.func @transform_11(%arg0: i32, %arg1: i32) -> (i32, i32, i32) {
    %c0_i32 = arith.constant 0 : i32
    %c0_i32_0 = arith.constant 0 : i32
    %c0_i32_1 = arith.constant 0 : i32
    return %arg1, %c0_i32, %c0_i32_0 : i32, i32, i32
  }
  func.func @transform_12(%arg0: i32, %arg1: i32) -> (i32, i32, i32) {
    %c0_i32 = arith.constant 0 : i32
    %c0_i32_0 = arith.constant 0 : i32
    %c0_i32_1 = arith.constant 0 : i32
    return %arg0, %c0_i32, %c0_i32_0 : i32, i32, i32
  }
}

</mosaic_0001>

<llo_original>
// kernel: gpt_forward.3
$region0: #{gpt_forward.3}
  #allocation0 [shape = 'u32[]', space=smem, size = 0x4, offset = 0x4, fixed_abs, tag = 'smem constant byte address 0x4 - core index']
  #allocation1 [shape = 'u32[144,128]{1,0:T(1,128)}', space=vmem, size = 0x12000, scoped, tag = 'internal scratch']
  %s0 = inlined_call_operand.vmem [shape: f32[128,128], index: 0, kind: input, shape index: {}]
  %s1 = inlined_call_operand.vmem [shape: f32[1,128], index: 1, kind: input, shape index: {}]
  %s2 = inlined_call_operand.vmem [shape: f32[1,128], index: 2, kind: input, shape index: {}]
  %s3 = inlined_call_operand.vmem [shape: bf16[128,128], index: 3, kind: input, shape index: {}]
  %s4 = inlined_call_operand.vmem [shape: f32[1,128], index: 4, kind: input, shape index: {}]
  %s5 = inlined_call_operand.hbm [shape: f32[128,128], index: 5, kind: output, shape index: {}]
  %s6 = sld [smem:[#allocation0]]
  $region53: #{gpt_forward.3} parent=0
    _
  %s8 = ssub.s32 1, %s6
  %s9 = scalar_select 0, %s8, %s6
  $region1: #{gpt_forward.3} parent=0
    #allocation2 [shape = 'u8[65536]{0}', space=vmem, size = 0x10000, scoped, tag = 'output window, operand 0']
    #allocation3 [shape = 's32[2]{0}', space=sflag, size = 0x8, scoped, tag = 'scoped memory for gpt_forward.3']
    %10 = vsyncpa [#allocation3], 0
    %s11 = scalar_lea.sflag [#allocation3], 1
    %12 = vsyncpa %s11, 0
    loop: start=0, step=1, limit=4
    $region2: #{gpt_forward.3} parent=1 // loop_pre_header
      _
    $region3: #{gpt_forward.3} parent=1 // loop_header
      %s14 = sphi 0, %s18
      %p15 = scmp.ge.s32.totalorder %s14, 4
      %s24 = sphi 0, %s26
      %s27 = sphi 0, %s24
      %s28 = sphi 0, %s27
      %s44 = sphi 0, %s28
      %s48 = sphi 0, %s48
      %s50 = sphi 0, %s48
      %s51 = sphi 0, %s50
      %s65 = sphi 0, %s51
      %s69 = sphi 0, %s69
      %s71 = sphi 0, %s69
      %s72 = sphi 0, %s71
      %s86 = sphi 0, %s72
      %s90 = sphi 0, %s90
      %s92 = sphi 0, %s90
      %s93 = sphi 0, %s92
      %s107 = sphi 0, %s93
      %s111 = sphi 0, %s111
      %s113 = sphi 0, %s111
      %s114 = sphi 0, %s113
      %s128 = sphi 0, %s114
      %s134 = sphi 0, %s136
      %s137 = sphi 0, %s134
      %s138 = sphi 0, %s137
      %s154 = sphi 0, %s138
    $region4: #{gpt_forward.3} parent=1 // loop_header_branch
      %17 = sbr.rel (%p15) target = $region8
    $region5: #{gpt_forward.3} parent=1 // loop_body
      %s19 = ssub.s32 %s14, 1
      %s20 = ssub.s32 %s14, 2
      %s21 = sadd.s32 %s14, 1
      %s22 = ssub.s32 %s14, %s21
      %p23 = scmp.eq.s32.totalorder %s22, 0
      %s25 = sadd.s32 %s24, 1
      %s26 = scalar_select %p23, %s24, %s25
      %p29 = pneg %p23
      %p30 = scmp.eq.s32.totalorder %s14, 1
      %p31 = por %p29, %p30
      %p32 = scmp.ne.s32.totalorder %s24, %s27
      %p33 = scmp.eq.s32.totalorder %s14, 0
      %p34 = por %p32, %p33
      %p35 = scmp.ne.s32.totalorder %s24, %s27
      %p36 = scmp.eq.s32.totalorder %s19, 1
      %p37 = por %p35, %p36
      %p38 = scmp.ne.s32.totalorder %s27, %s28
      %p39 = scmp.eq.s32.totalorder %s19, 0
      %p40 = por %p38, %p39
      %p41 = scmp.ne.s32.totalorder %s27, %s28
      %p42 = scmp.eq.s32.totalorder %s20, 1
      %p43 = por %p41, %p42
      %p45 = scmp.ne.s32.totalorder %s28, %s44
      %p46 = scmp.eq.s32.totalorder %s20, 0
      %p47 = por %p45, %p46
      %s49 = sadd.s32 %s48, 1
      %p52 = scmp.eq.s32.totalorder %s14, 1
      %p53 = scmp.ne.s32.totalorder %s48, %s50
      %p54 = scmp.eq.s32.totalorder %s14, 0
      %p55 = por %p53, %p54
      %p56 = scmp.ne.s32.totalorder %s48, %s50
      %p57 = scmp.eq.s32.totalorder %s19, 1
      %p58 = por %p56, %p57
      %p59 = scmp.ne.s32.totalorder %s50, %s51
      %p60 = scmp.eq.s32.totalorder %s19, 0
      %p61 = por %p59, %p60
      %p62 = scmp.ne.s32.totalorder %s50, %s51
      %p63 = scmp.eq.s32.totalorder %s20, 1
      %p64 = por %p62, %p63
      %p66 = scmp.ne.s32.totalorder %s51, %s65
      %p67 = scmp.eq.s32.totalorder %s20, 0
      %p68 = por %p66, %p67
      %s70 = sadd.s32 %s69, 1
      %p73 = scmp.eq.s32.totalorder %s14, 1
      %p74 = scmp.ne.s32.totalorder %s69, %s71
      %p75 = scmp.eq.s32.totalorder %s14, 0
      %p76 = por %p74, %p75
      %p77 = scmp.ne.s32.totalorder %s69, %s71
      %p78 = scmp.eq.s32.totalorder %s19, 1
      %p79 = por %p77, %p78
      %p80 = scmp.ne.s32.totalorder %s71, %s72
      %p81 = scmp.eq.s32.totalorder %s19, 0
      %p82 = por %p80, %p81
      %p83 = scmp.ne.s32.totalorder %s71, %s72
      %p84 = scmp.eq.s32.totalorder %s20, 1
      %p85 = por %p83, %p84
      %p87 = scmp.ne.s32.totalorder %s72, %s86
      %p88 = scmp.eq.s32.totalorder %s20, 0
      %p89 = por %p87, %p88
      %s91 = sadd.s32 %s90, 1
      %p94 = scmp.eq.s32.totalorder %s14, 1
      %p95 = scmp.ne.s32.totalorder %s90, %s92
      %p96 = scmp.eq.s32.totalorder %s14, 0
      %p97 = por %p95, %p96
      %p98 = scmp.ne.s32.totalorder %s90, %s92
      %p99 = scmp.eq.s32.totalorder %s19, 1
      %p100 = por %p98, %p99
      %p101 = scmp.ne.s32.totalorder %s92, %s93
      %p102 = scmp.eq.s32.totalorder %s19, 0
      %p103 = por %p101, %p102
      %p104 = scmp.ne.s32.totalorder %s92, %s93
      %p105 = scmp.eq.s32.totalorder %s20, 1
      %p106 = por %p104, %p105
      %p108 = scmp.ne.s32.totalorder %s93, %s107
      %p109 = scmp.eq.s32.totalorder %s20, 0
      %p110 = por %p108, %p109
      %s112 = sadd.s32 %s111, 1
      %p115 = scmp.eq.s32.totalorder %s14, 1
      %p116 = scmp.ne.s32.totalorder %s111, %s113
      %p117 = scmp.eq.s32.totalorder %s14, 0
      %p118 = por %p116, %p117
      %p119 = scmp.ne.s32.totalorder %s111, %s113
      %p120 = scmp.eq.s32.totalorder %s19, 1
      %p121 = por %p119, %p120
      %p122 = scmp.ne.s32.totalorder %s113, %s114
      %p123 = scmp.eq.s32.totalorder %s19, 0
      %p124 = por %p122, %p123
      %p125 = scmp.ne.s32.totalorder %s113, %s114
      %p126 = scmp.eq.s32.totalorder %s20, 1
      %p127 = por %p125, %p126
      %p129 = scmp.ne.s32.totalorder %s114, %s128
      %p130 = scmp.eq.s32.totalorder %s20, 0
      %p131 = por %p129, %p130
      %s132 = ssub.s32 %s14, %s21
      %p133 = scmp.eq.s32.totalorder %s132, 0
      %s135 = sadd.s32 %s134, 1
      %s136 = scalar_select %p133, %s134, %s135
      %p139 = pneg %p133
      %p140 = scmp.eq.s32.totalorder %s14, 1
      %p141 = por %p139, %p140
      %p142 = scmp.ne.s32.totalorder %s134, %s137
      %p143 = scmp.eq.s32.totalorder %s14, 0
      %p144 = por %p142, %p143
      %p145 = scmp.ne.s32.totalorder %s134, %s137
      %p146 = scmp.eq.s32.totalorder %s19, 1
      %p147 = por %p145, %p146
      %p148 = scmp.ne.s32.totalorder %s137, %s138
      %p149 = scmp.eq.s32.totalorder %s19, 0
      %p150 = por %p148, %p149
      %p151 = scmp.ne.s32.totalorder %s137, %s138
      %p152 = scmp.eq.s32.totalorder %s20, 1
      %p153 = por %p151, %p152
      %p155 = scmp.ne.s32.totalorder %s138, %s154
      %p156 = scmp.eq.s32.totalorder %s20, 0
      %p157 = por %p155, %p156
      %p158 = scmp.le.s32.totalorder 1, %s14
      %p159 = scmp.lt.s32.totalorder %s14, 3
      %p160 = pnand %p158, %p159
      %p161 = pneg %p160
      // Predicated region
      $region9: #{gpt_forward.3} parent=5 // pred_check
        _
      $region10: #{gpt_forward.3} parent=5 // pred_check_branch
        %163 = sbr.rel (%p160) target = $region12
      $region11: #{gpt_forward.3} parent=5 // pred_region
        %s164 = ssub.s32 %s14, 1
        // Predicated region
        $region13: #{gpt_forward.3} parent=11 // pred_check
          %p165 = pneg %p61
        $region14: #{gpt_forward.3} parent=11 // pred_check_branch
          %167 = sbr.rel (%p165) target = $region16
        $region15: #{gpt_forward.3} parent=11 // pred_region
          _
        $region16: #{gpt_forward.3} parent=11 // pred_fallthru
          _
        // Predicated region
        $region17: #{gpt_forward.3} parent=11 // pred_check
          %p168 = pneg %p82
        $region18: #{gpt_forward.3} parent=11 // pred_check_branch
          %170 = sbr.rel (%p168) target = $region20
        $region19: #{gpt_forward.3} parent=11 // pred_region
          _
        $region20: #{gpt_forward.3} parent=11 // pred_fallthru
          _
        // Predicated region
        $region21: #{gpt_forward.3} parent=11 // pred_check
          %p171 = pneg %p103
        $region22: #{gpt_forward.3} parent=11 // pred_check_branch
          %173 = sbr.rel (%p171) target = $region24
        $region23: #{gpt_forward.3} parent=11 // pred_region
          _
        $region24: #{gpt_forward.3} parent=11 // pred_fallthru
          _
        // Predicated region
        $region25: #{gpt_forward.3} parent=11 // pred_check
          %p174 = pneg %p124
        $region26: #{gpt_forward.3} parent=11 // pred_check_branch
          %176 = sbr.rel (%p174) target = $region28
        $region27: #{gpt_forward.3} parent=11 // pred_region
          _
        $region28: #{gpt_forward.3} parent=11 // pred_fallthru
          _
      $region12: #{gpt_forward.3} parent=5 // pred_fallthru
        _
      %p177 = scmp.lt.s32.totalorder %s14, 2
      // Predicated region
      $region29: #{gpt_forward.3} parent=5 // pred_check
        %p178 = pneg %p177
      $region30: #{gpt_forward.3} parent=5 // pred_check_branch
        %180 = sbr.rel (%p178) target = $region32
      $region31: #{gpt_forward.3} parent=5 // pred_region
        // Predicated region
        $region33: #{gpt_forward.3} parent=31 // pred_check
          %p181 = pneg %p34
        $region34: #{gpt_forward.3} parent=31 // pred_check_branch
          %183 = sbr.rel (%p181) target = $region36
        $region35: #{gpt_forward.3} parent=31 // pred_region
          %s184 = smul.u32 8, %s14
          %p185 = scmp.lt.s32.totalorder %s184, 15
          %s186 = scalar_select %p185, %s184, 15
          %s187 = smul.addr %s186, 8
          %s188 = scalar_lea.vmem %s0, %s187
          %s189 = smul.u32 8, %s14
        $region36: #{gpt_forward.3} parent=31 // pred_fallthru
          _
      $region32: #{gpt_forward.3} parent=5 // pred_fallthru
        _
      %p190 = scmp.le.s32.totalorder 1, %s14
      %p191 = scmp.lt.s32.totalorder %s14, 3
      %p192 = pnand %p190, %p191
      %p193 = pneg %p192
      // Predicated region
      $region37: #{gpt_forward.3} parent=5 // pred_check
        _
      $region38: #{gpt_forward.3} parent=5 // pred_check_branch
        %195 = sbr.rel (%p192) target = $region40
      $region39: #{gpt_forward.3} parent=5 // pred_region
        %s196 = ssub.s32 %s14, 1
        %s197 = smul.u32 8, %s19
        %p198 = scmp.lt.s32.totalorder %s197, 15
        %s199 = scalar_select %p198, %s197, 15
        %s200 = smul.addr %s199, 8
        %s201 = scalar_lea.vmem %s0, %s200
        %p202 = pneg %p40
        %p203 = pneg %p37
        %p204 = pneg %p61
        %p205 = pneg %p58
        %p206 = pneg %p82
        %p207 = pneg %p79
        %p208 = pneg %p103
        %p209 = pneg %p100
        %p210 = pneg %p124
        %p211 = pneg %p121
        %p212 = pneg %p150
        %p213 = pneg %p147
        %s214 = sand.u32 %s137, 1
        %s215 = scalar_lea.sflag [#allocation3], %s214
        %s216 = sand.u32 %s137, 1
        %s217 = smul.addr %s216, 64
        %s218 = scalar_lea.vmem [#allocation2], %s217
        %s219 = smul.u32 8, %s19
        %p220 = scmp.lt.s32.totalorder %s219, 15
        %s221 = scalar_select %p220, %s219, 15
        %s222 = smul.addr %s221, 8
        %s223 = scalar_lea.vmem %s0, %s222
        %s224 = smul.u32 8, %s19
        %s225 = smul.u32 8, %s19
        %v227 = vld [vmem:[%s223] sm:$0xff]
        %v228 = vld [vmem:[%s223 + $0x8] sm:$0xff]
        %v229 = vld [vmem:[%s223 + $0x10] sm:$0xff]
        %v230 = vld [vmem:[%s223 + $0x18] sm:$0xff]
        %v231 = vld [vmem:[%s223 + $0x20] sm:$0xff]
        %v232 = vld [vmem:[%s223 + $0x28] sm:$0xff]
        %v233 = vld [vmem:[%s223 + $0x30] sm:$0xff]
        %v234 = vld [vmem:[%s223 + $0x38] sm:$0xff]
        %235 = vadd.xlane.f32.xlu0 %v227
        %v236 = vpop.xlane.xlu0 %235
        %237 = vadd.xlane.f32.xlu0 %v228
        %v238 = vpop.xlane.xlu0 %237
        %239 = vadd.xlane.f32.xlu0 %v229
        %v240 = vpop.xlane.xlu0 %239
        %241 = vadd.xlane.f32.xlu0 %v230
        %v242 = vpop.xlane.xlu0 %241
        %243 = vadd.xlane.f32.xlu0 %v231
        %v244 = vpop.xlane.xlu0 %243
        %245 = vadd.xlane.f32.xlu0 %v232
        %v246 = vpop.xlane.xlu0 %245
        %247 = vadd.xlane.f32.xlu0 %v233
        %v248 = vpop.xlane.xlu0 %247
        %249 = vadd.xlane.f32.xlu0 %v234
        %v250 = vpop.xlane.xlu0 %249
        %v251 = vrcp.pop 128.0
        %v252 = vmul.f32 %v236, %v251
        %v253 = vmul.f32 %v238, %v251
        %v254 = vmul.f32 %v240, %v251
        %v255 = vmul.f32 %v242, %v251
        %v256 = vmul.f32 %v244, %v251
        %v257 = vmul.f32 %v246, %v251
        %v258 = vmul.f32 %v248, %v251
        %v259 = vmul.f32 %v250, %v251
        %v260 = vsub.f32 %v227, %v252
        %v261 = vsub.f32 %v228, %v253
        %v262 = vsub.f32 %v229, %v254
        %v263 = vsub.f32 %v230, %v255
        %v264 = vsub.f32 %v231, %v256
        %v265 = vsub.f32 %v232, %v257
        %v266 = vsub.f32 %v233, %v258
        %v267 = vsub.f32 %v234, %v259
        %v268 = vmul.f32 %v260, %v260
        %v269 = vmul.f32 %v261, %v261
        %v270 = vmul.f32 %v262, %v262
        %v271 = vmul.f32 %v263, %v263
        %v272 = vmul.f32 %v264, %v264
        %v273 = vmul.f32 %v265, %v265
        %v274 = vmul.f32 %v266, %v266
        %v275 = vmul.f32 %v267, %v267
        %276 = vadd.xlane.f32.xlu0 %v268
        %v277 = vpop.xlane.xlu0 %276
        %278 = vadd.xlane.f32.xlu0 %v269
        %v279 = vpop.xlane.xlu0 %278
        %280 = vadd.xlane.f32.xlu0 %v270
        %v281 = vpop.xlane.xlu0 %280
        %282 = vadd.xlane.f32.xlu0 %v271
        %v283 = vpop.xlane.xlu0 %282
        %284 = vadd.xlane.f32.xlu0 %v272
        %v285 = vpop.xlane.xlu0 %284
        %286 = vadd.xlane.f32.xlu0 %v273
        %v287 = vpop.xlane.xlu0 %286
        %288 = vadd.xlane.f32.xlu0 %v274
        %v289 = vpop.xlane.xlu0 %288
        %290 = vadd.xlane.f32.xlu0 %v275
        %v291 = vpop.xlane.xlu0 %290
        %v292 = vmul.f32 %v277, %v251
        %v293 = vmul.f32 %v279, %v251
        %v294 = vmul.f32 %v281, %v251
        %v295 = vmul.f32 %v283, %v251
        %v296 = vmul.f32 %v285, %v251
        %v297 = vmul.f32 %v287, %v251
        %v298 = vmul.f32 %v289, %v251
        %v299 = vmul.f32 %v291, %v251
        %v300 = vadd.f32 %v292, 1e-05
        %v301 = vadd.f32 %v293, 1e-05
        %v302 = vadd.f32 %v294, 1e-05
        %v303 = vadd.f32 %v295, 1e-05
        %v304 = vadd.f32 %v296, 1e-05
        %v305 = vadd.f32 %v297, 1e-05
        %v306 = vadd.f32 %v298, 1e-05
        %v307 = vadd.f32 %v299, 1e-05
        %v308 = vrsqrt.pop %v300
        %v309 = vrsqrt.pop %v301
        %v310 = vrsqrt.pop %v302
        %v311 = vrsqrt.pop %v303
        %v312 = vrsqrt.pop %v304
        %v313 = vrsqrt.pop %v305
        %v314 = vrsqrt.pop %v306
        %v315 = vrsqrt.pop %v307
        %v316 = vmul.f32 %v260, %v308
        %v317 = vmul.f32 %v261, %v309
        %v318 = vmul.f32 %v262, %v310
        %v319 = vmul.f32 %v263, %v311
        %v320 = vmul.f32 %v264, %v312
        %v321 = vmul.f32 %v265, %v313
        %v322 = vmul.f32 %v266, %v314
        %v323 = vmul.f32 %v267, %v315
        %v324 = vld [vmem:[%s1] sm:$0x1]
        %v326 = vlaneseq
        %v327 = vshrl.u32 %v326, 7
        %v328 = vsub.s32 0, %v327
        %v329 = vrot.slane %v324, %v328
        %v331 = vmul.f32 %v316, %v329
        %v332 = vmul.f32 %v317, %v329
        %v333 = vmul.f32 %v318, %v329
        %v334 = vmul.f32 %v319, %v329
        %v335 = vmul.f32 %v320, %v329
        %v336 = vmul.f32 %v321, %v329
        %v337 = vmul.f32 %v322, %v329
        %v338 = vmul.f32 %v323, %v329
        %v339 = vld [vmem:[%s2] sm:$0x1]
        %v341 = vlaneseq
        %v342 = vshrl.u32 %v341, 7
        %v343 = vsub.s32 0, %v342
        %v344 = vrot.slane %v339, %v343
        %v346 = vadd.f32 %v331, %v344
        %v347 = vadd.f32 %v332, %v344
        %v348 = vadd.f32 %v333, %v344
        %v349 = vadd.f32 %v334, %v344
        %v350 = vadd.f32 %v335, %v344
        %v351 = vadd.f32 %v336, %v344
        %v352 = vadd.f32 %v337, %v344
        %v353 = vadd.f32 %v338, %v344
        %v354 = vpack.c.bf16 %v347, %v346
        %v355 = vpack.c.bf16 %v349, %v348
        %v356 = vpack.c.bf16 %v351, %v350
        %v357 = vpack.c.bf16 %v353, %v352
        %v358 = vld [vmem:[%s3] sm:$0xf]
        %v359 = vld [vmem:[%s3 + $0x4] sm:$0xf]
        %v360 = vld [vmem:[%s3 + $0x8] sm:$0xf]
        %v361 = vld [vmem:[%s3 + $0xc] sm:$0xf]
        %v362 = vld [vmem:[%s3 + $0x10] sm:$0xf]
        %v363 = vld [vmem:[%s3 + $0x14] sm:$0xf]
        %v364 = vld [vmem:[%s3 + $0x18] sm:$0xf]
        %v365 = vld [vmem:[%s3 + $0x1c] sm:$0xf]
        %v366 = vld [vmem:[%s3 + $0x20] sm:$0xf]
        %v367 = vld [vmem:[%s3 + $0x24] sm:$0xf]
        %v368 = vld [vmem:[%s3 + $0x28] sm:$0xf]
        %v369 = vld [vmem:[%s3 + $0x2c] sm:$0xf]
        %v370 = vld [vmem:[%s3 + $0x30] sm:$0xf]
        %v371 = vld [vmem:[%s3 + $0x34] sm:$0xf]
        %v372 = vld [vmem:[%s3 + $0x38] sm:$0xf]
        %v373 = vld [vmem:[%s3 + $0x3c] sm:$0xf]
        %v374 = vld [vmem:[%s4] sm:$0x1]
        %v376 = vlaneseq
        %v377 = vshrl.u32 %v376, 7
        %v378 = vsub.s32 0, %v377
        %v379 = vrot.slane %v374, %v378
        %v397 = vunpack.c.l.b16 %v358
        %v398 = vunpack.c.l.b16 %v359
        %v399 = vunpack.c.l.b16 %v360
        %v400 = vunpack.c.l.b16 %v361
        %v401 = vunpack.c.l.b16 %v362
        %v402 = vunpack.c.l.b16 %v363
        %v403 = vunpack.c.l.b16 %v364
        %v404 = vunpack.c.l.b16 %v365
        %v405 = vunpack.c.l.b16 %v366
        %v406 = vunpack.c.l.b16 %v367
        %v407 = vunpack.c.l.b16 %v368
        %v408 = vunpack.c.l.b16 %v369
        %v409 = vunpack.c.l.b16 %v370
        %v410 = vunpack.c.l.b16 %v371
        %v411 = vunpack.c.l.b16 %v372
        %v412 = vunpack.c.l.b16 %v373
        %v413 = vpack.c.b16 %v398, %v397
        %v414 = vpack.c.b16 %v400, %v399
        %v415 = vpack.c.b16 %v402, %v401
        %v416 = vpack.c.b16 %v404, %v403
        %v417 = vpack.c.b16 %v406, %v405
        %v418 = vpack.c.b16 %v408, %v407
        %v419 = vpack.c.b16 %v410, %v409
        %v420 = vpack.c.b16 %v412, %v411
        %429 = vmatprep.subr.bf16.mxu0 0
        %430 = vmatpush1.bf16.msra.mxu0 %v420
        %431 = vmatprep.subr.bf16.mxu0 0
        %432 = vmatpush1.bf16.msra.mxu0 %v419
        %433 = vmatprep.subr.bf16.mxu0 0
        %434 = vmatpush1.bf16.msra.mxu0 %v418
        %435 = vmatprep.subr.bf16.mxu0 0
        %436 = vmatpush1.bf16.msra.mxu0 %v417
        %437 = vmatprep.subr.bf16.mxu0 0
        %438 = vmatpush1.bf16.msra.mxu0 %v416
        %439 = vmatprep.subr.bf16.mxu0 0
        %440 = vmatpush1.bf16.msra.mxu0 %v415
        %441 = vmatprep.subr.bf16.mxu0 0
        %442 = vmatpush1.bf16.msra.mxu0 %v414
        %443 = vmatprep.subr.bf16.mxu0 0
        %444 = vmatpush1.bf16.msra.mxu0 %v413
        %445 = vmatprep.subr.bf16.mxu0 0
        %446 = vmatpush2.bf16.msra.mxu0 0
        %447 = vmatprep.subr.bf16.mxu0 0
        %448 = vmatpush2.bf16.msra.mxu0 0
        %449 = vmatprep.subr.bf16.mxu0 0
        %450 = vmatpush2.bf16.msra.mxu0 0
        %451 = vmatprep.subr.bf16.mxu0 0
        %452 = vmatpush2.bf16.msra.mxu0 0
        %453 = vmatprep.subr.bf16.mxu0 0
        %454 = vmatpush2.bf16.msra.mxu0 0
        %455 = vmatprep.subr.bf16.mxu0 0
        %456 = vmatpush2.bf16.msra.mxu0 0
        %457 = vmatprep.subr.bf16.mxu0 0
        %458 = vmatpush2.bf16.msra.mxu0 0
        %459 = vmatprep.subr.bf16.mxu0 0
        %460 = vmatpush2.bf16.msra.mxu0 0
        %461 = vmatprep.mubr.bf16.mxu0 0
        %462 = vmatmul.mubr.bf16.gmra.mxu0 %v354
        %v463 = vpop.f32.mrf.mxu0
        %v464 = vadd.f32 %v379, %v463
        %v465 = vpop.f32.mrf.mxu0
        %v466 = vpop.f32.mrf.mxu0
        %v467 = vadd.f32 %v379, %v466
        %v468 = vpop.f32.mrf.mxu0
        %469 = vmatprep.mubr.bf16.mxu0 0
        %470 = vmatmul.mubr.bf16.gmra.mxu0 %v355
        %v471 = vpop.f32.mrf.mxu0
        %v472 = vadd.f32 %v379, %v471
        %v473 = vpop.f32.mrf.mxu0
        %v474 = vpop.f32.mrf.mxu0
        %v475 = vadd.f32 %v379, %v474
        %v476 = vpop.f32.mrf.mxu0
        %477 = vmatprep.mubr.bf16.mxu0 0
        %478 = vmatmul.mubr.bf16.gmra.mxu0 %v356
        %v479 = vpop.f32.mrf.mxu0
        %v480 = vadd.f32 %v379, %v479
        %v481 = vpop.f32.mrf.mxu0
        %v482 = vpop.f32.mrf.mxu0
        %v483 = vadd.f32 %v379, %v482
        %v484 = vpop.f32.mrf.mxu0
        %485 = vmatprep.mubr.bf16.mxu0 0
        %486 = vmatmul.mubr.bf16.gmra.mxu0 %v357
        %v487 = vpop.f32.mrf.mxu0
        %v488 = vadd.f32 %v379, %v487
        %v489 = vpop.f32.mrf.mxu0
        %v490 = vpop.f32.mrf.mxu0
        %v491 = vadd.f32 %v379, %v490
        %v492 = vpop.f32.mrf.mxu0
        %493 = vdwg.mxu0
        %494 = vst [vmem:[%s218] sm:$0xff] %v464
        %495 = vst [vmem:[%s218 + $0x8] sm:$0xff] %v467
        %496 = vst [vmem:[%s218 + $0x10] sm:$0xff] %v472
        %497 = vst [vmem:[%s218 + $0x18] sm:$0xff] %v475
        %498 = vst [vmem:[%s218 + $0x20] sm:$0xff] %v480
        %499 = vst [vmem:[%s218 + $0x28] sm:$0xff] %v483
        %500 = vst [vmem:[%s218 + $0x30] sm:$0xff] %v488
        %501 = vst [vmem:[%s218 + $0x38] sm:$0xff] %v491
        %s502 = sand.u32 %s137, 1
        %s503 = scalar_lea.sflag [#allocation3], %s502
        %s504 = sand.u32 %s137, 1
        %s505 = smul.addr %s504, 64
        %s506 = scalar_lea.vmem [#allocation2], %s505
        // Predicated region
        $region41: #{gpt_forward.3} parent=39 // pred_check
          %p507 = pneg %p147
        $region42: #{gpt_forward.3} parent=39 // pred_check_branch
          %509 = sbr.rel (%p507) target = $region44
        $region43: #{gpt_forward.3} parent=39 // pred_region
          %s510 = smul.u32 8, %s19
          %s512 = ssub.s32 1024, 1024
          %513 = vsyncadd %s503, %s512
          %s514 = smul.addr %s510, 128
          %s515 = scalar_lea.hbm %s5, %s514
          %s516 = sshll.u32 %s506, 4
          %s517 = int_to_ptr.vmem [resolvable:$true] %s516
          %522 = dma.vmem_to_hbm [thread:$0]  %s517, 1024, %s515, %s503, 128, 128, 8
        $region44: #{gpt_forward.3} parent=39 // pred_fallthru
          _
      $region40: #{gpt_forward.3} parent=5 // pred_fallthru
        _
      %p523 = scmp.le.s32.totalorder 2, %s14
      // Predicated region
      $region45: #{gpt_forward.3} parent=5 // pred_check
        %p524 = pneg %p523
      $region46: #{gpt_forward.3} parent=5 // pred_check_branch
        %526 = sbr.rel (%p524) target = $region48
      $region47: #{gpt_forward.3} parent=5 // pred_region
        %s527 = ssub.s32 %s14, 2
        // Predicated region
        $region49: #{gpt_forward.3} parent=47 // pred_check
          %p528 = pneg %p153
        $region50: #{gpt_forward.3} parent=47 // pred_check_branch
          %530 = sbr.rel (%p528) target = $region52
        $region51: #{gpt_forward.3} parent=47 // pred_region
          %s531 = sand.u32 %s138, 1
          %s532 = scalar_lea.sflag [#allocation3], %s531
          %s533 = sand.u32 %s138, 1
          %s534 = smul.addr %s533, 64
          %s535 = scalar_lea.vmem [#allocation2], %s534
          %536 = dma.done %s532, 1024
        $region52: #{gpt_forward.3} parent=47 // pred_fallthru
          _
      $region48: #{gpt_forward.3} parent=5 // pred_fallthru
        _
    $region6: #{gpt_forward.3} parent=1 // loop_footer
      %s18 = sadd.s32 1, %s14
    $region7: #{gpt_forward.3} parent=1 // loop_footer_branch
      %13 = sbr.rel target = $region3
    $region8: #{gpt_forward.3} parent=1 // loop_exit
      _
    %537 = vsyncpa [#allocation3], 1
    %s538 = scalar_lea.sflag [#allocation3], 1
    %539 = vsyncpa %s538, 1

// kernel: gpt_forward.2
$region0: #{gpt_forward.2}
  #allocation0 [shape = 'u32[]', space=smem, size = 0x4, offset = 0x4, fixed_abs, tag = 'smem constant byte address 0x4 - core index']
  #allocation1 [shape = 'u32[144,128]{1,0:T(1,128)}', space=vmem, size = 0x12000, scoped, tag = 'internal scratch']
  #allocation2 [shape = 'f32[64,128]{1,0:T(8,128)}', space=vmem, size = 0x8000, scoped, tag = 'scratch operand']
  %s0 = inlined_call_operand.vmem [shape: f32[2,64,128], index: 0, kind: input, shape index: {}]
  %s1 = inlined_call_operand.vmem [shape: f32[2,1,128], index: 1, kind: input, shape index: {}]
  %s2 = inlined_call_operand.vmem [shape: f32[2,1,128], index: 2, kind: input, shape index: {}]
  %s3 = inlined_call_operand.vmem [shape: bf16[2,128,384], index: 3, kind: input, shape index: {}]
  %s4 = inlined_call_operand.vmem [shape: bf16[2,128,128], index: 4, kind: input, shape index: {}]
  %s5 = inlined_call_operand.vmem [shape: f32[2,1,128], index: 5, kind: input, shape index: {}]
  %s6 = inlined_call_operand.vmem [shape: f32[2,1,128], index: 6, kind: input, shape index: {}]
  %s7 = inlined_call_operand.vmem [shape: f32[2,1,128], index: 7, kind: input, shape index: {}]
  %s8 = inlined_call_operand.vmem [shape: bf16[2,128,512], index: 8, kind: input, shape index: {}]
  %s9 = inlined_call_operand.vmem [shape: f32[2,1,512], index: 9, kind: input, shape index: {}]
  %s10 = inlined_call_operand.vmem [shape: bf16[2,512,128], index: 10, kind: input, shape index: {}]
  %s11 = inlined_call_operand.vmem [shape: f32[2,1,128], index: 11, kind: input, shape index: {}]
  %s12 = inlined_call_operand.vmem [shape: f32[2,64,128], index: 12, kind: output, shape index: {}]
  %s13 = sld [smem:[#allocation0]]
  $region89: #{gpt_forward.2} parent=0
    _
  %s15 = ssub.s32 1, %s13
  %s16 = scalar_select 0, %s15, %s13
  loop: start=0, step=1, limit=6
  $region2: #{gpt_forward.2} parent=0 // loop_pre_header
    _
  $region3: #{gpt_forward.2} parent=0 // loop_header
    %s18 = sphi 0, %s22
    %p19 = scmp.ge.s32.totalorder %s18, 6
    %s25 = sphi 0, %s37
    %s26 = sphi 0, %s33
    %s27 = sphi 0, %s25
    %s28 = sphi 0, %s26
    %s29 = sphi 0, %s27
    %s30 = sphi 0, %s28
    %s40 = sphi 0, %s42
    %s43 = sphi 0, %s40
    %s44 = sphi 0, %s43
    %s60 = sphi 0, %s44
    %s66 = sphi 0, %s68
    %s69 = sphi 0, %s66
    %s70 = sphi 0, %s69
    %s86 = sphi 0, %s70
    %s92 = sphi 0, %s94
    %s95 = sphi 0, %s92
    %s96 = sphi 0, %s95
    %s112 = sphi 0, %s96
    %s118 = sphi 0, %s120
    %s121 = sphi 0, %s118
    %s122 = sphi 0, %s121
    %s138 = sphi 0, %s122
    %s144 = sphi 0, %s146
    %s147 = sphi 0, %s144
    %s148 = sphi 0, %s147
    %s164 = sphi 0, %s148
    %s170 = sphi 0, %s172
    %s173 = sphi 0, %s170
    %s174 = sphi 0, %s173
    %s190 = sphi 0, %s174
    %s196 = sphi 0, %s198
    %s199 = sphi 0, %s196
    %s200 = sphi 0, %s199
    %s216 = sphi 0, %s200
    %s222 = sphi 0, %s224
    %s225 = sphi 0, %s222
    %s226 = sphi 0, %s225
    %s242 = sphi 0, %s226
    %s248 = sphi 0, %s250
    %s251 = sphi 0, %s248
    %s252 = sphi 0, %s251
    %s268 = sphi 0, %s252
    %s274 = sphi 0, %s276
    %s277 = sphi 0, %s274
    %s278 = sphi 0, %s277
    %s294 = sphi 0, %s278
    %s300 = sphi 0, %s302
    %s303 = sphi 0, %s300
    %s304 = sphi 0, %s303
    %s320 = sphi 0, %s304
    %s326 = sphi 0, %s328
    %s329 = sphi 0, %s326
    %s330 = sphi 0, %s329
    %s346 = sphi 0, %s330
    %s352 = sphi 0, %s354
    %s355 = sphi 0, %s352
    %s356 = sphi 0, %s355
    %s372 = sphi 0, %s356
  $region4: #{gpt_forward.2} parent=0 // loop_header_branch
    %21 = sbr.rel (%p19) target = $region8
  $region5: #{gpt_forward.2} parent=0 // loop_body
    %s23 = ssub.s32 %s18, 1
    %s24 = ssub.s32 %s18, 2
    %s31 = sadd.s32 1, %s26
    %p32 = scmp.ge.s32.totalorder %s31, 2
    %s33 = scalar_select %p32, 0, %s31
    %s34 = sadd.s32 1, %s25
    %s35 = scalar_select %p32, %s34, %s25
    %p36 = scmp.ge.s32.totalorder %s35, 2
    %s37 = scalar_select %p36, 0, %s35
    %s38 = ssub.s32 %s25, %s37
    %p39 = scmp.eq.s32.totalorder %s38, 0
    %s41 = sadd.s32 %s40, 1
    %s42 = scalar_select %p39, %s40, %s41
    %p45 = pneg %p39
    %p46 = scmp.eq.s32.totalorder %s18, 3
    %p47 = por %p45, %p46
    %p48 = scmp.ne.s32.totalorder %s40, %s43
    %p49 = scmp.eq.s32.totalorder %s18, 0
    %p50 = por %p48, %p49
    %p51 = scmp.ne.s32.totalorder %s40, %s43
    %p52 = scmp.eq.s32.totalorder %s23, 3
    %p53 = por %p51, %p52
    %p54 = scmp.ne.s32.totalorder %s43, %s44
    %p55 = scmp.eq.s32.totalorder %s23, 0
    %p56 = por %p54, %p55
    %p57 = scmp.ne.s32.totalorder %s43, %s44
    %p58 = scmp.eq.s32.totalorder %s24, 3
    %p59 = por %p57, %p58
    %p61 = scmp.ne.s32.totalorder %s44, %s60
    %p62 = scmp.eq.s32.totalorder %s24, 0
    %p63 = por %p61, %p62
    %s64 = ssub.s32 %s26, %s33
    %p65 = scmp.eq.s32.totalorder %s64, 0
    %s67 = sadd.s32 %s66, 1
    %s68 = scalar_select %p65, %s66, %s67
    %p71 = pneg %p65
    %p72 = scmp.eq.s32.totalorder %s18, 3
    %p73 = por %p71, %p72
    %p74 = scmp.ne.s32.totalorder %s66, %s69
    %p75 = scmp.eq.s32.totalorder %s18, 0
    %p76 = por %p74, %p75
    %p77 = scmp.ne.s32.totalorder %s66, %s69
    %p78 = scmp.eq.s32.totalorder %s23, 3
    %p79 = por %p77, %p78
    %p80 = scmp.ne.s32.totalorder %s69, %s70
    %p81 = scmp.eq.s32.totalorder %s23, 0
    %p82 = por %p80, %p81
    %p83 = scmp.ne.s32.totalorder %s69, %s70
    %p84 = scmp.eq.s32.totalorder %s24, 3
    %p85 = por %p83, %p84
    %p87 = scmp.ne.s32.totalorder %s70, %s86
    %p88 = scmp.eq.s32.totalorder %s24, 0
    %p89 = por %p87, %p88
    %s90 = ssub.s32 %s26, %s33
    %p91 = scmp.eq.s32.totalorder %s90, 0
    %s93 = sadd.s32 %s92, 1
    %s94 = scalar_select %p91, %s92, %s93
    %p97 = pneg %p91
    %p98 = scmp.eq.s32.totalorder %s18, 3
    %p99 = por %p97, %p98
    %p100 = scmp.ne.s32.totalorder %s92, %s95
    %p101 = scmp.eq.s32.totalorder %s18, 0
    %p102 = por %p100, %p101
    %p103 = scmp.ne.s32.totalorder %s92, %s95
    %p104 = scmp.eq.s32.totalorder %s23, 3
    %p105 = por %p103, %p104
    %p106 = scmp.ne.s32.totalorder %s95, %s96
    %p107 = scmp.eq.s32.totalorder %s23, 0
    %p108 = por %p106, %p107
    %p109 = scmp.ne.s32.totalorder %s95, %s96
    %p110 = scmp.eq.s32.totalorder %s24, 3
    %p111 = por %p109, %p110
    %p113 = scmp.ne.s32.totalorder %s96, %s112
    %p114 = scmp.eq.s32.totalorder %s24, 0
    %p115 = por %p113, %p114
    %s116 = ssub.s32 %s26, %s33
    %p117 = scmp.eq.s32.totalorder %s116, 0
    %s119 = sadd.s32 %s118, 1
    %s120 = scalar_select %p117, %s118, %s119
    %p123 = pneg %p117
    %p124 = scmp.eq.s32.totalorder %s18, 3
    %p125 = por %p123, %p124
    %p126 = scmp.ne.s32.totalorder %s118, %s121
    %p127 = scmp.eq.s32.totalorder %s18, 0
    %p128 = por %p126, %p127
    %p129 = scmp.ne.s32.totalorder %s118, %s121
    %p130 = scmp.eq.s32.totalorder %s23, 3
    %p131 = por %p129, %p130
    %p132 = scmp.ne.s32.totalorder %s121, %s122
    %p133 = scmp.eq.s32.totalorder %s23, 0
    %p134 = por %p132, %p133
    %p135 = scmp.ne.s32.totalorder %s121, %s122
    %p136 = scmp.eq.s32.totalorder %s24, 3
    %p137 = por %p135, %p136
    %p139 = scmp.ne.s32.totalorder %s122, %s138
    %p140 = scmp.eq.s32.totalorder %s24, 0
    %p141 = por %p139, %p140
    %s142 = ssub.s32 %s26, %s33
    %p143 = scmp.eq.s32.totalorder %s142, 0
    %s145 = sadd.s32 %s144, 1
    %s146 = scalar_select %p143, %s144, %s145
    %p149 = pneg %p143
    %p150 = scmp.eq.s32.totalorder %s18, 3
    %p151 = por %p149, %p150
    %p152 = scmp.ne.s32.totalorder %s144, %s147
    %p153 = scmp.eq.s32.totalorder %s18, 0
    %p154 = por %p152, %p153
    %p155 = scmp.ne.s32.totalorder %s144, %s147
    %p156 = scmp.eq.s32.totalorder %s23, 3
    %p157 = por %p155, %p156
    %p158 = scmp.ne.s32.totalorder %s147, %s148
    %p159 = scmp.eq.s32.totalorder %s23, 0
    %p160 = por %p158, %p159
    %p161 = scmp.ne.s32.totalorder %s147, %s148
    %p162 = scmp.eq.s32.totalorder %s24, 3
    %p163 = por %p161, %p162
    %p165 = scmp.ne.s32.totalorder %s148, %s164
    %p166 = scmp.eq.s32.totalorder %s24, 0
    %p167 = por %p165, %p166
    %s168 = ssub.s32 %s26, %s33
    %p169 = scmp.eq.s32.totalorder %s168, 0
    %s171 = sadd.s32 %s170, 1
    %s172 = scalar_select %p169, %s170, %s171
    %p175 = pneg %p169
    %p176 = scmp.eq.s32.totalorder %s18, 3
    %p177 = por %p175, %p176
    %p178 = scmp.ne.s32.totalorder %s170, %s173
    %p179 = scmp.eq.s32.totalorder %s18, 0
    %p180 = por %p178, %p179
    %p181 = scmp.ne.s32.totalorder %s170, %s173
    %p182 = scmp.eq.s32.totalorder %s23, 3
    %p183 = por %p181, %p182
    %p184 = scmp.ne.s32.totalorder %s173, %s174
    %p185 = scmp.eq.s32.totalorder %s23, 0
    %p186 = por %p184, %p185
    %p187 = scmp.ne.s32.totalorder %s173, %s174
    %p188 = scmp.eq.s32.totalorder %s24, 3
    %p189 = por %p187, %p188
    %p191 = scmp.ne.s32.totalorder %s174, %s190
    %p192 = scmp.eq.s32.totalorder %s24, 0
    %p193 = por %p191, %p192
    %s194 = ssub.s32 %s26, %s33
    %p195 = scmp.eq.s32.totalorder %s194, 0
    %s197 = sadd.s32 %s196, 1
    %s198 = scalar_select %p195, %s196, %s197
    %p201 = pneg %p195
    %p202 = scmp.eq.s32.totalorder %s18, 3
    %p203 = por %p201, %p202
    %p204 = scmp.ne.s32.totalorder %s196, %s199
    %p205 = scmp.eq.s32.totalorder %s18, 0
    %p206 = por %p204, %p205
    %p207 = scmp.ne.s32.totalorder %s196, %s199
    %p208 = scmp.eq.s32.totalorder %s23, 3
    %p209 = por %p207, %p208
    %p210 = scmp.ne.s32.totalorder %s199, %s200
    %p211 = scmp.eq.s32.totalorder %s23, 0
    %p212 = por %p210, %p211
    %p213 = scmp.ne.s32.totalorder %s199, %s200
    %p214 = scmp.eq.s32.totalorder %s24, 3
    %p215 = por %p213, %p214
    %p217 = scmp.ne.s32.totalorder %s200, %s216
    %p218 = scmp.eq.s32.totalorder %s24, 0
    %p219 = por %p217, %p218
    %s220 = ssub.s32 %s26, %s33
    %p221 = scmp.eq.s32.totalorder %s220, 0
    %s223 = sadd.s32 %s222, 1
    %s224 = scalar_select %p221, %s222, %s223
    %p227 = pneg %p221
    %p228 = scmp.eq.s32.totalorder %s18, 3
    %p229 = por %p227, %p228
    %p230 = scmp.ne.s32.totalorder %s222, %s225
    %p231 = scmp.eq.s32.totalorder %s18, 0
    %p232 = por %p230, %p231
    %p233 = scmp.ne.s32.totalorder %s222, %s225
    %p234 = scmp.eq.s32.totalorder %s23, 3
    %p235 = por %p233, %p234
    %p236 = scmp.ne.s32.totalorder %s225, %s226
    %p237 = scmp.eq.s32.totalorder %s23, 0
    %p238 = por %p236, %p237
    %p239 = scmp.ne.s32.totalorder %s225, %s226
    %p240 = scmp.eq.s32.totalorder %s24, 3
    %p241 = por %p239, %p240
    %p243 = scmp.ne.s32.totalorder %s226, %s242
    %p244 = scmp.eq.s32.totalorder %s24, 0
    %p245 = por %p243, %p244
    %s246 = ssub.s32 %s26, %s33
    %p247 = scmp.eq.s32.totalorder %s246, 0
    %s249 = sadd.s32 %s248, 1
    %s250 = scalar_select %p247, %s248, %s249
    %p253 = pneg %p247
    %p254 = scmp.eq.s32.totalorder %s18, 3
    %p255 = por %p253, %p254
    %p256 = scmp.ne.s32.totalorder %s248, %s251
    %p257 = scmp.eq.s32.totalorder %s18, 0
    %p258 = por %p256, %p257
    %p259 = scmp.ne.s32.totalorder %s248, %s251
    %p260 = scmp.eq.s32.totalorder %s23, 3
    %p261 = por %p259, %p260
    %p262 = scmp.ne.s32.totalorder %s251, %s252
    %p263 = scmp.eq.s32.totalorder %s23, 0
    %p264 = por %p262, %p263
    %p265 = scmp.ne.s32.totalorder %s251, %s252
    %p266 = scmp.eq.s32.totalorder %s24, 3
    %p267 = por %p265, %p266
    %p269 = scmp.ne.s32.totalorder %s252, %s268
    %p270 = scmp.eq.s32.totalorder %s24, 0
    %p271 = por %p269, %p270
    %s272 = ssub.s32 %s26, %s33
    %p273 = scmp.eq.s32.totalorder %s272, 0
    %s275 = sadd.s32 %s274, 1
    %s276 = scalar_select %p273, %s274, %s275
    %p279 = pneg %p273
    %p280 = scmp.eq.s32.totalorder %s18, 3
    %p281 = por %p279, %p280
    %p282 = scmp.ne.s32.totalorder %s274, %s277
    %p283 = scmp.eq.s32.totalorder %s18, 0
    %p284 = por %p282, %p283
    %p285 = scmp.ne.s32.totalorder %s274, %s277
    %p286 = scmp.eq.s32.totalorder %s23, 3
    %p287 = por %p285, %p286
    %p288 = scmp.ne.s32.totalorder %s277, %s278
    %p289 = scmp.eq.s32.totalorder %s23, 0
    %p290 = por %p288, %p289
    %p291 = scmp.ne.s32.totalorder %s277, %s278
    %p292 = scmp.eq.s32.totalorder %s24, 3
    %p293 = por %p291, %p292
    %p295 = scmp.ne.s32.totalorder %s278, %s294
    %p296 = scmp.eq.s32.totalorder %s24, 0
    %p297 = por %p295, %p296
    %s298 = ssub.s32 %s26, %s33
    %p299 = scmp.eq.s32.totalorder %s298, 0
    %s301 = sadd.s32 %s300, 1
    %s302 = scalar_select %p299, %s300, %s301
    %p305 = pneg %p299
    %p306 = scmp.eq.s32.totalorder %s18, 3
    %p307 = por %p305, %p306
    %p308 = scmp.ne.s32.totalorder %s300, %s303
    %p309 = scmp.eq.s32.totalorder %s18, 0
    %p310 = por %p308, %p309
    %p311 = scmp.ne.s32.totalorder %s300, %s303
    %p312 = scmp.eq.s32.totalorder %s23, 3
    %p313 = por %p311, %p312
    %p314 = scmp.ne.s32.totalorder %s303, %s304
    %p315 = scmp.eq.s32.totalorder %s23, 0
    %p316 = por %p314, %p315
    %p317 = scmp.ne.s32.totalorder %s303, %s304
    %p318 = scmp.eq.s32.totalorder %s24, 3
    %p319 = por %p317, %p318
    %p321 = scmp.ne.s32.totalorder %s304, %s320
    %p322 = scmp.eq.s32.totalorder %s24, 0
    %p323 = por %p321, %p322
    %s324 = ssub.s32 %s26, %s33
    %p325 = scmp.eq.s32.totalorder %s324, 0
    %s327 = sadd.s32 %s326, 1
    %s328 = scalar_select %p325, %s326, %s327
    %p331 = pneg %p325
    %p332 = scmp.eq.s32.totalorder %s18, 3
    %p333 = por %p331, %p332
    %p334 = scmp.ne.s32.totalorder %s326, %s329
    %p335 = scmp.eq.s32.totalorder %s18, 0
    %p336 = por %p334, %p335
    %p337 = scmp.ne.s32.totalorder %s326, %s329
    %p338 = scmp.eq.s32.totalorder %s23, 3
    %p339 = por %p337, %p338
    %p340 = scmp.ne.s32.totalorder %s329, %s330
    %p341 = scmp.eq.s32.totalorder %s23, 0
    %p342 = por %p340, %p341
    %p343 = scmp.ne.s32.totalorder %s329, %s330
    %p344 = scmp.eq.s32.totalorder %s24, 3
    %p345 = por %p343, %p344
    %p347 = scmp.ne.s32.totalorder %s330, %s346
    %p348 = scmp.eq.s32.totalorder %s24, 0
    %p349 = por %p347, %p348
    %s350 = ssub.s32 %s25, %s37
    %p351 = scmp.eq.s32.totalorder %s350, 0
    %s353 = sadd.s32 %s352, 1
    %s354 = scalar_select %p351, %s352, %s353
    %p357 = pneg %p351
    %p358 = scmp.eq.s32.totalorder %s18, 3
    %p359 = por %p357, %p358
    %p360 = scmp.ne.s32.totalorder %s352, %s355
    %p361 = scmp.eq.s32.totalorder %s18, 0
    %p362 = por %p360, %p361
    %p363 = scmp.ne.s32.totalorder %s352, %s355
    %p364 = scmp.eq.s32.totalorder %s23, 3
    %p365 = por %p363, %p364
    %p366 = scmp.ne.s32.totalorder %s355, %s356
    %p367 = scmp.eq.s32.totalorder %s23, 0
    %p368 = por %p366, %p367
    %p369 = scmp.ne.s32.totalorder %s355, %s356
    %p370 = scmp.eq.s32.totalorder %s24, 3
    %p371 = por %p369, %p370
    %p373 = scmp.ne.s32.totalorder %s356, %s372
    %p374 = scmp.eq.s32.totalorder %s24, 0
    %p375 = por %p373, %p374
    %p376 = scmp.le.s32.totalorder 1, %s18
    %p377 = scmp.lt.s32.totalorder %s18, 5
    %p378 = pnand %p376, %p377
    %p379 = pneg %p378
    // Predicated region
    $region9: #{gpt_forward.2} parent=5 // pred_check
      _
    $region10: #{gpt_forward.2} parent=5 // pred_check_branch
      %381 = sbr.rel (%p378) target = $region12
    $region11: #{gpt_forward.2} parent=5 // pred_region
      %s382 = ssub.s32 %s18, 1
    $region12: #{gpt_forward.2} parent=5 // pred_fallthru
      _
    %p383 = scmp.lt.s32.totalorder %s18, 4
    // Predicated region
    $region13: #{gpt_forward.2} parent=5 // pred_check
      %p384 = pneg %p383
    $region14: #{gpt_forward.2} parent=5 // pred_check_branch
      %386 = sbr.rel (%p384) target = $region16
    $region15: #{gpt_forward.2} parent=5 // pred_region
      // Predicated region
      $region17: #{gpt_forward.2} parent=15 // pred_check
        %p387 = pneg %p50
      $region18: #{gpt_forward.2} parent=15 // pred_check_branch
        %389 = sbr.rel (%p387) target = $region20
      $region19: #{gpt_forward.2} parent=15 // pred_region
        %p390 = scmp.lt.s32.totalorder %s25, 1
        %s391 = scalar_select %p390, %s25, 1
        %s392 = smul.addr %s391, 8
        %s393 = smul.addr %s392, 8
        %s394 = scalar_lea.vmem %s0, %s393
      $region20: #{gpt_forward.2} parent=15 // pred_fallthru
        _
      // Predicated region
      $region21: #{gpt_forward.2} parent=15 // pred_check
        %p395 = pneg %p76
      $region22: #{gpt_forward.2} parent=15 // pred_check_branch
        %397 = sbr.rel (%p395) target = $region24
      $region23: #{gpt_forward.2} parent=15 // pred_region
        %p398 = scmp.lt.s32.totalorder %s26, 1
        %s399 = scalar_select %p398, %s26, 1
        %s400 = scalar_lea.vmem %s1, %s399
      $region24: #{gpt_forward.2} parent=15 // pred_fallthru
        _
      // Predicated region
      $region25: #{gpt_forward.2} parent=15 // pred_check
        %p401 = pneg %p102
      $region26: #{gpt_forward.2} parent=15 // pred_check_branch
        %403 = sbr.rel (%p401) target = $region28
      $region27: #{gpt_forward.2} parent=15 // pred_region
        %p404 = scmp.lt.s32.totalorder %s26, 1
        %s405 = scalar_select %p404, %s26, 1
        %s406 = scalar_lea.vmem %s2, %s405
      $region28: #{gpt_forward.2} parent=15 // pred_fallthru
        _
      // Predicated region
      $region29: #{gpt_forward.2} parent=15 // pred_check
        %p407 = pneg %p128
      $region30: #{gpt_forward.2} parent=15 // pred_check_branch
        %409 = sbr.rel (%p407) target = $region32
      $region31: #{gpt_forward.2} parent=15 // pred_region
        %p410 = scmp.lt.s32.totalorder %s26, 1
        %s411 = scalar_select %p410, %s26, 1
        %s412 = smul.addr %s411, 48
        %s413 = smul.addr %s412, 4
        %s414 = scalar_lea.vmem %s3, %s413
      $region32: #{gpt_forward.2} parent=15 // pred_fallthru
        _
      // Predicated region
      $region33: #{gpt_forward.2} parent=15 // pred_check
        %p415 = pneg %p154
      $region34: #{gpt_forward.2} parent=15 // pred_check_branch
        %417 = sbr.rel (%p415) target = $region36
      $region35: #{gpt_forward.2} parent=15 // pred_region
        %p418 = scmp.lt.s32.totalorder %s26, 1
        %s419 = scalar_select %p418, %s26, 1
        %s420 = smul.addr %s419, 16
        %s421 = smul.addr %s420, 4
        %s422 = scalar_lea.vmem %s4, %s421
      $region36: #{gpt_forward.2} parent=15 // pred_fallthru
        _
      // Predicated region
      $region37: #{gpt_forward.2} parent=15 // pred_check
        %p423 = pneg %p180
      $region38: #{gpt_forward.2} parent=15 // pred_check_branch
        %425 = sbr.rel (%p423) target = $region40
      $region39: #{gpt_forward.2} parent=15 // pred_region
        %p426 = scmp.lt.s32.totalorder %s26, 1
        %s427 = scalar_select %p426, %s26, 1
        %s428 = scalar_lea.vmem %s5, %s427
      $region40: #{gpt_forward.2} parent=15 // pred_fallthru
        _
      // Predicated region
      $region41: #{gpt_forward.2} parent=15 // pred_check
        %p429 = pneg %p206
      $region42: #{gpt_forward.2} parent=15 // pred_check_branch
        %431 = sbr.rel (%p429) target = $region44
      $region43: #{gpt_forward.2} parent=15 // pred_region
        %p432 = scmp.lt.s32.totalorder %s26, 1
        %s433 = scalar_select %p432, %s26, 1
        %s434 = scalar_lea.vmem %s6, %s433
      $region44: #{gpt_forward.2} parent=15 // pred_fallthru
        _
      // Predicated region
      $region45: #{gpt_forward.2} parent=15 // pred_check
        %p435 = pneg %p232
      $region46: #{gpt_forward.2} parent=15 // pred_check_branch
        %437 = sbr.rel (%p435) target = $region48
      $region47: #{gpt_forward.2} parent=15 // pred_region
        %p438 = scmp.lt.s32.totalorder %s26, 1
        %s439 = scalar_select %p438, %s26, 1
        %s440 = scalar_lea.vmem %s7, %s439
      $region48: #{gpt_forward.2} parent=15 // pred_fallthru
        _
      // Predicated region
      $region49: #{gpt_forward.2} parent=15 // pred_check
        %p441 = pneg %p258
      $region50: #{gpt_forward.2} parent=15 // pred_check_branch
        %443 = sbr.rel (%p441) target = $region52
      $region51: #{gpt_forward.2} parent=15 // pred_region
        %p444 = scmp.lt.s32.totalorder %s26, 1
        %s445 = scalar_select %p444, %s26, 1
        %s446 = smul.addr %s445, 64
        %s447 = smul.addr %s446, 4
        %s448 = scalar_lea.vmem %s8, %s447
      $region52: #{gpt_forward.2} parent=15 // pred_fallthru
        _
      // Predicated region
      $region53: #{gpt_forward.2} parent=15 // pred_check
        %p449 = pneg %p284
      $region54: #{gpt_forward.2} parent=15 // pred_check_branch
        %451 = sbr.rel (%p449) target = $region56
      $region55: #{gpt_forward.2} parent=15 // pred_region
        %p452 = scmp.lt.s32.totalorder %s26, 1
        %s453 = scalar_select %p452, %s26, 1
        %s454 = smul.addr %s453, 4
        %s455 = scalar_lea.vmem %s9, %s454
      $region56: #{gpt_forward.2} parent=15 // pred_fallthru
        _
      // Predicated region
      $region57: #{gpt_forward.2} parent=15 // pred_check
        %p456 = pneg %p310
      $region58: #{gpt_forward.2} parent=15 // pred_check_branch
        %458 = sbr.rel (%p456) target = $region60
      $region59: #{gpt_forward.2} parent=15 // pred_region
        %p459 = scmp.lt.s32.totalorder %s26, 1
        %s460 = scalar_select %p459, %s26, 1
        %s461 = smul.addr %s460, 64
        %s462 = smul.addr %s461, 4
        %s463 = scalar_lea.vmem %s10, %s462
      $region60: #{gpt_forward.2} parent=15 // pred_fallthru
        _
      // Predicated region
      $region61: #{gpt_forward.2} parent=15 // pred_check
        %p464 = pneg %p336
      $region62: #{gpt_forward.2} parent=15 // pred_check_branch
        %466 = sbr.rel (%p464) target = $region64
      $region63: #{gpt_forward.2} parent=15 // pred_region
        %p467 = scmp.lt.s32.totalorder %s26, 1
        %s468 = scalar_select %p467, %s26, 1
        %s469 = scalar_lea.vmem %s11, %s468
      $region64: #{gpt_forward.2} parent=15 // pred_fallthru
        _
    $region16: #{gpt_forward.2} parent=5 // pred_fallthru
      _
    %p470 = scmp.le.s32.totalorder 1, %s18
    %p471 = scmp.lt.s32.totalorder %s18, 5
    %p472 = pnand %p470, %p471
    %p473 = pneg %p472
    // Predicated region
    $region65: #{gpt_forward.2} parent=5 // pred_check
      _
    $region66: #{gpt_forward.2} parent=5 // pred_check_branch
      %475 = sbr.rel (%p472) target = $region68
    $region67: #{gpt_forward.2} parent=5 // pred_region
      %s476 = ssub.s32 %s18, 1
      %p477 = scmp.lt.s32.totalorder %s27, 1
      %s478 = scalar_select %p477, %s27, 1
      %s479 = smul.addr %s478, 8
      %s480 = smul.addr %s479, 8
      %s481 = scalar_lea.vmem %s0, %s480
      %p482 = pneg %p56
      %p483 = pneg %p53
      %p484 = scmp.lt.s32.totalorder %s28, 1
      %s485 = scalar_select %p484, %s28, 1
      %s486 = scalar_lea.vmem %s1, %s485
      %p487 = pneg %p82
      %p488 = pneg %p79
      %p489 = scmp.lt.s32.totalorder %s28, 1
      %s490 = scalar_select %p489, %s28, 1
      %s491 = scalar_lea.vmem %s2, %s490
      %p492 = pneg %p108
      %p493 = pneg %p105
      %p494 = scmp.lt.s32.totalorder %s28, 1
      %s495 = scalar_select %p494, %s28, 1
      %s496 = smul.addr %s495, 48
      %s497 = smul.addr %s496, 4
      %s498 = scalar_lea.vmem %s3, %s497
      %p499 = pneg %p134
      %p500 = pneg %p131
      %p501 = scmp.lt.s32.totalorder %s28, 1
      %s502 = scalar_select %p501, %s28, 1
      %s503 = smul.addr %s502, 16
      %s504 = smul.addr %s503, 4
      %s505 = scalar_lea.vmem %s4, %s504
      %p506 = pneg %p160
      %p507 = pneg %p157
      %p508 = scmp.lt.s32.totalorder %s28, 1
      %s509 = scalar_select %p508, %s28, 1
      %s510 = scalar_lea.vmem %s5, %s509
      %p511 = pneg %p186
      %p512 = pneg %p183
      %p513 = scmp.lt.s32.totalorder %s28, 1
      %s514 = scalar_select %p513, %s28, 1
      %s515 = scalar_lea.vmem %s6, %s514
      %p516 = pneg %p212
      %p517 = pneg %p209
      %p518 = scmp.lt.s32.totalorder %s28, 1
      %s519 = scalar_select %p518, %s28, 1
      %s520 = scalar_lea.vmem %s7, %s519
      %p521 = pneg %p238
      %p522 = pneg %p235
      %p523 = scmp.lt.s32.totalorder %s28, 1
      %s524 = scalar_select %p523, %s28, 1
      %s525 = smul.addr %s524, 64
      %s526 = smul.addr %s525, 4
      %s527 = scalar_lea.vmem %s8, %s526
      %p528 = pneg %p264
      %p529 = pneg %p261
      %p530 = scmp.lt.s32.totalorder %s28, 1
      %s531 = scalar_select %p530, %s28, 1
      %s532 = smul.addr %s531, 4
      %s533 = scalar_lea.vmem %s9, %s532
      %p534 = pneg %p290
      %p535 = pneg %p287
      %p536 = scmp.lt.s32.totalorder %s28, 1
      %s537 = scalar_select %p536, %s28, 1
      %s538 = smul.addr %s537, 64
      %s539 = smul.addr %s538, 4
      %s540 = scalar_lea.vmem %s10, %s539
      %p541 = pneg %p316
      %p542 = pneg %p313
      %p543 = scmp.lt.s32.totalorder %s28, 1
      %s544 = scalar_select %p543, %s28, 1
      %s545 = scalar_lea.vmem %s11, %s544
      %p546 = pneg %p342
      %p547 = pneg %p339
      %p548 = pneg %p368
      %p549 = pneg %p365
      %p550 = scmp.lt.s32.totalorder %s27, 1
      %s551 = scalar_select %p550, %s27, 1
      %s552 = smul.addr %s551, 8
      %s553 = smul.addr %s552, 8
      %s554 = scalar_lea.vmem %s12, %s553
      %p555 = scmp.lt.s32.totalorder %s27, 1
      %s556 = scalar_select %p555, %s27, 1
      %s557 = smul.addr %s556, 8
      %s558 = smul.addr %s557, 8
      %s559 = scalar_lea.vmem %s0, %s558
      %p560 = scmp.lt.s32.totalorder %s28, 1
      %s561 = scalar_select %p560, %s28, 1
      %s562 = scalar_lea.vmem %s1, %s561
      %p563 = scmp.lt.s32.totalorder %s28, 1
      %s564 = scalar_select %p563, %s28, 1
      %s565 = scalar_lea.vmem %s2, %s564
      %p566 = scmp.lt.s32.totalorder %s28, 1
      %s567 = scalar_select %p566, %s28, 1
      %s568 = smul.addr %s567, 48
      %s569 = smul.addr %s568, 4
      %s570 = scalar_lea.vmem %s3, %s569
      %p571 = scmp.lt.s32.totalorder %s28, 1
      %s572 = scalar_select %p571, %s28, 1
      %s573 = smul.addr %s572, 16
      %s574 = smul.addr %s573, 4
      %s575 = scalar_lea.vmem %s4, %s574
      %p576 = scmp.lt.s32.totalorder %s28, 1
      %s577 = scalar_select %p576, %s28, 1
      %s578 = scalar_lea.vmem %s5, %s577
      %p579 = scmp.lt.s32.totalorder %s28, 1
      %s580 = scalar_select %p579, %s28, 1
      %s581 = scalar_lea.vmem %s6, %s580
      %p582 = scmp.lt.s32.totalorder %s28, 1
      %s583 = scalar_select %p582, %s28, 1
      %s584 = scalar_lea.vmem %s7, %s583
      %p585 = scmp.lt.s32.totalorder %s28, 1
      %s586 = scalar_select %p585, %s28, 1
      %s587 = smul.addr %s586, 64
      %s588 = smul.addr %s587, 4
      %s589 = scalar_lea.vmem %s8, %s588
      %p590 = scmp.lt.s32.totalorder %s28, 1
      %s591 = scalar_select %p590, %s28, 1
      %s592 = smul.addr %s591, 4
      %s593 = scalar_lea.vmem %s9, %s592
      %p594 = scmp.lt.s32.totalorder %s28, 1
      %s595 = scalar_select %p594, %s28, 1
      %s596 = smul.addr %s595, 64
      %s597 = smul.addr %s596, 4
      %s598 = scalar_lea.vmem %s10, %s597
      %p599 = scmp.lt.s32.totalorder %s28, 1
      %s600 = scalar_select %p599, %s28, 1
      %s601 = scalar_lea.vmem %s11, %s600
      %p602 = scmp.lt.s32.totalorder %s27, 1
      %s603 = scalar_select %p602, %s27, 1
      %s604 = smul.addr %s603, 8
      %s605 = smul.addr %s604, 8
      %s606 = scalar_lea.vmem %s12, %s605
      %p608 = scmp.eq.s32.totalorder %s28, 0
      // Predicated region
      $region69: #{gpt_forward.2} parent=67 // pred_check
        %p609 = pneg %p608
      $region70: #{gpt_forward.2} parent=67 // pred_check_branch
        %611 = sbr.rel (%p609) target = $region72
      $region71: #{gpt_forward.2} parent=67 // pred_region
        %v612 = vld [vmem:[%s559] sm:$0xff]
        %v613 = vld [vmem:[%s559 + $0x8] sm:$0xff]
        %v614 = vld [vmem:[%s559 + $0x10] sm:$0xff]
        %v615 = vld [vmem:[%s559 + $0x18] sm:$0xff]
        %v616 = vld [vmem:[%s559 + $0x20] sm:$0xff]
        %v617 = vld [vmem:[%s559 + $0x28] sm:$0xff]
        %v618 = vld [vmem:[%s559 + $0x30] sm:$0xff]
        %v619 = vld [vmem:[%s559 + $0x38] sm:$0xff]
        %620 = vst [vmem:[#allocation2] sm:$0xff] %v612
        %621 = vst [vmem:[#allocation2 + $0x8] sm:$0xff] %v613
        %622 = vst [vmem:[#allocation2 + $0x10] sm:$0xff] %v614
        %623 = vst [vmem:[#allocation2 + $0x18] sm:$0xff] %v615
        %624 = vst [vmem:[#allocation2 + $0x20] sm:$0xff] %v616
        %625 = vst [vmem:[#allocation2 + $0x28] sm:$0xff] %v617
        %626 = vst [vmem:[#allocation2 + $0x30] sm:$0xff] %v618
        %627 = vst [vmem:[#allocation2 + $0x38] sm:$0xff] %v619
      $region72: #{gpt_forward.2} parent=67 // pred_fallthru
        _
      %v628 = vld [vmem:[#allocation2] sm:$0xff]
      %v629 = vld [vmem:[#allocation2 + $0x8] sm:$0xff]
      %v630 = vld [vmem:[#allocation2 + $0x10] sm:$0xff]
      %v631 = vld [vmem:[#allocation2 + $0x18] sm:$0xff]
      %v632 = vld [vmem:[#allocation2 + $0x20] sm:$0xff]
      %v633 = vld [vmem:[#allocation2 + $0x28] sm:$0xff]
      %v634 = vld [vmem:[#allocation2 + $0x30] sm:$0xff]
      %v635 = vld [vmem:[#allocation2 + $0x38] sm:$0xff]
      %v636 = vld [vmem:[%s562] sm:$0x1]
      %v637 = vld [vmem:[%s565] sm:$0x1]
      %638 = vadd.xlane.f32.xlu0 %v628
      %v639 = vpop.xlane.xlu0 %638
      %640 = vadd.xlane.f32.xlu0 %v629
      %v641 = vpop.xlane.xlu0 %640
      %642 = vadd.xlane.f32.xlu0 %v630
      %v643 = vpop.xlane.xlu0 %642
      %644 = vadd.xlane.f32.xlu0 %v631
      %v645 = vpop.xlane.xlu0 %644
      %646 = vadd.xlane.f32.xlu0 %v632
      %v647 = vpop.xlane.xlu0 %646
      %648 = vadd.xlane.f32.xlu0 %v633
      %v649 = vpop.xlane.xlu0 %648
      %650 = vadd.xlane.f32.xlu0 %v634
      %v651 = vpop.xlane.xlu0 %650
      %652 = vadd.xlane.f32.xlu0 %v635
      %v653 = vpop.xlane.xlu0 %652
      %v654 = vrcp.pop 128.0
      %v655 = vmul.f32 %v639, %v654
      %v656 = vmul.f32 %v641, %v654
      %v657 = vmul.f32 %v643, %v654
      %v658 = vmul.f32 %v645, %v654
      %v659 = vmul.f32 %v647, %v654
      %v660 = vmul.f32 %v649, %v654
      %v661 = vmul.f32 %v651, %v654
      %v662 = vmul.f32 %v653, %v654
      %v663 = vsub.f32 %v628, %v655
      %v664 = vsub.f32 %v629, %v656
      %v665 = vsub.f32 %v630, %v657
      %v666 = vsub.f32 %v631, %v658
      %v667 = vsub.f32 %v632, %v659
      %v668 = vsub.f32 %v633, %v660
      %v669 = vsub.f32 %v634, %v661
      %v670 = vsub.f32 %v635, %v662
      %v671 = vmul.f32 %v663, %v663
      %v672 = vmul.f32 %v664, %v664
      %v673 = vmul.f32 %v665, %v665
      %v674 = vmul.f32 %v666, %v666
      %v675 = vmul.f32 %v667, %v667
      %v676 = vmul.f32 %v668, %v668
      %v677 = vmul.f32 %v669, %v669
      %v678 = vmul.f32 %v670, %v670
      %679 = vadd.xlane.f32.xlu0 %v671
      %v680 = vpop.xlane.xlu0 %679
      %681 = vadd.xlane.f32.xlu0 %v672
      %v682 = vpop.xlane.xlu0 %681
      %683 = vadd.xlane.f32.xlu0 %v673
      %v684 = vpop.xlane.xlu0 %683
      %685 = vadd.xlane.f32.xlu0 %v674
      %v686 = vpop.xlane.xlu0 %685
      %687 = vadd.xlane.f32.xlu0 %v675
      %v688 = vpop.xlane.xlu0 %687
      %689 = vadd.xlane.f32.xlu0 %v676
      %v690 = vpop.xlane.xlu0 %689
      %691 = vadd.xlane.f32.xlu0 %v677
      %v692 = vpop.xlane.xlu0 %691
      %693 = vadd.xlane.f32.xlu0 %v678
      %v694 = vpop.xlane.xlu0 %693
      %v695 = vmul.f32 %v680, %v654
      %v696 = vmul.f32 %v682, %v654
      %v697 = vmul.f32 %v684, %v654
      %v698 = vmul.f32 %v686, %v654
      %v699 = vmul.f32 %v688, %v654
      %v700 = vmul.f32 %v690, %v654
      %v701 = vmul.f32 %v692, %v654
      %v702 = vmul.f32 %v694, %v654
      %v703 = vadd.f32 %v695, 1e-05
      %v704 = vadd.f32 %v696, 1e-05
      %v705 = vadd.f32 %v697, 1e-05
      %v706 = vadd.f32 %v698, 1e-05
      %v707 = vadd.f32 %v699, 1e-05
      %v708 = vadd.f32 %v700, 1e-05
      %v709 = vadd.f32 %v701, 1e-05
      %v710 = vadd.f32 %v702, 1e-05
      %v711 = vrsqrt.pop %v703
      %v712 = vrsqrt.pop %v704
      %v713 = vrsqrt.pop %v705
      %v714 = vrsqrt.pop %v706
      %v715 = vrsqrt.pop %v707
      %v716 = vrsqrt.pop %v708
      %v717 = vrsqrt.pop %v709
      %v718 = vrsqrt.pop %v710
      %v719 = vmul.f32 %v663, %v711
      %v720 = vmul.f32 %v664, %v712
      %v721 = vmul.f32 %v665, %v713
      %v722 = vmul.f32 %v666, %v714
      %v723 = vmul.f32 %v667, %v715
      %v724 = vmul.f32 %v668, %v716
      %v725 = vmul.f32 %v669, %v717
      %v726 = vmul.f32 %v670, %v718
      %v728 = vlaneseq
      %v729 = vshrl.u32 %v728, 7
      %v730 = vsub.s32 0, %v729
      %v731 = vrot.slane %v636, %v730
      %v733 = vmul.f32 %v719, %v731
      %v734 = vmul.f32 %v720, %v731
      %v735 = vmul.f32 %v721, %v731
      %v736 = vmul.f32 %v722, %v731
      %v737 = vmul.f32 %v723, %v731
      %v738 = vmul.f32 %v724, %v731
      %v739 = vmul.f32 %v725, %v731
      %v740 = vmul.f32 %v726, %v731
      %v742 = vlaneseq
      %v743 = vshrl.u32 %v742, 7
      %v744 = vsub.s32 0, %v743
      %v745 = vrot.slane %v637, %v744
      %v747 = vadd.f32 %v733, %v745
      %v748 = vadd.f32 %v734, %v745
      %v749 = vadd.f32 %v735, %v745
      %v750 = vadd.f32 %v736, %v745
      %v751 = vadd.f32 %v737, %v745
      %v752 = vadd.f32 %v738, %v745
      %v753 = vadd.f32 %v739, %v745
      %v754 = vadd.f32 %v740, %v745
      %v755 = vpack.c.bf16 %v748, %v747
      %v756 = vpack.c.bf16 %v750, %v749
      %v757 = vpack.c.bf16 %v752, %v751
      %v758 = vpack.c.bf16 %v754, %v753
      %v759 = vld [vmem:[%s570] sm:$0xff]
      %v760 = vld [vmem:[%s570 + $0x8] sm:$0xf]
      %v761 = vld [vmem:[%s570 + $0xc] sm:$0xff]
      %v762 = vld [vmem:[%s570 + $0x14] sm:$0xf]
      %v763 = vld [vmem:[%s570 + $0x18] sm:$0xff]
      %v764 = vld [vmem:[%s570 + $0x20] sm:$0xf]
      %v765 = vld [vmem:[%s570 + $0x24] sm:$0xff]
      %v766 = vld [vmem:[%s570 + $0x2c] sm:$0xf]
      %v767 = vld [vmem:[%s570 + $0x30] sm:$0xff]
      %v768 = vld [vmem:[%s570 + $0x38] sm:$0xf]
      %v769 = vld [vmem:[%s570 + $0x3c] sm:$0xff]
      %v770 = vld [vmem:[%s570 + $0x44] sm:$0xf]
      %v771 = vld [vmem:[%s570 + $0x48] sm:$0xff]
      %v772 = vld [vmem:[%s570 + $0x50] sm:$0xf]
      %v773 = vld [vmem:[%s570 + $0x54] sm:$0xff]
      %v774 = vld [vmem:[%s570 + $0x5c] sm:$0xf]
      %v775 = vld [vmem:[%s570 + $0x60] sm:$0xff]
      %v776 = vld [vmem:[%s570 + $0x68] sm:$0xf]
      %v777 = vld [vmem:[%s570 + $0x6c] sm:$0xff]
      %v778 = vld [vmem:[%s570 + $0x74] sm:$0xf]
      %v779 = vld [vmem:[%s570 + $0x78] sm:$0xff]
      %v780 = vld [vmem:[%s570 + $0x80] sm:$0xf]
      %v781 = vld [vmem:[%s570 + $0x84] sm:$0xff]
      %v782 = vld [vmem:[%s570 + $0x8c] sm:$0xf]
      %v783 = vld [vmem:[%s570 + $0x90] sm:$0xff]
      %v784 = vld [vmem:[%s570 + $0x98] sm:$0xf]
      %v785 = vld [vmem:[%s570 + $0x9c] sm:$0xff]
      %v786 = vld [vmem:[%s570 + $0xa4] sm:$0xf]
      %v787 = vld [vmem:[%s570 + $0xa8] sm:$0xff]
      %v788 = vld [vmem:[%s570 + $0xb0] sm:$0xf]
      %v789 = vld [vmem:[%s570 + $0xb4] sm:$0xff]
      %v790 = vld [vmem:[%s570 + $0xbc] sm:$0xf]
      %v823 = vunpack.c.l.b16 %v759
      %v824 = vunpack.c.h.b16 %v759
      %v825 = vunpack.c.l.b16 %v760
      %v826 = vunpack.c.l.b16 %v761
      %v827 = vunpack.c.h.b16 %v761
      %v828 = vunpack.c.l.b16 %v762
      %v829 = vunpack.c.l.b16 %v763
      %v830 = vunpack.c.h.b16 %v763
      %v831 = vunpack.c.l.b16 %v764
      %v832 = vunpack.c.l.b16 %v765
      %v833 = vunpack.c.h.b16 %v765
      %v834 = vunpack.c.l.b16 %v766
      %v835 = vunpack.c.l.b16 %v767
      %v836 = vunpack.c.h.b16 %v767
      %v837 = vunpack.c.l.b16 %v768
      %v838 = vunpack.c.l.b16 %v769
      %v839 = vunpack.c.h.b16 %v769
      %v840 = vunpack.c.l.b16 %v770
      %v841 = vunpack.c.l.b16 %v771
      %v842 = vunpack.c.h.b16 %v771
      %v843 = vunpack.c.l.b16 %v772
      %v844 = vunpack.c.l.b16 %v773
      %v845 = vunpack.c.h.b16 %v773
      %v846 = vunpack.c.l.b16 %v774
      %v847 = vunpack.c.l.b16 %v775
      %v848 = vunpack.c.h.b16 %v775
      %v849 = vunpack.c.l.b16 %v776
      %v850 = vunpack.c.l.b16 %v777
      %v851 = vunpack.c.h.b16 %v777
      %v852 = vunpack.c.l.b16 %v778
      %v853 = vunpack.c.l.b16 %v779
      %v854 = vunpack.c.h.b16 %v779
      %v855 = vunpack.c.l.b16 %v780
      %v856 = vunpack.c.l.b16 %v781
      %v857 = vunpack.c.h.b16 %v781
      %v858 = vunpack.c.l.b16 %v782
      %v859 = vunpack.c.l.b16 %v783
      %v860 = vunpack.c.h.b16 %v783
      %v861 = vunpack.c.l.b16 %v784
      %v862 = vunpack.c.l.b16 %v785
      %v863 = vunpack.c.h.b16 %v785
      %v864 = vunpack.c.l.b16 %v786
      %v865 = vunpack.c.l.b16 %v787
      %v866 = vunpack.c.h.b16 %v787
      %v867 = vunpack.c.l.b16 %v788
      %v868 = vunpack.c.l.b16 %v789
      %v869 = vunpack.c.h.b16 %v789
      %v870 = vunpack.c.l.b16 %v790
      %v871 = vpack.c.b16 %v826, %v823
      %v872 = vpack.c.b16 %v827, %v824
      %v873 = vpack.c.b16 %v828, %v825
      %v874 = vpack.c.b16 %v832, %v829
      %v875 = vpack.c.b16 %v833, %v830
      %v876 = vpack.c.b16 %v834, %v831
      %v877 = vpack.c.b16 %v838, %v835
      %v878 = vpack.c.b16 %v839, %v836
      %v879 = vpack.c.b16 %v840, %v837
      %v880 = vpack.c.b16 %v844, %v841
      %v881 = vpack.c.b16 %v845, %v842
      %v882 = vpack.c.b16 %v846, %v843
      %v883 = vpack.c.b16 %v850, %v847
      %v884 = vpack.c.b16 %v851, %v848
      %v885 = vpack.c.b16 %v852, %v849
      %v886 = vpack.c.b16 %v856, %v853
      %v887 = vpack.c.b16 %v857, %v854
      %v888 = vpack.c.b16 %v858, %v855
      %v889 = vpack.c.b16 %v862, %v859
      %v890 = vpack.c.b16 %v863, %v860
      %v891 = vpack.c.b16 %v864, %v861
      %v892 = vpack.c.b16 %v868, %v865
      %v893 = vpack.c.b16 %v869, %v866
      %v894 = vpack.c.b16 %v870, %v867
      %919 = vmatprep.subr.bf16.mxu0 %v893
      %920 = vmatpush1.bf16.msra.mxu0 %v892
      %921 = vmatprep.subr.bf16.mxu0 %v890
      %922 = vmatpush1.bf16.msra.mxu0 %v889
      %923 = vmatprep.subr.bf16.mxu0 %v887
      %924 = vmatpush1.bf16.msra.mxu0 %v886
      %925 = vmatprep.subr.bf16.mxu0 %v884
      %926 = vmatpush1.bf16.msra.mxu0 %v883
      %927 = vmatprep.subr.bf16.mxu0 %v881
      %928 = vmatpush1.bf16.msra.mxu0 %v880
      %929 = vmatprep.subr.bf16.mxu0 %v878
      %930 = vmatpush1.bf16.msra.mxu0 %v877
      %931 = vmatprep.subr.bf16.mxu0 %v875
      %932 = vmatpush1.bf16.msra.mxu0 %v874
      %933 = vmatprep.subr.bf16.mxu0 %v872
      %934 = vmatpush1.bf16.msra.mxu0 %v871
      %935 = vmatprep.subr.bf16.mxu0 0
      %936 = vmatpush2.bf16.msra.mxu0 0
      %937 = vmatprep.subr.bf16.mxu0 0
      %938 = vmatpush2.bf16.msra.mxu0 0
      %939 = vmatprep.subr.bf16.mxu0 0
      %940 = vmatpush2.bf16.msra.mxu0 0
      %941 = vmatprep.subr.bf16.mxu0 0
      %942 = vmatpush2.bf16.msra.mxu0 0
      %943 = vmatprep.subr.bf16.mxu0 0
      %944 = vmatpush2.bf16.msra.mxu0 0
      %945 = vmatprep.subr.bf16.mxu0 0
      %946 = vmatpush2.bf16.msra.mxu0 0
      %947 = vmatprep.subr.bf16.mxu0 0
      %948 = vmatpush2.bf16.msra.mxu0 0
      %949 = vmatprep.subr.bf16.mxu0 0
      %950 = vmatpush2.bf16.msra.mxu0 0
      %951 = vmatprep.mubr.bf16.mxu0 0
      %952 = vmatmul.mubr.bf16.gmra.mxu0 %v755
      %v953 = vpop.f32.mrf.mxu0
      %v954 = vadd.f32 0.0, %v953
      %v955 = vpop.f32.mrf.mxu0
      %v956 = vadd.f32 0.0, %v955
      %v957 = vpop.f32.mrf.mxu0
      %v958 = vadd.f32 0.0, %v957
      %v959 = vpop.f32.mrf.mxu0
      %v960 = vadd.f32 0.0, %v959
      %961 = vmatprep.mubr.bf16.mxu0 0
      %962 = vmatmul.mubr.bf16.gmra.mxu0 %v756
      %v963 = vpop.f32.mrf.mxu0
      %v964 = vadd.f32 0.0, %v963
      %v965 = vpop.f32.mrf.mxu0
      %v966 = vadd.f32 0.0, %v965
      %v967 = vpop.f32.mrf.mxu0
      %v968 = vadd.f32 0.0, %v967
      %v969 = vpop.f32.mrf.mxu0
      %v970 = vadd.f32 0.0, %v969
      %971 = vmatprep.mubr.bf16.mxu0 0
      %972 = vmatmul.mubr.bf16.gmra.mxu0 %v757
      %v973 = vpop.f32.mrf.mxu0
      %v974 = vadd.f32 0.0, %v973
      %v975 = vpop.f32.mrf.mxu0
      %v976 = vadd.f32 0.0, %v975
      %v977 = vpop.f32.mrf.mxu0
      %v978 = vadd.f32 0.0, %v977
      %v979 = vpop.f32.mrf.mxu0
      %v980 = vadd.f32 0.0, %v979
      %981 = vmatprep.mubr.bf16.mxu0 0
      %982 = vmatmul.mubr.bf16.gmra.mxu0 %v758
      %v983 = vpop.f32.mrf.mxu0
      %v984 = vadd.f32 0.0, %v983
      %v985 = vpop.f32.mrf.mxu0
      %v986 = vadd.f32 0.0, %v985
      %v987 = vpop.f32.mrf.mxu0
      %v988 = vadd.f32 0.0, %v987
      %v989 = vpop.f32.mrf.mxu0
      %v990 = vadd.f32 0.0, %v989
      %991 = vdwg.mxu0
      %992 = vmatprep.subr.bf16.mxu0 0
      %993 = vmatpush1.bf16.msra.mxu0 %v894
      %994 = vmatprep.subr.bf16.mxu0 0
      %995 = vmatpush1.bf16.msra.mxu0 %v891
      %996 = vmatprep.subr.bf16.mxu0 0
      %997 = vmatpush1.bf16.msra.mxu0 %v888
      %998 = vmatprep.subr.bf16.mxu0 0
      %999 = vmatpush1.bf16.msra.mxu0 %v885
      %1000 = vmatprep.subr.bf16.mxu0 0
      %1001 = vmatpush1.bf16.msra.mxu0 %v882
      %1002 = vmatprep.subr.bf16.mxu0 0
      %1003 = vmatpush1.bf16.msra.mxu0 %v879
      %1004 = vmatprep.subr.bf16.mxu0 0
      %1005 = vmatpush1.bf16.msra.mxu0 %v876
      %1006 = vmatprep.subr.bf16.mxu0 0
      %1007 = vmatpush1.bf16.msra.mxu0 %v873
      %1008 = vmatprep.subr.bf16.mxu0 0
      %1009 = vmatpush2.bf16.msra.mxu0 0
      %1010 = vmatprep.subr.bf16.mxu0 0
      %1011 = vmatpush2.bf16.msra.mxu0 0
      %1012 = vmatprep.subr.bf16.mxu0 0
      %1013 = vmatpush2.bf16.msra.mxu0 0
      %1014 = vmatprep.subr.bf16.mxu0 0
      %1015 = vmatpush2.bf16.msra.mxu0 0
      %1016 = vmatprep.subr.bf16.mxu0 0
      %1017 = vmatpush2.bf16.msra.mxu0 0
      %1018 = vmatprep.subr.bf16.mxu0 0
      %1019 = vmatpush2.bf16.msra.mxu0 0
      %1020 = vmatprep.subr.bf16.mxu0 0
      %1021 = vmatpush2.bf16.msra.mxu0 0
      %1022 = vmatprep.subr.bf16.mxu0 0
      %1023 = vmatpush2.bf16.msra.mxu0 0
      %1024 = vmatprep.mubr.bf16.mxu0 0
      %1025 = vmatmul.mubr.bf16.gmra.mxu0 %v755
      %v1026 = vpop.f32.mrf.mxu0
      %v1027 = vadd.f32 0.0, %v1026
      %v1028 = vpop.f32.mrf.mxu0
      %v1029 = vpop.f32.mrf.mxu0
      %v1030 = vadd.f32 0.0, %v1029
      %v1031 = vpop.f32.mrf.mxu0
      %1032 = vmatprep.mubr.bf16.mxu0 0
      %1033 = vmatmul.mubr.bf16.gmra.mxu0 %v756
      %v1034 = vpop.f32.mrf.mxu0
      %v1035 = vadd.f32 0.0, %v1034
      %v1036 = vpop.f32.mrf.mxu0
      %v1037 = vpop.f32.mrf.mxu0
      %v1038 = vadd.f32 0.0, %v1037
      %v1039 = vpop.f32.mrf.mxu0
      %1040 = vmatprep.mubr.bf16.mxu0 0
      %1041 = vmatmul.mubr.bf16.gmra.mxu0 %v757
      %v1042 = vpop.f32.mrf.mxu0
      %v1043 = vadd.f32 0.0, %v1042
      %v1044 = vpop.f32.mrf.mxu0
      %v1045 = vpop.f32.mrf.mxu0
      %v1046 = vadd.f32 0.0, %v1045
      %v1047 = vpop.f32.mrf.mxu0
      %1048 = vmatprep.mubr.bf16.mxu0 0
      %1049 = vmatmul.mubr.bf16.gmra.mxu0 %v758
      %v1050 = vpop.f32.mrf.mxu0
      %v1051 = vadd.f32 0.0, %v1050
      %v1052 = vpop.f32.mrf.mxu0
      %v1053 = vpop.f32.mrf.mxu0
      %v1054 = vadd.f32 0.0, %v1053
      %v1055 = vpop.f32.mrf.mxu0
      %1056 = vdwg.mxu0
      %v1057 = vpack.c.bf16 %v958, %v954
      %v1058 = vpack.c.bf16 %v960, %v956
      %v1059 = vpack.c.bf16 %v1030, %v1027
      %v1060 = vpack.c.bf16 %v968, %v964
      %v1061 = vpack.c.bf16 %v970, %v966
      %v1062 = vpack.c.bf16 %v1038, %v1035
      %v1063 = vpack.c.bf16 %v978, %v974
      %v1064 = vpack.c.bf16 %v980, %v976
      %v1065 = vpack.c.bf16 %v1046, %v1043
      %v1066 = vpack.c.bf16 %v988, %v984
      %v1067 = vpack.c.bf16 %v990, %v986
      %v1068 = vpack.c.bf16 %v1054, %v1051
      %1073 = vrot.lane.b32.xlu0 %v1057, 96
      %v1074 = vpop.permute.xlu0 %1073
      %1075 = vrot.lane.b32.xlu0 %v1060, 96
      %v1076 = vpop.permute.xlu0 %1075
      %1077 = vrot.lane.b32.xlu0 %v1063, 96
      %v1078 = vpop.permute.xlu0 %1077
      %1079 = vrot.lane.b32.xlu0 %v1066, 96
      %v1080 = vpop.permute.xlu0 %1079
      %1081 = vrot.lane.b32.xlu0 %v1057, 64
      %v1082 = vpop.permute.xlu0 %1081
      %1083 = vrot.lane.b32.xlu0 %v1060, 64
      %v1084 = vpop.permute.xlu0 %1083
      %1085 = vrot.lane.b32.xlu0 %v1063, 64
      %v1086 = vpop.permute.xlu0 %1085
      %1087 = vrot.lane.b32.xlu0 %v1066, 64
      %v1088 = vpop.permute.xlu0 %1087
      %1089 = vrot.lane.b32.xlu0 %v1057, 32
      %v1090 = vpop.permute.xlu0 %1089
      %1091 = vrot.lane.b32.xlu0 %v1060, 32
      %v1092 = vpop.permute.xlu0 %1091
      %1093 = vrot.lane.b32.xlu0 %v1063, 32
      %v1094 = vpop.permute.xlu0 %1093
      %1095 = vrot.lane.b32.xlu0 %v1066, 32
      %v1096 = vpop.permute.xlu0 %1095
      %v1099 = vpack.i.b16 %v1074, %v1057
      %v1101 = vshrl.u32 %v1057, 16
      %v1102 = vshrl.u32 %v1074, 16
      %v1103 = vpack.i.b16 %v1102, %v1101
      %v1107 = vpack.i.b16 %v1090, %v1082
      %v1109 = vshrl.u32 %v1082, 16
      %v1110 = vshrl.u32 %v1090, 16
      %v1111 = vpack.i.b16 %v1110, %v1109
      %v1114 = vpack.i.b16 0, 0
      %v1116 = vshrl.u32 0, 16
      %v1117 = vpack.i.b16 %v1116, %v1116
      %v1121 = vpack.i.b16 %v1076, %v1060
      %v1123 = vshrl.u32 %v1060, 16
      %v1124 = vshrl.u32 %v1076, 16
      %v1125 = vpack.i.b16 %v1124, %v1123
      %v1129 = vpack.i.b16 %v1092, %v1084
      %v1131 = vshrl.u32 %v1084, 16
      %v1132 = vshrl.u32 %v1092, 16
      %v1133 = vpack.i.b16 %v1132, %v1131
      %v1137 = vpack.i.b16 %v1078, %v1063
      %v1139 = vshrl.u32 %v1063, 16
      %v1140 = vshrl.u32 %v1078, 16
      %v1141 = vpack.i.b16 %v1140, %v1139
      %v1145 = vpack.i.b16 %v1094, %v1086
      %v1147 = vshrl.u32 %v1086, 16
      %v1148 = vshrl.u32 %v1094, 16
      %v1149 = vpack.i.b16 %v1148, %v1147
      %v1153 = vpack.i.b16 %v1080, %v1066
      %v1155 = vshrl.u32 %v1066, 16
      %v1156 = vshrl.u32 %v1080, 16
      %v1157 = vpack.i.b16 %v1156, %v1155
      %v1161 = vpack.i.b16 %v1096, %v1088
      %v1163 = vshrl.u32 %v1088, 16
      %v1164 = vshrl.u32 %v1096, 16
      %v1165 = vpack.i.b16 %v1164, %v1163
      %v1167 = vcombine.high %v1099, %v1114
      %v1169 = vunpack.c.l.s4 1983009808
      %v1170 = vunpack.c.0.s8 %v1169
      %v1171 = vlaneseq
      %v1172 = vshrl.u32 %v1171, 7
      %v1173 = vsub.s32 %v1170, %v1172
      %v1174 = vrot.slane %v1099, %v1173
      %v1176 = vunpack.c.l.s4 1983009808
      %v1177 = vunpack.c.0.s8 %v1176
      %v1178 = vlaneseq
      %v1179 = vshrl.u32 %v1178, 7
      %v1180 = vsub.s32 %v1177, %v1179
      %v1181 = vrot.slane %v1167, %v1180
      %v1182 = vcombine.high %v1107, %v1114
      %v1184 = vunpack.c.l.s4 1983009808
      %v1185 = vunpack.c.0.s8 %v1184
      %v1186 = vlaneseq
      %v1187 = vshrl.u32 %v1186, 7
      %v1188 = vsub.s32 %v1185, %v1187
      %v1189 = vrot.slane %v1107, %v1188
      %v1191 = vunpack.c.l.s4 1983009808
      %v1192 = vunpack.c.0.s8 %v1191
      %v1193 = vlaneseq
      %v1194 = vshrl.u32 %v1193, 7
      %v1195 = vsub.s32 %v1192, %v1194
      %v1196 = vrot.slane %v1182, %v1195
      %v1197 = vcombine.low %v1174, %v1189
      %v1198 = vcombine.high %v1174, %v1189
      %v1200 = vunpack.c.l.s4 1934713408
      %v1201 = vunpack.c.0.s8 %v1200
      %v1202 = vlaneseq
      %v1203 = vshrl.u32 %v1202, 7
      %v1204 = vsub.s32 %v1201, %v1203
      %v1205 = vrot.slane %v1197, %v1204
      %v1207 = vunpack.c.l.s4 1934713408
      %v1208 = vunpack.c.0.s8 %v1207
      %v1209 = vlaneseq
      %v1210 = vshrl.u32 %v1209, 7
      %v1211 = vsub.s32 %v1208, %v1210
      %v1212 = vrot.slane %v1198, %v1211
      %v1213 = vcombine.low %v1181, %v1196
      %v1214 = vcombine.high %v1181, %v1196
      %v1216 = vunpack.c.l.s4 1934713408
      %v1217 = vunpack.c.0.s8 %v1216
      %v1218 = vlaneseq
      %v1219 = vshrl.u32 %v1218, 7
      %v1220 = vsub.s32 %v1217, %v1219
      %v1221 = vrot.slane %v1213, %v1220
      %v1223 = vunpack.c.l.s4 1934713408
      %v1224 = vunpack.c.0.s8 %v1223
      %v1225 = vlaneseq
      %v1226 = vshrl.u32 %v1225, 7
      %v1227 = vsub.s32 %v1224, %v1226
      %v1228 = vrot.slane %v1214, %v1227
      %v1229 = vcombine.high %v1205, 0
      %v1230 = vcombine.high %v1212, 0
      %v1231 = vcombine.high %v1221, 0
      %v1232 = vcombine.high %v1228, 0
      %v1233 = vcombine.high %v1103, %v1117
      %v1235 = vunpack.c.l.s4 1983009808
      %v1236 = vunpack.c.0.s8 %v1235
      %v1237 = vlaneseq
      %v1238 = vshrl.u32 %v1237, 7
      %v1239 = vsub.s32 %v1236, %v1238
      %v1240 = vrot.slane %v1103, %v1239
      %v1242 = vunpack.c.l.s4 1983009808
      %v1243 = vunpack.c.0.s8 %v1242
      %v1244 = vlaneseq
      %v1245 = vshrl.u32 %v1244, 7
      %v1246 = vsub.s32 %v1243, %v1245
      %v1247 = vrot.slane %v1233, %v1246
      %v1248 = vcombine.high %v1111, %v1117
      %v1250 = vunpack.c.l.s4 1983009808
      %v1251 = vunpack.c.0.s8 %v1250
      %v1252 = vlaneseq
      %v1253 = vshrl.u32 %v1252, 7
      %v1254 = vsub.s32 %v1251, %v1253
      %v1255 = vrot.slane %v1111, %v1254
      %v1257 = vunpack.c.l.s4 1983009808
      %v1258 = vunpack.c.0.s8 %v1257
      %v1259 = vlaneseq
      %v1260 = vshrl.u32 %v1259, 7
      %v1261 = vsub.s32 %v1258, %v1260
      %v1262 = vrot.slane %v1248, %v1261
      %v1263 = vcombine.low %v1240, %v1255
      %v1264 = vcombine.high %v1240, %v1255
      %v1266 = vunpack.c.l.s4 1934713408
      %v1267 = vunpack.c.0.s8 %v1266
      %v1268 = vlaneseq
      %v1269 = vshrl.u32 %v1268, 7
      %v1270 = vsub.s32 %v1267, %v1269
      %v1271 = vrot.slane %v1263, %v1270
      %v1273 = vunpack.c.l.s4 1934713408
      %v1274 = vunpack.c.0.s8 %v1273
      %v1275 = vlaneseq
      %v1276 = vshrl.u32 %v1275, 7
      %v1277 = vsub.s32 %v1274, %v1276
      %v1278 = vrot.slane %v1264, %v1277
      %v1279 = vcombine.low %v1247, %v1262
      %v1280 = vcombine.high %v1247, %v1262
      %v1282 = vunpack.c.l.s4 1934713408
      %v1283 = vunpack.c.0.s8 %v1282
      %v1284 = vlaneseq
      %v1285 = vshrl.u32 %v1284, 7
      %v1286 = vsub.s32 %v1283, %v1285
      %v1287 = vrot.slane %v1279, %v1286
      %v1289 = vunpack.c.l.s4 1934713408
      %v1290 = vunpack.c.0.s8 %v1289
      %v1291 = vlaneseq
      %v1292 = vshrl.u32 %v1291, 7
      %v1293 = vsub.s32 %v1290, %v1292
      %v1294 = vrot.slane %v1280, %v1293
      %v1295 = vcombine.high %v1271, 0
      %v1296 = vcombine.high %v1278, 0
      %v1297 = vcombine.high %v1287, 0
      %v1298 = vcombine.high %v1294, 0
      %v1299 = vcombine.high %v1121, %v1114
      %v1301 = vunpack.c.l.s4 1983009808
      %v1302 = vunpack.c.0.s8 %v1301
      %v1303 = vlaneseq
      %v1304 = vshrl.u32 %v1303, 7
      %v1305 = vsub.s32 %v1302, %v1304
      %v1306 = vrot.slane %v1121, %v1305
      %v1308 = vunpack.c.l.s4 1983009808
      %v1309 = vunpack.c.0.s8 %v1308
      %v1310 = vlaneseq
      %v1311 = vshrl.u32 %v1310, 7
      %v1312 = vsub.s32 %v1309, %v1311
      %v1313 = vrot.slane %v1299, %v1312
      %v1314 = vcombine.high %v1129, %v1114
      %v1316 = vunpack.c.l.s4 1983009808
      %v1317 = vunpack.c.0.s8 %v1316
      %v1318 = vlaneseq
      %v1319 = vshrl.u32 %v1318, 7
      %v1320 = vsub.s32 %v1317, %v1319
      %v1321 = vrot.slane %v1129, %v1320
      %v1323 = vunpack.c.l.s4 1983009808
      %v1324 = vunpack.c.0.s8 %v1323
      %v1325 = vlaneseq
      %v1326 = vshrl.u32 %v1325, 7
      %v1327 = vsub.s32 %v1324, %v1326
      %v1328 = vrot.slane %v1314, %v1327
      %v1329 = vcombine.low %v1306, %v1321
      %v1330 = vcombine.high %v1306, %v1321
      %v1332 = vunpack.c.l.s4 1934713408
      %v1333 = vunpack.c.0.s8 %v1332
      %v1334 = vlaneseq
      %v1335 = vshrl.u32 %v1334, 7
      %v1336 = vsub.s32 %v1333, %v1335
      %v1337 = vrot.slane %v1329, %v1336
      %v1339 = vunpack.c.l.s4 1934713408
      %v1340 = vunpack.c.0.s8 %v1339
      %v1341 = vlaneseq
      %v1342 = vshrl.u32 %v1341, 7
      %v1343 = vsub.s32 %v1340, %v1342
      %v1344 = vrot.slane %v1330, %v1343
      %v1345 = vcombine.low %v1313, %v1328
      %v1346 = vcombine.high %v1313, %v1328
      %v1348 = vunpack.c.l.s4 1934713408
      %v1349 = vunpack.c.0.s8 %v1348
      %v1350 = vlaneseq
      %v1351 = vshrl.u32 %v1350, 7
      %v1352 = vsub.s32 %v1349, %v1351
      %v1353 = vrot.slane %v1345, %v1352
      %v1355 = vunpack.c.l.s4 1934713408
      %v1356 = vunpack.c.0.s8 %v1355
      %v1357 = vlaneseq
      %v1358 = vshrl.u32 %v1357, 7
      %v1359 = vsub.s32 %v1356, %v1358
      %v1360 = vrot.slane %v1346, %v1359
      %v1361 = vcombine.high %v1337, 0
      %v1362 = vcombine.high %v1344, 0
      %v1363 = vcombine.high %v1353, 0
      %v1364 = vcombine.high %v1360, 0
      %v1365 = vcombine.high %v1125, %v1117
      %v1367 = vunpack.c.l.s4 1983009808
      %v1368 = vunpack.c.0.s8 %v1367
      %v1369 = vlaneseq
      %v1370 = vshrl.u32 %v1369, 7
      %v1371 = vsub.s32 %v1368, %v1370
      %v1372 = vrot.slane %v1125, %v1371
      %v1374 = vunpack.c.l.s4 1983009808
      %v1375 = vunpack.c.0.s8 %v1374
      %v1376 = vlaneseq
      %v1377 = vshrl.u32 %v1376, 7
      %v1378 = vsub.s32 %v1375, %v1377
      %v1379 = vrot.slane %v1365, %v1378
      %v1380 = vcombine.high %v1133, %v1117
      %v1382 = vunpack.c.l.s4 1983009808
      %v1383 = vunpack.c.0.s8 %v1382
      %v1384 = vlaneseq
      %v1385 = vshrl.u32 %v1384, 7
      %v1386 = vsub.s32 %v1383, %v1385
      %v1387 = vrot.slane %v1133, %v1386
      %v1389 = vunpack.c.l.s4 1983009808
      %v1390 = vunpack.c.0.s8 %v1389
      %v1391 = vlaneseq
      %v1392 = vshrl.u32 %v1391, 7
      %v1393 = vsub.s32 %v1390, %v1392
      %v1394 = vrot.slane %v1380, %v1393
      %v1395 = vcombine.low %v1372, %v1387
      %v1396 = vcombine.high %v1372, %v1387
      %v1398 = vunpack.c.l.s4 1934713408
      %v1399 = vunpack.c.0.s8 %v1398
      %v1400 = vlaneseq
      %v1401 = vshrl.u32 %v1400, 7
      %v1402 = vsub.s32 %v1399, %v1401
      %v1403 = vrot.slane %v1395, %v1402
      %v1405 = vunpack.c.l.s4 1934713408
      %v1406 = vunpack.c.0.s8 %v1405
      %v1407 = vlaneseq
      %v1408 = vshrl.u32 %v1407, 7
      %v1409 = vsub.s32 %v1406, %v1408
      %v1410 = vrot.slane %v1396, %v1409
      %v1411 = vcombine.low %v1379, %v1394
      %v1412 = vcombine.high %v1379, %v1394
      %v1414 = vunpack.c.l.s4 1934713408
      %v1415 = vunpack.c.0.s8 %v1414
      %v1416 = vlaneseq
      %v1417 = vshrl.u32 %v1416, 7
      %v1418 = vsub.s32 %v1415, %v1417
      %v1419 = vrot.slane %v1411, %v1418
      %v1421 = vunpack.c.l.s4 1934713408
      %v1422 = vunpack.c.0.s8 %v1421
      %v1423 = vlaneseq
      %v1424 = vshrl.u32 %v1423, 7
      %v1425 = vsub.s32 %v1422, %v1424
      %v1426 = vrot.slane %v1412, %v1425
      %v1427 = vcombine.high %v1403, 0
      %v1428 = vcombine.high %v1410, 0
      %v1429 = vcombine.high %v1419, 0
      %v1430 = vcombine.high %v1426, 0
      %v1431 = vcombine.high %v1137, %v1114
      %v1433 = vunpack.c.l.s4 1983009808
      %v1434 = vunpack.c.0.s8 %v1433
      %v1435 = vlaneseq
      %v1436 = vshrl.u32 %v1435, 7
      %v1437 = vsub.s32 %v1434, %v1436
      %v1438 = vrot.slane %v1137, %v1437
      %v1440 = vunpack.c.l.s4 1983009808
      %v1441 = vunpack.c.0.s8 %v1440
      %v1442 = vlaneseq
      %v1443 = vshrl.u32 %v1442, 7
      %v1444 = vsub.s32 %v1441, %v1443
      %v1445 = vrot.slane %v1431, %v1444
      %v1446 = vcombine.high %v1145, %v1114
      %v1448 = vunpack.c.l.s4 1983009808
      %v1449 = vunpack.c.0.s8 %v1448
      %v1450 = vlaneseq
      %v1451 = vshrl.u32 %v1450, 7
      %v1452 = vsub.s32 %v1449, %v1451
      %v1453 = vrot.slane %v1145, %v1452
      %v1455 = vunpack.c.l.s4 1983009808
      %v1456 = vunpack.c.0.s8 %v1455
      %v1457 = vlaneseq
      %v1458 = vshrl.u32 %v1457, 7
      %v1459 = vsub.s32 %v1456, %v1458
      %v1460 = vrot.slane %v1446, %v1459
      %v1461 = vcombine.low %v1438, %v1453
      %v1462 = vcombine.high %v1438, %v1453
      %v1464 = vunpack.c.l.s4 1934713408
      %v1465 = vunpack.c.0.s8 %v1464
      %v1466 = vlaneseq
      %v1467 = vshrl.u32 %v1466, 7
      %v1468 = vsub.s32 %v1465, %v1467
      %v1469 = vrot.slane %v1461, %v1468
      %v1471 = vunpack.c.l.s4 1934713408
      %v1472 = vunpack.c.0.s8 %v1471
      %v1473 = vlaneseq
      %v1474 = vshrl.u32 %v1473, 7
      %v1475 = vsub.s32 %v1472, %v1474
      %v1476 = vrot.slane %v1462, %v1475
      %v1477 = vcombine.low %v1445, %v1460
      %v1478 = vcombine.high %v1445, %v1460
      %v1480 = vunpack.c.l.s4 1934713408
      %v1481 = vunpack.c.0.s8 %v1480
      %v1482 = vlaneseq
      %v1483 = vshrl.u32 %v1482, 7
      %v1484 = vsub.s32 %v1481, %v1483
      %v1485 = vrot.slane %v1477, %v1484
      %v1487 = vunpack.c.l.s4 1934713408
      %v1488 = vunpack.c.0.s8 %v1487
      %v1489 = vlaneseq
      %v1490 = vshrl.u32 %v1489, 7
      %v1491 = vsub.s32 %v1488, %v1490
      %v1492 = vrot.slane %v1478, %v1491
      %v1493 = vcombine.high %v1469, 0
      %v1494 = vcombine.high %v1476, 0
      %v1495 = vcombine.high %v1485, 0
      %v1496 = vcombine.high %v1492, 0
      %v1497 = vcombine.high %v1141, %v1117
      %v1499 = vunpack.c.l.s4 1983009808
      %v1500 = vunpack.c.0.s8 %v1499
      %v1501 = vlaneseq
      %v1502 = vshrl.u32 %v1501, 7
      %v1503 = vsub.s32 %v1500, %v1502
      %v1504 = vrot.slane %v1141, %v1503
      %v1506 = vunpack.c.l.s4 1983009808
      %v1507 = vunpack.c.0.s8 %v1506
      %v1508 = vlaneseq
      %v1509 = vshrl.u32 %v1508, 7
      %v1510 = vsub.s32 %v1507, %v1509
      %v1511 = vrot.slane %v1497, %v1510
      %v1512 = vcombine.high %v1149, %v1117
      %v1514 = vunpack.c.l.s4 1983009808
      %v1515 = vunpack.c.0.s8 %v1514
      %v1516 = vlaneseq
      %v1517 = vshrl.u32 %v1516, 7
      %v1518 = vsub.s32 %v1515, %v1517
      %v1519 = vrot.slane %v1149, %v1518
      %v1521 = vunpack.c.l.s4 1983009808
      %v1522 = vunpack.c.0.s8 %v1521
      %v1523 = vlaneseq
      %v1524 = vshrl.u32 %v1523, 7
      %v1525 = vsub.s32 %v1522, %v1524
      %v1526 = vrot.slane %v1512, %v1525
      %v1527 = vcombine.low %v1504, %v1519
      %v1528 = vcombine.high %v1504, %v1519
      %v1530 = vunpack.c.l.s4 1934713408
      %v1531 = vunpack.c.0.s8 %v1530
      %v1532 = vlaneseq
      %v1533 = vshrl.u32 %v1532, 7
      %v1534 = vsub.s32 %v1531, %v1533
      %v1535 = vrot.slane %v1527, %v1534
      %v1537 = vunpack.c.l.s4 1934713408
      %v1538 = vunpack.c.0.s8 %v1537
      %v1539 = vlaneseq
      %v1540 = vshrl.u32 %v1539, 7
      %v1541 = vsub.s32 %v1538, %v1540
      %v1542 = vrot.slane %v1528, %v1541
      %v1543 = vcombine.low %v1511, %v1526
      %v1544 = vcombine.high %v1511, %v1526
      %v1546 = vunpack.c.l.s4 1934713408
      %v1547 = vunpack.c.0.s8 %v1546
      %v1548 = vlaneseq
      %v1549 = vshrl.u32 %v1548, 7
      %v1550 = vsub.s32 %v1547, %v1549
      %v1551 = vrot.slane %v1543, %v1550
      %v1553 = vunpack.c.l.s4 1934713408
      %v1554 = vunpack.c.0.s8 %v1553
      %v1555 = vlaneseq
      %v1556 = vshrl.u32 %v1555, 7
      %v1557 = vsub.s32 %v1554, %v1556
      %v1558 = vrot.slane %v1544, %v1557
      %v1559 = vcombine.high %v1535, 0
      %v1560 = vcombine.high %v1542, 0
      %v1561 = vcombine.high %v1551, 0
      %v1562 = vcombine.high %v1558, 0
      %v1563 = vcombine.high %v1153, %v1114
      %v1565 = vunpack.c.l.s4 1983009808
      %v1566 = vunpack.c.0.s8 %v1565
      %v1567 = vlaneseq
      %v1568 = vshrl.u32 %v1567, 7
      %v1569 = vsub.s32 %v1566, %v1568
      %v1570 = vrot.slane %v1153, %v1569
      %v1572 = vunpack.c.l.s4 1983009808
      %v1573 = vunpack.c.0.s8 %v1572
      %v1574 = vlaneseq
      %v1575 = vshrl.u32 %v1574, 7
      %v1576 = vsub.s32 %v1573, %v1575
      %v1577 = vrot.slane %v1563, %v1576
      %v1578 = vcombine.high %v1161, %v1114
      %v1580 = vunpack.c.l.s4 1983009808
      %v1581 = vunpack.c.0.s8 %v1580
      %v1582 = vlaneseq
      %v1583 = vshrl.u32 %v1582, 7
      %v1584 = vsub.s32 %v1581, %v1583
      %v1585 = vrot.slane %v1161, %v1584
      %v1587 = vunpack.c.l.s4 1983009808
      %v1588 = vunpack.c.0.s8 %v1587
      %v1589 = vlaneseq
      %v1590 = vshrl.u32 %v1589, 7
      %v1591 = vsub.s32 %v1588, %v1590
      %v1592 = vrot.slane %v1578, %v1591
      %v1593 = vcombine.low %v1570, %v1585
      %v1594 = vcombine.high %v1570, %v1585
      %v1596 = vunpack.c.l.s4 1934713408
      %v1597 = vunpack.c.0.s8 %v1596
      %v1598 = vlaneseq
      %v1599 = vshrl.u32 %v1598, 7
      %v1600 = vsub.s32 %v1597, %v1599
      %v1601 = vrot.slane %v1593, %v1600
      %v1603 = vunpack.c.l.s4 1934713408
      %v1604 = vunpack.c.0.s8 %v1603
      %v1605 = vlaneseq
      %v1606 = vshrl.u32 %v1605, 7
      %v1607 = vsub.s32 %v1604, %v1606
      %v1608 = vrot.slane %v1594, %v1607
      %v1609 = vcombine.low %v1577, %v1592
      %v1610 = vcombine.high %v1577, %v1592
      %v1612 = vunpack.c.l.s4 1934713408
      %v1613 = vunpack.c.0.s8 %v1612
      %v1614 = vlaneseq
      %v1615 = vshrl.u32 %v1614, 7
      %v1616 = vsub.s32 %v1613, %v1615
      %v1617 = vrot.slane %v1609, %v1616
      %v1619 = vunpack.c.l.s4 1934713408
      %v1620 = vunpack.c.0.s8 %v1619
      %v1621 = vlaneseq
      %v1622 = vshrl.u32 %v1621, 7
      %v1623 = vsub.s32 %v1620, %v1622
      %v1624 = vrot.slane %v1610, %v1623
      %v1625 = vcombine.high %v1601, 0
      %v1626 = vcombine.high %v1608, 0
      %v1627 = vcombine.high %v1617, 0
      %v1628 = vcombine.high %v1624, 0
      %v1629 = vcombine.high %v1157, %v1117
      %v1631 = vunpack.c.l.s4 1983009808
      %v1632 = vunpack.c.0.s8 %v1631
      %v1633 = vlaneseq
      %v1634 = vshrl.u32 %v1633, 7
      %v1635 = vsub.s32 %v1632, %v1634
      %v1636 = vrot.slane %v1157, %v1635
      %v1638 = vunpack.c.l.s4 1983009808
      %v1639 = vunpack.c.0.s8 %v1638
      %v1640 = vlaneseq
      %v1641 = vshrl.u32 %v1640, 7
      %v1642 = vsub.s32 %v1639, %v1641
      %v1643 = vrot.slane %v1629, %v1642
      %v1644 = vcombine.high %v1165, %v1117
      %v1646 = vunpack.c.l.s4 1983009808
      %v1647 = vunpack.c.0.s8 %v1646
      %v1648 = vlaneseq
      %v1649 = vshrl.u32 %v1648, 7
      %v1650 = vsub.s32 %v1647, %v1649
      %v1651 = vrot.slane %v1165, %v1650
      %v1653 = vunpack.c.l.s4 1983009808
      %v1654 = vunpack.c.0.s8 %v1653
      %v1655 = vlaneseq
      %v1656 = vshrl.u32 %v1655, 7
      %v1657 = vsub.s32 %v1654, %v1656
      %v1658 = vrot.slane %v1644, %v1657
      %v1659 = vcombine.low %v1636, %v1651
      %v1660 = vcombine.high %v1636, %v1651
      %v1662 = vunpack.c.l.s4 1934713408
      %v1663 = vunpack.c.0.s8 %v1662
      %v1664 = vlaneseq
      %v1665 = vshrl.u32 %v1664, 7
      %v1666 = vsub.s32 %v1663, %v1665
      %v1667 = vrot.slane %v1659, %v1666
      %v1669 = vunpack.c.l.s4 1934713408
      %v1670 = vunpack.c.0.s8 %v1669
      %v1671 = vlaneseq
      %v1672 = vshrl.u32 %v1671, 7
      %v1673 = vsub.s32 %v1670, %v1672
      %v1674 = vrot.slane %v1660, %v1673
      %v1675 = vcombine.low %v1643, %v1658
      %v1676 = vcombine.high %v1643, %v1658
      %v1678 = vunpack.c.l.s4 1934713408
      %v1679 = vunpack.c.0.s8 %v1678
      %v1680 = vlaneseq
      %v1681 = vshrl.u32 %v1680, 7
      %v1682 = vsub.s32 %v1679, %v1681
      %v1683 = vrot.slane %v1675, %v1682
      %v1685 = vunpack.c.l.s4 1934713408
      %v1686 = vunpack.c.0.s8 %v1685
      %v1687 = vlaneseq
      %v1688 = vshrl.u32 %v1687, 7
      %v1689 = vsub.s32 %v1686, %v1688
      %v1690 = vrot.slane %v1676, %v1689
      %v1691 = vcombine.high %v1667, 0
      %v1692 = vcombine.high %v1674, 0
      %v1693 = vcombine.high %v1683, 0
      %v1694 = vcombine.high %v1690, 0
      %v1695 = vcombine.low %v1205, %v1212
      %v1697 = vunpack.c.l.s4 1983009808
      %v1698 = vunpack.c.0.s8 %v1697
      %v1699 = vlaneseq
      %v1700 = vshrl.u32 %v1699, 7
      %v1701 = vsub.s32 %v1698, %v1700
      %v1702 = vrot.slane %v1695, %v1701
      %v1703 = vcombine.low %v1229, %v1230
      %v1705 = vunpack.c.l.s4 1983009808
      %v1706 = vunpack.c.0.s8 %v1705
      %v1707 = vlaneseq
      %v1708 = vshrl.u32 %v1707, 7
      %v1709 = vsub.s32 %v1706, %v1708
      %v1710 = vrot.slane %v1703, %v1709
      %v1711 = vcombine.low %v1221, %v1228
      %v1713 = vunpack.c.l.s4 1983009808
      %v1714 = vunpack.c.0.s8 %v1713
      %v1715 = vlaneseq
      %v1716 = vshrl.u32 %v1715, 7
      %v1717 = vsub.s32 %v1714, %v1716
      %v1718 = vrot.slane %v1711, %v1717
      %v1719 = vcombine.low %v1231, %v1232
      %v1721 = vunpack.c.l.s4 1983009808
      %v1722 = vunpack.c.0.s8 %v1721
      %v1723 = vlaneseq
      %v1724 = vshrl.u32 %v1723, 7
      %v1725 = vsub.s32 %v1722, %v1724
      %v1726 = vrot.slane %v1719, %v1725
      %v1727 = vcombine.low %v1702, %v1710
      %v1729 = vunpack.c.l.s4 1934713408
      %v1730 = vunpack.c.0.s8 %v1729
      %v1731 = vlaneseq
      %v1732 = vshrl.u32 %v1731, 7
      %v1733 = vsub.s32 %v1730, %v1732
      %v1734 = vrot.slane %v1727, %v1733
      %v1735 = vcombine.low %v1718, %v1726
      %v1737 = vunpack.c.l.s4 1934713408
      %v1738 = vunpack.c.0.s8 %v1737
      %v1739 = vlaneseq
      %v1740 = vshrl.u32 %v1739, 7
      %v1741 = vsub.s32 %v1738, %v1740
      %v1742 = vrot.slane %v1735, %v1741
      %v1743 = vcombine.low %v1734, %v1742
      %v1744 = vcombine.high %v1734, %v1742
      %v1745 = vcombine.low %v1271, %v1278
      %v1747 = vunpack.c.l.s4 1983009808
      %v1748 = vunpack.c.0.s8 %v1747
      %v1749 = vlaneseq
      %v1750 = vshrl.u32 %v1749, 7
      %v1751 = vsub.s32 %v1748, %v1750
      %v1752 = vrot.slane %v1745, %v1751
      %v1753 = vcombine.low %v1295, %v1296
      %v1755 = vunpack.c.l.s4 1983009808
      %v1756 = vunpack.c.0.s8 %v1755
      %v1757 = vlaneseq
      %v1758 = vshrl.u32 %v1757, 7
      %v1759 = vsub.s32 %v1756, %v1758
      %v1760 = vrot.slane %v1753, %v1759
      %v1761 = vcombine.low %v1287, %v1294
      %v1763 = vunpack.c.l.s4 1983009808
      %v1764 = vunpack.c.0.s8 %v1763
      %v1765 = vlaneseq
      %v1766 = vshrl.u32 %v1765, 7
      %v1767 = vsub.s32 %v1764, %v1766
      %v1768 = vrot.slane %v1761, %v1767
      %v1769 = vcombine.low %v1297, %v1298
      %v1771 = vunpack.c.l.s4 1983009808
      %v1772 = vunpack.c.0.s8 %v1771
      %v1773 = vlaneseq
      %v1774 = vshrl.u32 %v1773, 7
      %v1775 = vsub.s32 %v1772, %v1774
      %v1776 = vrot.slane %v1769, %v1775
      %v1777 = vcombine.low %v1752, %v1760
      %v1779 = vunpack.c.l.s4 1934713408
      %v1780 = vunpack.c.0.s8 %v1779
      %v1781 = vlaneseq
      %v1782 = vshrl.u32 %v1781, 7
      %v1783 = vsub.s32 %v1780, %v1782
      %v1784 = vrot.slane %v1777, %v1783
      %v1785 = vcombine.low %v1768, %v1776
      %v1787 = vunpack.c.l.s4 1934713408
      %v1788 = vunpack.c.0.s8 %v1787
      %v1789 = vlaneseq
      %v1790 = vshrl.u32 %v1789, 7
      %v1791 = vsub.s32 %v1788, %v1790
      %v1792 = vrot.slane %v1785, %v1791
      %v1793 = vcombine.low %v1784, %v1792
      %v1794 = vcombine.high %v1784, %v1792
      %v1795 = vcombine.low %v1337, %v1344
      %v1797 = vunpack.c.l.s4 1983009808
      %v1798 = vunpack.c.0.s8 %v1797
      %v1799 = vlaneseq
      %v1800 = vshrl.u32 %v1799, 7
      %v1801 = vsub.s32 %v1798, %v1800
      %v1802 = vrot.slane %v1795, %v1801
      %v1803 = vcombine.low %v1361, %v1362
      %v1805 = vunpack.c.l.s4 1983009808
      %v1806 = vunpack.c.0.s8 %v1805
      %v1807 = vlaneseq
      %v1808 = vshrl.u32 %v1807, 7
      %v1809 = vsub.s32 %v1806, %v1808
      %v1810 = vrot.slane %v1803, %v1809
      %v1811 = vcombine.low %v1353, %v1360
      %v1813 = vunpack.c.l.s4 1983009808
      %v1814 = vunpack.c.0.s8 %v1813
      %v1815 = vlaneseq
      %v1816 = vshrl.u32 %v1815, 7
      %v1817 = vsub.s32 %v1814, %v1816
      %v1818 = vrot.slane %v1811, %v1817
      %v1819 = vcombine.low %v1363, %v1364
      %v1821 = vunpack.c.l.s4 1983009808
      %v1822 = vunpack.c.0.s8 %v1821
      %v1823 = vlaneseq
      %v1824 = vshrl.u32 %v1823, 7
      %v1825 = vsub.s32 %v1822, %v1824
      %v1826 = vrot.slane %v1819, %v1825
      %v1827 = vcombine.low %v1802, %v1810
      %v1829 = vunpack.c.l.s4 1934713408
      %v1830 = vunpack.c.0.s8 %v1829
      %v1831 = vlaneseq
      %v1832 = vshrl.u32 %v1831, 7
      %v1833 = vsub.s32 %v1830, %v1832
      %v1834 = vrot.slane %v1827, %v1833
      %v1835 = vcombine.low %v1818, %v1826
      %v1837 = vunpack.c.l.s4 1934713408
      %v1838 = vunpack.c.0.s8 %v1837
      %v1839 = vlaneseq
      %v1840 = vshrl.u32 %v1839, 7
      %v1841 = vsub.s32 %v1838, %v1840
      %v1842 = vrot.slane %v1835, %v1841
      %v1843 = vcombine.low %v1834, %v1842
      %v1844 = vcombine.high %v1834, %v1842
      %v1845 = vcombine.low %v1403, %v1410
      %v1847 = vunpack.c.l.s4 1983009808
      %v1848 = vunpack.c.0.s8 %v1847
      %v1849 = vlaneseq
      %v1850 = vshrl.u32 %v1849, 7
      %v1851 = vsub.s32 %v1848, %v1850
      %v1852 = vrot.slane %v1845, %v1851
      %v1853 = vcombine.low %v1427, %v1428
      %v1855 = vunpack.c.l.s4 1983009808
      %v1856 = vunpack.c.0.s8 %v1855
      %v1857 = vlaneseq
      %v1858 = vshrl.u32 %v1857, 7
      %v1859 = vsub.s32 %v1856, %v1858
      %v1860 = vrot.slane %v1853, %v1859
      %v1861 = vcombine.low %v1419, %v1426
      %v1863 = vunpack.c.l.s4 1983009808
      %v1864 = vunpack.c.0.s8 %v1863
      %v1865 = vlaneseq
      %v1866 = vshrl.u32 %v1865, 7
      %v1867 = vsub.s32 %v1864, %v1866
      %v1868 = vrot.slane %v1861, %v1867
      %v1869 = vcombine.low %v1429, %v1430
      %v1871 = vunpack.c.l.s4 1983009808
      %v1872 = vunpack.c.0.s8 %v1871
      %v1873 = vlaneseq
      %v1874 = vshrl.u32 %v1873, 7
      %v1875 = vsub.s32 %v1872, %v1874
      %v1876 = vrot.slane %v1869, %v1875
      %v1877 = vcombine.low %v1852, %v1860
      %v1879 = vunpack.c.l.s4 1934713408
      %v1880 = vunpack.c.0.s8 %v1879
      %v1881 = vlaneseq
      %v1882 = vshrl.u32 %v1881, 7
      %v1883 = vsub.s32 %v1880, %v1882
      %v1884 = vrot.slane %v1877, %v1883
      %v1885 = vcombine.low %v1868, %v1876
      %v1887 = vunpack.c.l.s4 1934713408
      %v1888 = vunpack.c.0.s8 %v1887
      %v1889 = vlaneseq
      %v1890 = vshrl.u32 %v1889, 7
      %v1891 = vsub.s32 %v1888, %v1890
      %v1892 = vrot.slane %v1885, %v1891
      %v1893 = vcombine.low %v1884, %v1892
      %v1894 = vcombine.high %v1884, %v1892
      %v1895 = vcombine.low %v1469, %v1476
      %v1897 = vunpack.c.l.s4 1983009808
      %v1898 = vunpack.c.0.s8 %v1897
      %v1899 = vlaneseq
      %v1900 = vshrl.u32 %v1899, 7
      %v1901 = vsub.s32 %v1898, %v1900
      %v1902 = vrot.slane %v1895, %v1901
      %v1903 = vcombine.low %v1493, %v1494
      %v1905 = vunpack.c.l.s4 1983009808
      %v1906 = vunpack.c.0.s8 %v1905
      %v1907 = vlaneseq
      %v1908 = vshrl.u32 %v1907, 7
      %v1909 = vsub.s32 %v1906, %v1908
      %v1910 = vrot.slane %v1903, %v1909
      %v1911 = vcombine.low %v1485, %v1492
      %v1913 = vunpack.c.l.s4 1983009808
      %v1914 = vunpack.c.0.s8 %v1913
      %v1915 = vlaneseq
      %v1916 = vshrl.u32 %v1915, 7
      %v1917 = vsub.s32 %v1914, %v1916
      %v1918 = vrot.slane %v1911, %v1917
      %v1919 = vcombine.low %v1495, %v1496
      %v1921 = vunpack.c.l.s4 1983009808
      %v1922 = vunpack.c.0.s8 %v1921
      %v1923 = vlaneseq
      %v1924 = vshrl.u32 %v1923, 7
      %v1925 = vsub.s32 %v1922, %v1924
      %v1926 = vrot.slane %v1919, %v1925
      %v1927 = vcombine.low %v1902, %v1910
      %v1929 = vunpack.c.l.s4 1934713408
      %v1930 = vunpack.c.0.s8 %v1929
      %v1931 = vlaneseq
      %v1932 = vshrl.u32 %v1931, 7
      %v1933 = vsub.s32 %v1930, %v1932
      %v1934 = vrot.slane %v1927, %v1933
      %v1935 = vcombine.low %v1918, %v1926
      %v1937 = vunpack.c.l.s4 1934713408
      %v1938 = vunpack.c.0.s8 %v1937
      %v1939 = vlaneseq
      %v1940 = vshrl.u32 %v1939, 7
      %v1941 = vsub.s32 %v1938, %v1940
      %v1942 = vrot.slane %v1935, %v1941
      %v1943 = vcombine.low %v1934, %v1942
      %v1944 = vcombine.high %v1934, %v1942
      %v1945 = vcombine.low %v1535, %v1542
      %v1947 = vunpack.c.l.s4 1983009808
      %v1948 = vunpack.c.0.s8 %v1947
      %v1949 = vlaneseq
      %v1950 = vshrl.u32 %v1949, 7
      %v1951 = vsub.s32 %v1948, %v1950
      %v1952 = vrot.slane %v1945, %v1951
      %v1953 = vcombine.low %v1559, %v1560
      %v1955 = vunpack.c.l.s4 1983009808
      %v1956 = vunpack.c.0.s8 %v1955
      %v1957 = vlaneseq
      %v1958 = vshrl.u32 %v1957, 7
      %v1959 = vsub.s32 %v1956, %v1958
      %v1960 = vrot.slane %v1953, %v1959
      %v1961 = vcombine.low %v1551, %v1558
      %v1963 = vunpack.c.l.s4 1983009808
      %v1964 = vunpack.c.0.s8 %v1963
      %v1965 = vlaneseq
      %v1966 = vshrl.u32 %v1965, 7
      %v1967 = vsub.s32 %v1964, %v1966
      %v1968 = vrot.slane %v1961, %v1967
      %v1969 = vcombine.low %v1561, %v1562
      %v1971 = vunpack.c.l.s4 1983009808
      %v1972 = vunpack.c.0.s8 %v1971
      %v1973 = vlaneseq
      %v1974 = vshrl.u32 %v1973, 7
      %v1975 = vsub.s32 %v1972, %v1974
      %v1976 = vrot.slane %v1969, %v1975
      %v1977 = vcombine.low %v1952, %v1960
      %v1979 = vunpack.c.l.s4 1934713408
      %v1980 = vunpack.c.0.s8 %v1979
      %v1981 = vlaneseq
      %v1982 = vshrl.u32 %v1981, 7
      %v1983 = vsub.s32 %v1980, %v1982
      %v1984 = vrot.slane %v1977, %v1983
      %v1985 = vcombine.low %v1968, %v1976
      %v1987 = vunpack.c.l.s4 1934713408
      %v1988 = vunpack.c.0.s8 %v1987
      %v1989 = vlaneseq
      %v1990 = vshrl.u32 %v1989, 7
      %v1991 = vsub.s32 %v1988, %v1990
      %v1992 = vrot.slane %v1985, %v1991
      %v1993 = vcombine.low %v1984, %v1992
      %v1994 = vcombine.high %v1984, %v1992
      %v1995 = vcombine.low %v1601, %v1608
      %v1997 = vunpack.c.l.s4 1983009808
      %v1998 = vunpack.c.0.s8 %v1997
      %v1999 = vlaneseq
      %v2000 = vshrl.u32 %v1999, 7
      %v2001 = vsub.s32 %v1998, %v2000
      %v2002 = vrot.slane %v1995, %v2001
      %v2003 = vcombine.low %v1625, %v1626
      %v2005 = vunpack.c.l.s4 1983009808
      %v2006 = vunpack.c.0.s8 %v2005
      %v2007 = vlaneseq
      %v2008 = vshrl.u32 %v2007, 7
      %v2009 = vsub.s32 %v2006, %v2008
      %v2010 = vrot.slane %v2003, %v2009
      %v2011 = vcombine.low %v1617, %v1624
      %v2013 = vunpack.c.l.s4 1983009808
      %v2014 = vunpack.c.0.s8 %v2013
      %v2015 = vlaneseq
      %v2016 = vshrl.u32 %v2015, 7
      %v2017 = vsub.s32 %v2014, %v2016
      %v2018 = vrot.slane %v2011, %v2017
      %v2019 = vcombine.low %v1627, %v1628
      %v2021 = vunpack.c.l.s4 1983009808
      %v2022 = vunpack.c.0.s8 %v2021
      %v2023 = vlaneseq
      %v2024 = vshrl.u32 %v2023, 7
      %v2025 = vsub.s32 %v2022, %v2024
      %v2026 = vrot.slane %v2019, %v2025
      %v2027 = vcombine.low %v2002, %v2010
      %v2029 = vunpack.c.l.s4 1934713408
      %v2030 = vunpack.c.0.s8 %v2029
      %v2031 = vlaneseq
      %v2032 = vshrl.u32 %v2031, 7
      %v2033 = vsub.s32 %v2030, %v2032
      %v2034 = vrot.slane %v2027, %v2033
      %v2035 = vcombine.low %v2018, %v2026
      %v2037 = vunpack.c.l.s4 1934713408
      %v2038 = vunpack.c.0.s8 %v2037
      %v2039 = vlaneseq
      %v2040 = vshrl.u32 %v2039, 7
      %v2041 = vsub.s32 %v2038, %v2040
      %v2042 = vrot.slane %v2035, %v2041
      %v2043 = vcombine.low %v2034, %v2042
      %v2044 = vcombine.high %v2034, %v2042
      %v2045 = vcombine.low %v1667, %v1674
      %v2047 = vunpack.c.l.s4 1983009808
      %v2048 = vunpack.c.0.s8 %v2047
      %v2049 = vlaneseq
      %v2050 = vshrl.u32 %v2049, 7
      %v2051 = vsub.s32 %v2048, %v2050
      %v2052 = vrot.slane %v2045, %v2051
      %v2053 = vcombine.low %v1691, %v1692
      %v2055 = vunpack.c.l.s4 1983009808
      %v2056 = vunpack.c.0.s8 %v2055
      %v2057 = vlaneseq
      %v2058 = vshrl.u32 %v2057, 7
      %v2059 = vsub.s32 %v2056, %v2058
      %v2060 = vrot.slane %v2053, %v2059
      %v2061 = vcombine.low %v1683, %v1690
      %v2063 = vunpack.c.l.s4 1983009808
      %v2064 = vunpack.c.0.s8 %v2063
      %v2065 = vlaneseq
      %v2066 = vshrl.u32 %v2065, 7
      %v2067 = vsub.s32 %v2064, %v2066
      %v2068 = vrot.slane %v2061, %v2067
      %v2069 = vcombine.low %v1693, %v1694
      %v2071 = vunpack.c.l.s4 1983009808
      %v2072 = vunpack.c.0.s8 %v2071
      %v2073 = vlaneseq
      %v2074 = vshrl.u32 %v2073, 7
      %v2075 = vsub.s32 %v2072, %v2074
      %v2076 = vrot.slane %v2069, %v2075
      %v2077 = vcombine.low %v2052, %v2060
      %v2079 = vunpack.c.l.s4 1934713408
      %v2080 = vunpack.c.0.s8 %v2079
      %v2081 = vlaneseq
      %v2082 = vshrl.u32 %v2081, 7
      %v2083 = vsub.s32 %v2080, %v2082
      %v2084 = vrot.slane %v2077, %v2083
      %v2085 = vcombine.low %v2068, %v2076
      %v2087 = vunpack.c.l.s4 1934713408
      %v2088 = vunpack.c.0.s8 %v2087
      %v2089 = vlaneseq
      %v2090 = vshrl.u32 %v2089, 7
      %v2091 = vsub.s32 %v2088, %v2090
      %v2092 = vrot.slane %v2085, %v2091
      %v2093 = vcombine.low %v2084, %v2092
      %v2094 = vcombine.high %v2084, %v2092
      %v2097 = vpack.i.b16 %v1793, %v1743
      %v2098 = vshrl.u32 %v1743, 16
      %v2099 = vshrl.u32 %v1793, 16
      %v2100 = vpack.i.b16 %v2099, %v2098
      %v2103 = vpack.i.b16 %v1794, %v1744
      %v2104 = vshrl.u32 %v1744, 16
      %v2105 = vshrl.u32 %v1794, 16
      %v2106 = vpack.i.b16 %v2105, %v2104
      %v2109 = vpack.i.b16 %v1893, %v1843
      %v2110 = vshrl.u32 %v1843, 16
      %v2111 = vshrl.u32 %v1893, 16
      %v2112 = vpack.i.b16 %v2111, %v2110
      %v2115 = vpack.i.b16 %v1894, %v1844
      %v2116 = vshrl.u32 %v1844, 16
      %v2117 = vshrl.u32 %v1894, 16
      %v2118 = vpack.i.b16 %v2117, %v2116
      %v2121 = vpack.i.b16 %v1993, %v1943
      %v2122 = vshrl.u32 %v1943, 16
      %v2123 = vshrl.u32 %v1993, 16
      %v2124 = vpack.i.b16 %v2123, %v2122
      %v2127 = vpack.i.b16 %v1994, %v1944
      %v2128 = vshrl.u32 %v1944, 16
      %v2129 = vshrl.u32 %v1994, 16
      %v2130 = vpack.i.b16 %v2129, %v2128
      %v2133 = vpack.i.b16 %v2093, %v2043
      %v2134 = vshrl.u32 %v2043, 16
      %v2135 = vshrl.u32 %v2093, 16
      %v2136 = vpack.i.b16 %v2135, %v2134
      %v2139 = vpack.i.b16 %v2094, %v2044
      %v2140 = vshrl.u32 %v2044, 16
      %v2141 = vshrl.u32 %v2094, 16
      %v2142 = vpack.i.b16 %v2141, %v2140
      %2147 = vrot.lane.b32.xlu0 %v1058, 96
      %v2148 = vpop.permute.xlu0 %2147
      %2149 = vrot.lane.b32.xlu0 %v1061, 96
      %v2150 = vpop.permute.xlu0 %2149
      %2151 = vrot.lane.b32.xlu0 %v1064, 96
      %v2152 = vpop.permute.xlu0 %2151
      %2153 = vrot.lane.b32.xlu0 %v1067, 96
      %v2154 = vpop.permute.xlu0 %2153
      %2155 = vrot.lane.b32.xlu0 %v1058, 64
      %v2156 = vpop.permute.xlu0 %2155
      %2157 = vrot.lane.b32.xlu0 %v1061, 64
      %v2158 = vpop.permute.xlu0 %2157
      %2159 = vrot.lane.b32.xlu0 %v1064, 64
      %v2160 = vpop.permute.xlu0 %2159
      %2161 = vrot.lane.b32.xlu0 %v1067, 64
      %v2162 = vpop.permute.xlu0 %2161
      %2163 = vrot.lane.b32.xlu0 %v1058, 32
      %v2164 = vpop.permute.xlu0 %2163
      %2165 = vrot.lane.b32.xlu0 %v1061, 32
      %v2166 = vpop.permute.xlu0 %2165
      %2167 = vrot.lane.b32.xlu0 %v1064, 32
      %v2168 = vpop.permute.xlu0 %2167
      %2169 = vrot.lane.b32.xlu0 %v1067, 32
      %v2170 = vpop.permute.xlu0 %2169
      %v2173 = vpack.i.b16 %v2148, %v1058
      %v2175 = vshrl.u32 %v1058, 16
      %v2176 = vshrl.u32 %v2148, 16
      %v2177 = vpack.i.b16 %v2176, %v2175
      %v2181 = vpack.i.b16 %v2164, %v2156
      %v2183 = vshrl.u32 %v2156, 16
      %v2184 = vshrl.u32 %v2164, 16
      %v2185 = vpack.i.b16 %v2184, %v2183
      %v2189 = vpack.i.b16 %v2150, %v1061
      %v2191 = vshrl.u32 %v1061, 16
      %v2192 = vshrl.u32 %v2150, 16
      %v2193 = vpack.i.b16 %v2192, %v2191
      %v2197 = vpack.i.b16 %v2166, %v2158
      %v2199 = vshrl.u32 %v2158, 16
      %v2200 = vshrl.u32 %v2166, 16
      %v2201 = vpack.i.b16 %v2200, %v2199
      %v2205 = vpack.i.b16 %v2152, %v1064
      %v2207 = vshrl.u32 %v1064, 16
      %v2208 = vshrl.u32 %v2152, 16
      %v2209 = vpack.i.b16 %v2208, %v2207
      %v2213 = vpack.i.b16 %v2168, %v2160
      %v2215 = vshrl.u32 %v2160, 16
      %v2216 = vshrl.u32 %v2168, 16
      %v2217 = vpack.i.b16 %v2216, %v2215
      %v2221 = vpack.i.b16 %v2154, %v1067
      %v2223 = vshrl.u32 %v1067, 16
      %v2224 = vshrl.u32 %v2154, 16
      %v2225 = vpack.i.b16 %v2224, %v2223
      %v2229 = vpack.i.b16 %v2170, %v2162
      %v2231 = vshrl.u32 %v2162, 16
      %v2232 = vshrl.u32 %v2170, 16
      %v2233 = vpack.i.b16 %v2232, %v2231
      %v2235 = vcombine.high %v2173, %v1114
      %v2237 = vunpack.c.l.s4 1983009808
      %v2238 = vunpack.c.0.s8 %v2237
      %v2239 = vlaneseq
      %v2240 = vshrl.u32 %v2239, 7
      %v2241 = vsub.s32 %v2238, %v2240
      %v2242 = vrot.slane %v2173, %v2241
      %v2244 = vunpack.c.l.s4 1983009808
      %v2245 = vunpack.c.0.s8 %v2244
      %v2246 = vlaneseq
      %v2247 = vshrl.u32 %v2246, 7
      %v2248 = vsub.s32 %v2245, %v2247
      %v2249 = vrot.slane %v2235, %v2248
      %v2250 = vcombine.high %v2181, %v1114
      %v2252 = vunpack.c.l.s4 1983009808
      %v2253 = vunpack.c.0.s8 %v2252
      %v2254 = vlaneseq
      %v2255 = vshrl.u32 %v2254, 7
      %v2256 = vsub.s32 %v2253, %v2255
      %v2257 = vrot.slane %v2181, %v2256
      %v2259 = vunpack.c.l.s4 1983009808
      %v2260 = vunpack.c.0.s8 %v2259
      %v2261 = vlaneseq
      %v2262 = vshrl.u32 %v2261, 7
      %v2263 = vsub.s32 %v2260, %v2262
      %v2264 = vrot.slane %v2250, %v2263
      %v2265 = vcombine.low %v2242, %v2257
      %v2266 = vcombine.high %v2242, %v2257
      %v2268 = vunpack.c.l.s4 1934713408
      %v2269 = vunpack.c.0.s8 %v2268
      %v2270 = vlaneseq
      %v2271 = vshrl.u32 %v2270, 7
      %v2272 = vsub.s32 %v2269, %v2271
      %v2273 = vrot.slane %v2265, %v2272
      %v2275 = vunpack.c.l.s4 1934713408
      %v2276 = vunpack.c.0.s8 %v2275
      %v2277 = vlaneseq
      %v2278 = vshrl.u32 %v2277, 7
      %v2279 = vsub.s32 %v2276, %v2278
      %v2280 = vrot.slane %v2266, %v2279
      %v2281 = vcombine.low %v2249, %v2264
      %v2282 = vcombine.high %v2249, %v2264
      %v2284 = vunpack.c.l.s4 1934713408
      %v2285 = vunpack.c.0.s8 %v2284
      %v2286 = vlaneseq
      %v2287 = vshrl.u32 %v2286, 7
      %v2288 = vsub.s32 %v2285, %v2287
      %v2289 = vrot.slane %v2281, %v2288
      %v2291 = vunpack.c.l.s4 1934713408
      %v2292 = vunpack.c.0.s8 %v2291
      %v2293 = vlaneseq
      %v2294 = vshrl.u32 %v2293, 7
      %v2295 = vsub.s32 %v2292, %v2294
      %v2296 = vrot.slane %v2282, %v2295
      %v2297 = vcombine.high %v2273, 0
      %v2298 = vcombine.high %v2280, 0
      %v2299 = vcombine.high %v2289, 0
      %v2300 = vcombine.high %v2296, 0
      %v2301 = vcombine.high %v2177, %v1117
      %v2303 = vunpack.c.l.s4 1983009808
      %v2304 = vunpack.c.0.s8 %v2303
      %v2305 = vlaneseq
      %v2306 = vshrl.u32 %v2305, 7
      %v2307 = vsub.s32 %v2304, %v2306
      %v2308 = vrot.slane %v2177, %v2307
      %v2310 = vunpack.c.l.s4 1983009808
      %v2311 = vunpack.c.0.s8 %v2310
      %v2312 = vlaneseq
      %v2313 = vshrl.u32 %v2312, 7
      %v2314 = vsub.s32 %v2311, %v2313
      %v2315 = vrot.slane %v2301, %v2314
      %v2316 = vcombine.high %v2185, %v1117
      %v2318 = vunpack.c.l.s4 1983009808
      %v2319 = vunpack.c.0.s8 %v2318
      %v2320 = vlaneseq
      %v2321 = vshrl.u32 %v2320, 7
      %v2322 = vsub.s32 %v2319, %v2321
      %v2323 = vrot.slane %v2185, %v2322
      %v2325 = vunpack.c.l.s4 1983009808
      %v2326 = vunpack.c.0.s8 %v2325
      %v2327 = vlaneseq
      %v2328 = vshrl.u32 %v2327, 7
      %v2329 = vsub.s32 %v2326, %v2328
      %v2330 = vrot.slane %v2316, %v2329
      %v2331 = vcombine.low %v2308, %v2323
      %v2332 = vcombine.high %v2308, %v2323
      %v2334 = vunpack.c.l.s4 1934713408
      %v2335 = vunpack.c.0.s8 %v2334
      %v2336 = vlaneseq
      %v2337 = vshrl.u32 %v2336, 7
      %v2338 = vsub.s32 %v2335, %v2337
      %v2339 = vrot.slane %v2331, %v2338
      %v2341 = vunpack.c.l.s4 1934713408
      %v2342 = vunpack.c.0.s8 %v2341
      %v2343 = vlaneseq
      %v2344 = vshrl.u32 %v2343, 7
      %v2345 = vsub.s32 %v2342, %v2344
      %v2346 = vrot.slane %v2332, %v2345
      %v2347 = vcombine.low %v2315, %v2330
      %v2348 = vcombine.high %v2315, %v2330
      %v2350 = vunpack.c.l.s4 1934713408
      %v2351 = vunpack.c.0.s8 %v2350
      %v2352 = vlaneseq
      %v2353 = vshrl.u32 %v2352, 7
      %v2354 = vsub.s32 %v2351, %v2353
      %v2355 = vrot.slane %v2347, %v2354
      %v2357 = vunpack.c.l.s4 1934713408
      %v2358 = vunpack.c.0.s8 %v2357
      %v2359 = vlaneseq
      %v2360 = vshrl.u32 %v2359, 7
      %v2361 = vsub.s32 %v2358, %v2360
      %v2362 = vrot.slane %v2348, %v2361
      %v2363 = vcombine.high %v2339, 0
      %v2364 = vcombine.high %v2346, 0
      %v2365 = vcombine.high %v2355, 0
      %v2366 = vcombine.high %v2362, 0
      %v2367 = vcombine.high %v2189, %v1114
      %v2369 = vunpack.c.l.s4 1983009808
      %v2370 = vunpack.c.0.s8 %v2369
      %v2371 = vlaneseq
      %v2372 = vshrl.u32 %v2371, 7
      %v2373 = vsub.s32 %v2370, %v2372
      %v2374 = vrot.slane %v2189, %v2373
      %v2376 = vunpack.c.l.s4 1983009808
      %v2377 = vunpack.c.0.s8 %v2376
      %v2378 = vlaneseq
      %v2379 = vshrl.u32 %v2378, 7
      %v2380 = vsub.s32 %v2377, %v2379
      %v2381 = vrot.slane %v2367, %v2380
      %v2382 = vcombine.high %v2197, %v1114
      %v2384 = vunpack.c.l.s4 1983009808
      %v2385 = vunpack.c.0.s8 %v2384
      %v2386 = vlaneseq
      %v2387 = vshrl.u32 %v2386, 7
      %v2388 = vsub.s32 %v2385, %v2387
      %v2389 = vrot.slane %v2197, %v2388
      %v2391 = vunpack.c.l.s4 1983009808
      %v2392 = vunpack.c.0.s8 %v2391
      %v2393 = vlaneseq
      %v2394 = vshrl.u32 %v2393, 7
      %v2395 = vsub.s32 %v2392, %v2394
      %v2396 = vrot.slane %v2382, %v2395
      %v2397 = vcombine.low %v2374, %v2389
      %v2398 = vcombine.high %v2374, %v2389
      %v2400 = vunpack.c.l.s4 1934713408
      %v2401 = vunpack.c.0.s8 %v2400
      %v2402 = vlaneseq
      %v2403 = vshrl.u32 %v2402, 7
      %v2404 = vsub.s32 %v2401, %v2403
      %v2405 = vrot.slane %v2397, %v2404
      %v2407 = vunpack.c.l.s4 1934713408
      %v2408 = vunpack.c.0.s8 %v2407
      %v2409 = vlaneseq
      %v2410 = vshrl.u32 %v2409, 7
      %v2411 = vsub.s32 %v2408, %v2410
      %v2412 = vrot.slane %v2398, %v2411
      %v2413 = vcombine.low %v2381, %v2396
      %v2414 = vcombine.high %v2381, %v2396
      %v2416 = vunpack.c.l.s4 1934713408
      %v2417 = vunpack.c.0.s8 %v2416
      %v2418 = vlaneseq
      %v2419 = vshrl.u32 %v2418, 7
      %v2420 = vsub.s32 %v2417, %v2419
      %v2421 = vrot.slane %v2413, %v2420
      %v2423 = vunpack.c.l.s4 1934713408
      %v2424 = vunpack.c.0.s8 %v2423
      %v2425 = vlaneseq
      %v2426 = vshrl.u32 %v2425, 7
      %v2427 = vsub.s32 %v2424, %v2426
      %v2428 = vrot.slane %v2414, %v2427
      %v2429 = vcombine.high %v2405, 0
      %v2430 = vcombine.high %v2412, 0
      %v2431 = vcombine.high %v2421, 0
      %v2432 = vcombine.high %v2428, 0
      %v2433 = vcombine.high %v2193, %v1117
      %v2435 = vunpack.c.l.s4 1983009808
      %v2436 = vunpack.c.0.s8 %v2435
      %v2437 = vlaneseq
      %v2438 = vshrl.u32 %v2437, 7
      %v2439 = vsub.s32 %v2436, %v2438
      %v2440 = vrot.slane %v2193, %v2439
      %v2442 = vunpack.c.l.s4 1983009808
      %v2443 = vunpack.c.0.s8 %v2442
      %v2444 = vlaneseq
      %v2445 = vshrl.u32 %v2444, 7
      %v2446 = vsub.s32 %v2443, %v2445
      %v2447 = vrot.slane %v2433, %v2446
      %v2448 = vcombine.high %v2201, %v1117
      %v2450 = vunpack.c.l.s4 1983009808
      %v2451 = vunpack.c.0.s8 %v2450
      %v2452 = vlaneseq
      %v2453 = vshrl.u32 %v2452, 7
      %v2454 = vsub.s32 %v2451, %v2453
      %v2455 = vrot.slane %v2201, %v2454
      %v2457 = vunpack.c.l.s4 1983009808
      %v2458 = vunpack.c.0.s8 %v2457
      %v2459 = vlaneseq
      %v2460 = vshrl.u32 %v2459, 7
      %v2461 = vsub.s32 %v2458, %v2460
      %v2462 = vrot.slane %v2448, %v2461
      %v2463 = vcombine.low %v2440, %v2455
      %v2464 = vcombine.high %v2440, %v2455
      %v2466 = vunpack.c.l.s4 1934713408
      %v2467 = vunpack.c.0.s8 %v2466
      %v2468 = vlaneseq
      %v2469 = vshrl.u32 %v2468, 7
      %v2470 = vsub.s32 %v2467, %v2469
      %v2471 = vrot.slane %v2463, %v2470
      %v2473 = vunpack.c.l.s4 1934713408
      %v2474 = vunpack.c.0.s8 %v2473
      %v2475 = vlaneseq
      %v2476 = vshrl.u32 %v2475, 7
      %v2477 = vsub.s32 %v2474, %v2476
      %v2478 = vrot.slane %v2464, %v2477
      %v2479 = vcombine.low %v2447, %v2462
      %v2480 = vcombine.high %v2447, %v2462
      %v2482 = vunpack.c.l.s4 1934713408
      %v2483 = vunpack.c.0.s8 %v2482
      %v2484 = vlaneseq
      %v2485 = vshrl.u32 %v2484, 7
      %v2486 = vsub.s32 %v2483, %v2485
      %v2487 = vrot.slane %v2479, %v2486
      %v2489 = vunpack.c.l.s4 1934713408
      %v2490 = vunpack.c.0.s8 %v2489
      %v2491 = vlaneseq
      %v2492 = vshrl.u32 %v2491, 7
      %v2493 = vsub.s32 %v2490, %v2492
      %v2494 = vrot.slane %v2480, %v2493
      %v2495 = vcombine.high %v2471, 0
      %v2496 = vcombine.high %v2478, 0
      %v2497 = vcombine.high %v2487, 0
      %v2498 = vcombine.high %v2494, 0
      %v2499 = vcombine.high %v2205, %v1114
      %v2501 = vunpack.c.l.s4 1983009808
      %v2502 = vunpack.c.0.s8 %v2501
      %v2503 = vlaneseq
      %v2504 = vshrl.u32 %v2503, 7
      %v2505 = vsub.s32 %v2502, %v2504
      %v2506 = vrot.slane %v2205, %v2505
      %v2508 = vunpack.c.l.s4 1983009808
      %v2509 = vunpack.c.0.s8 %v2508
      %v2510 = vlaneseq
      %v2511 = vshrl.u32 %v2510, 7
      %v2512 = vsub.s32 %v2509, %v2511
      %v2513 = vrot.slane %v2499, %v2512
      %v2514 = vcombine.high %v2213, %v1114
      %v2516 = vunpack.c.l.s4 1983009808
      %v2517 = vunpack.c.0.s8 %v2516
      %v2518 = vlaneseq
      %v2519 = vshrl.u32 %v2518, 7
      %v2520 = vsub.s32 %v2517, %v2519
      %v2521 = vrot.slane %v2213, %v2520
      %v2523 = vunpack.c.l.s4 1983009808
      %v2524 = vunpack.c.0.s8 %v2523
      %v2525 = vlaneseq
      %v2526 = vshrl.u32 %v2525, 7
      %v2527 = vsub.s32 %v2524, %v2526
      %v2528 = vrot.slane %v2514, %v2527
      %v2529 = vcombine.low %v2506, %v2521
      %v2530 = vcombine.high %v2506, %v2521
      %v2532 = vunpack.c.l.s4 1934713408
      %v2533 = vunpack.c.0.s8 %v2532
      %v2534 = vlaneseq
      %v2535 = vshrl.u32 %v2534, 7
      %v2536 = vsub.s32 %v2533, %v2535
      %v2537 = vrot.slane %v2529, %v2536
      %v2539 = vunpack.c.l.s4 1934713408
      %v2540 = vunpack.c.0.s8 %v2539
      %v2541 = vlaneseq
      %v2542 = vshrl.u32 %v2541, 7
      %v2543 = vsub.s32 %v2540, %v2542
      %v2544 = vrot.slane %v2530, %v2543
      %v2545 = vcombine.low %v2513, %v2528
      %v2546 = vcombine.high %v2513, %v2528
      %v2548 = vunpack.c.l.s4 1934713408
      %v2549 = vunpack.c.0.s8 %v2548
      %v2550 = vlaneseq
      %v2551 = vshrl.u32 %v2550, 7
      %v2552 = vsub.s32 %v2549, %v2551
      %v2553 = vrot.slane %v2545, %v2552
      %v2555 = vunpack.c.l.s4 1934713408
      %v2556 = vunpack.c.0.s8 %v2555
      %v2557 = vlaneseq
      %v2558 = vshrl.u32 %v2557, 7
      %v2559 = vsub.s32 %v2556, %v2558
      %v2560 = vrot.slane %v2546, %v2559
      %v2561 = vcombine.high %v2537, 0
      %v2562 = vcombine.high %v2544, 0
      %v2563 = vcombine.high %v2553, 0
      %v2564 = vcombine.high %v2560, 0
      %v2565 = vcombine.high %v2209, %v1117
      %v2567 = vunpack.c.l.s4 1983009808
      %v2568 = vunpack.c.0.s8 %v2567
      %v2569 = vlaneseq
      %v2570 = vshrl.u32 %v2569, 7
      %v2571 = vsub.s32 %v2568, %v2570
      %v2572 = vrot.slane %v2209, %v2571
      %v2574 = vunpack.c.l.s4 1983009808
      %v2575 = vunpack.c.0.s8 %v2574
      %v2576 = vlaneseq
      %v2577 = vshrl.u32 %v2576, 7
      %v2578 = vsub.s32 %v2575, %v2577
      %v2579 = vrot.slane %v2565, %v2578
      %v2580 = vcombine.high %v2217, %v1117
      %v2582 = vunpack.c.l.s4 1983009808
      %v2583 = vunpack.c.0.s8 %v2582
      %v2584 = vlaneseq
      %v2585 = vshrl.u32 %v2584, 7
      %v2586 = vsub.s32 %v2583, %v2585
      %v2587 = vrot.slane %v2217, %v2586
      %v2589 = vunpack.c.l.s4 1983009808
      %v2590 = vunpack.c.0.s8 %v2589
      %v2591 = vlaneseq
      %v2592 = vshrl.u32 %v2591, 7
      %v2593 = vsub.s32 %v2590, %v2592
      %v2594 = vrot.slane %v2580, %v2593
      %v2595 = vcombine.low %v2572, %v2587
      %v2596 = vcombine.high %v2572, %v2587
      %v2598 = vunpack.c.l.s4 1934713408
      %v2599 = vunpack.c.0.s8 %v2598
      %v2600 = vlaneseq
      %v2601 = vshrl.u32 %v2600, 7
      %v2602 = vsub.s32 %v2599, %v2601
      %v2603 = vrot.slane %v2595, %v2602
      %v2605 = vunpack.c.l.s4 1934713408
      %v2606 = vunpack.c.0.s8 %v2605
      %v2607 = vlaneseq
      %v2608 = vshrl.u32 %v2607, 7
      %v2609 = vsub.s32 %v2606, %v2608
      %v2610 = vrot.slane %v2596, %v2609
      %v2611 = vcombine.low %v2579, %v2594
      %v2612 = vcombine.high %v2579, %v2594
      %v2614 = vunpack.c.l.s4 1934713408
      %v2615 = vunpack.c.0.s8 %v2614
      %v2616 = vlaneseq
      %v2617 = vshrl.u32 %v2616, 7
      %v2618 = vsub.s32 %v2615, %v2617
      %v2619 = vrot.slane %v2611, %v2618
      %v2621 = vunpack.c.l.s4 1934713408
      %v2622 = vunpack.c.0.s8 %v2621
      %v2623 = vlaneseq
      %v2624 = vshrl.u32 %v2623, 7
      %v2625 = vsub.s32 %v2622, %v2624
      %v2626 = vrot.slane %v2612, %v2625
      %v2627 = vcombine.high %v2603, 0
      %v2628 = vcombine.high %v2610, 0
      %v2629 = vcombine.high %v2619, 0
      %v2630 = vcombine.high %v2626, 0
      %v2631 = vcombine.high %v2221, %v1114
      %v2633 = vunpack.c.l.s4 1983009808
      %v2634 = vunpack.c.0.s8 %v2633
      %v2635 = vlaneseq
      %v2636 = vshrl.u32 %v2635, 7
      %v2637 = vsub.s32 %v2634, %v2636
      %v2638 = vrot.slane %v2221, %v2637
      %v2640 = vunpack.c.l.s4 1983009808
      %v2641 = vunpack.c.0.s8 %v2640
      %v2642 = vlaneseq
      %v2643 = vshrl.u32 %v2642, 7
      %v2644 = vsub.s32 %v2641, %v2643
      %v2645 = vrot.slane %v2631, %v2644
      %v2646 = vcombine.high %v2229, %v1114
      %v2648 = vunpack.c.l.s4 1983009808
      %v2649 = vunpack.c.0.s8 %v2648
      %v2650 = vlaneseq
      %v2651 = vshrl.u32 %v2650, 7
      %v2652 = vsub.s32 %v2649, %v2651
      %v2653 = vrot.slane %v2229, %v2652
      %v2655 = vunpack.c.l.s4 1983009808
      %v2656 = vunpack.c.0.s8 %v2655
      %v2657 = vlaneseq
      %v2658 = vshrl.u32 %v2657, 7
      %v2659 = vsub.s32 %v2656, %v2658
      %v2660 = vrot.slane %v2646, %v2659
      %v2661 = vcombine.low %v2638, %v2653
      %v2662 = vcombine.high %v2638, %v2653
      %v2664 = vunpack.c.l.s4 1934713408
      %v2665 = vunpack.c.0.s8 %v2664
      %v2666 = vlaneseq
      %v2667 = vshrl.u32 %v2666, 7
      %v2668 = vsub.s32 %v2665, %v2667
      %v2669 = vrot.slane %v2661, %v2668
      %v2671 = vunpack.c.l.s4 1934713408
      %v2672 = vunpack.c.0.s8 %v2671
      %v2673 = vlaneseq
      %v2674 = vshrl.u32 %v2673, 7
      %v2675 = vsub.s32 %v2672, %v2674
      %v2676 = vrot.slane %v2662, %v2675
      %v2677 = vcombine.low %v2645, %v2660
      %v2678 = vcombine.high %v2645, %v2660
      %v2680 = vunpack.c.l.s4 1934713408
      %v2681 = vunpack.c.0.s8 %v2680
      %v2682 = vlaneseq
      %v2683 = vshrl.u32 %v2682, 7
      %v2684 = vsub.s32 %v2681, %v2683
      %v2685 = vrot.slane %v2677, %v2684
      %v2687 = vunpack.c.l.s4 1934713408
      %v2688 = vunpack.c.0.s8 %v2687
      %v2689 = vlaneseq
      %v2690 = vshrl.u32 %v2689, 7
      %v2691 = vsub.s32 %v2688, %v2690
      %v2692 = vrot.slane %v2678, %v2691
      %v2693 = vcombine.high %v2669, 0
      %v2694 = vcombine.high %v2676, 0
      %v2695 = vcombine.high %v2685, 0
      %v2696 = vcombine.high %v2692, 0
      %v2697 = vcombine.high %v2225, %v1117
      %v2699 = vunpack.c.l.s4 1983009808
      %v2700 = vunpack.c.0.s8 %v2699
      %v2701 = vlaneseq
      %v2702 = vshrl.u32 %v2701, 7
      %v2703 = vsub.s32 %v2700, %v2702
      %v2704 = vrot.slane %v2225, %v2703
      %v2706 = vunpack.c.l.s4 1983009808
      %v2707 = vunpack.c.0.s8 %v2706
      %v2708 = vlaneseq
      %v2709 = vshrl.u32 %v2708, 7
      %v2710 = vsub.s32 %v2707, %v2709
      %v2711 = vrot.slane %v2697, %v2710
      %v2712 = vcombine.high %v2233, %v1117
      %v2714 = vunpack.c.l.s4 1983009808
      %v2715 = vunpack.c.0.s8 %v2714
      %v2716 = vlaneseq
      %v2717 = vshrl.u32 %v2716, 7
      %v2718 = vsub.s32 %v2715, %v2717
      %v2719 = vrot.slane %v2233, %v2718
      %v2721 = vunpack.c.l.s4 1983009808
      %v2722 = vunpack.c.0.s8 %v2721
      %v2723 = vlaneseq
      %v2724 = vshrl.u32 %v2723, 7
      %v2725 = vsub.s32 %v2722, %v2724
      %v2726 = vrot.slane %v2712, %v2725
      %v2727 = vcombine.low %v2704, %v2719
      %v2728 = vcombine.high %v2704, %v2719
      %v2730 = vunpack.c.l.s4 1934713408
      %v2731 = vunpack.c.0.s8 %v2730
      %v2732 = vlaneseq
      %v2733 = vshrl.u32 %v2732, 7
      %v2734 = vsub.s32 %v2731, %v2733
      %v2735 = vrot.slane %v2727, %v2734
      %v2737 = vunpack.c.l.s4 1934713408
      %v2738 = vunpack.c.0.s8 %v2737
      %v2739 = vlaneseq
      %v2740 = vshrl.u32 %v2739, 7
      %v2741 = vsub.s32 %v2738, %v2740
      %v2742 = vrot.slane %v2728, %v2741
      %v2743 = vcombine.low %v2711, %v2726
      %v2744 = vcombine.high %v2711, %v2726
      %v2746 = vunpack.c.l.s4 1934713408
      %v2747 = vunpack.c.0.s8 %v2746
      %v2748 = vlaneseq
      %v2749 = vshrl.u32 %v2748, 7
      %v2750 = vsub.s32 %v2747, %v2749
      %v2751 = vrot.slane %v2743, %v2750
      %v2753 = vunpack.c.l.s4 1934713408
      %v2754 = vunpack.c.0.s8 %v2753
      %v2755 = vlaneseq
      %v2756 = vshrl.u32 %v2755, 7
      %v2757 = vsub.s32 %v2754, %v2756
      %v2758 = vrot.slane %v2744, %v2757
      %v2759 = vcombine.high %v2735, 0
      %v2760 = vcombine.high %v2742, 0
      %v2761 = vcombine.high %v2751, 0
      %v2762 = vcombine.high %v2758, 0
      %v2763 = vcombine.low %v2273, %v2280
      %v2765 = vunpack.c.l.s4 1983009808
      %v2766 = vunpack.c.0.s8 %v2765
      %v2767 = vlaneseq
      %v2768 = vshrl.u32 %v2767, 7
      %v2769 = vsub.s32 %v2766, %v2768
      %v2770 = vrot.slane %v2763, %v2769
      %v2771 = vcombine.low %v2297, %v2298
      %v2773 = vunpack.c.l.s4 1983009808
      %v2774 = vunpack.c.0.s8 %v2773
      %v2775 = vlaneseq
      %v2776 = vshrl.u32 %v2775, 7
      %v2777 = vsub.s32 %v2774, %v2776
      %v2778 = vrot.slane %v2771, %v2777
      %v2779 = vcombine.low %v2289, %v2296
      %v2781 = vunpack.c.l.s4 1983009808
      %v2782 = vunpack.c.0.s8 %v2781
      %v2783 = vlaneseq
      %v2784 = vshrl.u32 %v2783, 7
      %v2785 = vsub.s32 %v2782, %v2784
      %v2786 = vrot.slane %v2779, %v2785
      %v2787 = vcombine.low %v2299, %v2300
      %v2789 = vunpack.c.l.s4 1983009808
      %v2790 = vunpack.c.0.s8 %v2789
      %v2791 = vlaneseq
      %v2792 = vshrl.u32 %v2791, 7
      %v2793 = vsub.s32 %v2790, %v2792
      %v2794 = vrot.slane %v2787, %v2793
      %v2795 = vcombine.low %v2770, %v2778
      %v2797 = vunpack.c.l.s4 1934713408
      %v2798 = vunpack.c.0.s8 %v2797
      %v2799 = vlaneseq
      %v2800 = vshrl.u32 %v2799, 7
      %v2801 = vsub.s32 %v2798, %v2800
      %v2802 = vrot.slane %v2795, %v2801
      %v2803 = vcombine.low %v2786, %v2794
      %v2805 = vunpack.c.l.s4 1934713408
      %v2806 = vunpack.c.0.s8 %v2805
      %v2807 = vlaneseq
      %v2808 = vshrl.u32 %v2807, 7
      %v2809 = vsub.s32 %v2806, %v2808
      %v2810 = vrot.slane %v2803, %v2809
      %v2811 = vcombine.low %v2802, %v2810
      %v2812 = vcombine.high %v2802, %v2810
      %v2813 = vcombine.low %v2339, %v2346
      %v2815 = vunpack.c.l.s4 1983009808
      %v2816 = vunpack.c.0.s8 %v2815
      %v2817 = vlaneseq
      %v2818 = vshrl.u32 %v2817, 7
      %v2819 = vsub.s32 %v2816, %v2818
      %v2820 = vrot.slane %v2813, %v2819
      %v2821 = vcombine.low %v2363, %v2364
      %v2823 = vunpack.c.l.s4 1983009808
      %v2824 = vunpack.c.0.s8 %v2823
      %v2825 = vlaneseq
      %v2826 = vshrl.u32 %v2825, 7
      %v2827 = vsub.s32 %v2824, %v2826
      %v2828 = vrot.slane %v2821, %v2827
      %v2829 = vcombine.low %v2355, %v2362
      %v2831 = vunpack.c.l.s4 1983009808
      %v2832 = vunpack.c.0.s8 %v2831
      %v2833 = vlaneseq
      %v2834 = vshrl.u32 %v2833, 7
      %v2835 = vsub.s32 %v2832, %v2834
      %v2836 = vrot.slane %v2829, %v2835
      %v2837 = vcombine.low %v2365, %v2366
      %v2839 = vunpack.c.l.s4 1983009808
      %v2840 = vunpack.c.0.s8 %v2839
      %v2841 = vlaneseq
      %v2842 = vshrl.u32 %v2841, 7
      %v2843 = vsub.s32 %v2840, %v2842
      %v2844 = vrot.slane %v2837, %v2843
      %v2845 = vcombine.low %v2820, %v2828
      %v2847 = vunpack.c.l.s4 1934713408
      %v2848 = vunpack.c.0.s8 %v2847
      %v2849 = vlaneseq
      %v2850 = vshrl.u32 %v2849, 7
      %v2851 = vsub.s32 %v2848, %v2850
      %v2852 = vrot.slane %v2845, %v2851
      %v2853 = vcombine.low %v2836, %v2844
      %v2855 = vunpack.c.l.s4 1934713408
      %v2856 = vunpack.c.0.s8 %v2855
      %v2857 = vlaneseq
      %v2858 = vshrl.u32 %v2857, 7
      %v2859 = vsub.s32 %v2856, %v2858
      %v2860 = vrot.slane %v2853, %v2859
      %v2861 = vcombine.low %v2852, %v2860
      %v2862 = vcombine.high %v2852, %v2860
      %v2863 = vcombine.low %v2405, %v2412
      %v2865 = vunpack.c.l.s4 1983009808
      %v2866 = vunpack.c.0.s8 %v2865
      %v2867 = vlaneseq
      %v2868 = vshrl.u32 %v2867, 7
      %v2869 = vsub.s32 %v2866, %v2868
      %v2870 = vrot.slane %v2863, %v2869
      %v2871 = vcombine.low %v2429, %v2430
      %v2873 = vunpack.c.l.s4 1983009808
      %v2874 = vunpack.c.0.s8 %v2873
      %v2875 = vlaneseq
      %v2876 = vshrl.u32 %v2875, 7
      %v2877 = vsub.s32 %v2874, %v2876
      %v2878 = vrot.slane %v2871, %v2877
      %v2879 = vcombine.low %v2421, %v2428
      %v2881 = vunpack.c.l.s4 1983009808
      %v2882 = vunpack.c.0.s8 %v2881
      %v2883 = vlaneseq
      %v2884 = vshrl.u32 %v2883, 7
      %v2885 = vsub.s32 %v2882, %v2884
      %v2886 = vrot.slane %v2879, %v2885
      %v2887 = vcombine.low %v2431, %v2432
      %v2889 = vunpack.c.l.s4 1983009808
      %v2890 = vunpack.c.0.s8 %v2889
      %v2891 = vlaneseq
      %v2892 = vshrl.u32 %v2891, 7
      %v2893 = vsub.s32 %v2890, %v2892
      %v2894 = vrot.slane %v2887, %v2893
      %v2895 = vcombine.low %v2870, %v2878
      %v2897 = vunpack.c.l.s4 1934713408
      %v2898 = vunpack.c.0.s8 %v2897
      %v2899 = vlaneseq
      %v2900 = vshrl.u32 %v2899, 7
      %v2901 = vsub.s32 %v2898, %v2900
      %v2902 = vrot.slane %v2895, %v2901
      %v2903 = vcombine.low %v2886, %v2894
      %v2905 = vunpack.c.l.s4 1934713408
      %v2906 = vunpack.c.0.s8 %v2905
      %v2907 = vlaneseq
      %v2908 = vshrl.u32 %v2907, 7
      %v2909 = vsub.s32 %v2906, %v2908
      %v2910 = vrot.slane %v2903, %v2909
      %v2911 = vcombine.low %v2902, %v2910
      %v2912 = vcombine.high %v2902, %v2910
      %v2913 = vcombine.low %v2471, %v2478
      %v2915 = vunpack.c.l.s4 1983009808
      %v2916 = vunpack.c.0.s8 %v2915
      %v2917 = vlaneseq
      %v2918 = vshrl.u32 %v2917, 7
      %v2919 = vsub.s32 %v2916, %v2918
      %v2920 = vrot.slane %v2913, %v2919
      %v2921 = vcombine.low %v2495, %v2496
      %v2923 = vunpack.c.l.s4 1983009808
      %v2924 = vunpack.c.0.s8 %v2923
      %v2925 = vlaneseq
      %v2926 = vshrl.u32 %v2925, 7
      %v2927 = vsub.s32 %v2924, %v2926
      %v2928 = vrot.slane %v2921, %v2927
      %v2929 = vcombine.low %v2487, %v2494
      %v2931 = vunpack.c.l.s4 1983009808
      %v2932 = vunpack.c.0.s8 %v2931
      %v2933 = vlaneseq
      %v2934 = vshrl.u32 %v2933, 7
      %v2935 = vsub.s32 %v2932, %v2934
      %v2936 = vrot.slane %v2929, %v2935
      %v2937 = vcombine.low %v2497, %v2498
      %v2939 = vunpack.c.l.s4 1983009808
      %v2940 = vunpack.c.0.s8 %v2939
      %v2941 = vlaneseq
      %v2942 = vshrl.u32 %v2941, 7
      %v2943 = vsub.s32 %v2940, %v2942
      %v2944 = vrot.slane %v2937, %v2943
      %v2945 = vcombine.low %v2920, %v2928
      %v2947 = vunpack.c.l.s4 1934713408
      %v2948 = vunpack.c.0.s8 %v2947
      %v2949 = vlaneseq
      %v2950 = vshrl.u32 %v2949, 7
      %v2951 = vsub.s32 %v2948, %v2950
      %v2952 = vrot.slane %v2945, %v2951
      %v2953 = vcombine.low %v2936, %v2944
      %v2955 = vunpack.c.l.s4 1934713408
      %v2956 = vunpack.c.0.s8 %v2955
      %v2957 = vlaneseq
      %v2958 = vshrl.u32 %v2957, 7
      %v2959 = vsub.s32 %v2956, %v2958
      %v2960 = vrot.slane %v2953, %v2959
      %v2961 = vcombine.low %v2952, %v2960
      %v2962 = vcombine.high %v2952, %v2960
      %v2963 = vcombine.low %v2537, %v2544
      %v2965 = vunpack.c.l.s4 1983009808
      %v2966 = vunpack.c.0.s8 %v2965
      %v2967 = vlaneseq
      %v2968 = vshrl.u32 %v2967, 7
      %v2969 = vsub.s32 %v2966, %v2968
      %v2970 = vrot.slane %v2963, %v2969
      %v2971 = vcombine.low %v2561, %v2562
      %v2973 = vunpack.c.l.s4 1983009808
      %v2974 = vunpack.c.0.s8 %v2973
      %v2975 = vlaneseq
      %v2976 = vshrl.u32 %v2975, 7
      %v2977 = vsub.s32 %v2974, %v2976
      %v2978 = vrot.slane %v2971, %v2977
      %v2979 = vcombine.low %v2553, %v2560
      %v2981 = vunpack.c.l.s4 1983009808
      %v2982 = vunpack.c.0.s8 %v2981
      %v2983 = vlaneseq
      %v2984 = vshrl.u32 %v2983, 7
      %v2985 = vsub.s32 %v2982, %v2984
      %v2986 = vrot.slane %v2979, %v2985
      %v2987 = vcombine.low %v2563, %v2564
      %v2989 = vunpack.c.l.s4 1983009808
      %v2990 = vunpack.c.0.s8 %v2989
      %v2991 = vlaneseq
      %v2992 = vshrl.u32 %v2991, 7
      %v2993 = vsub.s32 %v2990, %v2992
      %v2994 = vrot.slane %v2987, %v2993
      %v2995 = vcombine.low %v2970, %v2978
      %v2997 = vunpack.c.l.s4 1934713408
      %v2998 = vunpack.c.0.s8 %v2997
      %v2999 = vlaneseq
      %v3000 = vshrl.u32 %v2999, 7
      %v3001 = vsub.s32 %v2998, %v3000
      %v3002 = vrot.slane %v2995, %v3001
      %v3003 = vcombine.low %v2986, %v2994
      %v3005 = vunpack.c.l.s4 1934713408
      %v3006 = vunpack.c.0.s8 %v3005
      %v3007 = vlaneseq
      %v3008 = vshrl.u32 %v3007, 7
      %v3009 = vsub.s32 %v3006, %v3008
      %v3010 = vrot.slane %v3003, %v3009
      %v3011 = vcombine.low %v3002, %v3010
      %v3012 = vcombine.high %v3002, %v3010
      %v3013 = vcombine.low %v2603, %v2610
      %v3015 = vunpack.c.l.s4 1983009808
      %v3016 = vunpack.c.0.s8 %v3015
      %v3017 = vlaneseq
      %v3018 = vshrl.u32 %v3017, 7
      %v3019 = vsub.s32 %v3016, %v3018
      %v3020 = vrot.slane %v3013, %v3019
      %v3021 = vcombine.low %v2627, %v2628
      %v3023 = vunpack.c.l.s4 1983009808
      %v3024 = vunpack.c.0.s8 %v3023
      %v3025 = vlaneseq
      %v3026 = vshrl.u32 %v3025, 7
      %v3027 = vsub.s32 %v3024, %v3026
      %v3028 = vrot.slane %v3021, %v3027
      %v3029 = vcombine.low %v2619, %v2626
      %v3031 = vunpack.c.l.s4 1983009808
      %v3032 = vunpack.c.0.s8 %v3031
      %v3033 = vlaneseq
      %v3034 = vshrl.u32 %v3033, 7
      %v3035 = vsub.s32 %v3032, %v3034
      %v3036 = vrot.slane %v3029, %v3035
      %v3037 = vcombine.low %v2629, %v2630
      %v3039 = vunpack.c.l.s4 1983009808
      %v3040 = vunpack.c.0.s8 %v3039
      %v3041 = vlaneseq
      %v3042 = vshrl.u32 %v3041, 7
      %v3043 = vsub.s32 %v3040, %v3042
      %v3044 = vrot.slane %v3037, %v3043
      %v3045 = vcombine.low %v3020, %v3028
      %v3047 = vunpack.c.l.s4 1934713408
      %v3048 = vunpack.c.0.s8 %v3047
      %v3049 = vlaneseq
      %v3050 = vshrl.u32 %v3049, 7
      %v3051 = vsub.s32 %v3048, %v3050
      %v3052 = vrot.slane %v3045, %v3051
      %v3053 = vcombine.low %v3036, %v3044
      %v3055 = vunpack.c.l.s4 1934713408
      %v3056 = vunpack.c.0.s8 %v3055
      %v3057 = vlaneseq
      %v3058 = vshrl.u32 %v3057, 7
      %v3059 = vsub.s32 %v3056, %v3058
      %v3060 = vrot.slane %v3053, %v3059
      %v3061 = vcombine.low %v3052, %v3060
      %v3062 = vcombine.high %v3052, %v3060
      %v3063 = vcombine.low %v2669, %v2676
      %v3065 = vunpack.c.l.s4 1983009808
      %v3066 = vunpack.c.0.s8 %v3065
      %v3067 = vlaneseq
      %v3068 = vshrl.u32 %v3067, 7
      %v3069 = vsub.s32 %v3066, %v3068
      %v3070 = vrot.slane %v3063, %v3069
      %v3071 = vcombine.low %v2693, %v2694
      %v3073 = vunpack.c.l.s4 1983009808
      %v3074 = vunpack.c.0.s8 %v3073
      %v3075 = vlaneseq
      %v3076 = vshrl.u32 %v3075, 7
      %v3077 = vsub.s32 %v3074, %v3076
      %v3078 = vrot.slane %v3071, %v3077
      %v3079 = vcombine.low %v2685, %v2692
      %v3081 = vunpack.c.l.s4 1983009808
      %v3082 = vunpack.c.0.s8 %v3081
      %v3083 = vlaneseq
      %v3084 = vshrl.u32 %v3083, 7
      %v3085 = vsub.s32 %v3082, %v3084
      %v3086 = vrot.slane %v3079, %v3085
      %v3087 = vcombine.low %v2695, %v2696
      %v3089 = vunpack.c.l.s4 1983009808
      %v3090 = vunpack.c.0.s8 %v3089
      %v3091 = vlaneseq
      %v3092 = vshrl.u32 %v3091, 7
      %v3093 = vsub.s32 %v3090, %v3092
      %v3094 = vrot.slane %v3087, %v3093
      %v3095 = vcombine.low %v3070, %v3078
      %v3097 = vunpack.c.l.s4 1934713408
      %v3098 = vunpack.c.0.s8 %v3097
      %v3099 = vlaneseq
      %v3100 = vshrl.u32 %v3099, 7
      %v3101 = vsub.s32 %v3098, %v3100
      %v3102 = vrot.slane %v3095, %v3101
      %v3103 = vcombine.low %v3086, %v3094
      %v3105 = vunpack.c.l.s4 1934713408
      %v3106 = vunpack.c.0.s8 %v3105
      %v3107 = vlaneseq
      %v3108 = vshrl.u32 %v3107, 7
      %v3109 = vsub.s32 %v3106, %v3108
      %v3110 = vrot.slane %v3103, %v3109
      %v3111 = vcombine.low %v3102, %v3110
      %v3112 = vcombine.high %v3102, %v3110
      %v3113 = vcombine.low %v2735, %v2742
      %v3115 = vunpack.c.l.s4 1983009808
      %v3116 = vunpack.c.0.s8 %v3115
      %v3117 = vlaneseq
      %v3118 = vshrl.u32 %v3117, 7
      %v3119 = vsub.s32 %v3116, %v3118
      %v3120 = vrot.slane %v3113, %v3119
      %v3121 = vcombine.low %v2759, %v2760
      %v3123 = vunpack.c.l.s4 1983009808
      %v3124 = vunpack.c.0.s8 %v3123
      %v3125 = vlaneseq
      %v3126 = vshrl.u32 %v3125, 7
      %v3127 = vsub.s32 %v3124, %v3126
      %v3128 = vrot.slane %v3121, %v3127
      %v3129 = vcombine.low %v2751, %v2758
      %v3131 = vunpack.c.l.s4 1983009808
      %v3132 = vunpack.c.0.s8 %v3131
      %v3133 = vlaneseq
      %v3134 = vshrl.u32 %v3133, 7
      %v3135 = vsub.s32 %v3132, %v3134
      %v3136 = vrot.slane %v3129, %v3135
      %v3137 = vcombine.low %v2761, %v2762
      %v3139 = vunpack.c.l.s4 1983009808
      %v3140 = vunpack.c.0.s8 %v3139
      %v3141 = vlaneseq
      %v3142 = vshrl.u32 %v3141, 7
      %v3143 = vsub.s32 %v3140, %v3142
      %v3144 = vrot.slane %v3137, %v3143
      %v3145 = vcombine.low %v3120, %v3128
      %v3147 = vunpack.c.l.s4 1934713408
      %v3148 = vunpack.c.0.s8 %v3147
      %v3149 = vlaneseq
      %v3150 = vshrl.u32 %v3149, 7
      %v3151 = vsub.s32 %v3148, %v3150
      %v3152 = vrot.slane %v3145, %v3151
      %v3153 = vcombine.low %v3136, %v3144
      %v3155 = vunpack.c.l.s4 1934713408
      %v3156 = vunpack.c.0.s8 %v3155
      %v3157 = vlaneseq
      %v3158 = vshrl.u32 %v3157, 7
      %v3159 = vsub.s32 %v3156, %v3158
      %v3160 = vrot.slane %v3153, %v3159
      %v3161 = vcombine.low %v3152, %v3160
      %v3162 = vcombine.high %v3152, %v3160
      %v3165 = vpack.i.b16 %v2861, %v2811
      %v3166 = vshrl.u32 %v2811, 16
      %v3167 = vshrl.u32 %v2861, 16
      %v3168 = vpack.i.b16 %v3167, %v3166
      %v3171 = vpack.i.b16 %v2862, %v2812
      %v3172 = vshrl.u32 %v2812, 16
      %v3173 = vshrl.u32 %v2862, 16
      %v3174 = vpack.i.b16 %v3173, %v3172
      %v3177 = vpack.i.b16 %v2961, %v2911
      %v3178 = vshrl.u32 %v2911, 16
      %v3179 = vshrl.u32 %v2961, 16
      %v3180 = vpack.i.b16 %v3179, %v3178
      %v3183 = vpack.i.b16 %v2962, %v2912
      %v3184 = vshrl.u32 %v2912, 16
      %v3185 = vshrl.u32 %v2962, 16
      %v3186 = vpack.i.b16 %v3185, %v3184
      %v3189 = vpack.i.b16 %v3061, %v3011
      %v3190 = vshrl.u32 %v3011, 16
      %v3191 = vshrl.u32 %v3061, 16
      %v3192 = vpack.i.b16 %v3191, %v3190
      %v3195 = vpack.i.b16 %v3062, %v3012
      %v3196 = vshrl.u32 %v3012, 16
      %v3197 = vshrl.u32 %v3062, 16
      %v3198 = vpack.i.b16 %v3197, %v3196
      %v3201 = vpack.i.b16 %v3161, %v3111
      %v3202 = vshrl.u32 %v3111, 16
      %v3203 = vshrl.u32 %v3161, 16
      %v3204 = vpack.i.b16 %v3203, %v3202
      %v3207 = vpack.i.b16 %v3162, %v3112
      %v3208 = vshrl.u32 %v3112, 16
      %v3209 = vshrl.u32 %v3162, 16
      %v3210 = vpack.i.b16 %v3209, %v3208
      %3215 = vrot.lane.b32.xlu0 %v1059, 96
      %v3216 = vpop.permute.xlu0 %3215
      %3217 = vrot.lane.b32.xlu0 %v1062, 96
      %v3218 = vpop.permute.xlu0 %3217
      %3219 = vrot.lane.b32.xlu0 %v1065, 96
      %v3220 = vpop.permute.xlu0 %3219
      %3221 = vrot.lane.b32.xlu0 %v1068, 96
      %v3222 = vpop.permute.xlu0 %3221
      %3223 = vrot.lane.b32.xlu0 %v1059, 64
      %v3224 = vpop.permute.xlu0 %3223
      %3225 = vrot.lane.b32.xlu0 %v1062, 64
      %v3226 = vpop.permute.xlu0 %3225
      %3227 = vrot.lane.b32.xlu0 %v1065, 64
      %v3228 = vpop.permute.xlu0 %3227
      %3229 = vrot.lane.b32.xlu0 %v1068, 64
      %v3230 = vpop.permute.xlu0 %3229
      %3231 = vrot.lane.b32.xlu0 %v1059, 32
      %v3232 = vpop.permute.xlu0 %3231
      %3233 = vrot.lane.b32.xlu0 %v1062, 32
      %v3234 = vpop.permute.xlu0 %3233
      %3235 = vrot.lane.b32.xlu0 %v1065, 32
      %v3236 = vpop.permute.xlu0 %3235
      %3237 = vrot.lane.b32.xlu0 %v1068, 32
      %v3238 = vpop.permute.xlu0 %3237
      %v3241 = vpack.i.b16 %v3216, %v1059
      %v3243 = vshrl.u32 %v1059, 16
      %v3244 = vshrl.u32 %v3216, 16
      %v3245 = vpack.i.b16 %v3244, %v3243
      %v3249 = vpack.i.b16 %v3232, %v3224
      %v3251 = vshrl.u32 %v3224, 16
      %v3252 = vshrl.u32 %v3232, 16
      %v3253 = vpack.i.b16 %v3252, %v3251
      %v3257 = vpack.i.b16 %v3218, %v1062
      %v3259 = vshrl.u32 %v1062, 16
      %v3260 = vshrl.u32 %v3218, 16
      %v3261 = vpack.i.b16 %v3260, %v3259
      %v3265 = vpack.i.b16 %v3234, %v3226
      %v3267 = vshrl.u32 %v3226, 16
      %v3268 = vshrl.u32 %v3234, 16
      %v3269 = vpack.i.b16 %v3268, %v3267
      %v3273 = vpack.i.b16 %v3220, %v1065
      %v3275 = vshrl.u32 %v1065, 16
      %v3276 = vshrl.u32 %v3220, 16
      %v3277 = vpack.i.b16 %v3276, %v3275
      %v3281 = vpack.i.b16 %v3236, %v3228
      %v3283 = vshrl.u32 %v3228, 16
      %v3284 = vshrl.u32 %v3236, 16
      %v3285 = vpack.i.b16 %v3284, %v3283
      %v3289 = vpack.i.b16 %v3222, %v1068
      %v3291 = vshrl.u32 %v1068, 16
      %v3292 = vshrl.u32 %v3222, 16
      %v3293 = vpack.i.b16 %v3292, %v3291
      %v3297 = vpack.i.b16 %v3238, %v3230
      %v3299 = vshrl.u32 %v3230, 16
      %v3300 = vshrl.u32 %v3238, 16
      %v3301 = vpack.i.b16 %v3300, %v3299
      %v3303 = vcombine.high %v3241, %v1114
      %v3305 = vunpack.c.l.s4 1983009808
      %v3306 = vunpack.c.0.s8 %v3305
      %v3307 = vlaneseq
      %v3308 = vshrl.u32 %v3307, 7
      %v3309 = vsub.s32 %v3306, %v3308
      %v3310 = vrot.slane %v3241, %v3309
      %v3312 = vunpack.c.l.s4 1983009808
      %v3313 = vunpack.c.0.s8 %v3312
      %v3314 = vlaneseq
      %v3315 = vshrl.u32 %v3314, 7
      %v3316 = vsub.s32 %v3313, %v3315
      %v3317 = vrot.slane %v3303, %v3316
      %v3318 = vcombine.high %v3249, %v1114
      %v3320 = vunpack.c.l.s4 1983009808
      %v3321 = vunpack.c.0.s8 %v3320
      %v3322 = vlaneseq
      %v3323 = vshrl.u32 %v3322, 7
      %v3324 = vsub.s32 %v3321, %v3323
      %v3325 = vrot.slane %v3249, %v3324
      %v3327 = vunpack.c.l.s4 1983009808
      %v3328 = vunpack.c.0.s8 %v3327
      %v3329 = vlaneseq
      %v3330 = vshrl.u32 %v3329, 7
      %v3331 = vsub.s32 %v3328, %v3330
      %v3332 = vrot.slane %v3318, %v3331
      %v3333 = vcombine.low %v3310, %v3325
      %v3334 = vcombine.high %v3310, %v3325
      %v3336 = vunpack.c.l.s4 1934713408
      %v3337 = vunpack.c.0.s8 %v3336
      %v3338 = vlaneseq
      %v3339 = vshrl.u32 %v3338, 7
      %v3340 = vsub.s32 %v3337, %v3339
      %v3341 = vrot.slane %v3333, %v3340
      %v3343 = vunpack.c.l.s4 1934713408
      %v3344 = vunpack.c.0.s8 %v3343
      %v3345 = vlaneseq
      %v3346 = vshrl.u32 %v3345, 7
      %v3347 = vsub.s32 %v3344, %v3346
      %v3348 = vrot.slane %v3334, %v3347
      %v3349 = vcombine.low %v3317, %v3332
      %v3350 = vcombine.high %v3317, %v3332
      %v3352 = vunpack.c.l.s4 1934713408
      %v3353 = vunpack.c.0.s8 %v3352
      %v3354 = vlaneseq
      %v3355 = vshrl.u32 %v3354, 7
      %v3356 = vsub.s32 %v3353, %v3355
      %v3357 = vrot.slane %v3349, %v3356
      %v3359 = vunpack.c.l.s4 1934713408
      %v3360 = vunpack.c.0.s8 %v3359
      %v3361 = vlaneseq
      %v3362 = vshrl.u32 %v3361, 7
      %v3363 = vsub.s32 %v3360, %v3362
      %v3364 = vrot.slane %v3350, %v3363
      %v3365 = vcombine.high %v3341, 0
      %v3366 = vcombine.high %v3348, 0
      %v3367 = vcombine.high %v3357, 0
      %v3368 = vcombine.high %v3364, 0
      %v3369 = vcombine.high %v3245, %v1117
      %v3371 = vunpack.c.l.s4 1983009808
      %v3372 = vunpack.c.0.s8 %v3371
      %v3373 = vlaneseq
      %v3374 = vshrl.u32 %v3373, 7
      %v3375 = vsub.s32 %v3372, %v3374
      %v3376 = vrot.slane %v3245, %v3375
      %v3378 = vunpack.c.l.s4 1983009808
      %v3379 = vunpack.c.0.s8 %v3378
      %v3380 = vlaneseq
      %v3381 = vshrl.u32 %v3380, 7
      %v3382 = vsub.s32 %v3379, %v3381
      %v3383 = vrot.slane %v3369, %v3382
      %v3384 = vcombine.high %v3253, %v1117
      %v3386 = vunpack.c.l.s4 1983009808
      %v3387 = vunpack.c.0.s8 %v3386
      %v3388 = vlaneseq
      %v3389 = vshrl.u32 %v3388, 7
      %v3390 = vsub.s32 %v3387, %v3389
      %v3391 = vrot.slane %v3253, %v3390
      %v3393 = vunpack.c.l.s4 1983009808
      %v3394 = vunpack.c.0.s8 %v3393
      %v3395 = vlaneseq
      %v3396 = vshrl.u32 %v3395, 7
      %v3397 = vsub.s32 %v3394, %v3396
      %v3398 = vrot.slane %v3384, %v3397
      %v3399 = vcombine.low %v3376, %v3391
      %v3400 = vcombine.high %v3376, %v3391
      %v3402 = vunpack.c.l.s4 1934713408
      %v3403 = vunpack.c.0.s8 %v3402
      %v3404 = vlaneseq
      %v3405 = vshrl.u32 %v3404, 7
      %v3406 = vsub.s32 %v3403, %v3405
      %v3407 = vrot.slane %v3399, %v3406
      %v3409 = vunpack.c.l.s4 1934713408
      %v3410 = vunpack.c.0.s8 %v3409
      %v3411 = vlaneseq
      %v3412 = vshrl.u32 %v3411, 7
      %v3413 = vsub.s32 %v3410, %v3412
      %v3414 = vrot.slane %v3400, %v3413
      %v3415 = vcombine.low %v3383, %v3398
      %v3416 = vcombine.high %v3383, %v3398
      %v3418 = vunpack.c.l.s4 1934713408
      %v3419 = vunpack.c.0.s8 %v3418
      %v3420 = vlaneseq
      %v3421 = vshrl.u32 %v3420, 7
      %v3422 = vsub.s32 %v3419, %v3421
      %v3423 = vrot.slane %v3415, %v3422
      %v3425 = vunpack.c.l.s4 1934713408
      %v3426 = vunpack.c.0.s8 %v3425
      %v3427 = vlaneseq
      %v3428 = vshrl.u32 %v3427, 7
      %v3429 = vsub.s32 %v3426, %v3428
      %v3430 = vrot.slane %v3416, %v3429
      %v3431 = vcombine.high %v3407, 0
      %v3432 = vcombine.high %v3414, 0
      %v3433 = vcombine.high %v3423, 0
      %v3434 = vcombine.high %v3430, 0
      %v3435 = vcombine.high %v3257, %v1114
      %v3437 = vunpack.c.l.s4 1983009808
      %v3438 = vunpack.c.0.s8 %v3437
      %v3439 = vlaneseq
      %v3440 = vshrl.u32 %v3439, 7
      %v3441 = vsub.s32 %v3438, %v3440
      %v3442 = vrot.slane %v3257, %v3441
      %v3444 = vunpack.c.l.s4 1983009808
      %v3445 = vunpack.c.0.s8 %v3444
      %v3446 = vlaneseq
      %v3447 = vshrl.u32 %v3446, 7
      %v3448 = vsub.s32 %v3445, %v3447
      %v3449 = vrot.slane %v3435, %v3448
      %v3450 = vcombine.high %v3265, %v1114
      %v3452 = vunpack.c.l.s4 1983009808
      %v3453 = vunpack.c.0.s8 %v3452
      %v3454 = vlaneseq
      %v3455 = vshrl.u32 %v3454, 7
      %v3456 = vsub.s32 %v3453, %v3455
      %v3457 = vrot.slane %v3265, %v3456
      %v3459 = vunpack.c.l.s4 1983009808
      %v3460 = vunpack.c.0.s8 %v3459
      %v3461 = vlaneseq
      %v3462 = vshrl.u32 %v3461, 7
      %v3463 = vsub.s32 %v3460, %v3462
      %v3464 = vrot.slane %v3450, %v3463
      %v3465 = vcombine.low %v3442, %v3457
      %v3466 = vcombine.high %v3442, %v3457
      %v3468 = vunpack.c.l.s4 1934713408
      %v3469 = vunpack.c.0.s8 %v3468
      %v3470 = vlaneseq
      %v3471 = vshrl.u32 %v3470, 7
      %v3472 = vsub.s32 %v3469, %v3471
      %v3473 = vrot.slane %v3465, %v3472
      %v3475 = vunpack.c.l.s4 1934713408
      %v3476 = vunpack.c.0.s8 %v3475
      %v3477 = vlaneseq
      %v3478 = vshrl.u32 %v3477, 7
      %v3479 = vsub.s32 %v3476, %v3478
      %v3480 = vrot.slane %v3466, %v3479
      %v3481 = vcombine.low %v3449, %v3464
      %v3482 = vcombine.high %v3449, %v3464
      %v3484 = vunpack.c.l.s4 1934713408
      %v3485 = vunpack.c.0.s8 %v3484
      %v3486 = vlaneseq
      %v3487 = vshrl.u32 %v3486, 7
      %v3488 = vsub.s32 %v3485, %v3487
      %v3489 = vrot.slane %v3481, %v3488
      %v3491 = vunpack.c.l.s4 1934713408
      %v3492 = vunpack.c.0.s8 %v3491
      %v3493 = vlaneseq
      %v3494 = vshrl.u32 %v3493, 7
      %v3495 = vsub.s32 %v3492, %v3494
      %v3496 = vrot.slane %v3482, %v3495
      %v3497 = vcombine.high %v3473, 0
      %v3498 = vcombine.high %v3480, 0
      %v3499 = vcombine.high %v3489, 0
      %v3500 = vcombine.high %v3496, 0
      %v3501 = vcombine.high %v3261, %v1117
      %v3503 = vunpack.c.l.s4 1983009808
      %v3504 = vunpack.c.0.s8 %v3503
      %v3505 = vlaneseq
      %v3506 = vshrl.u32 %v3505, 7
      %v3507 = vsub.s32 %v3504, %v3506
      %v3508 = vrot.slane %v3261, %v3507
      %v3510 = vunpack.c.l.s4 1983009808
      %v3511 = vunpack.c.0.s8 %v3510
      %v3512 = vlaneseq
      %v3513 = vshrl.u32 %v3512, 7
      %v3514 = vsub.s32 %v3511, %v3513
      %v3515 = vrot.slane %v3501, %v3514
      %v3516 = vcombine.high %v3269, %v1117
      %v3518 = vunpack.c.l.s4 1983009808
      %v3519 = vunpack.c.0.s8 %v3518
      %v3520 = vlaneseq
      %v3521 = vshrl.u32 %v3520, 7
      %v3522 = vsub.s32 %v3519, %v3521
      %v3523 = vrot.slane %v3269, %v3522
      %v3525 = vunpack.c.l.s4 1983009808
      %v3526 = vunpack.c.0.s8 %v3525
      %v3527 = vlaneseq
      %v3528 = vshrl.u32 %v3527, 7
      %v3529 = vsub.s32 %v3526, %v3528
      %v3530 = vrot.slane %v3516, %v3529
      %v3531 = vcombine.low %v3508, %v3523
      %v3532 = vcombine.high %v3508, %v3523
      %v3534 = vunpack.c.l.s4 1934713408
      %v3535 = vunpack.c.0.s8 %v3534
      %v3536 = vlaneseq
      %v3537 = vshrl.u32 %v3536, 7
      %v3538 = vsub.s32 %v3535, %v3537
      %v3539 = vrot.slane %v3531, %v3538
      %v3541 = vunpack.c.l.s4 1934713408
      %v3542 = vunpack.c.0.s8 %v3541
      %v3543 = vlaneseq
      %v3544 = vshrl.u32 %v3543, 7
      %v3545 = vsub.s32 %v3542, %v3544
      %v3546 = vrot.slane %v3532, %v3545
      %v3547 = vcombine.low %v3515, %v3530
      %v3548 = vcombine.high %v3515, %v3530
      %v3550 = vunpack.c.l.s4 1934713408
      %v3551 = vunpack.c.0.s8 %v3550
      %v3552 = vlaneseq
      %v3553 = vshrl.u32 %v3552, 7
      %v3554 = vsub.s32 %v3551, %v3553
      %v3555 = vrot.slane %v3547, %v3554
      %v3557 = vunpack.c.l.s4 1934713408
      %v3558 = vunpack.c.0.s8 %v3557
      %v3559 = vlaneseq
      %v3560 = vshrl.u32 %v3559, 7
      %v3561 = vsub.s32 %v3558, %v3560
      %v3562 = vrot.slane %v3548, %v3561
      %v3563 = vcombine.high %v3539, 0
      %v3564 = vcombine.high %v3546, 0
      %v3565 = vcombine.high %v3555, 0
      %v3566 = vcombine.high %v3562, 0
      %v3567 = vcombine.high %v3273, %v1114
      %v3569 = vunpack.c.l.s4 1983009808
      %v3570 = vunpack.c.0.s8 %v3569
      %v3571 = vlaneseq
      %v3572 = vshrl.u32 %v3571, 7
      %v3573 = vsub.s32 %v3570, %v3572
      %v3574 = vrot.slane %v3273, %v3573
      %v3576 = vunpack.c.l.s4 1983009808
      %v3577 = vunpack.c.0.s8 %v3576
      %v3578 = vlaneseq
      %v3579 = vshrl.u32 %v3578, 7
      %v3580 = vsub.s32 %v3577, %v3579
      %v3581 = vrot.slane %v3567, %v3580
      %v3582 = vcombine.high %v3281, %v1114
      %v3584 = vunpack.c.l.s4 1983009808
      %v3585 = vunpack.c.0.s8 %v3584
      %v3586 = vlaneseq
      %v3587 = vshrl.u32 %v3586, 7
      %v3588 = vsub.s32 %v3585, %v3587
      %v3589 = vrot.slane %v3281, %v3588
      %v3591 = vunpack.c.l.s4 1983009808
      %v3592 = vunpack.c.0.s8 %v3591
      %v3593 = vlaneseq
      %v3594 = vshrl.u32 %v3593, 7
      %v3595 = vsub.s32 %v3592, %v3594
      %v3596 = vrot.slane %v3582, %v3595
      %v3597 = vcombine.low %v3574, %v3589
      %v3598 = vcombine.high %v3574, %v3589
      %v3600 = vunpack.c.l.s4 1934713408
      %v3601 = vunpack.c.0.s8 %v3600
      %v3602 = vlaneseq
      %v3603 = vshrl.u32 %v3602, 7
      %v3604 = vsub.s32 %v3601, %v3603
      %v3605 = vrot.slane %v3597, %v3604
      %v3607 = vunpack.c.l.s4 1934713408
      %v3608 = vunpack.c.0.s8 %v3607
      %v3609 = vlaneseq
      %v3610 = vshrl.u32 %v3609, 7
      %v3611 = vsub.s32 %v3608, %v3610
      %v3612 = vrot.slane %v3598, %v3611
      %v3613 = vcombine.low %v3581, %v3596
      %v3614 = vcombine.high %v3581, %v3596
      %v3616 = vunpack.c.l.s4 1934713408
      %v3617 = vunpack.c.0.s8 %v3616
      %v3618 = vlaneseq
      %v3619 = vshrl.u32 %v3618, 7
      %v3620 = vsub.s32 %v3617, %v3619
      %v3621 = vrot.slane %v3613, %v3620
      %v3623 = vunpack.c.l.s4 1934713408
      %v3624 = vunpack.c.0.s8 %v3623
      %v3625 = vlaneseq
      %v3626 = vshrl.u32 %v3625, 7
      %v3627 = vsub.s32 %v3624, %v3626
      %v3628 = vrot.slane %v3614, %v3627
      %v3629 = vcombine.high %v3605, 0
      %v3630 = vcombine.high %v3612, 0
      %v3631 = vcombine.high %v3621, 0
      %v3632 = vcombine.high %v3628, 0
      %v3633 = vcombine.high %v3277, %v1117
      %v3635 = vunpack.c.l.s4 1983009808
      %v3636 = vunpack.c.0.s8 %v3635
      %v3637 = vlaneseq
      %v3638 = vshrl.u32 %v3637, 7
      %v3639 = vsub.s32 %v3636, %v3638
      %v3640 = vrot.slane %v3277, %v3639
      %v3642 = vunpack.c.l.s4 1983009808
      %v3643 = vunpack.c.0.s8 %v3642
      %v3644 = vlaneseq
      %v3645 = vshrl.u32 %v3644, 7
      %v3646 = vsub.s32 %v3643, %v3645
      %v3647 = vrot.slane %v3633, %v3646
      %v3648 = vcombine.high %v3285, %v1117
      %v3650 = vunpack.c.l.s4 1983009808
      %v3651 = vunpack.c.0.s8 %v3650
      %v3652 = vlaneseq
      %v3653 = vshrl.u32 %v3652, 7
      %v3654 = vsub.s32 %v3651, %v3653
      %v3655 = vrot.slane %v3285, %v3654
      %v3657 = vunpack.c.l.s4 1983009808
      %v3658 = vunpack.c.0.s8 %v3657
      %v3659 = vlaneseq
      %v3660 = vshrl.u32 %v3659, 7
      %v3661 = vsub.s32 %v3658, %v3660
      %v3662 = vrot.slane %v3648, %v3661
      %v3663 = vcombine.low %v3640, %v3655
      %v3664 = vcombine.high %v3640, %v3655
      %v3666 = vunpack.c.l.s4 1934713408
      %v3667 = vunpack.c.0.s8 %v3666
      %v3668 = vlaneseq
      %v3669 = vshrl.u32 %v3668, 7
      %v3670 = vsub.s32 %v3667, %v3669
      %v3671 = vrot.slane %v3663, %v3670
      %v3673 = vunpack.c.l.s4 1934713408
      %v3674 = vunpack.c.0.s8 %v3673
      %v3675 = vlaneseq
      %v3676 = vshrl.u32 %v3675, 7
      %v3677 = vsub.s32 %v3674, %v3676
      %v3678 = vrot.slane %v3664, %v3677
      %v3679 = vcombine.low %v3647, %v3662
      %v3680 = vcombine.high %v3647, %v3662
      %v3682 = vunpack.c.l.s4 1934713408
      %v3683 = vunpack.c.0.s8 %v3682
      %v3684 = vlaneseq
      %v3685 = vshrl.u32 %v3684, 7
      %v3686 = vsub.s32 %v3683, %v3685
      %v3687 = vrot.slane %v3679, %v3686
      %v3689 = vunpack.c.l.s4 1934713408
      %v3690 = vunpack.c.0.s8 %v3689
      %v3691 = vlaneseq
      %v3692 = vshrl.u32 %v3691, 7
      %v3693 = vsub.s32 %v3690, %v3692
      %v3694 = vrot.slane %v3680, %v3693
      %v3695 = vcombine.high %v3671, 0
      %v3696 = vcombine.high %v3678, 0
      %v3697 = vcombine.high %v3687, 0
      %v3698 = vcombine.high %v3694, 0
      %v3699 = vcombine.high %v3289, %v1114
      %v3701 = vunpack.c.l.s4 1983009808
      %v3702 = vunpack.c.0.s8 %v3701
      %v3703 = vlaneseq
      %v3704 = vshrl.u32 %v3703, 7
      %v3705 = vsub.s32 %v3702, %v3704
      %v3706 = vrot.slane %v3289, %v3705
      %v3708 = vunpack.c.l.s4 1983009808
      %v3709 = vunpack.c.0.s8 %v3708
      %v3710 = vlaneseq
      %v3711 = vshrl.u32 %v3710, 7
      %v3712 = vsub.s32 %v3709, %v3711
      %v3713 = vrot.slane %v3699, %v3712
      %v3714 = vcombine.high %v3297, %v1114
      %v3716 = vunpack.c.l.s4 1983009808
      %v3717 = vunpack.c.0.s8 %v3716
      %v3718 = vlaneseq
      %v3719 = vshrl.u32 %v3718, 7
      %v3720 = vsub.s32 %v3717, %v3719
      %v3721 = vrot.slane %v3297, %v3720
      %v3723 = vunpack.c.l.s4 1983009808
      %v3724 = vunpack.c.0.s8 %v3723
      %v3725 = vlaneseq
      %v3726 = vshrl.u32 %v3725, 7
      %v3727 = vsub.s32 %v3724, %v3726
      %v3728 = vrot.slane %v3714, %v3727
      %v3729 = vcombine.low %v3706, %v3721
      %v3730 = vcombine.high %v3706, %v3721
      %v3732 = vunpack.c.l.s4 1934713408
      %v3733 = vunpack.c.0.s8 %v3732
      %v3734 = vlaneseq
      %v3735 = vshrl.u32 %v3734, 7
      %v3736 = vsub.s32 %v3733, %v3735
      %v3737 = vrot.slane %v3729, %v3736
      %v3739 = vunpack.c.l.s4 1934713408
      %v3740 = vunpack.c.0.s8 %v3739
      %v3741 = vlaneseq
      %v3742 = vshrl.u32 %v3741, 7
      %v3743 = vsub.s32 %v3740, %v3742
      %v3744 = vrot.slane %v3730, %v3743
      %v3745 = vcombine.low %v3713, %v3728
      %v3746 = vcombine.high %v3713, %v3728
      %v3748 = vunpack.c.l.s4 1934713408
      %v3749 = vunpack.c.0.s8 %v3748
      %v3750 = vlaneseq
      %v3751 = vshrl.u32 %v3750, 7
      %v3752 = vsub.s32 %v3749, %v3751
      %v3753 = vrot.slane %v3745, %v3752
      %v3755 = vunpack.c.l.s4 1934713408
      %v3756 = vunpack.c.0.s8 %v3755
      %v3757 = vlaneseq
      %v3758 = vshrl.u32 %v3757, 7
      %v3759 = vsub.s32 %v3756, %v3758
      %v3760 = vrot.slane %v3746, %v3759
      %v3761 = vcombine.high %v3737, 0
      %v3762 = vcombine.high %v3744, 0
      %v3763 = vcombine.high %v3753, 0
      %v3764 = vcombine.high %v3760, 0
      %v3765 = vcombine.high %v3293, %v1117
      %v3767 = vunpack.c.l.s4 1983009808
      %v3768 = vunpack.c.0.s8 %v3767
      %v3769 = vlaneseq
      %v3770 = vshrl.u32 %v3769, 7
      %v3771 = vsub.s32 %v3768, %v3770
      %v3772 = vrot.slane %v3293, %v3771
      %v3774 = vunpack.c.l.s4 1983009808
      %v3775 = vunpack.c.0.s8 %v3774
      %v3776 = vlaneseq
      %v3777 = vshrl.u32 %v3776, 7
      %v3778 = vsub.s32 %v3775, %v3777
      %v3779 = vrot.slane %v3765, %v3778
      %v3780 = vcombine.high %v3301, %v1117
      %v3782 = vunpack.c.l.s4 1983009808
      %v3783 = vunpack.c.0.s8 %v3782
      %v3784 = vlaneseq
      %v3785 = vshrl.u32 %v3784, 7
      %v3786 = vsub.s32 %v3783, %v3785
      %v3787 = vrot.slane %v3301, %v3786
      %v3789 = vunpack.c.l.s4 1983009808
      %v3790 = vunpack.c.0.s8 %v3789
      %v3791 = vlaneseq
      %v3792 = vshrl.u32 %v3791, 7
      %v3793 = vsub.s32 %v3790, %v3792
      %v3794 = vrot.slane %v3780, %v3793
      %v3795 = vcombine.low %v3772, %v3787
      %v3796 = vcombine.high %v3772, %v3787
      %v3798 = vunpack.c.l.s4 1934713408
      %v3799 = vunpack.c.0.s8 %v3798
      %v3800 = vlaneseq
      %v3801 = vshrl.u32 %v3800, 7
      %v3802 = vsub.s32 %v3799, %v3801
      %v3803 = vrot.slane %v3795, %v3802
      %v3805 = vunpack.c.l.s4 1934713408
      %v3806 = vunpack.c.0.s8 %v3805
      %v3807 = vlaneseq
      %v3808 = vshrl.u32 %v3807, 7
      %v3809 = vsub.s32 %v3806, %v3808
      %v3810 = vrot.slane %v3796, %v3809
      %v3811 = vcombine.low %v3779, %v3794
      %v3812 = vcombine.high %v3779, %v3794
      %v3814 = vunpack.c.l.s4 1934713408
      %v3815 = vunpack.c.0.s8 %v3814
      %v3816 = vlaneseq
      %v3817 = vshrl.u32 %v3816, 7
      %v3818 = vsub.s32 %v3815, %v3817
      %v3819 = vrot.slane %v3811, %v3818
      %v3821 = vunpack.c.l.s4 1934713408
      %v3822 = vunpack.c.0.s8 %v3821
      %v3823 = vlaneseq
      %v3824 = vshrl.u32 %v3823, 7
      %v3825 = vsub.s32 %v3822, %v3824
      %v3826 = vrot.slane %v3812, %v3825
      %v3827 = vcombine.high %v3803, 0
      %v3828 = vcombine.high %v3810, 0
      %v3829 = vcombine.high %v3819, 0
      %v3830 = vcombine.high %v3826, 0
      %v3831 = vcombine.low %v3341, %v3348
      %v3833 = vunpack.c.l.s4 1983009808
      %v3834 = vunpack.c.0.s8 %v3833
      %v3835 = vlaneseq
      %v3836 = vshrl.u32 %v3835, 7
      %v3837 = vsub.s32 %v3834, %v3836
      %v3838 = vrot.slane %v3831, %v3837
      %v3839 = vcombine.low %v3365, %v3366
      %v3841 = vunpack.c.l.s4 1983009808
      %v3842 = vunpack.c.0.s8 %v3841
      %v3843 = vlaneseq
      %v3844 = vshrl.u32 %v3843, 7
      %v3845 = vsub.s32 %v3842, %v3844
      %v3846 = vrot.slane %v3839, %v3845
      %v3847 = vcombine.low %v3357, %v3364
      %v3849 = vunpack.c.l.s4 1983009808
      %v3850 = vunpack.c.0.s8 %v3849
      %v3851 = vlaneseq
      %v3852 = vshrl.u32 %v3851, 7
      %v3853 = vsub.s32 %v3850, %v3852
      %v3854 = vrot.slane %v3847, %v3853
      %v3855 = vcombine.low %v3367, %v3368
      %v3857 = vunpack.c.l.s4 1983009808
      %v3858 = vunpack.c.0.s8 %v3857
      %v3859 = vlaneseq
      %v3860 = vshrl.u32 %v3859, 7
      %v3861 = vsub.s32 %v3858, %v3860
      %v3862 = vrot.slane %v3855, %v3861
      %v3863 = vcombine.low %v3838, %v3846
      %v3865 = vunpack.c.l.s4 1934713408
      %v3866 = vunpack.c.0.s8 %v3865
      %v3867 = vlaneseq
      %v3868 = vshrl.u32 %v3867, 7
      %v3869 = vsub.s32 %v3866, %v3868
      %v3870 = vrot.slane %v3863, %v3869
      %v3871 = vcombine.low %v3854, %v3862
      %v3873 = vunpack.c.l.s4 1934713408
      %v3874 = vunpack.c.0.s8 %v3873
      %v3875 = vlaneseq
      %v3876 = vshrl.u32 %v3875, 7
      %v3877 = vsub.s32 %v3874, %v3876
      %v3878 = vrot.slane %v3871, %v3877
      %v3879 = vcombine.low %v3870, %v3878
      %v3880 = vcombine.high %v3870, %v3878
      %v3881 = vcombine.low %v3407, %v3414
      %v3883 = vunpack.c.l.s4 1983009808
      %v3884 = vunpack.c.0.s8 %v3883
      %v3885 = vlaneseq
      %v3886 = vshrl.u32 %v3885, 7
      %v3887 = vsub.s32 %v3884, %v3886
      %v3888 = vrot.slane %v3881, %v3887
      %v3889 = vcombine.low %v3431, %v3432
      %v3891 = vunpack.c.l.s4 1983009808
      %v3892 = vunpack.c.0.s8 %v3891
      %v3893 = vlaneseq
      %v3894 = vshrl.u32 %v3893, 7
      %v3895 = vsub.s32 %v3892, %v3894
      %v3896 = vrot.slane %v3889, %v3895
      %v3897 = vcombine.low %v3423, %v3430
      %v3899 = vunpack.c.l.s4 1983009808
      %v3900 = vunpack.c.0.s8 %v3899
      %v3901 = vlaneseq
      %v3902 = vshrl.u32 %v3901, 7
      %v3903 = vsub.s32 %v3900, %v3902
      %v3904 = vrot.slane %v3897, %v3903
      %v3905 = vcombine.low %v3433, %v3434
      %v3907 = vunpack.c.l.s4 1983009808
      %v3908 = vunpack.c.0.s8 %v3907
      %v3909 = vlaneseq
      %v3910 = vshrl.u32 %v3909, 7
      %v3911 = vsub.s32 %v3908, %v3910
      %v3912 = vrot.slane %v3905, %v3911
      %v3913 = vcombine.low %v3888, %v3896
      %v3915 = vunpack.c.l.s4 1934713408
      %v3916 = vunpack.c.0.s8 %v3915
      %v3917 = vlaneseq
      %v3918 = vshrl.u32 %v3917, 7
      %v3919 = vsub.s32 %v3916, %v3918
      %v3920 = vrot.slane %v3913, %v3919
      %v3921 = vcombine.low %v3904, %v3912
      %v3923 = vunpack.c.l.s4 1934713408
      %v3924 = vunpack.c.0.s8 %v3923
      %v3925 = vlaneseq
      %v3926 = vshrl.u32 %v3925, 7
      %v3927 = vsub.s32 %v3924, %v3926
      %v3928 = vrot.slane %v3921, %v3927
      %v3929 = vcombine.low %v3920, %v3928
      %v3930 = vcombine.high %v3920, %v3928
      %v3931 = vcombine.low %v3473, %v3480
      %v3933 = vunpack.c.l.s4 1983009808
      %v3934 = vunpack.c.0.s8 %v3933
      %v3935 = vlaneseq
      %v3936 = vshrl.u32 %v3935, 7
      %v3937 = vsub.s32 %v3934, %v3936
      %v3938 = vrot.slane %v3931, %v3937
      %v3939 = vcombine.low %v3497, %v3498
      %v3941 = vunpack.c.l.s4 1983009808
      %v3942 = vunpack.c.0.s8 %v3941
      %v3943 = vlaneseq
      %v3944 = vshrl.u32 %v3943, 7
      %v3945 = vsub.s32 %v3942, %v3944
      %v3946 = vrot.slane %v3939, %v3945
      %v3947 = vcombine.low %v3489, %v3496
      %v3949 = vunpack.c.l.s4 1983009808
      %v3950 = vunpack.c.0.s8 %v3949
      %v3951 = vlaneseq
      %v3952 = vshrl.u32 %v3951, 7
      %v3953 = vsub.s32 %v3950, %v3952
      %v3954 = vrot.slane %v3947, %v3953
      %v3955 = vcombine.low %v3499, %v3500
      %v3957 = vunpack.c.l.s4 1983009808
      %v3958 = vunpack.c.0.s8 %v3957
      %v3959 = vlaneseq
      %v3960 = vshrl.u32 %v3959, 7
      %v3961 = vsub.s32 %v3958, %v3960
      %v3962 = vrot.slane %v3955, %v3961
      %v3963 = vcombine.low %v3938, %v3946
      %v3965 = vunpack.c.l.s4 1934713408
      %v3966 = vunpack.c.0.s8 %v3965
      %v3967 = vlaneseq
      %v3968 = vshrl.u32 %v3967, 7
      %v3969 = vsub.s32 %v3966, %v3968
      %v3970 = vrot.slane %v3963, %v3969
      %v3971 = vcombine.low %v3954, %v3962
      %v3973 = vunpack.c.l.s4 1934713408
      %v3974 = vunpack.c.0.s8 %v3973
      %v3975 = vlaneseq
      %v3976 = vshrl.u32 %v3975, 7
      %v3977 = vsub.s32 %v3974, %v3976
      %v3978 = vrot.slane %v3971, %v3977
      %v3979 = vcombine.low %v3970, %v3978
      %v3980 = vcombine.high %v3970, %v3978
      %v3981 = vcombine.low %v3539, %v3546
      %v3983 = vunpack.c.l.s4 1983009808
      %v3984 = vunpack.c.0.s8 %v3983
      %v3985 = vlaneseq
      %v3986 = vshrl.u32 %v3985, 7
      %v3987 = vsub.s32 %v3984, %v3986
      %v3988 = vrot.slane %v3981, %v3987
      %v3989 = vcombine.low %v3563, %v3564
      %v3991 = vunpack.c.l.s4 1983009808
      %v3992 = vunpack.c.0.s8 %v3991
      %v3993 = vlaneseq
      %v3994 = vshrl.u32 %v3993, 7
      %v3995 = vsub.s32 %v3992, %v3994
      %v3996 = vrot.slane %v3989, %v3995
      %v3997 = vcombine.low %v3555, %v3562
      %v3999 = vunpack.c.l.s4 1983009808
      %v4000 = vunpack.c.0.s8 %v3999
      %v4001 = vlaneseq
      %v4002 = vshrl.u32 %v4001, 7
      %v4003 = vsub.s32 %v4000, %v4002
      %v4004 = vrot.slane %v3997, %v4003
      %v4005 = vcombine.low %v3565, %v3566
      %v4007 = vunpack.c.l.s4 1983009808
      %v4008 = vunpack.c.0.s8 %v4007
      %v4009 = vlaneseq
      %v4010 = vshrl.u32 %v4009, 7
      %v4011 = vsub.s32 %v4008, %v4010
      %v4012 = vrot.slane %v4005, %v4011
      %v4013 = vcombine.low %v3988, %v3996
      %v4015 = vunpack.c.l.s4 1934713408
      %v4016 = vunpack.c.0.s8 %v4015
      %v4017 = vlaneseq
      %v4018 = vshrl.u32 %v4017, 7
      %v4019 = vsub.s32 %v4016, %v4018
      %v4020 = vrot.slane %v4013, %v4019
      %v4021 = vcombine.low %v4004, %v4012
      %v4023 = vunpack.c.l.s4 1934713408
      %v4024 = vunpack.c.0.s8 %v4023
      %v4025 = vlaneseq
      %v4026 = vshrl.u32 %v4025, 7
      %v4027 = vsub.s32 %v4024, %v4026
      %v4028 = vrot.slane %v4021, %v4027
      %v4029 = vcombine.low %v4020, %v4028
      %v4030 = vcombine.high %v4020, %v4028
      %v4031 = vcombine.low %v3605, %v3612
      %v4033 = vunpack.c.l.s4 1983009808
      %v4034 = vunpack.c.0.s8 %v4033
      %v4035 = vlaneseq
      %v4036 = vshrl.u32 %v4035, 7
      %v4037 = vsub.s32 %v4034, %v4036
      %v4038 = vrot.slane %v4031, %v4037
      %v4039 = vcombine.low %v3629, %v3630
      %v4041 = vunpack.c.l.s4 1983009808
      %v4042 = vunpack.c.0.s8 %v4041
      %v4043 = vlaneseq
      %v4044 = vshrl.u32 %v4043, 7
      %v4045 = vsub.s32 %v4042, %v4044
      %v4046 = vrot.slane %v4039, %v4045
      %v4047 = vcombine.low %v3621, %v3628
      %v4049 = vunpack.c.l.s4 1983009808
      %v4050 = vunpack.c.0.s8 %v4049
      %v4051 = vlaneseq
      %v4052 = vshrl.u32 %v4051, 7
      %v4053 = vsub.s32 %v4050, %v4052
      %v4054 = vrot.slane %v4047, %v4053
      %v4055 = vcombine.low %v3631, %v3632
      %v4057 = vunpack.c.l.s4 1983009808
      %v4058 = vunpack.c.0.s8 %v4057
      %v4059 = vlaneseq
      %v4060 = vshrl.u32 %v4059, 7
      %v4061 = vsub.s32 %v4058, %v4060
      %v4062 = vrot.slane %v4055, %v4061
      %v4063 = vcombine.low %v4038, %v4046
      %v4065 = vunpack.c.l.s4 1934713408
      %v4066 = vunpack.c.0.s8 %v4065
      %v4067 = vlaneseq
      %v4068 = vshrl.u32 %v4067, 7
      %v4069 = vsub.s32 %v4066, %v4068
      %v4070 = vrot.slane %v4063, %v4069
      %v4071 = vcombine.low %v4054, %v4062
      %v4073 = vunpack.c.l.s4 1934713408
      %v4074 = vunpack.c.0.s8 %v4073
      %v4075 = vlaneseq
      %v4076 = vshrl.u32 %v4075, 7
      %v4077 = vsub.s32 %v4074, %v4076
      %v4078 = vrot.slane %v4071, %v4077
      %v4079 = vcombine.low %v4070, %v4078
      %v4080 = vcombine.high %v4070, %v4078
      %v4081 = vcombine.low %v3671, %v3678
      %v4083 = vunpack.c.l.s4 1983009808
      %v4084 = vunpack.c.0.s8 %v4083
      %v4085 = vlaneseq
      %v4086 = vshrl.u32 %v4085, 7
      %v4087 = vsub.s32 %v4084, %v4086
      %v4088 = vrot.slane %v4081, %v4087
      %v4089 = vcombine.low %v3695, %v3696
      %v4091 = vunpack.c.l.s4 1983009808
      %v4092 = vunpack.c.0.s8 %v4091
      %v4093 = vlaneseq
      %v4094 = vshrl.u32 %v4093, 7
      %v4095 = vsub.s32 %v4092, %v4094
      %v4096 = vrot.slane %v4089, %v4095
      %v4097 = vcombine.low %v3687, %v3694
      %v4099 = vunpack.c.l.s4 1983009808
      %v4100 = vunpack.c.0.s8 %v4099
      %v4101 = vlaneseq
      %v4102 = vshrl.u32 %v4101, 7
      %v4103 = vsub.s32 %v4100, %v4102
      %v4104 = vrot.slane %v4097, %v4103
      %v4105 = vcombine.low %v3697, %v3698
      %v4107 = vunpack.c.l.s4 1983009808
      %v4108 = vunpack.c.0.s8 %v4107
      %v4109 = vlaneseq
      %v4110 = vshrl.u32 %v4109, 7
      %v4111 = vsub.s32 %v4108, %v4110
      %v4112 = vrot.slane %v4105, %v4111
      %v4113 = vcombine.low %v4088, %v4096
      %v4115 = vunpack.c.l.s4 1934713408
      %v4116 = vunpack.c.0.s8 %v4115
      %v4117 = vlaneseq
      %v4118 = vshrl.u32 %v4117, 7
      %v4119 = vsub.s32 %v4116, %v4118
      %v4120 = vrot.slane %v4113, %v4119
      %v4121 = vcombine.low %v4104, %v4112
      %v4123 = vunpack.c.l.s4 1934713408
      %v4124 = vunpack.c.0.s8 %v4123
      %v4125 = vlaneseq
      %v4126 = vshrl.u32 %v4125, 7
      %v4127 = vsub.s32 %v4124, %v4126
      %v4128 = vrot.slane %v4121, %v4127
      %v4129 = vcombine.low %v4120, %v4128
      %v4130 = vcombine.high %v4120, %v4128
      %v4131 = vcombine.low %v3737, %v3744
      %v4133 = vunpack.c.l.s4 1983009808
      %v4134 = vunpack.c.0.s8 %v4133
      %v4135 = vlaneseq
      %v4136 = vshrl.u32 %v4135, 7
      %v4137 = vsub.s32 %v4134, %v4136
      %v4138 = vrot.slane %v4131, %v4137
      %v4139 = vcombine.low %v3761, %v3762
      %v4141 = vunpack.c.l.s4 1983009808
      %v4142 = vunpack.c.0.s8 %v4141
      %v4143 = vlaneseq
      %v4144 = vshrl.u32 %v4143, 7
      %v4145 = vsub.s32 %v4142, %v4144
      %v4146 = vrot.slane %v4139, %v4145
      %v4147 = vcombine.low %v3753, %v3760
      %v4149 = vunpack.c.l.s4 1983009808
      %v4150 = vunpack.c.0.s8 %v4149
      %v4151 = vlaneseq
      %v4152 = vshrl.u32 %v4151, 7
      %v4153 = vsub.s32 %v4150, %v4152
      %v4154 = vrot.slane %v4147, %v4153
      %v4155 = vcombine.low %v3763, %v3764
      %v4157 = vunpack.c.l.s4 1983009808
      %v4158 = vunpack.c.0.s8 %v4157
      %v4159 = vlaneseq
      %v4160 = vshrl.u32 %v4159, 7
      %v4161 = vsub.s32 %v4158, %v4160
      %v4162 = vrot.slane %v4155, %v4161
      %v4163 = vcombine.low %v4138, %v4146
      %v4165 = vunpack.c.l.s4 1934713408
      %v4166 = vunpack.c.0.s8 %v4165
      %v4167 = vlaneseq
      %v4168 = vshrl.u32 %v4167, 7
      %v4169 = vsub.s32 %v4166, %v4168
      %v4170 = vrot.slane %v4163, %v4169
      %v4171 = vcombine.low %v4154, %v4162
      %v4173 = vunpack.c.l.s4 1934713408
      %v4174 = vunpack.c.0.s8 %v4173
      %v4175 = vlaneseq
      %v4176 = vshrl.u32 %v4175, 7
      %v4177 = vsub.s32 %v4174, %v4176
      %v4178 = vrot.slane %v4171, %v4177
      %v4179 = vcombine.low %v4170, %v4178
      %v4180 = vcombine.high %v4170, %v4178
      %v4181 = vcombine.low %v3803, %v3810
      %v4183 = vunpack.c.l.s4 1983009808
      %v4184 = vunpack.c.0.s8 %v4183
      %v4185 = vlaneseq
      %v4186 = vshrl.u32 %v4185, 7
      %v4187 = vsub.s32 %v4184, %v4186
      %v4188 = vrot.slane %v4181, %v4187
      %v4189 = vcombine.low %v3827, %v3828
      %v4191 = vunpack.c.l.s4 1983009808
      %v4192 = vunpack.c.0.s8 %v4191
      %v4193 = vlaneseq
      %v4194 = vshrl.u32 %v4193, 7
      %v4195 = vsub.s32 %v4192, %v4194
      %v4196 = vrot.slane %v4189, %v4195
      %v4197 = vcombine.low %v3819, %v3826
      %v4199 = vunpack.c.l.s4 1983009808
      %v4200 = vunpack.c.0.s8 %v4199
      %v4201 = vlaneseq
      %v4202 = vshrl.u32 %v4201, 7
      %v4203 = vsub.s32 %v4200, %v4202
      %v4204 = vrot.slane %v4197, %v4203
      %v4205 = vcombine.low %v3829, %v3830
      %v4207 = vunpack.c.l.s4 1983009808
      %v4208 = vunpack.c.0.s8 %v4207
      %v4209 = vlaneseq
      %v4210 = vshrl.u32 %v4209, 7
      %v4211 = vsub.s32 %v4208, %v4210
      %v4212 = vrot.slane %v4205, %v4211
      %v4213 = vcombine.low %v4188, %v4196
      %v4215 = vunpack.c.l.s4 1934713408
      %v4216 = vunpack.c.0.s8 %v4215
      %v4217 = vlaneseq
      %v4218 = vshrl.u32 %v4217, 7
      %v4219 = vsub.s32 %v4216, %v4218
      %v4220 = vrot.slane %v4213, %v4219
      %v4221 = vcombine.low %v4204, %v4212
      %v4223 = vunpack.c.l.s4 1934713408
      %v4224 = vunpack.c.0.s8 %v4223
      %v4225 = vlaneseq
      %v4226 = vshrl.u32 %v4225, 7
      %v4227 = vsub.s32 %v4224, %v4226
      %v4228 = vrot.slane %v4221, %v4227
      %v4229 = vcombine.low %v4220, %v4228
      %v4230 = vcombine.high %v4220, %v4228
      %v4233 = vpack.i.b16 %v3929, %v3879
      %v4235 = vshrl.u32 %v3879, 16
      %v4236 = vshrl.u32 %v3929, 16
      %v4237 = vpack.i.b16 %v4236, %v4235
      %v4241 = vpack.i.b16 %v3930, %v3880
      %v4243 = vshrl.u32 %v3880, 16
      %v4244 = vshrl.u32 %v3930, 16
      %v4245 = vpack.i.b16 %v4244, %v4243
      %v4249 = vpack.i.b16 %v4029, %v3979
      %v4251 = vshrl.u32 %v3979, 16
      %v4252 = vshrl.u32 %v4029, 16
      %v4253 = vpack.i.b16 %v4252, %v4251
      %v4257 = vpack.i.b16 %v4030, %v3980
      %v4259 = vshrl.u32 %v3980, 16
      %v4260 = vshrl.u32 %v4030, 16
      %v4261 = vpack.i.b16 %v4260, %v4259
      %v4265 = vpack.i.b16 %v4129, %v4079
      %v4267 = vshrl.u32 %v4079, 16
      %v4268 = vshrl.u32 %v4129, 16
      %v4269 = vpack.i.b16 %v4268, %v4267
      %v4273 = vpack.i.b16 %v4130, %v4080
      %v4275 = vshrl.u32 %v4080, 16
      %v4276 = vshrl.u32 %v4130, 16
      %v4277 = vpack.i.b16 %v4276, %v4275
      %v4281 = vpack.i.b16 %v4229, %v4179
      %v4283 = vshrl.u32 %v4179, 16
      %v4284 = vshrl.u32 %v4229, 16
      %v4285 = vpack.i.b16 %v4284, %v4283
      %v4289 = vpack.i.b16 %v4230, %v4180
      %v4291 = vshrl.u32 %v4180, 16
      %v4292 = vshrl.u32 %v4230, 16
      %v4293 = vpack.i.b16 %v4292, %v4291
      %vm4295 = vcmask 261120
      %v4297 = vsel %vm4295, %v2097, 0
      %v4300 = vsel %vm4295, %v2109, 0
      %v4303 = vsel %vm4295, %v2121, 0
      %v4306 = vsel %vm4295, %v2133, 0
      %v4309 = vsel %vm4295, %v3165, 0
      %v4312 = vsel %vm4295, %v3177, 0
      %v4315 = vsel %vm4295, %v3189, 0
      %v4318 = vsel %vm4295, %v3201, 0
      %4320 = vmatprep.subr.bf16.mxu0 0
      %4321 = vmatpush1.bf16.xpose.msra.mxu0 0
      %4322 = vmatprep.subr.bf16.mxu0 0
      %4323 = vmatpush1.bf16.xpose.msra.mxu0 0
      %4324 = vmatprep.subr.bf16.mxu0 0
      %4325 = vmatpush1.bf16.xpose.msra.mxu0 0
      %4326 = vmatprep.subr.bf16.mxu0 0
      %4327 = vmatpush1.bf16.xpose.msra.mxu0 0
      %4328 = vmatprep.subr.bf16.mxu0 0
      %4329 = vmatpush1.bf16.xpose.msra.mxu0 %v4318
      %4330 = vmatprep.subr.bf16.mxu0 0
      %4331 = vmatpush1.bf16.xpose.msra.mxu0 %v4315
      %4332 = vmatprep.subr.bf16.mxu0 0
      %4333 = vmatpush1.bf16.xpose.msra.mxu0 %v4312
      %4334 = vmatprep.subr.bf16.mxu0 0
      %4335 = vmatpush1.bf16.xpose.msra.mxu0 %v4309
      %4336 = vmatprep.subr.bf16.mxu0 0
      %4337 = vmatpush2.bf16.xpose.msra.mxu0 0
      %4338 = vmatprep.subr.bf16.mxu0 0
      %4339 = vmatpush2.bf16.xpose.msra.mxu0 0
      %4340 = vmatprep.subr.bf16.mxu0 0
      %4341 = vmatpush2.bf16.xpose.msra.mxu0 0
      %4342 = vmatprep.subr.bf16.mxu0 0
      %4343 = vmatpush2.bf16.xpose.msra.mxu0 0
      %4344 = vmatprep.subr.bf16.mxu0 0
      %4345 = vmatpush2.bf16.xpose.msra.mxu0 0
      %4346 = vmatprep.subr.bf16.mxu0 0
      %4347 = vmatpush2.bf16.xpose.msra.mxu0 0
      %4348 = vmatprep.subr.bf16.mxu0 0
      %4349 = vmatpush2.bf16.xpose.msra.mxu0 0
      %4350 = vmatprep.subr.bf16.mxu0 0
      %4351 = vmatpush2.bf16.xpose.msra.mxu0 0
      %4352 = vmatprep.mubr.bf16.mxu0 0
      %4353 = vmatmul.mubr.bf16.gmra.mxu0 %v4297
      %v4354 = vpop.f32.mrf.mxu0
      %v4355 = vadd.f32 0.0, %v4354
      %v4356 = vpop.f32.mrf.mxu0
      %v4357 = vpop.f32.mrf.mxu0
      %v4358 = vadd.f32 0.0, %v4357
      %v4359 = vpop.f32.mrf.mxu0
      %4360 = vmatprep.mubr.bf16.mxu0 0
      %4361 = vmatmul.mubr.bf16.gmra.mxu0 %v4300
      %v4362 = vpop.f32.mrf.mxu0
      %v4363 = vadd.f32 0.0, %v4362
      %v4364 = vpop.f32.mrf.mxu0
      %v4365 = vpop.f32.mrf.mxu0
      %v4366 = vadd.f32 0.0, %v4365
      %v4367 = vpop.f32.mrf.mxu0
      %4368 = vmatprep.mubr.bf16.mxu0 0
      %4369 = vmatmul.mubr.bf16.gmra.mxu0 %v4303
      %v4370 = vpop.f32.mrf.mxu0
      %v4371 = vadd.f32 0.0, %v4370
      %v4372 = vpop.f32.mrf.mxu0
      %v4373 = vpop.f32.mrf.mxu0
      %v4374 = vadd.f32 0.0, %v4373
      %v4375 = vpop.f32.mrf.mxu0
      %4376 = vmatprep.mubr.bf16.mxu0 0
      %4377 = vmatmul.mubr.bf16.gmra.mxu0 %v4306
      %v4378 = vpop.f32.mrf.mxu0
      %v4379 = vadd.f32 0.0, %v4378
      %v4380 = vpop.f32.mrf.mxu0
      %v4381 = vpop.f32.mrf.mxu0
      %v4382 = vadd.f32 0.0, %v4381
      %v4383 = vpop.f32.mrf.mxu0
      %4384 = vdwg.mxu0
      %v4386 = vsel %vm4295, %v2100, 0
      %v4389 = vsel %vm4295, %v2112, 0
      %v4392 = vsel %vm4295, %v2124, 0
      %v4395 = vsel %vm4295, %v2136, 0
      %v4398 = vsel %vm4295, %v3168, 0
      %v4401 = vsel %vm4295, %v3180, 0
      %v4404 = vsel %vm4295, %v3192, 0
      %v4407 = vsel %vm4295, %v3204, 0
      %4409 = vmatprep.subr.bf16.mxu0 0
      %4410 = vmatpush1.bf16.xpose.msra.mxu0 0
      %4411 = vmatprep.subr.bf16.mxu0 0
      %4412 = vmatpush1.bf16.xpose.msra.mxu0 0
      %4413 = vmatprep.subr.bf16.mxu0 0
      %4414 = vmatpush1.bf16.xpose.msra.mxu0 0
      %4415 = vmatprep.subr.bf16.mxu0 0
      %4416 = vmatpush1.bf16.xpose.msra.mxu0 0
      %4417 = vmatprep.subr.bf16.mxu0 0
      %4418 = vmatpush1.bf16.xpose.msra.mxu0 %v4407
      %4419 = vmatprep.subr.bf16.mxu0 0
      %4420 = vmatpush1.bf16.xpose.msra.mxu0 %v4404
      %4421 = vmatprep.subr.bf16.mxu0 0
      %4422 = vmatpush1.bf16.xpose.msra.mxu0 %v4401
      %4423 = vmatprep.subr.bf16.mxu0 0
      %4424 = vmatpush1.bf16.xpose.msra.mxu0 %v4398
      %4425 = vmatprep.subr.bf16.mxu0 0
      %4426 = vmatpush2.bf16.xpose.msra.mxu0 0
      %4427 = vmatprep.subr.bf16.mxu0 0
      %4428 = vmatpush2.bf16.xpose.msra.mxu0 0
      %4429 = vmatprep.subr.bf16.mxu0 0
      %4430 = vmatpush2.bf16.xpose.msra.mxu0 0
      %4431 = vmatprep.subr.bf16.mxu0 0
      %4432 = vmatpush2.bf16.xpose.msra.mxu0 0
      %4433 = vmatprep.subr.bf16.mxu0 0
      %4434 = vmatpush2.bf16.xpose.msra.mxu0 0
      %4435 = vmatprep.subr.bf16.mxu0 0
      %4436 = vmatpush2.bf16.xpose.msra.mxu0 0
      %4437 = vmatprep.subr.bf16.mxu0 0
      %4438 = vmatpush2.bf16.xpose.msra.mxu0 0
      %4439 = vmatprep.subr.bf16.mxu0 0
      %4440 = vmatpush2.bf16.xpose.msra.mxu0 0
      %4441 = vmatprep.mubr.bf16.mxu0 0
      %4442 = vmatmul.mubr.bf16.gmra.mxu0 %v4386
      %v4443 = vpop.f32.mrf.mxu0
      %v4444 = vadd.f32 0.0, %v4443
      %v4445 = vpop.f32.mrf.mxu0
      %v4446 = vpop.f32.mrf.mxu0
      %v4447 = vadd.f32 0.0, %v4446
      %v4448 = vpop.f32.mrf.mxu0
      %4449 = vmatprep.mubr.bf16.mxu0 0
      %4450 = vmatmul.mubr.bf16.gmra.mxu0 %v4389
      %v4451 = vpop.f32.mrf.mxu0
      %v4452 = vadd.f32 0.0, %v4451
      %v4453 = vpop.f32.mrf.mxu0
      %v4454 = vpop.f32.mrf.mxu0
      %v4455 = vadd.f32 0.0, %v4454
      %v4456 = vpop.f32.mrf.mxu0
      %4457 = vmatprep.mubr.bf16.mxu0 0
      %4458 = vmatmul.mubr.bf16.gmra.mxu0 %v4392
      %v4459 = vpop.f32.mrf.mxu0
      %v4460 = vadd.f32 0.0, %v4459
      %v4461 = vpop.f32.mrf.mxu0
      %v4462 = vpop.f32.mrf.mxu0
      %v4463 = vadd.f32 0.0, %v4462
      %v4464 = vpop.f32.mrf.mxu0
      %4465 = vmatprep.mubr.bf16.mxu0 0
      %4466 = vmatmul.mubr.bf16.gmra.mxu0 %v4395
      %v4467 = vpop.f32.mrf.mxu0
      %v4468 = vadd.f32 0.0, %v4467
      %v4469 = vpop.f32.mrf.mxu0
      %v4470 = vpop.f32.mrf.mxu0
      %v4471 = vadd.f32 0.0, %v4470
      %v4472 = vpop.f32.mrf.mxu0
      %4473 = vdwg.mxu0
      %v4475 = vsel %vm4295, %v2103, 0
      %v4478 = vsel %vm4295, %v2115, 0
      %v4481 = vsel %vm4295, %v2127, 0
      %v4484 = vsel %vm4295, %v2139, 0
      %v4487 = vsel %vm4295, %v3171, 0
      %v4490 = vsel %vm4295, %v3183, 0
      %v4493 = vsel %vm4295, %v3195, 0
      %v4496 = vsel %vm4295, %v3207, 0
      %4498 = vmatprep.subr.bf16.mxu0 0
      %4499 = vmatpush1.bf16.xpose.msra.mxu0 0
      %4500 = vmatprep.subr.bf16.mxu0 0
      %4501 = vmatpush1.bf16.xpose.msra.mxu0 0
      %4502 = vmatprep.subr.bf16.mxu0 0
      %4503 = vmatpush1.bf16.xpose.msra.mxu0 0
      %4504 = vmatprep.subr.bf16.mxu0 0
      %4505 = vmatpush1.bf16.xpose.msra.mxu0 0
      %4506 = vmatprep.subr.bf16.mxu0 0
      %4507 = vmatpush1.bf16.xpose.msra.mxu0 %v4496
      %4508 = vmatprep.subr.bf16.mxu0 0
      %4509 = vmatpush1.bf16.xpose.msra.mxu0 %v4493
      %4510 = vmatprep.subr.bf16.mxu0 0
      %4511 = vmatpush1.bf16.xpose.msra.mxu0 %v4490
      %4512 = vmatprep.subr.bf16.mxu0 0
      %4513 = vmatpush1.bf16.xpose.msra.mxu0 %v4487
      %4514 = vmatprep.subr.bf16.mxu0 0
      %4515 = vmatpush2.bf16.xpose.msra.mxu0 0
      %4516 = vmatprep.subr.bf16.mxu0 0
      %4517 = vmatpush2.bf16.xpose.msra.mxu0 0
      %4518 = vmatprep.subr.bf16.mxu0 0
      %4519 = vmatpush2.bf16.xpose.msra.mxu0 0
      %4520 = vmatprep.subr.bf16.mxu0 0
      %4521 = vmatpush2.bf16.xpose.msra.mxu0 0
      %4522 = vmatprep.subr.bf16.mxu0 0
      %4523 = vmatpush2.bf16.xpose.msra.mxu0 0
      %4524 = vmatprep.subr.bf16.mxu0 0
      %4525 = vmatpush2.bf16.xpose.msra.mxu0 0
      %4526 = vmatprep.subr.bf16.mxu0 0
      %4527 = vmatpush2.bf16.xpose.msra.mxu0 0
      %4528 = vmatprep.subr.bf16.mxu0 0
      %4529 = vmatpush2.bf16.xpose.msra.mxu0 0
      %4530 = vmatprep.mubr.bf16.mxu0 0
      %4531 = vmatmul.mubr.bf16.gmra.mxu0 %v4475
      %v4532 = vpop.f32.mrf.mxu0
      %v4533 = vadd.f32 0.0, %v4532
      %v4534 = vpop.f32.mrf.mxu0
      %v4535 = vpop.f32.mrf.mxu0
      %v4536 = vadd.f32 0.0, %v4535
      %v4537 = vpop.f32.mrf.mxu0
      %4538 = vmatprep.mubr.bf16.mxu0 0
      %4539 = vmatmul.mubr.bf16.gmra.mxu0 %v4478
      %v4540 = vpop.f32.mrf.mxu0
      %v4541 = vadd.f32 0.0, %v4540
      %v4542 = vpop.f32.mrf.mxu0
      %v4543 = vpop.f32.mrf.mxu0
      %v4544 = vadd.f32 0.0, %v4543
      %v4545 = vpop.f32.mrf.mxu0
      %4546 = vmatprep.mubr.bf16.mxu0 0
      %4547 = vmatmul.mubr.bf16.gmra.mxu0 %v4481
      %v4548 = vpop.f32.mrf.mxu0
      %v4549 = vadd.f32 0.0, %v4548
      %v4550 = vpop.f32.mrf.mxu0
      %v4551 = vpop.f32.mrf.mxu0
      %v4552 = vadd.f32 0.0, %v4551
      %v4553 = vpop.f32.mrf.mxu0
      %4554 = vmatprep.mubr.bf16.mxu0 0
      %4555 = vmatmul.mubr.bf16.gmra.mxu0 %v4484
      %v4556 = vpop.f32.mrf.mxu0
      %v4557 = vadd.f32 0.0, %v4556
      %v4558 = vpop.f32.mrf.mxu0
      %v4559 = vpop.f32.mrf.mxu0
      %v4560 = vadd.f32 0.0, %v4559
      %v4561 = vpop.f32.mrf.mxu0
      %4562 = vdwg.mxu0
      %v4564 = vsel %vm4295, %v2106, 0
      %v4567 = vsel %vm4295, %v2118, 0
      %v4570 = vsel %vm4295, %v2130, 0
      %v4573 = vsel %vm4295, %v2142, 0
      %v4576 = vsel %vm4295, %v3174, 0
      %v4579 = vsel %vm4295, %v3186, 0
      %v4582 = vsel %vm4295, %v3198, 0
      %v4585 = vsel %vm4295, %v3210, 0
      %4587 = vmatprep.subr.bf16.mxu0 0
      %4588 = vmatpush1.bf16.xpose.msra.mxu0 0
      %4589 = vmatprep.subr.bf16.mxu0 0
      %4590 = vmatpush1.bf16.xpose.msra.mxu0 0
      %4591 = vmatprep.subr.bf16.mxu0 0
      %4592 = vmatpush1.bf16.xpose.msra.mxu0 0
      %4593 = vmatprep.subr.bf16.mxu0 0
      %4594 = vmatpush1.bf16.xpose.msra.mxu0 0
      %4595 = vmatprep.subr.bf16.mxu0 0
      %4596 = vmatpush1.bf16.xpose.msra.mxu0 %v4585
      %4597 = vmatprep.subr.bf16.mxu0 0
      %4598 = vmatpush1.bf16.xpose.msra.mxu0 %v4582
      %4599 = vmatprep.subr.bf16.mxu0 0
      %4600 = vmatpush1.bf16.xpose.msra.mxu0 %v4579
      %4601 = vmatprep.subr.bf16.mxu0 0
      %4602 = vmatpush1.bf16.xpose.msra.mxu0 %v4576
      %4603 = vmatprep.subr.bf16.mxu0 0
      %4604 = vmatpush2.bf16.xpose.msra.mxu0 0
      %4605 = vmatprep.subr.bf16.mxu0 0
      %4606 = vmatpush2.bf16.xpose.msra.mxu0 0
      %4607 = vmatprep.subr.bf16.mxu0 0
      %4608 = vmatpush2.bf16.xpose.msra.mxu0 0
      %4609 = vmatprep.subr.bf16.mxu0 0
      %4610 = vmatpush2.bf16.xpose.msra.mxu0 0
      %4611 = vmatprep.subr.bf16.mxu0 0
      %4612 = vmatpush2.bf16.xpose.msra.mxu0 0
      %4613 = vmatprep.subr.bf16.mxu0 0
      %4614 = vmatpush2.bf16.xpose.msra.mxu0 0
      %4615 = vmatprep.subr.bf16.mxu0 0
      %4616 = vmatpush2.bf16.xpose.msra.mxu0 0
      %4617 = vmatprep.subr.bf16.mxu0 0
      %4618 = vmatpush2.bf16.xpose.msra.mxu0 0
      %4619 = vmatprep.mubr.bf16.mxu0 0
      %4620 = vmatmul.mubr.bf16.gmra.mxu0 %v4564
      %v4621 = vpop.f32.mrf.mxu0
      %v4622 = vadd.f32 0.0, %v4621
      %v4623 = vpop.f32.mrf.mxu0
      %v4624 = vpop.f32.mrf.mxu0
      %v4625 = vadd.f32 0.0, %v4624
      %v4626 = vpop.f32.mrf.mxu0
      %4627 = vmatprep.mubr.bf16.mxu0 0
      %4628 = vmatmul.mubr.bf16.gmra.mxu0 %v4567
      %v4629 = vpop.f32.mrf.mxu0
      %v4630 = vadd.f32 0.0, %v4629
      %v4631 = vpop.f32.mrf.mxu0
      %v4632 = vpop.f32.mrf.mxu0
      %v4633 = vadd.f32 0.0, %v4632
      %v4634 = vpop.f32.mrf.mxu0
      %4635 = vmatprep.mubr.bf16.mxu0 0
      %4636 = vmatmul.mubr.bf16.gmra.mxu0 %v4570
      %v4637 = vpop.f32.mrf.mxu0
      %v4638 = vadd.f32 0.0, %v4637
      %v4639 = vpop.f32.mrf.mxu0
      %v4640 = vpop.f32.mrf.mxu0
      %v4641 = vadd.f32 0.0, %v4640
      %v4642 = vpop.f32.mrf.mxu0
      %4643 = vmatprep.mubr.bf16.mxu0 0
      %4644 = vmatmul.mubr.bf16.gmra.mxu0 %v4573
      %v4645 = vpop.f32.mrf.mxu0
      %v4646 = vadd.f32 0.0, %v4645
      %v4647 = vpop.f32.mrf.mxu0
      %v4648 = vpop.f32.mrf.mxu0
      %v4649 = vadd.f32 0.0, %v4648
      %v4650 = vpop.f32.mrf.mxu0
      %4651 = vdwg.mxu0
      %v4652 = vmul.f32 %v4355, 0.17677669
      %v4653 = vmul.f32 %v4358, 0.17677669
      %v4654 = vmul.f32 %v4363, 0.17677669
      %v4655 = vmul.f32 %v4366, 0.17677669
      %v4656 = vmul.f32 %v4371, 0.17677669
      %v4657 = vmul.f32 %v4374, 0.17677669
      %v4658 = vmul.f32 %v4379, 0.17677669
      %v4659 = vmul.f32 %v4382, 0.17677669
      %v4660 = vmul.f32 %v4444, 0.17677669
      %v4661 = vmul.f32 %v4447, 0.17677669
      %v4662 = vmul.f32 %v4452, 0.17677669
      %v4663 = vmul.f32 %v4455, 0.17677669
      %v4664 = vmul.f32 %v4460, 0.17677669
      %v4665 = vmul.f32 %v4463, 0.17677669
      %v4666 = vmul.f32 %v4468, 0.17677669
      %v4667 = vmul.f32 %v4471, 0.17677669
      %v4668 = vmul.f32 %v4533, 0.17677669
      %v4669 = vmul.f32 %v4536, 0.17677669
      %v4670 = vmul.f32 %v4541, 0.17677669
      %v4671 = vmul.f32 %v4544, 0.17677669
      %v4672 = vmul.f32 %v4549, 0.17677669
      %v4673 = vmul.f32 %v4552, 0.17677669
      %v4674 = vmul.f32 %v4557, 0.17677669
      %v4675 = vmul.f32 %v4560, 0.17677669
      %v4676 = vmul.f32 %v4622, 0.17677669
      %v4677 = vmul.f32 %v4625, 0.17677669
      %v4678 = vmul.f32 %v4630, 0.17677669
      %v4679 = vmul.f32 %v4633, 0.17677669
      %v4680 = vmul.f32 %v4638, 0.17677669
      %v4681 = vmul.f32 %v4641, 0.17677669
      %v4682 = vmul.f32 %v4646, 0.17677669
      %v4683 = vmul.f32 %v4649, 0.17677669
      %v4684 = vlaneseq
      %v4685 = vshrl.u32 %v4684, 7
      %v4686 = vadd.s32 %v4685, 8
      %v4687 = vadd.s32 %v4685, 16
      %v4688 = vadd.s32 %v4685, 24
      %v4689 = vadd.s32 %v4685, 32
      %v4690 = vadd.s32 %v4685, 40
      %v4691 = vadd.s32 %v4685, 48
      %v4692 = vadd.s32 %v4685, 56
      %v4693 = vlaneseq
      %v4694 = vand.u32 %v4693, 127
      %vm4695 = vcmp.le.s32.totalorder %v4694, %v4685
      %vm4696 = vcmp.le.s32.totalorder %v4694, %v4686
      %vm4697 = vcmp.le.s32.totalorder %v4694, %v4687
      %vm4698 = vcmp.le.s32.totalorder %v4694, %v4688
      %vm4699 = vcmp.le.s32.totalorder %v4694, %v4689
      %vm4700 = vcmp.le.s32.totalorder %v4694, %v4690
      %vm4701 = vcmp.le.s32.totalorder %v4694, %v4691
      %vm4702 = vcmp.le.s32.totalorder %v4694, %v4692
      %v4703 = vsel %vm4695, 1, 0
      %v4704 = vsel %vm4696, 1, 0
      %v4705 = vsel %vm4697, 1, 0
      %v4706 = vsel %vm4698, 1, 0
      %v4707 = vsel %vm4699, 1, 0
      %v4708 = vsel %vm4700, 1, 0
      %v4709 = vsel %vm4701, 1, 0
      %v4710 = vsel %vm4702, 1, 0
      %vm4711 = vcmp.eq.s32.totalorder %v4703, 1
      %vm4712 = vcmp.eq.s32.totalorder %v4704, 1
      %vm4713 = vcmp.eq.s32.totalorder %v4705, 1
      %vm4714 = vcmp.eq.s32.totalorder %v4706, 1
      %vm4715 = vcmp.eq.s32.totalorder %v4707, 1
      %vm4716 = vcmp.eq.s32.totalorder %v4708, 1
      %vm4717 = vcmp.eq.s32.totalorder %v4709, 1
      %vm4718 = vcmp.eq.s32.totalorder %v4710, 1
      %v4719 = vsel %vm4711, %v4652, -1e+30
      %v4720 = vsel %vm4712, %v4653, -1e+30
      %v4721 = vsel %vm4713, %v4654, -1e+30
      %v4722 = vsel %vm4714, %v4655, -1e+30
      %v4723 = vsel %vm4715, %v4656, -1e+30
      %v4724 = vsel %vm4716, %v4657, -1e+30
      %v4725 = vsel %vm4717, %v4658, -1e+30
      %v4726 = vsel %vm4718, %v4659, -1e+30
      %v4727 = vsel %vm4711, %v4660, -1e+30
      %v4728 = vsel %vm4712, %v4661, -1e+30
      %v4729 = vsel %vm4713, %v4662, -1e+30
      %v4730 = vsel %vm4714, %v4663, -1e+30
      %v4731 = vsel %vm4715, %v4664, -1e+30
      %v4732 = vsel %vm4716, %v4665, -1e+30
      %v4733 = vsel %vm4717, %v4666, -1e+30
      %v4734 = vsel %vm4718, %v4667, -1e+30
      %v4735 = vsel %vm4711, %v4668, -1e+30
      %v4736 = vsel %vm4712, %v4669, -1e+30
      %v4737 = vsel %vm4713, %v4670, -1e+30
      %v4738 = vsel %vm4714, %v4671, -1e+30
      %v4739 = vsel %vm4715, %v4672, -1e+30
      %v4740 = vsel %vm4716, %v4673, -1e+30
      %v4741 = vsel %vm4717, %v4674, -1e+30
      %v4742 = vsel %vm4718, %v4675, -1e+30
      %v4743 = vsel %vm4711, %v4676, -1e+30
      %v4744 = vsel %vm4712, %v4677, -1e+30
      %v4745 = vsel %vm4713, %v4678, -1e+30
      %v4746 = vsel %vm4714, %v4679, -1e+30
      %v4747 = vsel %vm4715, %v4680, -1e+30
      %v4748 = vsel %vm4716, %v4681, -1e+30
      %v4749 = vsel %vm4717, %v4682, -1e+30
      %v4750 = vsel %vm4718, %v4683, -1e+30
      %vm4751 = vcmask 523264
      %v4752 = vsel %vm4751, %v4719, -inf
      %4753 = vmax.xlane.f32.xlu0 %v4752
      %v4754 = vpop.xlane.xlu0 %4753
      %v4755 = vsel %vm4751, %v4720, -inf
      %4756 = vmax.xlane.f32.xlu0 %v4755
      %v4757 = vpop.xlane.xlu0 %4756
      %v4758 = vsel %vm4751, %v4721, -inf
      %4759 = vmax.xlane.f32.xlu0 %v4758
      %v4760 = vpop.xlane.xlu0 %4759
      %v4761 = vsel %vm4751, %v4722, -inf
      %4762 = vmax.xlane.f32.xlu0 %v4761
      %v4763 = vpop.xlane.xlu0 %4762
      %v4764 = vsel %vm4751, %v4723, -inf
      %4765 = vmax.xlane.f32.xlu0 %v4764
      %v4766 = vpop.xlane.xlu0 %4765
      %v4767 = vsel %vm4751, %v4724, -inf
      %4768 = vmax.xlane.f32.xlu0 %v4767
      %v4769 = vpop.xlane.xlu0 %4768
      %v4770 = vsel %vm4751, %v4725, -inf
      %4771 = vmax.xlane.f32.xlu0 %v4770
      %v4772 = vpop.xlane.xlu0 %4771
      %v4773 = vsel %vm4751, %v4726, -inf
      %4774 = vmax.xlane.f32.xlu0 %v4773
      %v4775 = vpop.xlane.xlu0 %4774
      %v4776 = vsel %vm4751, %v4727, -inf
      %4777 = vmax.xlane.f32.xlu0 %v4776
      %v4778 = vpop.xlane.xlu0 %4777
      %v4779 = vsel %vm4751, %v4728, -inf
      %4780 = vmax.xlane.f32.xlu0 %v4779
      %v4781 = vpop.xlane.xlu0 %4780
      %v4782 = vsel %vm4751, %v4729, -inf
      %4783 = vmax.xlane.f32.xlu0 %v4782
      %v4784 = vpop.xlane.xlu0 %4783
      %v4785 = vsel %vm4751, %v4730, -inf
      %4786 = vmax.xlane.f32.xlu0 %v4785
      %v4787 = vpop.xlane.xlu0 %4786
      %v4788 = vsel %vm4751, %v4731, -inf
      %4789 = vmax.xlane.f32.xlu0 %v4788
      %v4790 = vpop.xlane.xlu0 %4789
      %v4791 = vsel %vm4751, %v4732, -inf
      %4792 = vmax.xlane.f32.xlu0 %v4791
      %v4793 = vpop.xlane.xlu0 %4792
      %v4794 = vsel %vm4751, %v4733, -inf
      %4795 = vmax.xlane.f32.xlu0 %v4794
      %v4796 = vpop.xlane.xlu0 %4795
      %v4797 = vsel %vm4751, %v4734, -inf
      %4798 = vmax.xlane.f32.xlu0 %v4797
      %v4799 = vpop.xlane.xlu0 %4798
      %v4800 = vsel %vm4751, %v4735, -inf
      %4801 = vmax.xlane.f32.xlu0 %v4800
      %v4802 = vpop.xlane.xlu0 %4801
      %v4803 = vsel %vm4751, %v4736, -inf
      %4804 = vmax.xlane.f32.xlu0 %v4803
      %v4805 = vpop.xlane.xlu0 %4804
      %v4806 = vsel %vm4751, %v4737, -inf
      %4807 = vmax.xlane.f32.xlu0 %v4806
      %v4808 = vpop.xlane.xlu0 %4807
      %v4809 = vsel %vm4751, %v4738, -inf
      %4810 = vmax.xlane.f32.xlu0 %v4809
      %v4811 = vpop.xlane.xlu0 %4810
      %v4812 = vsel %vm4751, %v4739, -inf
      %4813 = vmax.xlane.f32.xlu0 %v4812
      %v4814 = vpop.xlane.xlu0 %4813
      %v4815 = vsel %vm4751, %v4740, -inf
      %4816 = vmax.xlane.f32.xlu0 %v4815
      %v4817 = vpop.xlane.xlu0 %4816
      %v4818 = vsel %vm4751, %v4741, -inf
      %4819 = vmax.xlane.f32.xlu0 %v4818
      %v4820 = vpop.xlane.xlu0 %4819
      %v4821 = vsel %vm4751, %v4742, -inf
      %4822 = vmax.xlane.f32.xlu0 %v4821
      %v4823 = vpop.xlane.xlu0 %4822
      %v4824 = vsel %vm4751, %v4743, -inf
      %4825 = vmax.xlane.f32.xlu0 %v4824
      %v4826 = vpop.xlane.xlu0 %4825
      %v4827 = vsel %vm4751, %v4744, -inf
      %4828 = vmax.xlane.f32.xlu0 %v4827
      %v4829 = vpop.xlane.xlu0 %4828
      %v4830 = vsel %vm4751, %v4745, -inf
      %4831 = vmax.xlane.f32.xlu0 %v4830
      %v4832 = vpop.xlane.xlu0 %4831
      %v4833 = vsel %vm4751, %v4746, -inf
      %4834 = vmax.xlane.f32.xlu0 %v4833
      %v4835 = vpop.xlane.xlu0 %4834
      %v4836 = vsel %vm4751, %v4747, -inf
      %4837 = vmax.xlane.f32.xlu0 %v4836
      %v4838 = vpop.xlane.xlu0 %4837
      %v4839 = vsel %vm4751, %v4748, -inf
      %4840 = vmax.xlane.f32.xlu0 %v4839
      %v4841 = vpop.xlane.xlu0 %4840
      %v4842 = vsel %vm4751, %v4749, -inf
      %4843 = vmax.xlane.f32.xlu0 %v4842
      %v4844 = vpop.xlane.xlu0 %4843
      %v4845 = vsel %vm4751, %v4750, -inf
      %4846 = vmax.xlane.f32.xlu0 %v4845
      %v4847 = vpop.xlane.xlu0 %4846
      %v4848 = vsub.f32 %v4719, %v4754
      %v4849 = vsub.f32 %v4720, %v4757
      %v4850 = vsub.f32 %v4721, %v4760
      %v4851 = vsub.f32 %v4722, %v4763
      %v4852 = vsub.f32 %v4723, %v4766
      %v4853 = vsub.f32 %v4724, %v4769
      %v4854 = vsub.f32 %v4725, %v4772
      %v4855 = vsub.f32 %v4726, %v4775
      %v4856 = vsub.f32 %v4727, %v4778
      %v4857 = vsub.f32 %v4728, %v4781
      %v4858 = vsub.f32 %v4729, %v4784
      %v4859 = vsub.f32 %v4730, %v4787
      %v4860 = vsub.f32 %v4731, %v4790
      %v4861 = vsub.f32 %v4732, %v4793
      %v4862 = vsub.f32 %v4733, %v4796
      %v4863 = vsub.f32 %v4734, %v4799
      %v4864 = vsub.f32 %v4735, %v4802
      %v4865 = vsub.f32 %v4736, %v4805
      %v4866 = vsub.f32 %v4737, %v4808
      %v4867 = vsub.f32 %v4738, %v4811
      %v4868 = vsub.f32 %v4739, %v4814
      %v4869 = vsub.f32 %v4740, %v4817
      %v4870 = vsub.f32 %v4741, %v4820
      %v4871 = vsub.f32 %v4742, %v4823
      %v4872 = vsub.f32 %v4743, %v4826
      %v4873 = vsub.f32 %v4744, %v4829
      %v4874 = vsub.f32 %v4745, %v4832
      %v4875 = vsub.f32 %v4746, %v4835
      %v4876 = vsub.f32 %v4747, %v4838
      %v4877 = vsub.f32 %v4748, %v4841
      %v4878 = vsub.f32 %v4749, %v4844
      %v4879 = vsub.f32 %v4750, %v4847
      %v4880 = vmul.f32 %v4848, 1.442695
      %v4881 = vpow.pop %v4880
      %v4882 = vmul.f32 %v4849, 1.442695
      %v4883 = vpow.pop %v4882
      %v4884 = vmul.f32 %v4850, 1.442695
      %v4885 = vpow.pop %v4884
      %v4886 = vmul.f32 %v4851, 1.442695
      %v4887 = vpow.pop %v4886
      %v4888 = vmul.f32 %v4852, 1.442695
      %v4889 = vpow.pop %v4888
      %v4890 = vmul.f32 %v4853, 1.442695
      %v4891 = vpow.pop %v4890
      %v4892 = vmul.f32 %v4854, 1.442695
      %v4893 = vpow.pop %v4892
      %v4894 = vmul.f32 %v4855, 1.442695
      %v4895 = vpow.pop %v4894
      %v4896 = vmul.f32 %v4856, 1.442695
      %v4897 = vpow.pop %v4896
      %v4898 = vmul.f32 %v4857, 1.442695
      %v4899 = vpow.pop %v4898
      %v4900 = vmul.f32 %v4858, 1.442695
      %v4901 = vpow.pop %v4900
      %v4902 = vmul.f32 %v4859, 1.442695
      %v4903 = vpow.pop %v4902
      %v4904 = vmul.f32 %v4860, 1.442695
      %v4905 = vpow.pop %v4904
      %v4906 = vmul.f32 %v4861, 1.442695
      %v4907 = vpow.pop %v4906
      %v4908 = vmul.f32 %v4862, 1.442695
      %v4909 = vpow.pop %v4908
      %v4910 = vmul.f32 %v4863, 1.442695
      %v4911 = vpow.pop %v4910
      %v4912 = vmul.f32 %v4864, 1.442695
      %v4913 = vpow.pop %v4912
      %v4914 = vmul.f32 %v4865, 1.442695
      %v4915 = vpow.pop %v4914
      %v4916 = vmul.f32 %v4866, 1.442695
      %v4917 = vpow.pop %v4916
      %v4918 = vmul.f32 %v4867, 1.442695
      %v4919 = vpow.pop %v4918
      %v4920 = vmul.f32 %v4868, 1.442695
      %v4921 = vpow.pop %v4920
      %v4922 = vmul.f32 %v4869, 1.442695
      %v4923 = vpow.pop %v4922
      %v4924 = vmul.f32 %v4870, 1.442695
      %v4925 = vpow.pop %v4924
      %v4926 = vmul.f32 %v4871, 1.442695
      %v4927 = vpow.pop %v4926
      %v4928 = vmul.f32 %v4872, 1.442695
      %v4929 = vpow.pop %v4928
      %v4930 = vmul.f32 %v4873, 1.442695
      %v4931 = vpow.pop %v4930
      %v4932 = vmul.f32 %v4874, 1.442695
      %v4933 = vpow.pop %v4932
      %v4934 = vmul.f32 %v4875, 1.442695
      %v4935 = vpow.pop %v4934
      %v4936 = vmul.f32 %v4876, 1.442695
      %v4937 = vpow.pop %v4936
      %v4938 = vmul.f32 %v4877, 1.442695
      %v4939 = vpow.pop %v4938
      %v4940 = vmul.f32 %v4878, 1.442695
      %v4941 = vpow.pop %v4940
      %v4942 = vmul.f32 %v4879, 1.442695
      %v4943 = vpow.pop %v4942
      %v4944 = vsel %vm4751, %v4881, 0.0
      %4945 = vadd.xlane.f32.xlu0 %v4944
      %v4946 = vpop.xlane.xlu0 %4945
      %v4947 = vsel %vm4751, %v4883, 0.0
      %4948 = vadd.xlane.f32.xlu0 %v4947
      %v4949 = vpop.xlane.xlu0 %4948
      %v4950 = vsel %vm4751, %v4885, 0.0
      %4951 = vadd.xlane.f32.xlu0 %v4950
      %v4952 = vpop.xlane.xlu0 %4951
      %v4953 = vsel %vm4751, %v4887, 0.0
      %4954 = vadd.xlane.f32.xlu0 %v4953
      %v4955 = vpop.xlane.xlu0 %4954
      %v4956 = vsel %vm4751, %v4889, 0.0
      %4957 = vadd.xlane.f32.xlu0 %v4956
      %v4958 = vpop.xlane.xlu0 %4957
      %v4959 = vsel %vm4751, %v4891, 0.0
      %4960 = vadd.xlane.f32.xlu0 %v4959
      %v4961 = vpop.xlane.xlu0 %4960
      %v4962 = vsel %vm4751, %v4893, 0.0
      %4963 = vadd.xlane.f32.xlu0 %v4962
      %v4964 = vpop.xlane.xlu0 %4963
      %v4965 = vsel %vm4751, %v4895, 0.0
      %4966 = vadd.xlane.f32.xlu0 %v4965
      %v4967 = vpop.xlane.xlu0 %4966
      %v4968 = vsel %vm4751, %v4897, 0.0
      %4969 = vadd.xlane.f32.xlu0 %v4968
      %v4970 = vpop.xlane.xlu0 %4969
      %v4971 = vsel %vm4751, %v4899, 0.0
      %4972 = vadd.xlane.f32.xlu0 %v4971
      %v4973 = vpop.xlane.xlu0 %4972
      %v4974 = vsel %vm4751, %v4901, 0.0
      %4975 = vadd.xlane.f32.xlu0 %v4974
      %v4976 = vpop.xlane.xlu0 %4975
      %v4977 = vsel %vm4751, %v4903, 0.0
      %4978 = vadd.xlane.f32.xlu0 %v4977
      %v4979 = vpop.xlane.xlu0 %4978
      %v4980 = vsel %vm4751, %v4905, 0.0
      %4981 = vadd.xlane.f32.xlu0 %v4980
      %v4982 = vpop.xlane.xlu0 %4981
      %v4983 = vsel %vm4751, %v4907, 0.0
      %4984 = vadd.xlane.f32.xlu0 %v4983
      %v4985 = vpop.xlane.xlu0 %4984
      %v4986 = vsel %vm4751, %v4909, 0.0
      %4987 = vadd.xlane.f32.xlu0 %v4986
      %v4988 = vpop.xlane.xlu0 %4987
      %v4989 = vsel %vm4751, %v4911, 0.0
      %4990 = vadd.xlane.f32.xlu0 %v4989
      %v4991 = vpop.xlane.xlu0 %4990
      %v4992 = vsel %vm4751, %v4913, 0.0
      %4993 = vadd.xlane.f32.xlu0 %v4992
      %v4994 = vpop.xlane.xlu0 %4993
      %v4995 = vsel %vm4751, %v4915, 0.0
      %4996 = vadd.xlane.f32.xlu0 %v4995
      %v4997 = vpop.xlane.xlu0 %4996
      %v4998 = vsel %vm4751, %v4917, 0.0
      %4999 = vadd.xlane.f32.xlu0 %v4998
      %v5000 = vpop.xlane.xlu0 %4999
      %v5001 = vsel %vm4751, %v4919, 0.0
      %5002 = vadd.xlane.f32.xlu0 %v5001
      %v5003 = vpop.xlane.xlu0 %5002
      %v5004 = vsel %vm4751, %v4921, 0.0
      %5005 = vadd.xlane.f32.xlu0 %v5004
      %v5006 = vpop.xlane.xlu0 %5005
      %v5007 = vsel %vm4751, %v4923, 0.0
      %5008 = vadd.xlane.f32.xlu0 %v5007
      %v5009 = vpop.xlane.xlu0 %5008
      %v5010 = vsel %vm4751, %v4925, 0.0
      %5011 = vadd.xlane.f32.xlu0 %v5010
      %v5012 = vpop.xlane.xlu0 %5011
      %v5013 = vsel %vm4751, %v4927, 0.0
      %5014 = vadd.xlane.f32.xlu0 %v5013
      %v5015 = vpop.xlane.xlu0 %5014
      %v5016 = vsel %vm4751, %v4929, 0.0
      %5017 = vadd.xlane.f32.xlu0 %v5016
      %v5018 = vpop.xlane.xlu0 %5017
      %v5019 = vsel %vm4751, %v4931, 0.0
      %5020 = vadd.xlane.f32.xlu0 %v5019
      %v5021 = vpop.xlane.xlu0 %5020
      %v5022 = vsel %vm4751, %v4933, 0.0
      %5023 = vadd.xlane.f32.xlu0 %v5022
      %v5024 = vpop.xlane.xlu0 %5023
      %v5025 = vsel %vm4751, %v4935, 0.0
      %5026 = vadd.xlane.f32.xlu0 %v5025
      %v5027 = vpop.xlane.xlu0 %5026
      %v5028 = vsel %vm4751, %v4937, 0.0
      %5029 = vadd.xlane.f32.xlu0 %v5028
      %v5030 = vpop.xlane.xlu0 %5029
      %v5031 = vsel %vm4751, %v4939, 0.0
      %5032 = vadd.xlane.f32.xlu0 %v5031
      %v5033 = vpop.xlane.xlu0 %5032
      %v5034 = vsel %vm4751, %v4941, 0.0
      %5035 = vadd.xlane.f32.xlu0 %v5034
      %v5036 = vpop.xlane.xlu0 %5035
      %v5037 = vsel %vm4751, %v4943, 0.0
      %5038 = vadd.xlane.f32.xlu0 %v5037
      %v5039 = vpop.xlane.xlu0 %5038
      %v5040 = vrcp.pop %v4946
      %v5041 = vrcp.pop %v4949
      %v5042 = vrcp.pop %v4952
      %v5043 = vrcp.pop %v4955
      %v5044 = vrcp.pop %v4958
      %v5045 = vrcp.pop %v4961
      %v5046 = vrcp.pop %v4964
      %v5047 = vrcp.pop %v4967
      %v5048 = vrcp.pop %v4970
      %v5049 = vrcp.pop %v4973
      %v5050 = vrcp.pop %v4976
      %v5051 = vrcp.pop %v4979
      %v5052 = vrcp.pop %v4982
      %v5053 = vrcp.pop %v4985
      %v5054 = vrcp.pop %v4988
      %v5055 = vrcp.pop %v4991
      %v5056 = vrcp.pop %v4994
      %v5057 = vrcp.pop %v4997
      %v5058 = vrcp.pop %v5000
      %v5059 = vrcp.pop %v5003
      %v5060 = vrcp.pop %v5006
      %v5061 = vrcp.pop %v5009
      %v5062 = vrcp.pop %v5012
      %v5063 = vrcp.pop %v5015
      %v5064 = vrcp.pop %v5018
      %v5065 = vrcp.pop %v5021
      %v5066 = vrcp.pop %v5024
      %v5067 = vrcp.pop %v5027
      %v5068 = vrcp.pop %v5030
      %v5069 = vrcp.pop %v5033
      %v5070 = vrcp.pop %v5036
      %v5071 = vrcp.pop %v5039
      %v5072 = vmul.f32 %v4881, %v5040
      %v5073 = vmul.f32 %v4883, %v5041
      %v5074 = vmul.f32 %v4885, %v5042
      %v5075 = vmul.f32 %v4887, %v5043
      %v5076 = vmul.f32 %v4889, %v5044
      %v5077 = vmul.f32 %v4891, %v5045
      %v5078 = vmul.f32 %v4893, %v5046
      %v5079 = vmul.f32 %v4895, %v5047
      %v5080 = vmul.f32 %v4897, %v5048
      %v5081 = vmul.f32 %v4899, %v5049
      %v5082 = vmul.f32 %v4901, %v5050
      %v5083 = vmul.f32 %v4903, %v5051
      %v5084 = vmul.f32 %v4905, %v5052
      %v5085 = vmul.f32 %v4907, %v5053
      %v5086 = vmul.f32 %v4909, %v5054
      %v5087 = vmul.f32 %v4911, %v5055
      %v5088 = vmul.f32 %v4913, %v5056
      %v5089 = vmul.f32 %v4915, %v5057
      %v5090 = vmul.f32 %v4917, %v5058
      %v5091 = vmul.f32 %v4919, %v5059
      %v5092 = vmul.f32 %v4921, %v5060
      %v5093 = vmul.f32 %v4923, %v5061
      %v5094 = vmul.f32 %v4925, %v5062
      %v5095 = vmul.f32 %v4927, %v5063
      %v5096 = vmul.f32 %v4929, %v5064
      %v5097 = vmul.f32 %v4931, %v5065
      %v5098 = vmul.f32 %v4933, %v5066
      %v5099 = vmul.f32 %v4935, %v5067
      %v5100 = vmul.f32 %v4937, %v5068
      %v5101 = vmul.f32 %v4939, %v5069
      %v5102 = vmul.f32 %v4941, %v5070
      %v5103 = vmul.f32 %v4943, %v5071
      %v5104 = vpack.c.bf16 %v5073, %v5072
      %v5105 = vpack.c.bf16 %v5075, %v5074
      %v5106 = vpack.c.bf16 %v5077, %v5076
      %v5107 = vpack.c.bf16 %v5079, %v5078
      %v5108 = vpack.c.bf16 %v5081, %v5080
      %v5109 = vpack.c.bf16 %v5083, %v5082
      %v5110 = vpack.c.bf16 %v5085, %v5084
      %v5111 = vpack.c.bf16 %v5087, %v5086
      %v5112 = vpack.c.bf16 %v5089, %v5088
      %v5113 = vpack.c.bf16 %v5091, %v5090
      %v5114 = vpack.c.bf16 %v5093, %v5092
      %v5115 = vpack.c.bf16 %v5095, %v5094
      %v5116 = vpack.c.bf16 %v5097, %v5096
      %v5117 = vpack.c.bf16 %v5099, %v5098
      %v5118 = vpack.c.bf16 %v5101, %v5100
      %v5119 = vpack.c.bf16 %v5103, %v5102
      %v5121 = vsel %vm4751, %v5104, 0
      %v5124 = vsel %vm4751, %v5105, 0
      %v5127 = vsel %vm4751, %v5106, 0
      %v5130 = vsel %vm4751, %v5107, 0
      %5132 = vmatprep.subr.bf16.mxu0 0
      %5133 = vmatpush1.bf16.msra.mxu0 0
      %5134 = vmatprep.subr.bf16.mxu0 0
      %5135 = vmatpush1.bf16.msra.mxu0 0
      %5136 = vmatprep.subr.bf16.mxu0 0
      %5137 = vmatpush1.bf16.msra.mxu0 0
      %5138 = vmatprep.subr.bf16.mxu0 0
      %5139 = vmatpush1.bf16.msra.mxu0 0
      %5140 = vmatprep.subr.bf16.mxu0 0
      %5141 = vmatpush1.bf16.msra.mxu0 %v4281
      %5142 = vmatprep.subr.bf16.mxu0 0
      %5143 = vmatpush1.bf16.msra.mxu0 %v4265
      %5144 = vmatprep.subr.bf16.mxu0 0
      %5145 = vmatpush1.bf16.msra.mxu0 %v4249
      %5146 = vmatprep.subr.bf16.mxu0 0
      %5147 = vmatpush1.bf16.msra.mxu0 %v4233
      %5148 = vmatprep.subr.bf16.mxu0 0
      %5149 = vmatpush2.bf16.msra.mxu0 0
      %5150 = vmatprep.subr.bf16.mxu0 0
      %5151 = vmatpush2.bf16.msra.mxu0 0
      %5152 = vmatprep.subr.bf16.mxu0 0
      %5153 = vmatpush2.bf16.msra.mxu0 0
      %5154 = vmatprep.subr.bf16.mxu0 0
      %5155 = vmatpush2.bf16.msra.mxu0 0
      %5156 = vmatprep.subr.bf16.mxu0 0
      %5157 = vmatpush2.bf16.msra.mxu0 0
      %5158 = vmatprep.subr.bf16.mxu0 0
      %5159 = vmatpush2.bf16.msra.mxu0 0
      %5160 = vmatprep.subr.bf16.mxu0 0
      %5161 = vmatpush2.bf16.msra.mxu0 0
      %5162 = vmatprep.subr.bf16.mxu0 0
      %5163 = vmatpush2.bf16.msra.mxu0 0
      %5164 = vmatprep.mubr.bf16.mxu0 0
      %5165 = vmatmul.mubr.bf16.gmra.mxu0 %v5121
      %v5166 = vpop.f32.mrf.mxu0
      %v5167 = vadd.f32 0.0, %v5166
      %v5168 = vpop.f32.mrf.mxu0
      %v5169 = vpop.f32.mrf.mxu0
      %v5170 = vadd.f32 0.0, %v5169
      %v5171 = vpop.f32.mrf.mxu0
      %5172 = vmatprep.mubr.bf16.mxu0 0
      %5173 = vmatmul.mubr.bf16.gmra.mxu0 %v5124
      %v5174 = vpop.f32.mrf.mxu0
      %v5175 = vadd.f32 0.0, %v5174
      %v5176 = vpop.f32.mrf.mxu0
      %v5177 = vpop.f32.mrf.mxu0
      %v5178 = vadd.f32 0.0, %v5177
      %v5179 = vpop.f32.mrf.mxu0
      %5180 = vmatprep.mubr.bf16.mxu0 0
      %5181 = vmatmul.mubr.bf16.gmra.mxu0 %v5127
      %v5182 = vpop.f32.mrf.mxu0
      %v5183 = vadd.f32 0.0, %v5182
      %v5184 = vpop.f32.mrf.mxu0
      %v5185 = vpop.f32.mrf.mxu0
      %v5186 = vadd.f32 0.0, %v5185
      %v5187 = vpop.f32.mrf.mxu0
      %5188 = vmatprep.mubr.bf16.mxu0 0
      %5189 = vmatmul.mubr.bf16.gmra.mxu0 %v5130
      %v5190 = vpop.f32.mrf.mxu0
      %v5191 = vadd.f32 0.0, %v5190
      %v5192 = vpop.f32.mrf.mxu0
      %v5193 = vpop.f32.mrf.mxu0
      %v5194 = vadd.f32 0.0, %v5193
      %v5195 = vpop.f32.mrf.mxu0
      %5196 = vdwg.mxu0
      %v5198 = vsel %vm4751, %v5108, 0
      %v5201 = vsel %vm4751, %v5109, 0
      %v5204 = vsel %vm4751, %v5110, 0
      %v5207 = vsel %vm4751, %v5111, 0
      %5209 = vmatprep.subr.bf16.mxu0 0
      %5210 = vmatpush1.bf16.msra.mxu0 0
      %5211 = vmatprep.subr.bf16.mxu0 0
      %5212 = vmatpush1.bf16.msra.mxu0 0
      %5213 = vmatprep.subr.bf16.mxu0 0
      %5214 = vmatpush1.bf16.msra.mxu0 0
      %5215 = vmatprep.subr.bf16.mxu0 0
      %5216 = vmatpush1.bf16.msra.mxu0 0
      %5217 = vmatprep.subr.bf16.mxu0 0
      %5218 = vmatpush1.bf16.msra.mxu0 %v4285
      %5219 = vmatprep.subr.bf16.mxu0 0
      %5220 = vmatpush1.bf16.msra.mxu0 %v4269
      %5221 = vmatprep.subr.bf16.mxu0 0
      %5222 = vmatpush1.bf16.msra.mxu0 %v4253
      %5223 = vmatprep.subr.bf16.mxu0 0
      %5224 = vmatpush1.bf16.msra.mxu0 %v4237
      %5225 = vmatprep.subr.bf16.mxu0 0
      %5226 = vmatpush2.bf16.msra.mxu0 0
      %5227 = vmatprep.subr.bf16.mxu0 0
      %5228 = vmatpush2.bf16.msra.mxu0 0
      %5229 = vmatprep.subr.bf16.mxu0 0
      %5230 = vmatpush2.bf16.msra.mxu0 0
      %5231 = vmatprep.subr.bf16.mxu0 0
      %5232 = vmatpush2.bf16.msra.mxu0 0
      %5233 = vmatprep.subr.bf16.mxu0 0
      %5234 = vmatpush2.bf16.msra.mxu0 0
      %5235 = vmatprep.subr.bf16.mxu0 0
      %5236 = vmatpush2.bf16.msra.mxu0 0
      %5237 = vmatprep.subr.bf16.mxu0 0
      %5238 = vmatpush2.bf16.msra.mxu0 0
      %5239 = vmatprep.subr.bf16.mxu0 0
      %5240 = vmatpush2.bf16.msra.mxu0 0
      %5241 = vmatprep.mubr.bf16.mxu0 0
      %5242 = vmatmul.mubr.bf16.gmra.mxu0 %v5198
      %v5243 = vpop.f32.mrf.mxu0
      %v5244 = vadd.f32 0.0, %v5243
      %v5245 = vpop.f32.mrf.mxu0
      %v5246 = vpop.f32.mrf.mxu0
      %v5247 = vadd.f32 0.0, %v5246
      %v5248 = vpop.f32.mrf.mxu0
      %5249 = vmatprep.mubr.bf16.mxu0 0
      %5250 = vmatmul.mubr.bf16.gmra.mxu0 %v5201
      %v5251 = vpop.f32.mrf.mxu0
      %v5252 = vadd.f32 0.0, %v5251
      %v5253 = vpop.f32.mrf.mxu0
      %v5254 = vpop.f32.mrf.mxu0
      %v5255 = vadd.f32 0.0, %v5254
      %v5256 = vpop.f32.mrf.mxu0
      %5257 = vmatprep.mubr.bf16.mxu0 0
      %5258 = vmatmul.mubr.bf16.gmra.mxu0 %v5204
      %v5259 = vpop.f32.mrf.mxu0
      %v5260 = vadd.f32 0.0, %v5259
      %v5261 = vpop.f32.mrf.mxu0
      %v5262 = vpop.f32.mrf.mxu0
      %v5263 = vadd.f32 0.0, %v5262
      %v5264 = vpop.f32.mrf.mxu0
      %5265 = vmatprep.mubr.bf16.mxu0 0
      %5266 = vmatmul.mubr.bf16.gmra.mxu0 %v5207
      %v5267 = vpop.f32.mrf.mxu0
      %v5268 = vadd.f32 0.0, %v5267
      %v5269 = vpop.f32.mrf.mxu0
      %v5270 = vpop.f32.mrf.mxu0
      %v5271 = vadd.f32 0.0, %v5270
      %v5272 = vpop.f32.mrf.mxu0
      %5273 = vdwg.mxu0
      %v5275 = vsel %vm4751, %v5112, 0
      %v5278 = vsel %vm4751, %v5113, 0
      %v5281 = vsel %vm4751, %v5114, 0
      %v5284 = vsel %vm4751, %v5115, 0
      %5286 = vmatprep.subr.bf16.mxu0 0
      %5287 = vmatpush1.bf16.msra.mxu0 0
      %5288 = vmatprep.subr.bf16.mxu0 0
      %5289 = vmatpush1.bf16.msra.mxu0 0
      %5290 = vmatprep.subr.bf16.mxu0 0
      %5291 = vmatpush1.bf16.msra.mxu0 0
      %5292 = vmatprep.subr.bf16.mxu0 0
      %5293 = vmatpush1.bf16.msra.mxu0 0
      %5294 = vmatprep.subr.bf16.mxu0 0
      %5295 = vmatpush1.bf16.msra.mxu0 %v4289
      %5296 = vmatprep.subr.bf16.mxu0 0
      %5297 = vmatpush1.bf16.msra.mxu0 %v4273
      %5298 = vmatprep.subr.bf16.mxu0 0
      %5299 = vmatpush1.bf16.msra.mxu0 %v4257
      %5300 = vmatprep.subr.bf16.mxu0 0
      %5301 = vmatpush1.bf16.msra.mxu0 %v4241
      %5302 = vmatprep.subr.bf16.mxu0 0
      %5303 = vmatpush2.bf16.msra.mxu0 0
      %5304 = vmatprep.subr.bf16.mxu0 0
      %5305 = vmatpush2.bf16.msra.mxu0 0
      %5306 = vmatprep.subr.bf16.mxu0 0
      %5307 = vmatpush2.bf16.msra.mxu0 0
      %5308 = vmatprep.subr.bf16.mxu0 0
      %5309 = vmatpush2.bf16.msra.mxu0 0
      %5310 = vmatprep.subr.bf16.mxu0 0
      %5311 = vmatpush2.bf16.msra.mxu0 0
      %5312 = vmatprep.subr.bf16.mxu0 0
      %5313 = vmatpush2.bf16.msra.mxu0 0
      %5314 = vmatprep.subr.bf16.mxu0 0
      %5315 = vmatpush2.bf16.msra.mxu0 0
      %5316 = vmatprep.subr.bf16.mxu0 0
      %5317 = vmatpush2.bf16.msra.mxu0 0
      %5318 = vmatprep.mubr.bf16.mxu0 0
      %5319 = vmatmul.mubr.bf16.gmra.mxu0 %v5275
      %v5320 = vpop.f32.mrf.mxu0
      %v5321 = vadd.f32 0.0, %v5320
      %v5322 = vpop.f32.mrf.mxu0
      %v5323 = vpop.f32.mrf.mxu0
      %v5324 = vadd.f32 0.0, %v5323
      %v5325 = vpop.f32.mrf.mxu0
      %5326 = vmatprep.mubr.bf16.mxu0 0
      %5327 = vmatmul.mubr.bf16.gmra.mxu0 %v5278
      %v5328 = vpop.f32.mrf.mxu0
      %v5329 = vadd.f32 0.0, %v5328
      %v5330 = vpop.f32.mrf.mxu0
      %v5331 = vpop.f32.mrf.mxu0
      %v5332 = vadd.f32 0.0, %v5331
      %v5333 = vpop.f32.mrf.mxu0
      %5334 = vmatprep.mubr.bf16.mxu0 0
      %5335 = vmatmul.mubr.bf16.gmra.mxu0 %v5281
      %v5336 = vpop.f32.mrf.mxu0
      %v5337 = vadd.f32 0.0, %v5336
      %v5338 = vpop.f32.mrf.mxu0
      %v5339 = vpop.f32.mrf.mxu0
      %v5340 = vadd.f32 0.0, %v5339
      %v5341 = vpop.f32.mrf.mxu0
      %5342 = vmatprep.mubr.bf16.mxu0 0
      %5343 = vmatmul.mubr.bf16.gmra.mxu0 %v5284
      %v5344 = vpop.f32.mrf.mxu0
      %v5345 = vadd.f32 0.0, %v5344
      %v5346 = vpop.f32.mrf.mxu0
      %v5347 = vpop.f32.mrf.mxu0
      %v5348 = vadd.f32 0.0, %v5347
      %v5349 = vpop.f32.mrf.mxu0
      %5350 = vdwg.mxu0
      %v5352 = vsel %vm4751, %v5116, 0
      %v5355 = vsel %vm4751, %v5117, 0
      %v5358 = vsel %vm4751, %v5118, 0
      %v5361 = vsel %vm4751, %v5119, 0
      %5363 = vmatprep.subr.bf16.mxu0 0
      %5364 = vmatpush1.bf16.msra.mxu0 0
      %5365 = vmatprep.subr.bf16.mxu0 0
      %5366 = vmatpush1.bf16.msra.mxu0 0
      %5367 = vmatprep.subr.bf16.mxu0 0
      %5368 = vmatpush1.bf16.msra.mxu0 0
      %5369 = vmatprep.subr.bf16.mxu0 0
      %5370 = vmatpush1.bf16.msra.mxu0 0
      %5371 = vmatprep.subr.bf16.mxu0 0
      %5372 = vmatpush1.bf16.msra.mxu0 %v4293
      %5373 = vmatprep.subr.bf16.mxu0 0
      %5374 = vmatpush1.bf16.msra.mxu0 %v4277
      %5375 = vmatprep.subr.bf16.mxu0 0
      %5376 = vmatpush1.bf16.msra.mxu0 %v4261
      %5377 = vmatprep.subr.bf16.mxu0 0
      %5378 = vmatpush1.bf16.msra.mxu0 %v4245
      %5379 = vmatprep.subr.bf16.mxu0 0
      %5380 = vmatpush2.bf16.msra.mxu0 0
      %5381 = vmatprep.subr.bf16.mxu0 0
      %5382 = vmatpush2.bf16.msra.mxu0 0
      %5383 = vmatprep.subr.bf16.mxu0 0
      %5384 = vmatpush2.bf16.msra.mxu0 0
      %5385 = vmatprep.subr.bf16.mxu0 0
      %5386 = vmatpush2.bf16.msra.mxu0 0
      %5387 = vmatprep.subr.bf16.mxu0 0
      %5388 = vmatpush2.bf16.msra.mxu0 0
      %5389 = vmatprep.subr.bf16.mxu0 0
      %5390 = vmatpush2.bf16.msra.mxu0 0
      %5391 = vmatprep.subr.bf16.mxu0 0
      %5392 = vmatpush2.bf16.msra.mxu0 0
      %5393 = vmatprep.subr.bf16.mxu0 0
      %5394 = vmatpush2.bf16.msra.mxu0 0
      %5395 = vmatprep.mubr.bf16.mxu0 0
      %5396 = vmatmul.mubr.bf16.gmra.mxu0 %v5352
      %v5397 = vpop.f32.mrf.mxu0
      %v5398 = vadd.f32 0.0, %v5397
      %v5399 = vpop.f32.mrf.mxu0
      %v5400 = vpop.f32.mrf.mxu0
      %v5401 = vadd.f32 0.0, %v5400
      %v5402 = vpop.f32.mrf.mxu0
      %5403 = vmatprep.mubr.bf16.mxu0 0
      %5404 = vmatmul.mubr.bf16.gmra.mxu0 %v5355
      %v5405 = vpop.f32.mrf.mxu0
      %v5406 = vadd.f32 0.0, %v5405
      %v5407 = vpop.f32.mrf.mxu0
      %v5408 = vpop.f32.mrf.mxu0
      %v5409 = vadd.f32 0.0, %v5408
      %v5410 = vpop.f32.mrf.mxu0
      %5411 = vmatprep.mubr.bf16.mxu0 0
      %5412 = vmatmul.mubr.bf16.gmra.mxu0 %v5358
      %v5413 = vpop.f32.mrf.mxu0
      %v5414 = vadd.f32 0.0, %v5413
      %v5415 = vpop.f32.mrf.mxu0
      %v5416 = vpop.f32.mrf.mxu0
      %v5417 = vadd.f32 0.0, %v5416
      %v5418 = vpop.f32.mrf.mxu0
      %5419 = vmatprep.mubr.bf16.mxu0 0
      %5420 = vmatmul.mubr.bf16.gmra.mxu0 %v5361
      %v5421 = vpop.f32.mrf.mxu0
      %v5422 = vadd.f32 0.0, %v5421
      %v5423 = vpop.f32.mrf.mxu0
      %v5424 = vpop.f32.mrf.mxu0
      %v5425 = vadd.f32 0.0, %v5424
      %v5426 = vpop.f32.mrf.mxu0
      %5427 = vdwg.mxu0
      %v5428 = vcombine.low %v5167, %v5321
      %v5429 = vcombine.high %v5167, %v5321
      %v5431 = vunpack.c.l.s4 1983009808
      %v5432 = vunpack.c.0.s8 %v5431
      %v5433 = vlaneseq
      %v5434 = vshrl.u32 %v5433, 7
      %v5435 = vsub.s32 %v5432, %v5434
      %v5436 = vrot.slane %v5428, %v5435
      %v5438 = vunpack.c.l.s4 1983009808
      %v5439 = vunpack.c.0.s8 %v5438
      %v5440 = vlaneseq
      %v5441 = vshrl.u32 %v5440, 7
      %v5442 = vsub.s32 %v5439, %v5441
      %v5443 = vrot.slane %v5429, %v5442
      %v5444 = vcombine.low %v5244, %v5398
      %v5445 = vcombine.high %v5244, %v5398
      %v5447 = vunpack.c.l.s4 1983009808
      %v5448 = vunpack.c.0.s8 %v5447
      %v5449 = vlaneseq
      %v5450 = vshrl.u32 %v5449, 7
      %v5451 = vsub.s32 %v5448, %v5450
      %v5452 = vrot.slane %v5444, %v5451
      %v5454 = vunpack.c.l.s4 1983009808
      %v5455 = vunpack.c.0.s8 %v5454
      %v5456 = vlaneseq
      %v5457 = vshrl.u32 %v5456, 7
      %v5458 = vsub.s32 %v5455, %v5457
      %v5459 = vrot.slane %v5445, %v5458
      %v5460 = vcombine.low %v5436, %v5452
      %v5461 = vcombine.high %v5436, %v5452
      %v5463 = vunpack.c.l.s4 1934713408
      %v5464 = vunpack.c.0.s8 %v5463
      %v5465 = vlaneseq
      %v5466 = vshrl.u32 %v5465, 7
      %v5467 = vsub.s32 %v5464, %v5466
      %v5468 = vrot.slane %v5460, %v5467
      %v5470 = vunpack.c.l.s4 1934713408
      %v5471 = vunpack.c.0.s8 %v5470
      %v5472 = vlaneseq
      %v5473 = vshrl.u32 %v5472, 7
      %v5474 = vsub.s32 %v5471, %v5473
      %v5475 = vrot.slane %v5461, %v5474
      %v5476 = vcombine.low %v5443, %v5459
      %v5477 = vcombine.high %v5443, %v5459
      %v5479 = vunpack.c.l.s4 1934713408
      %v5480 = vunpack.c.0.s8 %v5479
      %v5481 = vlaneseq
      %v5482 = vshrl.u32 %v5481, 7
      %v5483 = vsub.s32 %v5480, %v5482
      %v5484 = vrot.slane %v5476, %v5483
      %v5486 = vunpack.c.l.s4 1934713408
      %v5487 = vunpack.c.0.s8 %v5486
      %v5488 = vlaneseq
      %v5489 = vshrl.u32 %v5488, 7
      %v5490 = vsub.s32 %v5487, %v5489
      %v5491 = vrot.slane %v5477, %v5490
      %v5492 = vcombine.high %v5468, 0.0
      %v5493 = vcombine.high %v5475, 0.0
      %v5494 = vcombine.high %v5484, 0.0
      %v5495 = vcombine.high %v5491, 0.0
      %v5496 = vcombine.low %v5170, %v5324
      %v5497 = vcombine.high %v5170, %v5324
      %v5499 = vunpack.c.l.s4 1983009808
      %v5500 = vunpack.c.0.s8 %v5499
      %v5501 = vlaneseq
      %v5502 = vshrl.u32 %v5501, 7
      %v5503 = vsub.s32 %v5500, %v5502
      %v5504 = vrot.slane %v5496, %v5503
      %v5506 = vunpack.c.l.s4 1983009808
      %v5507 = vunpack.c.0.s8 %v5506
      %v5508 = vlaneseq
      %v5509 = vshrl.u32 %v5508, 7
      %v5510 = vsub.s32 %v5507, %v5509
      %v5511 = vrot.slane %v5497, %v5510
      %v5512 = vcombine.low %v5247, %v5401
      %v5513 = vcombine.high %v5247, %v5401
      %v5515 = vunpack.c.l.s4 1983009808
      %v5516 = vunpack.c.0.s8 %v5515
      %v5517 = vlaneseq
      %v5518 = vshrl.u32 %v5517, 7
      %v5519 = vsub.s32 %v5516, %v5518
      %v5520 = vrot.slane %v5512, %v5519
      %v5522 = vunpack.c.l.s4 1983009808
      %v5523 = vunpack.c.0.s8 %v5522
      %v5524 = vlaneseq
      %v5525 = vshrl.u32 %v5524, 7
      %v5526 = vsub.s32 %v5523, %v5525
      %v5527 = vrot.slane %v5513, %v5526
      %v5528 = vcombine.low %v5504, %v5520
      %v5529 = vcombine.high %v5504, %v5520
      %v5531 = vunpack.c.l.s4 1934713408
      %v5532 = vunpack.c.0.s8 %v5531
      %v5533 = vlaneseq
      %v5534 = vshrl.u32 %v5533, 7
      %v5535 = vsub.s32 %v5532, %v5534
      %v5536 = vrot.slane %v5528, %v5535
      %v5538 = vunpack.c.l.s4 1934713408
      %v5539 = vunpack.c.0.s8 %v5538
      %v5540 = vlaneseq
      %v5541 = vshrl.u32 %v5540, 7
      %v5542 = vsub.s32 %v5539, %v5541
      %v5543 = vrot.slane %v5529, %v5542
      %v5544 = vcombine.low %v5511, %v5527
      %v5545 = vcombine.high %v5511, %v5527
      %v5547 = vunpack.c.l.s4 1934713408
      %v5548 = vunpack.c.0.s8 %v5547
      %v5549 = vlaneseq
      %v5550 = vshrl.u32 %v5549, 7
      %v5551 = vsub.s32 %v5548, %v5550
      %v5552 = vrot.slane %v5544, %v5551
      %v5554 = vunpack.c.l.s4 1934713408
      %v5555 = vunpack.c.0.s8 %v5554
      %v5556 = vlaneseq
      %v5557 = vshrl.u32 %v5556, 7
      %v5558 = vsub.s32 %v5555, %v5557
      %v5559 = vrot.slane %v5545, %v5558
      %v5560 = vcombine.high %v5536, 0.0
      %v5561 = vcombine.high %v5543, 0.0
      %v5562 = vcombine.high %v5552, 0.0
      %v5563 = vcombine.high %v5559, 0.0
      %v5564 = vcombine.low %v5175, %v5329
      %v5565 = vcombine.high %v5175, %v5329
      %v5567 = vunpack.c.l.s4 1983009808
      %v5568 = vunpack.c.0.s8 %v5567
      %v5569 = vlaneseq
      %v5570 = vshrl.u32 %v5569, 7
      %v5571 = vsub.s32 %v5568, %v5570
      %v5572 = vrot.slane %v5564, %v5571
      %v5574 = vunpack.c.l.s4 1983009808
      %v5575 = vunpack.c.0.s8 %v5574
      %v5576 = vlaneseq
      %v5577 = vshrl.u32 %v5576, 7
      %v5578 = vsub.s32 %v5575, %v5577
      %v5579 = vrot.slane %v5565, %v5578
      %v5580 = vcombine.low %v5252, %v5406
      %v5581 = vcombine.high %v5252, %v5406
      %v5583 = vunpack.c.l.s4 1983009808
      %v5584 = vunpack.c.0.s8 %v5583
      %v5585 = vlaneseq
      %v5586 = vshrl.u32 %v5585, 7
      %v5587 = vsub.s32 %v5584, %v5586
      %v5588 = vrot.slane %v5580, %v5587
      %v5590 = vunpack.c.l.s4 1983009808
      %v5591 = vunpack.c.0.s8 %v5590
      %v5592 = vlaneseq
      %v5593 = vshrl.u32 %v5592, 7
      %v5594 = vsub.s32 %v5591, %v5593
      %v5595 = vrot.slane %v5581, %v5594
      %v5596 = vcombine.low %v5572, %v5588
      %v5597 = vcombine.high %v5572, %v5588
      %v5599 = vunpack.c.l.s4 1934713408
      %v5600 = vunpack.c.0.s8 %v5599
      %v5601 = vlaneseq
      %v5602 = vshrl.u32 %v5601, 7
      %v5603 = vsub.s32 %v5600, %v5602
      %v5604 = vrot.slane %v5596, %v5603
      %v5606 = vunpack.c.l.s4 1934713408
      %v5607 = vunpack.c.0.s8 %v5606
      %v5608 = vlaneseq
      %v5609 = vshrl.u32 %v5608, 7
      %v5610 = vsub.s32 %v5607, %v5609
      %v5611 = vrot.slane %v5597, %v5610
      %v5612 = vcombine.low %v5579, %v5595
      %v5613 = vcombine.high %v5579, %v5595
      %v5615 = vunpack.c.l.s4 1934713408
      %v5616 = vunpack.c.0.s8 %v5615
      %v5617 = vlaneseq
      %v5618 = vshrl.u32 %v5617, 7
      %v5619 = vsub.s32 %v5616, %v5618
      %v5620 = vrot.slane %v5612, %v5619
      %v5622 = vunpack.c.l.s4 1934713408
      %v5623 = vunpack.c.0.s8 %v5622
      %v5624 = vlaneseq
      %v5625 = vshrl.u32 %v5624, 7
      %v5626 = vsub.s32 %v5623, %v5625
      %v5627 = vrot.slane %v5613, %v5626
      %v5628 = vcombine.high %v5604, 0.0
      %v5629 = vcombine.high %v5611, 0.0
      %v5630 = vcombine.high %v5620, 0.0
      %v5631 = vcombine.high %v5627, 0.0
      %v5632 = vcombine.low %v5178, %v5332
      %v5633 = vcombine.high %v5178, %v5332
      %v5635 = vunpack.c.l.s4 1983009808
      %v5636 = vunpack.c.0.s8 %v5635
      %v5637 = vlaneseq
      %v5638 = vshrl.u32 %v5637, 7
      %v5639 = vsub.s32 %v5636, %v5638
      %v5640 = vrot.slane %v5632, %v5639
      %v5642 = vunpack.c.l.s4 1983009808
      %v5643 = vunpack.c.0.s8 %v5642
      %v5644 = vlaneseq
      %v5645 = vshrl.u32 %v5644, 7
      %v5646 = vsub.s32 %v5643, %v5645
      %v5647 = vrot.slane %v5633, %v5646
      %v5648 = vcombine.low %v5255, %v5409
      %v5649 = vcombine.high %v5255, %v5409
      %v5651 = vunpack.c.l.s4 1983009808
      %v5652 = vunpack.c.0.s8 %v5651
      %v5653 = vlaneseq
      %v5654 = vshrl.u32 %v5653, 7
      %v5655 = vsub.s32 %v5652, %v5654
      %v5656 = vrot.slane %v5648, %v5655
      %v5658 = vunpack.c.l.s4 1983009808
      %v5659 = vunpack.c.0.s8 %v5658
      %v5660 = vlaneseq
      %v5661 = vshrl.u32 %v5660, 7
      %v5662 = vsub.s32 %v5659, %v5661
      %v5663 = vrot.slane %v5649, %v5662
      %v5664 = vcombine.low %v5640, %v5656
      %v5665 = vcombine.high %v5640, %v5656
      %v5667 = vunpack.c.l.s4 1934713408
      %v5668 = vunpack.c.0.s8 %v5667
      %v5669 = vlaneseq
      %v5670 = vshrl.u32 %v5669, 7
      %v5671 = vsub.s32 %v5668, %v5670
      %v5672 = vrot.slane %v5664, %v5671
      %v5674 = vunpack.c.l.s4 1934713408
      %v5675 = vunpack.c.0.s8 %v5674
      %v5676 = vlaneseq
      %v5677 = vshrl.u32 %v5676, 7
      %v5678 = vsub.s32 %v5675, %v5677
      %v5679 = vrot.slane %v5665, %v5678
      %v5680 = vcombine.low %v5647, %v5663
      %v5681 = vcombine.high %v5647, %v5663
      %v5683 = vunpack.c.l.s4 1934713408
      %v5684 = vunpack.c.0.s8 %v5683
      %v5685 = vlaneseq
      %v5686 = vshrl.u32 %v5685, 7
      %v5687 = vsub.s32 %v5684, %v5686
      %v5688 = vrot.slane %v5680, %v5687
      %v5690 = vunpack.c.l.s4 1934713408
      %v5691 = vunpack.c.0.s8 %v5690
      %v5692 = vlaneseq
      %v5693 = vshrl.u32 %v5692, 7
      %v5694 = vsub.s32 %v5691, %v5693
      %v5695 = vrot.slane %v5681, %v5694
      %v5696 = vcombine.high %v5672, 0.0
      %v5697 = vcombine.high %v5679, 0.0
      %v5698 = vcombine.high %v5688, 0.0
      %v5699 = vcombine.high %v5695, 0.0
      %v5700 = vcombine.low %v5183, %v5337
      %v5701 = vcombine.high %v5183, %v5337
      %v5703 = vunpack.c.l.s4 1983009808
      %v5704 = vunpack.c.0.s8 %v5703
      %v5705 = vlaneseq
      %v5706 = vshrl.u32 %v5705, 7
      %v5707 = vsub.s32 %v5704, %v5706
      %v5708 = vrot.slane %v5700, %v5707
      %v5710 = vunpack.c.l.s4 1983009808
      %v5711 = vunpack.c.0.s8 %v5710
      %v5712 = vlaneseq
      %v5713 = vshrl.u32 %v5712, 7
      %v5714 = vsub.s32 %v5711, %v5713
      %v5715 = vrot.slane %v5701, %v5714
      %v5716 = vcombine.low %v5260, %v5414
      %v5717 = vcombine.high %v5260, %v5414
      %v5719 = vunpack.c.l.s4 1983009808
      %v5720 = vunpack.c.0.s8 %v5719
      %v5721 = vlaneseq
      %v5722 = vshrl.u32 %v5721, 7
      %v5723 = vsub.s32 %v5720, %v5722
      %v5724 = vrot.slane %v5716, %v5723
      %v5726 = vunpack.c.l.s4 1983009808
      %v5727 = vunpack.c.0.s8 %v5726
      %v5728 = vlaneseq
      %v5729 = vshrl.u32 %v5728, 7
      %v5730 = vsub.s32 %v5727, %v5729
      %v5731 = vrot.slane %v5717, %v5730
      %v5732 = vcombine.low %v5708, %v5724
      %v5733 = vcombine.high %v5708, %v5724
      %v5735 = vunpack.c.l.s4 1934713408
      %v5736 = vunpack.c.0.s8 %v5735
      %v5737 = vlaneseq
      %v5738 = vshrl.u32 %v5737, 7
      %v5739 = vsub.s32 %v5736, %v5738
      %v5740 = vrot.slane %v5732, %v5739
      %v5742 = vunpack.c.l.s4 1934713408
      %v5743 = vunpack.c.0.s8 %v5742
      %v5744 = vlaneseq
      %v5745 = vshrl.u32 %v5744, 7
      %v5746 = vsub.s32 %v5743, %v5745
      %v5747 = vrot.slane %v5733, %v5746
      %v5748 = vcombine.low %v5715, %v5731
      %v5749 = vcombine.high %v5715, %v5731
      %v5751 = vunpack.c.l.s4 1934713408
      %v5752 = vunpack.c.0.s8 %v5751
      %v5753 = vlaneseq
      %v5754 = vshrl.u32 %v5753, 7
      %v5755 = vsub.s32 %v5752, %v5754
      %v5756 = vrot.slane %v5748, %v5755
      %v5758 = vunpack.c.l.s4 1934713408
      %v5759 = vunpack.c.0.s8 %v5758
      %v5760 = vlaneseq
      %v5761 = vshrl.u32 %v5760, 7
      %v5762 = vsub.s32 %v5759, %v5761
      %v5763 = vrot.slane %v5749, %v5762
      %v5764 = vcombine.high %v5740, 0.0
      %v5765 = vcombine.high %v5747, 0.0
      %v5766 = vcombine.high %v5756, 0.0
      %v5767 = vcombine.high %v5763, 0.0
      %v5768 = vcombine.low %v5186, %v5340
      %v5769 = vcombine.high %v5186, %v5340
      %v5771 = vunpack.c.l.s4 1983009808
      %v5772 = vunpack.c.0.s8 %v5771
      %v5773 = vlaneseq
      %v5774 = vshrl.u32 %v5773, 7
      %v5775 = vsub.s32 %v5772, %v5774
      %v5776 = vrot.slane %v5768, %v5775
      %v5778 = vunpack.c.l.s4 1983009808
      %v5779 = vunpack.c.0.s8 %v5778
      %v5780 = vlaneseq
      %v5781 = vshrl.u32 %v5780, 7
      %v5782 = vsub.s32 %v5779, %v5781
      %v5783 = vrot.slane %v5769, %v5782
      %v5784 = vcombine.low %v5263, %v5417
      %v5785 = vcombine.high %v5263, %v5417
      %v5787 = vunpack.c.l.s4 1983009808
      %v5788 = vunpack.c.0.s8 %v5787
      %v5789 = vlaneseq
      %v5790 = vshrl.u32 %v5789, 7
      %v5791 = vsub.s32 %v5788, %v5790
      %v5792 = vrot.slane %v5784, %v5791
      %v5794 = vunpack.c.l.s4 1983009808
      %v5795 = vunpack.c.0.s8 %v5794
      %v5796 = vlaneseq
      %v5797 = vshrl.u32 %v5796, 7
      %v5798 = vsub.s32 %v5795, %v5797
      %v5799 = vrot.slane %v5785, %v5798
      %v5800 = vcombine.low %v5776, %v5792
      %v5801 = vcombine.high %v5776, %v5792
      %v5803 = vunpack.c.l.s4 1934713408
      %v5804 = vunpack.c.0.s8 %v5803
      %v5805 = vlaneseq
      %v5806 = vshrl.u32 %v5805, 7
      %v5807 = vsub.s32 %v5804, %v5806
      %v5808 = vrot.slane %v5800, %v5807
      %v5810 = vunpack.c.l.s4 1934713408
      %v5811 = vunpack.c.0.s8 %v5810
      %v5812 = vlaneseq
      %v5813 = vshrl.u32 %v5812, 7
      %v5814 = vsub.s32 %v5811, %v5813
      %v5815 = vrot.slane %v5801, %v5814
      %v5816 = vcombine.low %v5783, %v5799
      %v5817 = vcombine.high %v5783, %v5799
      %v5819 = vunpack.c.l.s4 1934713408
      %v5820 = vunpack.c.0.s8 %v5819
      %v5821 = vlaneseq
      %v5822 = vshrl.u32 %v5821, 7
      %v5823 = vsub.s32 %v5820, %v5822
      %v5824 = vrot.slane %v5816, %v5823
      %v5826 = vunpack.c.l.s4 1934713408
      %v5827 = vunpack.c.0.s8 %v5826
      %v5828 = vlaneseq
      %v5829 = vshrl.u32 %v5828, 7
      %v5830 = vsub.s32 %v5827, %v5829
      %v5831 = vrot.slane %v5817, %v5830
      %v5832 = vcombine.high %v5808, 0.0
      %v5833 = vcombine.high %v5815, 0.0
      %v5834 = vcombine.high %v5824, 0.0
      %v5835 = vcombine.high %v5831, 0.0
      %v5836 = vcombine.low %v5191, %v5345
      %v5837 = vcombine.high %v5191, %v5345
      %v5839 = vunpack.c.l.s4 1983009808
      %v5840 = vunpack.c.0.s8 %v5839
      %v5841 = vlaneseq
      %v5842 = vshrl.u32 %v5841, 7
      %v5843 = vsub.s32 %v5840, %v5842
      %v5844 = vrot.slane %v5836, %v5843
      %v5846 = vunpack.c.l.s4 1983009808
      %v5847 = vunpack.c.0.s8 %v5846
      %v5848 = vlaneseq
      %v5849 = vshrl.u32 %v5848, 7
      %v5850 = vsub.s32 %v5847, %v5849
      %v5851 = vrot.slane %v5837, %v5850
      %v5852 = vcombine.low %v5268, %v5422
      %v5853 = vcombine.high %v5268, %v5422
      %v5855 = vunpack.c.l.s4 1983009808
      %v5856 = vunpack.c.0.s8 %v5855
      %v5857 = vlaneseq
      %v5858 = vshrl.u32 %v5857, 7
      %v5859 = vsub.s32 %v5856, %v5858
      %v5860 = vrot.slane %v5852, %v5859
      %v5862 = vunpack.c.l.s4 1983009808
      %v5863 = vunpack.c.0.s8 %v5862
      %v5864 = vlaneseq
      %v5865 = vshrl.u32 %v5864, 7
      %v5866 = vsub.s32 %v5863, %v5865
      %v5867 = vrot.slane %v5853, %v5866
      %v5868 = vcombine.low %v5844, %v5860
      %v5869 = vcombine.high %v5844, %v5860
      %v5871 = vunpack.c.l.s4 1934713408
      %v5872 = vunpack.c.0.s8 %v5871
      %v5873 = vlaneseq
      %v5874 = vshrl.u32 %v5873, 7
      %v5875 = vsub.s32 %v5872, %v5874
      %v5876 = vrot.slane %v5868, %v5875
      %v5878 = vunpack.c.l.s4 1934713408
      %v5879 = vunpack.c.0.s8 %v5878
      %v5880 = vlaneseq
      %v5881 = vshrl.u32 %v5880, 7
      %v5882 = vsub.s32 %v5879, %v5881
      %v5883 = vrot.slane %v5869, %v5882
      %v5884 = vcombine.low %v5851, %v5867
      %v5885 = vcombine.high %v5851, %v5867
      %v5887 = vunpack.c.l.s4 1934713408
      %v5888 = vunpack.c.0.s8 %v5887
      %v5889 = vlaneseq
      %v5890 = vshrl.u32 %v5889, 7
      %v5891 = vsub.s32 %v5888, %v5890
      %v5892 = vrot.slane %v5884, %v5891
      %v5894 = vunpack.c.l.s4 1934713408
      %v5895 = vunpack.c.0.s8 %v5894
      %v5896 = vlaneseq
      %v5897 = vshrl.u32 %v5896, 7
      %v5898 = vsub.s32 %v5895, %v5897
      %v5899 = vrot.slane %v5885, %v5898
      %v5900 = vcombine.high %v5876, 0.0
      %v5901 = vcombine.high %v5883, 0.0
      %v5902 = vcombine.high %v5892, 0.0
      %v5903 = vcombine.high %v5899, 0.0
      %v5904 = vcombine.low %v5194, %v5348
      %v5905 = vcombine.high %v5194, %v5348
      %v5907 = vunpack.c.l.s4 1983009808
      %v5908 = vunpack.c.0.s8 %v5907
      %v5909 = vlaneseq
      %v5910 = vshrl.u32 %v5909, 7
      %v5911 = vsub.s32 %v5908, %v5910
      %v5912 = vrot.slane %v5904, %v5911
      %v5914 = vunpack.c.l.s4 1983009808
      %v5915 = vunpack.c.0.s8 %v5914
      %v5916 = vlaneseq
      %v5917 = vshrl.u32 %v5916, 7
      %v5918 = vsub.s32 %v5915, %v5917
      %v5919 = vrot.slane %v5905, %v5918
      %v5920 = vcombine.low %v5271, %v5425
      %v5921 = vcombine.high %v5271, %v5425
      %v5923 = vunpack.c.l.s4 1983009808
      %v5924 = vunpack.c.0.s8 %v5923
      %v5925 = vlaneseq
      %v5926 = vshrl.u32 %v5925, 7
      %v5927 = vsub.s32 %v5924, %v5926
      %v5928 = vrot.slane %v5920, %v5927
      %v5930 = vunpack.c.l.s4 1983009808
      %v5931 = vunpack.c.0.s8 %v5930
      %v5932 = vlaneseq
      %v5933 = vshrl.u32 %v5932, 7
      %v5934 = vsub.s32 %v5931, %v5933
      %v5935 = vrot.slane %v5921, %v5934
      %v5936 = vcombine.low %v5912, %v5928
      %v5937 = vcombine.high %v5912, %v5928
      %v5939 = vunpack.c.l.s4 1934713408
      %v5940 = vunpack.c.0.s8 %v5939
      %v5941 = vlaneseq
      %v5942 = vshrl.u32 %v5941, 7
      %v5943 = vsub.s32 %v5940, %v5942
      %v5944 = vrot.slane %v5936, %v5943
      %v5946 = vunpack.c.l.s4 1934713408
      %v5947 = vunpack.c.0.s8 %v5946
      %v5948 = vlaneseq
      %v5949 = vshrl.u32 %v5948, 7
      %v5950 = vsub.s32 %v5947, %v5949
      %v5951 = vrot.slane %v5937, %v5950
      %v5952 = vcombine.low %v5919, %v5935
      %v5953 = vcombine.high %v5919, %v5935
      %v5955 = vunpack.c.l.s4 1934713408
      %v5956 = vunpack.c.0.s8 %v5955
      %v5957 = vlaneseq
      %v5958 = vshrl.u32 %v5957, 7
      %v5959 = vsub.s32 %v5956, %v5958
      %v5960 = vrot.slane %v5952, %v5959
      %v5962 = vunpack.c.l.s4 1934713408
      %v5963 = vunpack.c.0.s8 %v5962
      %v5964 = vlaneseq
      %v5965 = vshrl.u32 %v5964, 7
      %v5966 = vsub.s32 %v5963, %v5965
      %v5967 = vrot.slane %v5953, %v5966
      %v5968 = vcombine.high %v5944, 0.0
      %v5969 = vcombine.high %v5951, 0.0
      %v5970 = vcombine.high %v5960, 0.0
      %v5971 = vcombine.high %v5967, 0.0
      %v5972 = vcombine.low %v5468, %v5475
      %v5974 = vunpack.c.l.s4 1983009808
      %v5975 = vunpack.c.0.s8 %v5974
      %v5976 = vlaneseq
      %v5977 = vshrl.u32 %v5976, 7
      %v5978 = vsub.s32 %v5975, %v5977
      %v5979 = vrot.slane %v5972, %v5978
      %v5980 = vcombine.low %v5492, %v5493
      %v5982 = vunpack.c.l.s4 1983009808
      %v5983 = vunpack.c.0.s8 %v5982
      %v5984 = vlaneseq
      %v5985 = vshrl.u32 %v5984, 7
      %v5986 = vsub.s32 %v5983, %v5985
      %v5987 = vrot.slane %v5980, %v5986
      %v5988 = vcombine.low %v5484, %v5491
      %v5990 = vunpack.c.l.s4 1983009808
      %v5991 = vunpack.c.0.s8 %v5990
      %v5992 = vlaneseq
      %v5993 = vshrl.u32 %v5992, 7
      %v5994 = vsub.s32 %v5991, %v5993
      %v5995 = vrot.slane %v5988, %v5994
      %v5996 = vcombine.low %v5494, %v5495
      %v5998 = vunpack.c.l.s4 1983009808
      %v5999 = vunpack.c.0.s8 %v5998
      %v6000 = vlaneseq
      %v6001 = vshrl.u32 %v6000, 7
      %v6002 = vsub.s32 %v5999, %v6001
      %v6003 = vrot.slane %v5996, %v6002
      %v6004 = vcombine.low %v5979, %v5987
      %v6005 = vcombine.high %v5979, %v5987
      %v6007 = vunpack.c.l.s4 1934713408
      %v6008 = vunpack.c.0.s8 %v6007
      %v6009 = vlaneseq
      %v6010 = vshrl.u32 %v6009, 7
      %v6011 = vsub.s32 %v6008, %v6010
      %v6012 = vrot.slane %v6004, %v6011
      %v6014 = vunpack.c.l.s4 1934713408
      %v6015 = vunpack.c.0.s8 %v6014
      %v6016 = vlaneseq
      %v6017 = vshrl.u32 %v6016, 7
      %v6018 = vsub.s32 %v6015, %v6017
      %v6019 = vrot.slane %v6005, %v6018
      %v6020 = vcombine.low %v5995, %v6003
      %v6021 = vcombine.high %v5995, %v6003
      %v6023 = vunpack.c.l.s4 1934713408
      %v6024 = vunpack.c.0.s8 %v6023
      %v6025 = vlaneseq
      %v6026 = vshrl.u32 %v6025, 7
      %v6027 = vsub.s32 %v6024, %v6026
      %v6028 = vrot.slane %v6020, %v6027
      %v6030 = vunpack.c.l.s4 1934713408
      %v6031 = vunpack.c.0.s8 %v6030
      %v6032 = vlaneseq
      %v6033 = vshrl.u32 %v6032, 7
      %v6034 = vsub.s32 %v6031, %v6033
      %v6035 = vrot.slane %v6021, %v6034
      %v6036 = vcombine.low %v6012, %v6028
      %v6037 = vcombine.high %v6012, %v6028
      %v6038 = vcombine.low %v6019, %v6035
      %v6039 = vcombine.high %v6019, %v6035
      %v6040 = vcombine.low %v5536, %v5543
      %v6042 = vunpack.c.l.s4 1983009808
      %v6043 = vunpack.c.0.s8 %v6042
      %v6044 = vlaneseq
      %v6045 = vshrl.u32 %v6044, 7
      %v6046 = vsub.s32 %v6043, %v6045
      %v6047 = vrot.slane %v6040, %v6046
      %v6048 = vcombine.low %v5560, %v5561
      %v6050 = vunpack.c.l.s4 1983009808
      %v6051 = vunpack.c.0.s8 %v6050
      %v6052 = vlaneseq
      %v6053 = vshrl.u32 %v6052, 7
      %v6054 = vsub.s32 %v6051, %v6053
      %v6055 = vrot.slane %v6048, %v6054
      %v6056 = vcombine.low %v5552, %v5559
      %v6058 = vunpack.c.l.s4 1983009808
      %v6059 = vunpack.c.0.s8 %v6058
      %v6060 = vlaneseq
      %v6061 = vshrl.u32 %v6060, 7
      %v6062 = vsub.s32 %v6059, %v6061
      %v6063 = vrot.slane %v6056, %v6062
      %v6064 = vcombine.low %v5562, %v5563
      %v6066 = vunpack.c.l.s4 1983009808
      %v6067 = vunpack.c.0.s8 %v6066
      %v6068 = vlaneseq
      %v6069 = vshrl.u32 %v6068, 7
      %v6070 = vsub.s32 %v6067, %v6069
      %v6071 = vrot.slane %v6064, %v6070
      %v6072 = vcombine.low %v6047, %v6055
      %v6073 = vcombine.high %v6047, %v6055
      %v6075 = vunpack.c.l.s4 1934713408
      %v6076 = vunpack.c.0.s8 %v6075
      %v6077 = vlaneseq
      %v6078 = vshrl.u32 %v6077, 7
      %v6079 = vsub.s32 %v6076, %v6078
      %v6080 = vrot.slane %v6072, %v6079
      %v6082 = vunpack.c.l.s4 1934713408
      %v6083 = vunpack.c.0.s8 %v6082
      %v6084 = vlaneseq
      %v6085 = vshrl.u32 %v6084, 7
      %v6086 = vsub.s32 %v6083, %v6085
      %v6087 = vrot.slane %v6073, %v6086
      %v6088 = vcombine.low %v6063, %v6071
      %v6089 = vcombine.high %v6063, %v6071
      %v6091 = vunpack.c.l.s4 1934713408
      %v6092 = vunpack.c.0.s8 %v6091
      %v6093 = vlaneseq
      %v6094 = vshrl.u32 %v6093, 7
      %v6095 = vsub.s32 %v6092, %v6094
      %v6096 = vrot.slane %v6088, %v6095
      %v6098 = vunpack.c.l.s4 1934713408
      %v6099 = vunpack.c.0.s8 %v6098
      %v6100 = vlaneseq
      %v6101 = vshrl.u32 %v6100, 7
      %v6102 = vsub.s32 %v6099, %v6101
      %v6103 = vrot.slane %v6089, %v6102
      %v6104 = vcombine.low %v6080, %v6096
      %v6105 = vcombine.high %v6080, %v6096
      %v6106 = vcombine.low %v6087, %v6103
      %v6107 = vcombine.high %v6087, %v6103
      %v6108 = vcombine.low %v5604, %v5611
      %v6110 = vunpack.c.l.s4 1983009808
      %v6111 = vunpack.c.0.s8 %v6110
      %v6112 = vlaneseq
      %v6113 = vshrl.u32 %v6112, 7
      %v6114 = vsub.s32 %v6111, %v6113
      %v6115 = vrot.slane %v6108, %v6114
      %v6116 = vcombine.low %v5628, %v5629
      %v6118 = vunpack.c.l.s4 1983009808
      %v6119 = vunpack.c.0.s8 %v6118
      %v6120 = vlaneseq
      %v6121 = vshrl.u32 %v6120, 7
      %v6122 = vsub.s32 %v6119, %v6121
      %v6123 = vrot.slane %v6116, %v6122
      %v6124 = vcombine.low %v5620, %v5627
      %v6126 = vunpack.c.l.s4 1983009808
      %v6127 = vunpack.c.0.s8 %v6126
      %v6128 = vlaneseq
      %v6129 = vshrl.u32 %v6128, 7
      %v6130 = vsub.s32 %v6127, %v6129
      %v6131 = vrot.slane %v6124, %v6130
      %v6132 = vcombine.low %v5630, %v5631
      %v6134 = vunpack.c.l.s4 1983009808
      %v6135 = vunpack.c.0.s8 %v6134
      %v6136 = vlaneseq
      %v6137 = vshrl.u32 %v6136, 7
      %v6138 = vsub.s32 %v6135, %v6137
      %v6139 = vrot.slane %v6132, %v6138
      %v6140 = vcombine.low %v6115, %v6123
      %v6141 = vcombine.high %v6115, %v6123
      %v6143 = vunpack.c.l.s4 1934713408
      %v6144 = vunpack.c.0.s8 %v6143
      %v6145 = vlaneseq
      %v6146 = vshrl.u32 %v6145, 7
      %v6147 = vsub.s32 %v6144, %v6146
      %v6148 = vrot.slane %v6140, %v6147
      %v6150 = vunpack.c.l.s4 1934713408
      %v6151 = vunpack.c.0.s8 %v6150
      %v6152 = vlaneseq
      %v6153 = vshrl.u32 %v6152, 7
      %v6154 = vsub.s32 %v6151, %v6153
      %v6155 = vrot.slane %v6141, %v6154
      %v6156 = vcombine.low %v6131, %v6139
      %v6157 = vcombine.high %v6131, %v6139
      %v6159 = vunpack.c.l.s4 1934713408
      %v6160 = vunpack.c.0.s8 %v6159
      %v6161 = vlaneseq
      %v6162 = vshrl.u32 %v6161, 7
      %v6163 = vsub.s32 %v6160, %v6162
      %v6164 = vrot.slane %v6156, %v6163
      %v6166 = vunpack.c.l.s4 1934713408
      %v6167 = vunpack.c.0.s8 %v6166
      %v6168 = vlaneseq
      %v6169 = vshrl.u32 %v6168, 7
      %v6170 = vsub.s32 %v6167, %v6169
      %v6171 = vrot.slane %v6157, %v6170
      %v6172 = vcombine.low %v6148, %v6164
      %v6173 = vcombine.high %v6148, %v6164
      %v6174 = vcombine.low %v6155, %v6171
      %v6175 = vcombine.high %v6155, %v6171
      %v6176 = vcombine.low %v5672, %v5679
      %v6178 = vunpack.c.l.s4 1983009808
      %v6179 = vunpack.c.0.s8 %v6178
      %v6180 = vlaneseq
      %v6181 = vshrl.u32 %v6180, 7
      %v6182 = vsub.s32 %v6179, %v6181
      %v6183 = vrot.slane %v6176, %v6182
      %v6184 = vcombine.low %v5696, %v5697
      %v6186 = vunpack.c.l.s4 1983009808
      %v6187 = vunpack.c.0.s8 %v6186
      %v6188 = vlaneseq
      %v6189 = vshrl.u32 %v6188, 7
      %v6190 = vsub.s32 %v6187, %v6189
      %v6191 = vrot.slane %v6184, %v6190
      %v6192 = vcombine.low %v5688, %v5695
      %v6194 = vunpack.c.l.s4 1983009808
      %v6195 = vunpack.c.0.s8 %v6194
      %v6196 = vlaneseq
      %v6197 = vshrl.u32 %v6196, 7
      %v6198 = vsub.s32 %v6195, %v6197
      %v6199 = vrot.slane %v6192, %v6198
      %v6200 = vcombine.low %v5698, %v5699
      %v6202 = vunpack.c.l.s4 1983009808
      %v6203 = vunpack.c.0.s8 %v6202
      %v6204 = vlaneseq
      %v6205 = vshrl.u32 %v6204, 7
      %v6206 = vsub.s32 %v6203, %v6205
      %v6207 = vrot.slane %v6200, %v6206
      %v6208 = vcombine.low %v6183, %v6191
      %v6209 = vcombine.high %v6183, %v6191
      %v6211 = vunpack.c.l.s4 1934713408
      %v6212 = vunpack.c.0.s8 %v6211
      %v6213 = vlaneseq
      %v6214 = vshrl.u32 %v6213, 7
      %v6215 = vsub.s32 %v6212, %v6214
      %v6216 = vrot.slane %v6208, %v6215
      %v6218 = vunpack.c.l.s4 1934713408
      %v6219 = vunpack.c.0.s8 %v6218
      %v6220 = vlaneseq
      %v6221 = vshrl.u32 %v6220, 7
      %v6222 = vsub.s32 %v6219, %v6221
      %v6223 = vrot.slane %v6209, %v6222
      %v6224 = vcombine.low %v6199, %v6207
      %v6225 = vcombine.high %v6199, %v6207
      %v6227 = vunpack.c.l.s4 1934713408
      %v6228 = vunpack.c.0.s8 %v6227
      %v6229 = vlaneseq
      %v6230 = vshrl.u32 %v6229, 7
      %v6231 = vsub.s32 %v6228, %v6230
      %v6232 = vrot.slane %v6224, %v6231
      %v6234 = vunpack.c.l.s4 1934713408
      %v6235 = vunpack.c.0.s8 %v6234
      %v6236 = vlaneseq
      %v6237 = vshrl.u32 %v6236, 7
      %v6238 = vsub.s32 %v6235, %v6237
      %v6239 = vrot.slane %v6225, %v6238
      %v6240 = vcombine.low %v6216, %v6232
      %v6241 = vcombine.high %v6216, %v6232
      %v6242 = vcombine.low %v6223, %v6239
      %v6243 = vcombine.high %v6223, %v6239
      %v6244 = vcombine.low %v5740, %v5747
      %v6246 = vunpack.c.l.s4 1983009808
      %v6247 = vunpack.c.0.s8 %v6246
      %v6248 = vlaneseq
      %v6249 = vshrl.u32 %v6248, 7
      %v6250 = vsub.s32 %v6247, %v6249
      %v6251 = vrot.slane %v6244, %v6250
      %v6252 = vcombine.low %v5764, %v5765
      %v6254 = vunpack.c.l.s4 1983009808
      %v6255 = vunpack.c.0.s8 %v6254
      %v6256 = vlaneseq
      %v6257 = vshrl.u32 %v6256, 7
      %v6258 = vsub.s32 %v6255, %v6257
      %v6259 = vrot.slane %v6252, %v6258
      %v6260 = vcombine.low %v5756, %v5763
      %v6262 = vunpack.c.l.s4 1983009808
      %v6263 = vunpack.c.0.s8 %v6262
      %v6264 = vlaneseq
      %v6265 = vshrl.u32 %v6264, 7
      %v6266 = vsub.s32 %v6263, %v6265
      %v6267 = vrot.slane %v6260, %v6266
      %v6268 = vcombine.low %v5766, %v5767
      %v6270 = vunpack.c.l.s4 1983009808
      %v6271 = vunpack.c.0.s8 %v6270
      %v6272 = vlaneseq
      %v6273 = vshrl.u32 %v6272, 7
      %v6274 = vsub.s32 %v6271, %v6273
      %v6275 = vrot.slane %v6268, %v6274
      %v6276 = vcombine.low %v6251, %v6259
      %v6277 = vcombine.high %v6251, %v6259
      %v6279 = vunpack.c.l.s4 1934713408
      %v6280 = vunpack.c.0.s8 %v6279
      %v6281 = vlaneseq
      %v6282 = vshrl.u32 %v6281, 7
      %v6283 = vsub.s32 %v6280, %v6282
      %v6284 = vrot.slane %v6276, %v6283
      %v6286 = vunpack.c.l.s4 1934713408
      %v6287 = vunpack.c.0.s8 %v6286
      %v6288 = vlaneseq
      %v6289 = vshrl.u32 %v6288, 7
      %v6290 = vsub.s32 %v6287, %v6289
      %v6291 = vrot.slane %v6277, %v6290
      %v6292 = vcombine.low %v6267, %v6275
      %v6293 = vcombine.high %v6267, %v6275
      %v6295 = vunpack.c.l.s4 1934713408
      %v6296 = vunpack.c.0.s8 %v6295
      %v6297 = vlaneseq
      %v6298 = vshrl.u32 %v6297, 7
      %v6299 = vsub.s32 %v6296, %v6298
      %v6300 = vrot.slane %v6292, %v6299
      %v6302 = vunpack.c.l.s4 1934713408
      %v6303 = vunpack.c.0.s8 %v6302
      %v6304 = vlaneseq
      %v6305 = vshrl.u32 %v6304, 7
      %v6306 = vsub.s32 %v6303, %v6305
      %v6307 = vrot.slane %v6293, %v6306
      %v6308 = vcombine.low %v6284, %v6300
      %v6309 = vcombine.high %v6284, %v6300
      %v6310 = vcombine.low %v6291, %v6307
      %v6311 = vcombine.high %v6291, %v6307
      %v6312 = vcombine.low %v5808, %v5815
      %v6314 = vunpack.c.l.s4 1983009808
      %v6315 = vunpack.c.0.s8 %v6314
      %v6316 = vlaneseq
      %v6317 = vshrl.u32 %v6316, 7
      %v6318 = vsub.s32 %v6315, %v6317
      %v6319 = vrot.slane %v6312, %v6318
      %v6320 = vcombine.low %v5832, %v5833
      %v6322 = vunpack.c.l.s4 1983009808
      %v6323 = vunpack.c.0.s8 %v6322
      %v6324 = vlaneseq
      %v6325 = vshrl.u32 %v6324, 7
      %v6326 = vsub.s32 %v6323, %v6325
      %v6327 = vrot.slane %v6320, %v6326
      %v6328 = vcombine.low %v5824, %v5831
      %v6330 = vunpack.c.l.s4 1983009808
      %v6331 = vunpack.c.0.s8 %v6330
      %v6332 = vlaneseq
      %v6333 = vshrl.u32 %v6332, 7
      %v6334 = vsub.s32 %v6331, %v6333
      %v6335 = vrot.slane %v6328, %v6334
      %v6336 = vcombine.low %v5834, %v5835
      %v6338 = vunpack.c.l.s4 1983009808
      %v6339 = vunpack.c.0.s8 %v6338
      %v6340 = vlaneseq
      %v6341 = vshrl.u32 %v6340, 7
      %v6342 = vsub.s32 %v6339, %v6341
      %v6343 = vrot.slane %v6336, %v6342
      %v6344 = vcombine.low %v6319, %v6327
      %v6345 = vcombine.high %v6319, %v6327
      %v6347 = vunpack.c.l.s4 1934713408
      %v6348 = vunpack.c.0.s8 %v6347
      %v6349 = vlaneseq
      %v6350 = vshrl.u32 %v6349, 7
      %v6351 = vsub.s32 %v6348, %v6350
      %v6352 = vrot.slane %v6344, %v6351
      %v6354 = vunpack.c.l.s4 1934713408
      %v6355 = vunpack.c.0.s8 %v6354
      %v6356 = vlaneseq
      %v6357 = vshrl.u32 %v6356, 7
      %v6358 = vsub.s32 %v6355, %v6357
      %v6359 = vrot.slane %v6345, %v6358
      %v6360 = vcombine.low %v6335, %v6343
      %v6361 = vcombine.high %v6335, %v6343
      %v6363 = vunpack.c.l.s4 1934713408
      %v6364 = vunpack.c.0.s8 %v6363
      %v6365 = vlaneseq
      %v6366 = vshrl.u32 %v6365, 7
      %v6367 = vsub.s32 %v6364, %v6366
      %v6368 = vrot.slane %v6360, %v6367
      %v6370 = vunpack.c.l.s4 1934713408
      %v6371 = vunpack.c.0.s8 %v6370
      %v6372 = vlaneseq
      %v6373 = vshrl.u32 %v6372, 7
      %v6374 = vsub.s32 %v6371, %v6373
      %v6375 = vrot.slane %v6361, %v6374
      %v6376 = vcombine.low %v6352, %v6368
      %v6377 = vcombine.high %v6352, %v6368
      %v6378 = vcombine.low %v6359, %v6375
      %v6379 = vcombine.high %v6359, %v6375
      %v6380 = vcombine.low %v5876, %v5883
      %v6382 = vunpack.c.l.s4 1983009808
      %v6383 = vunpack.c.0.s8 %v6382
      %v6384 = vlaneseq
      %v6385 = vshrl.u32 %v6384, 7
      %v6386 = vsub.s32 %v6383, %v6385
      %v6387 = vrot.slane %v6380, %v6386
      %v6388 = vcombine.low %v5900, %v5901
      %v6390 = vunpack.c.l.s4 1983009808
      %v6391 = vunpack.c.0.s8 %v6390
      %v6392 = vlaneseq
      %v6393 = vshrl.u32 %v6392, 7
      %v6394 = vsub.s32 %v6391, %v6393
      %v6395 = vrot.slane %v6388, %v6394
      %v6396 = vcombine.low %v5892, %v5899
      %v6398 = vunpack.c.l.s4 1983009808
      %v6399 = vunpack.c.0.s8 %v6398
      %v6400 = vlaneseq
      %v6401 = vshrl.u32 %v6400, 7
      %v6402 = vsub.s32 %v6399, %v6401
      %v6403 = vrot.slane %v6396, %v6402
      %v6404 = vcombine.low %v5902, %v5903
      %v6406 = vunpack.c.l.s4 1983009808
      %v6407 = vunpack.c.0.s8 %v6406
      %v6408 = vlaneseq
      %v6409 = vshrl.u32 %v6408, 7
      %v6410 = vsub.s32 %v6407, %v6409
      %v6411 = vrot.slane %v6404, %v6410
      %v6412 = vcombine.low %v6387, %v6395
      %v6413 = vcombine.high %v6387, %v6395
      %v6415 = vunpack.c.l.s4 1934713408
      %v6416 = vunpack.c.0.s8 %v6415
      %v6417 = vlaneseq
      %v6418 = vshrl.u32 %v6417, 7
      %v6419 = vsub.s32 %v6416, %v6418
      %v6420 = vrot.slane %v6412, %v6419
      %v6422 = vunpack.c.l.s4 1934713408
      %v6423 = vunpack.c.0.s8 %v6422
      %v6424 = vlaneseq
      %v6425 = vshrl.u32 %v6424, 7
      %v6426 = vsub.s32 %v6423, %v6425
      %v6427 = vrot.slane %v6413, %v6426
      %v6428 = vcombine.low %v6403, %v6411
      %v6429 = vcombine.high %v6403, %v6411
      %v6431 = vunpack.c.l.s4 1934713408
      %v6432 = vunpack.c.0.s8 %v6431
      %v6433 = vlaneseq
      %v6434 = vshrl.u32 %v6433, 7
      %v6435 = vsub.s32 %v6432, %v6434
      %v6436 = vrot.slane %v6428, %v6435
      %v6438 = vunpack.c.l.s4 1934713408
      %v6439 = vunpack.c.0.s8 %v6438
      %v6440 = vlaneseq
      %v6441 = vshrl.u32 %v6440, 7
      %v6442 = vsub.s32 %v6439, %v6441
      %v6443 = vrot.slane %v6429, %v6442
      %v6444 = vcombine.low %v6420, %v6436
      %v6445 = vcombine.high %v6420, %v6436
      %v6446 = vcombine.low %v6427, %v6443
      %v6447 = vcombine.high %v6427, %v6443
      %v6448 = vcombine.low %v5944, %v5951
      %v6450 = vunpack.c.l.s4 1983009808
      %v6451 = vunpack.c.0.s8 %v6450
      %v6452 = vlaneseq
      %v6453 = vshrl.u32 %v6452, 7
      %v6454 = vsub.s32 %v6451, %v6453
      %v6455 = vrot.slane %v6448, %v6454
      %v6456 = vcombine.low %v5968, %v5969
      %v6458 = vunpack.c.l.s4 1983009808
      %v6459 = vunpack.c.0.s8 %v6458
      %v6460 = vlaneseq
      %v6461 = vshrl.u32 %v6460, 7
      %v6462 = vsub.s32 %v6459, %v6461
      %v6463 = vrot.slane %v6456, %v6462
      %v6464 = vcombine.low %v5960, %v5967
      %v6466 = vunpack.c.l.s4 1983009808
      %v6467 = vunpack.c.0.s8 %v6466
      %v6468 = vlaneseq
      %v6469 = vshrl.u32 %v6468, 7
      %v6470 = vsub.s32 %v6467, %v6469
      %v6471 = vrot.slane %v6464, %v6470
      %v6472 = vcombine.low %v5970, %v5971
      %v6474 = vunpack.c.l.s4 1983009808
      %v6475 = vunpack.c.0.s8 %v6474
      %v6476 = vlaneseq
      %v6477 = vshrl.u32 %v6476, 7
      %v6478 = vsub.s32 %v6475, %v6477
      %v6479 = vrot.slane %v6472, %v6478
      %v6480 = vcombine.low %v6455, %v6463
      %v6481 = vcombine.high %v6455, %v6463
      %v6483 = vunpack.c.l.s4 1934713408
      %v6484 = vunpack.c.0.s8 %v6483
      %v6485 = vlaneseq
      %v6486 = vshrl.u32 %v6485, 7
      %v6487 = vsub.s32 %v6484, %v6486
      %v6488 = vrot.slane %v6480, %v6487
      %v6490 = vunpack.c.l.s4 1934713408
      %v6491 = vunpack.c.0.s8 %v6490
      %v6492 = vlaneseq
      %v6493 = vshrl.u32 %v6492, 7
      %v6494 = vsub.s32 %v6491, %v6493
      %v6495 = vrot.slane %v6481, %v6494
      %v6496 = vcombine.low %v6471, %v6479
      %v6497 = vcombine.high %v6471, %v6479
      %v6499 = vunpack.c.l.s4 1934713408
      %v6500 = vunpack.c.0.s8 %v6499
      %v6501 = vlaneseq
      %v6502 = vshrl.u32 %v6501, 7
      %v6503 = vsub.s32 %v6500, %v6502
      %v6504 = vrot.slane %v6496, %v6503
      %v6506 = vunpack.c.l.s4 1934713408
      %v6507 = vunpack.c.0.s8 %v6506
      %v6508 = vlaneseq
      %v6509 = vshrl.u32 %v6508, 7
      %v6510 = vsub.s32 %v6507, %v6509
      %v6511 = vrot.slane %v6497, %v6510
      %v6512 = vcombine.low %v6488, %v6504
      %v6513 = vcombine.high %v6488, %v6504
      %v6514 = vcombine.low %v6495, %v6511
      %v6515 = vcombine.high %v6495, %v6511
      %6524 = vrot.lane.b32.xlu0 %v6037, 32
      %v6525 = vpop.permute.xlu0 %6524
      %6526 = vrot.lane.b32.xlu0 %v6105, 32
      %v6527 = vpop.permute.xlu0 %6526
      %6528 = vrot.lane.b32.xlu0 %v6173, 32
      %v6529 = vpop.permute.xlu0 %6528
      %6530 = vrot.lane.b32.xlu0 %v6241, 32
      %v6531 = vpop.permute.xlu0 %6530
      %6532 = vrot.lane.b32.xlu0 %v6309, 32
      %v6533 = vpop.permute.xlu0 %6532
      %6534 = vrot.lane.b32.xlu0 %v6377, 32
      %v6535 = vpop.permute.xlu0 %6534
      %6536 = vrot.lane.b32.xlu0 %v6445, 32
      %v6537 = vpop.permute.xlu0 %6536
      %6538 = vrot.lane.b32.xlu0 %v6513, 32
      %v6539 = vpop.permute.xlu0 %6538
      %6556 = vrot.lane.b32.xlu0 %v6038, 64
      %v6557 = vpop.permute.xlu0 %6556
      %6558 = vrot.lane.b32.xlu0 %v6106, 64
      %v6559 = vpop.permute.xlu0 %6558
      %6560 = vrot.lane.b32.xlu0 %v6174, 64
      %v6561 = vpop.permute.xlu0 %6560
      %6562 = vrot.lane.b32.xlu0 %v6242, 64
      %v6563 = vpop.permute.xlu0 %6562
      %6564 = vrot.lane.b32.xlu0 %v6310, 64
      %v6565 = vpop.permute.xlu0 %6564
      %6566 = vrot.lane.b32.xlu0 %v6378, 64
      %v6567 = vpop.permute.xlu0 %6566
      %6568 = vrot.lane.b32.xlu0 %v6446, 64
      %v6569 = vpop.permute.xlu0 %6568
      %6570 = vrot.lane.b32.xlu0 %v6514, 64
      %v6571 = vpop.permute.xlu0 %6570
      %6588 = vrot.lane.b32.xlu0 %v6039, 96
      %v6589 = vpop.permute.xlu0 %6588
      %6590 = vrot.lane.b32.xlu0 %v6107, 96
      %v6591 = vpop.permute.xlu0 %6590
      %6592 = vrot.lane.b32.xlu0 %v6175, 96
      %v6593 = vpop.permute.xlu0 %6592
      %6594 = vrot.lane.b32.xlu0 %v6243, 96
      %v6595 = vpop.permute.xlu0 %6594
      %6596 = vrot.lane.b32.xlu0 %v6311, 96
      %v6597 = vpop.permute.xlu0 %6596
      %6598 = vrot.lane.b32.xlu0 %v6379, 96
      %v6599 = vpop.permute.xlu0 %6598
      %6600 = vrot.lane.b32.xlu0 %v6447, 96
      %v6601 = vpop.permute.xlu0 %6600
      %6602 = vrot.lane.b32.xlu0 %v6515, 96
      %v6603 = vpop.permute.xlu0 %6602
      %v6612 = vsel %vm4295, %v6036, %v6525
      %v6613 = vsel %vm4295, %v6104, %v6527
      %v6614 = vsel %vm4295, %v6172, %v6529
      %v6615 = vsel %vm4295, %v6240, %v6531
      %v6616 = vsel %vm4295, %v6308, %v6533
      %v6617 = vsel %vm4295, %v6376, %v6535
      %v6618 = vsel %vm4295, %v6444, %v6537
      %v6619 = vsel %vm4295, %v6512, %v6539
      %v6620 = vsel %vm4751, %v6612, %v6557
      %v6621 = vsel %vm4751, %v6613, %v6559
      %v6622 = vsel %vm4751, %v6614, %v6561
      %v6623 = vsel %vm4751, %v6615, %v6563
      %v6624 = vsel %vm4751, %v6616, %v6565
      %v6625 = vsel %vm4751, %v6617, %v6567
      %v6626 = vsel %vm4751, %v6618, %v6569
      %v6627 = vsel %vm4751, %v6619, %v6571
      %vm6628 = vcmask 785408
      %v6629 = vsel %vm6628, %v6620, %v6589
      %v6630 = vsel %vm6628, %v6621, %v6591
      %v6631 = vsel %vm6628, %v6622, %v6593
      %v6632 = vsel %vm6628, %v6623, %v6595
      %v6633 = vsel %vm6628, %v6624, %v6597
      %v6634 = vsel %vm6628, %v6625, %v6599
      %v6635 = vsel %vm6628, %v6626, %v6601
      %v6636 = vsel %vm6628, %v6627, %v6603
      %v6637 = vpack.c.bf16 %v6630, %v6629
      %v6638 = vpack.c.bf16 %v6632, %v6631
      %v6639 = vpack.c.bf16 %v6634, %v6633
      %v6640 = vpack.c.bf16 %v6636, %v6635
      %v6641 = vld [vmem:[%s575] sm:$0xf]
      %v6642 = vld [vmem:[%s575 + $0x4] sm:$0xf]
      %v6643 = vld [vmem:[%s575 + $0x8] sm:$0xf]
      %v6644 = vld [vmem:[%s575 + $0xc] sm:$0xf]
      %v6645 = vld [vmem:[%s575 + $0x10] sm:$0xf]
      %v6646 = vld [vmem:[%s575 + $0x14] sm:$0xf]
      %v6647 = vld [vmem:[%s575 + $0x18] sm:$0xf]
      %v6648 = vld [vmem:[%s575 + $0x1c] sm:$0xf]
      %v6649 = vld [vmem:[%s575 + $0x20] sm:$0xf]
      %v6650 = vld [vmem:[%s575 + $0x24] sm:$0xf]
      %v6651 = vld [vmem:[%s575 + $0x28] sm:$0xf]
      %v6652 = vld [vmem:[%s575 + $0x2c] sm:$0xf]
      %v6653 = vld [vmem:[%s575 + $0x30] sm:$0xf]
      %v6654 = vld [vmem:[%s575 + $0x34] sm:$0xf]
      %v6655 = vld [vmem:[%s575 + $0x38] sm:$0xf]
      %v6656 = vld [vmem:[%s575 + $0x3c] sm:$0xf]
      %v6657 = vld [vmem:[%s578] sm:$0x1]
      %v6659 = vlaneseq
      %v6660 = vshrl.u32 %v6659, 7
      %v6661 = vsub.s32 0, %v6660
      %v6662 = vrot.slane %v6657, %v6661
      %v6680 = vunpack.c.l.b16 %v6641
      %v6681 = vunpack.c.l.b16 %v6642
      %v6682 = vunpack.c.l.b16 %v6643
      %v6683 = vunpack.c.l.b16 %v6644
      %v6684 = vunpack.c.l.b16 %v6645
      %v6685 = vunpack.c.l.b16 %v6646
      %v6686 = vunpack.c.l.b16 %v6647
      %v6687 = vunpack.c.l.b16 %v6648
      %v6688 = vunpack.c.l.b16 %v6649
      %v6689 = vunpack.c.l.b16 %v6650
      %v6690 = vunpack.c.l.b16 %v6651
      %v6691 = vunpack.c.l.b16 %v6652
      %v6692 = vunpack.c.l.b16 %v6653
      %v6693 = vunpack.c.l.b16 %v6654
      %v6694 = vunpack.c.l.b16 %v6655
      %v6695 = vunpack.c.l.b16 %v6656
      %v6696 = vpack.c.b16 %v6681, %v6680
      %v6697 = vpack.c.b16 %v6683, %v6682
      %v6698 = vpack.c.b16 %v6685, %v6684
      %v6699 = vpack.c.b16 %v6687, %v6686
      %v6700 = vpack.c.b16 %v6689, %v6688
      %v6701 = vpack.c.b16 %v6691, %v6690
      %v6702 = vpack.c.b16 %v6693, %v6692
      %v6703 = vpack.c.b16 %v6695, %v6694
      %6712 = vmatprep.subr.bf16.mxu0 0
      %6713 = vmatpush1.bf16.msra.mxu0 %v6703
      %6714 = vmatprep.subr.bf16.mxu0 0
      %6715 = vmatpush1.bf16.msra.mxu0 %v6702
      %6716 = vmatprep.subr.bf16.mxu0 0
      %6717 = vmatpush1.bf16.msra.mxu0 %v6701
      %6718 = vmatprep.subr.bf16.mxu0 0
      %6719 = vmatpush1.bf16.msra.mxu0 %v6700
      %6720 = vmatprep.subr.bf16.mxu0 0
      %6721 = vmatpush1.bf16.msra.mxu0 %v6699
      %6722 = vmatprep.subr.bf16.mxu0 0
      %6723 = vmatpush1.bf16.msra.mxu0 %v6698
      %6724 = vmatprep.subr.bf16.mxu0 0
      %6725 = vmatpush1.bf16.msra.mxu0 %v6697
      %6726 = vmatprep.subr.bf16.mxu0 0
      %6727 = vmatpush1.bf16.msra.mxu0 %v6696
      %6728 = vmatprep.subr.bf16.mxu0 0
      %6729 = vmatpush2.bf16.msra.mxu0 0
      %6730 = vmatprep.subr.bf16.mxu0 0
      %6731 = vmatpush2.bf16.msra.mxu0 0
      %6732 = vmatprep.subr.bf16.mxu0 0
      %6733 = vmatpush2.bf16.msra.mxu0 0
      %6734 = vmatprep.subr.bf16.mxu0 0
      %6735 = vmatpush2.bf16.msra.mxu0 0
      %6736 = vmatprep.subr.bf16.mxu0 0
      %6737 = vmatpush2.bf16.msra.mxu0 0
      %6738 = vmatprep.subr.bf16.mxu0 0
      %6739 = vmatpush2.bf16.msra.mxu0 0
      %6740 = vmatprep.subr.bf16.mxu0 0
      %6741 = vmatpush2.bf16.msra.mxu0 0
      %6742 = vmatprep.subr.bf16.mxu0 0
      %6743 = vmatpush2.bf16.msra.mxu0 0
      %6744 = vmatprep.mubr.bf16.mxu0 0
      %6745 = vmatmul.mubr.bf16.gmra.mxu0 %v6637
      %v6746 = vpop.f32.mrf.mxu0
      %v6747 = vadd.f32 %v6662, %v6746
      %v6748 = vpop.f32.mrf.mxu0
      %v6749 = vpop.f32.mrf.mxu0
      %v6750 = vadd.f32 %v6662, %v6749
      %v6751 = vpop.f32.mrf.mxu0
      %6752 = vmatprep.mubr.bf16.mxu0 0
      %6753 = vmatmul.mubr.bf16.gmra.mxu0 %v6638
      %v6754 = vpop.f32.mrf.mxu0
      %v6755 = vadd.f32 %v6662, %v6754
      %v6756 = vpop.f32.mrf.mxu0
      %v6757 = vpop.f32.mrf.mxu0
      %v6758 = vadd.f32 %v6662, %v6757
      %v6759 = vpop.f32.mrf.mxu0
      %6760 = vmatprep.mubr.bf16.mxu0 0
      %6761 = vmatmul.mubr.bf16.gmra.mxu0 %v6639
      %v6762 = vpop.f32.mrf.mxu0
      %v6763 = vadd.f32 %v6662, %v6762
      %v6764 = vpop.f32.mrf.mxu0
      %v6765 = vpop.f32.mrf.mxu0
      %v6766 = vadd.f32 %v6662, %v6765
      %v6767 = vpop.f32.mrf.mxu0
      %6768 = vmatprep.mubr.bf16.mxu0 0
      %6769 = vmatmul.mubr.bf16.gmra.mxu0 %v6640
      %v6770 = vpop.f32.mrf.mxu0
      %v6771 = vadd.f32 %v6662, %v6770
      %v6772 = vpop.f32.mrf.mxu0
      %v6773 = vpop.f32.mrf.mxu0
      %v6774 = vadd.f32 %v6662, %v6773
      %v6775 = vpop.f32.mrf.mxu0
      %6776 = vdwg.mxu0
      %v6777 = vadd.f32 %v628, %v6747
      %v6778 = vadd.f32 %v629, %v6750
      %v6779 = vadd.f32 %v630, %v6755
      %v6780 = vadd.f32 %v631, %v6758
      %v6781 = vadd.f32 %v632, %v6763
      %v6782 = vadd.f32 %v633, %v6766
      %v6783 = vadd.f32 %v634, %v6771
      %v6784 = vadd.f32 %v635, %v6774
      %v6785 = vld [vmem:[%s581] sm:$0x1]
      %v6786 = vld [vmem:[%s584] sm:$0x1]
      %6787 = vadd.xlane.f32.xlu0 %v6777
      %v6788 = vpop.xlane.xlu0 %6787
      %6789 = vadd.xlane.f32.xlu0 %v6778
      %v6790 = vpop.xlane.xlu0 %6789
      %6791 = vadd.xlane.f32.xlu0 %v6779
      %v6792 = vpop.xlane.xlu0 %6791
      %6793 = vadd.xlane.f32.xlu0 %v6780
      %v6794 = vpop.xlane.xlu0 %6793
      %6795 = vadd.xlane.f32.xlu0 %v6781
      %v6796 = vpop.xlane.xlu0 %6795
      %6797 = vadd.xlane.f32.xlu0 %v6782
      %v6798 = vpop.xlane.xlu0 %6797
      %6799 = vadd.xlane.f32.xlu0 %v6783
      %v6800 = vpop.xlane.xlu0 %6799
      %6801 = vadd.xlane.f32.xlu0 %v6784
      %v6802 = vpop.xlane.xlu0 %6801
      %v6803 = vmul.f32 %v6788, %v654
      %v6804 = vmul.f32 %v6790, %v654
      %v6805 = vmul.f32 %v6792, %v654
      %v6806 = vmul.f32 %v6794, %v654
      %v6807 = vmul.f32 %v6796, %v654
      %v6808 = vmul.f32 %v6798, %v654
      %v6809 = vmul.f32 %v6800, %v654
      %v6810 = vmul.f32 %v6802, %v654
      %v6811 = vsub.f32 %v6777, %v6803
      %v6812 = vsub.f32 %v6778, %v6804
      %v6813 = vsub.f32 %v6779, %v6805
      %v6814 = vsub.f32 %v6780, %v6806
      %v6815 = vsub.f32 %v6781, %v6807
      %v6816 = vsub.f32 %v6782, %v6808
      %v6817 = vsub.f32 %v6783, %v6809
      %v6818 = vsub.f32 %v6784, %v6810
      %v6819 = vmul.f32 %v6811, %v6811
      %v6820 = vmul.f32 %v6812, %v6812
      %v6821 = vmul.f32 %v6813, %v6813
      %v6822 = vmul.f32 %v6814, %v6814
      %v6823 = vmul.f32 %v6815, %v6815
      %v6824 = vmul.f32 %v6816, %v6816
      %v6825 = vmul.f32 %v6817, %v6817
      %v6826 = vmul.f32 %v6818, %v6818
      %6827 = vadd.xlane.f32.xlu0 %v6819
      %v6828 = vpop.xlane.xlu0 %6827
      %6829 = vadd.xlane.f32.xlu0 %v6820
      %v6830 = vpop.xlane.xlu0 %6829
      %6831 = vadd.xlane.f32.xlu0 %v6821
      %v6832 = vpop.xlane.xlu0 %6831
      %6833 = vadd.xlane.f32.xlu0 %v6822
      %v6834 = vpop.xlane.xlu0 %6833
      %6835 = vadd.xlane.f32.xlu0 %v6823
      %v6836 = vpop.xlane.xlu0 %6835
      %6837 = vadd.xlane.f32.xlu0 %v6824
      %v6838 = vpop.xlane.xlu0 %6837
      %6839 = vadd.xlane.f32.xlu0 %v6825
      %v6840 = vpop.xlane.xlu0 %6839
      %6841 = vadd.xlane.f32.xlu0 %v6826
      %v6842 = vpop.xlane.xlu0 %6841
      %v6843 = vmul.f32 %v6828, %v654
      %v6844 = vmul.f32 %v6830, %v654
      %v6845 = vmul.f32 %v6832, %v654
      %v6846 = vmul.f32 %v6834, %v654
      %v6847 = vmul.f32 %v6836, %v654
      %v6848 = vmul.f32 %v6838, %v654
      %v6849 = vmul.f32 %v6840, %v654
      %v6850 = vmul.f32 %v6842, %v654
      %v6851 = vadd.f32 %v6843, 1e-05
      %v6852 = vadd.f32 %v6844, 1e-05
      %v6853 = vadd.f32 %v6845, 1e-05
      %v6854 = vadd.f32 %v6846, 1e-05
      %v6855 = vadd.f32 %v6847, 1e-05
      %v6856 = vadd.f32 %v6848, 1e-05
      %v6857 = vadd.f32 %v6849, 1e-05
      %v6858 = vadd.f32 %v6850, 1e-05
      %v6859 = vrsqrt.pop %v6851
      %v6860 = vrsqrt.pop %v6852
      %v6861 = vrsqrt.pop %v6853
      %v6862 = vrsqrt.pop %v6854
      %v6863 = vrsqrt.pop %v6855
      %v6864 = vrsqrt.pop %v6856
      %v6865 = vrsqrt.pop %v6857
      %v6866 = vrsqrt.pop %v6858
      %v6867 = vmul.f32 %v6811, %v6859
      %v6868 = vmul.f32 %v6812, %v6860
      %v6869 = vmul.f32 %v6813, %v6861
      %v6870 = vmul.f32 %v6814, %v6862
      %v6871 = vmul.f32 %v6815, %v6863
      %v6872 = vmul.f32 %v6816, %v6864
      %v6873 = vmul.f32 %v6817, %v6865
      %v6874 = vmul.f32 %v6818, %v6866
      %v6876 = vlaneseq
      %v6877 = vshrl.u32 %v6876, 7
      %v6878 = vsub.s32 0, %v6877
      %v6879 = vrot.slane %v6785, %v6878
      %v6881 = vmul.f32 %v6867, %v6879
      %v6882 = vmul.f32 %v6868, %v6879
      %v6883 = vmul.f32 %v6869, %v6879
      %v6884 = vmul.f32 %v6870, %v6879
      %v6885 = vmul.f32 %v6871, %v6879
      %v6886 = vmul.f32 %v6872, %v6879
      %v6887 = vmul.f32 %v6873, %v6879
      %v6888 = vmul.f32 %v6874, %v6879
      %v6890 = vlaneseq
      %v6891 = vshrl.u32 %v6890, 7
      %v6892 = vsub.s32 0, %v6891
      %v6893 = vrot.slane %v6786, %v6892
      %v6895 = vadd.f32 %v6881, %v6893
      %v6896 = vadd.f32 %v6882, %v6893
      %v6897 = vadd.f32 %v6883, %v6893
      %v6898 = vadd.f32 %v6884, %v6893
      %v6899 = vadd.f32 %v6885, %v6893
      %v6900 = vadd.f32 %v6886, %v6893
      %v6901 = vadd.f32 %v6887, %v6893
      %v6902 = vadd.f32 %v6888, %v6893
      %v6903 = vpack.c.bf16 %v6896, %v6895
      %v6904 = vpack.c.bf16 %v6898, %v6897
      %v6905 = vpack.c.bf16 %v6900, %v6899
      %v6906 = vpack.c.bf16 %v6902, %v6901
      %v6907 = vld [vmem:[%s589] sm:$0xff]
      %v6908 = vld [vmem:[%s589 + $0x8] sm:$0xff]
      %v6909 = vld [vmem:[%s589 + $0x10] sm:$0xff]
      %v6910 = vld [vmem:[%s589 + $0x18] sm:$0xff]
      %v6911 = vld [vmem:[%s589 + $0x20] sm:$0xff]
      %v6912 = vld [vmem:[%s589 + $0x28] sm:$0xff]
      %v6913 = vld [vmem:[%s589 + $0x30] sm:$0xff]
      %v6914 = vld [vmem:[%s589 + $0x38] sm:$0xff]
      %v6915 = vld [vmem:[%s589 + $0x40] sm:$0xff]
      %v6916 = vld [vmem:[%s589 + $0x48] sm:$0xff]
      %v6917 = vld [vmem:[%s589 + $0x50] sm:$0xff]
      %v6918 = vld [vmem:[%s589 + $0x58] sm:$0xff]
      %v6919 = vld [vmem:[%s589 + $0x60] sm:$0xff]
      %v6920 = vld [vmem:[%s589 + $0x68] sm:$0xff]
      %v6921 = vld [vmem:[%s589 + $0x70] sm:$0xff]
      %v6922 = vld [vmem:[%s589 + $0x78] sm:$0xff]
      %v6923 = vld [vmem:[%s589 + $0x80] sm:$0xff]
      %v6924 = vld [vmem:[%s589 + $0x88] sm:$0xff]
      %v6925 = vld [vmem:[%s589 + $0x90] sm:$0xff]
      %v6926 = vld [vmem:[%s589 + $0x98] sm:$0xff]
      %v6927 = vld [vmem:[%s589 + $0xa0] sm:$0xff]
      %v6928 = vld [vmem:[%s589 + $0xa8] sm:$0xff]
      %v6929 = vld [vmem:[%s589 + $0xb0] sm:$0xff]
      %v6930 = vld [vmem:[%s589 + $0xb8] sm:$0xff]
      %v6931 = vld [vmem:[%s589 + $0xc0] sm:$0xff]
      %v6932 = vld [vmem:[%s589 + $0xc8] sm:$0xff]
      %v6933 = vld [vmem:[%s589 + $0xd0] sm:$0xff]
      %v6934 = vld [vmem:[%s589 + $0xd8] sm:$0xff]
      %v6935 = vld [vmem:[%s589 + $0xe0] sm:$0xff]
      %v6936 = vld [vmem:[%s589 + $0xe8] sm:$0xff]
      %v6937 = vld [vmem:[%s589 + $0xf0] sm:$0xff]
      %v6938 = vld [vmem:[%s589 + $0xf8] sm:$0xff]
      %v6939 = vld [vmem:[%s593] sm:$0xf]
      %v6941 = vlaneseq
      %v6942 = vshrl.u32 %v6941, 7
      %v6943 = vsub.s32 0, %v6942
      %v6944 = vrot.slane %v6939, %v6943
      %v6945 = vlaneseq
      %v6946 = vshrl.u32 %v6945, 7
      %v6947 = vsub.s32 1, %v6946
      %v6948 = vrot.slane %v6939, %v6947
      %v6949 = vlaneseq
      %v6950 = vshrl.u32 %v6949, 7
      %v6951 = vsub.s32 2, %v6950
      %v6952 = vrot.slane %v6939, %v6951
      %v6953 = vlaneseq
      %v6954 = vshrl.u32 %v6953, 7
      %v6955 = vsub.s32 3, %v6954
      %v6956 = vrot.slane %v6939, %v6955
      %v6993 = vunpack.c.l.b16 %v6907
      %v6994 = vunpack.c.h.b16 %v6907
      %v6995 = vunpack.c.l.b16 %v6908
      %v6996 = vunpack.c.h.b16 %v6908
      %v6997 = vunpack.c.l.b16 %v6909
      %v6998 = vunpack.c.h.b16 %v6909
      %v6999 = vunpack.c.l.b16 %v6910
      %v7000 = vunpack.c.h.b16 %v6910
      %v7001 = vunpack.c.l.b16 %v6911
      %v7002 = vunpack.c.h.b16 %v6911
      %v7003 = vunpack.c.l.b16 %v6912
      %v7004 = vunpack.c.h.b16 %v6912
      %v7005 = vunpack.c.l.b16 %v6913
      %v7006 = vunpack.c.h.b16 %v6913
      %v7007 = vunpack.c.l.b16 %v6914
      %v7008 = vunpack.c.h.b16 %v6914
      %v7009 = vunpack.c.l.b16 %v6915
      %v7010 = vunpack.c.h.b16 %v6915
      %v7011 = vunpack.c.l.b16 %v6916
      %v7012 = vunpack.c.h.b16 %v6916
      %v7013 = vunpack.c.l.b16 %v6917
      %v7014 = vunpack.c.h.b16 %v6917
      %v7015 = vunpack.c.l.b16 %v6918
      %v7016 = vunpack.c.h.b16 %v6918
      %v7017 = vunpack.c.l.b16 %v6919
      %v7018 = vunpack.c.h.b16 %v6919
      %v7019 = vunpack.c.l.b16 %v6920
      %v7020 = vunpack.c.h.b16 %v6920
      %v7021 = vunpack.c.l.b16 %v6921
      %v7022 = vunpack.c.h.b16 %v6921
      %v7023 = vunpack.c.l.b16 %v6922
      %v7024 = vunpack.c.h.b16 %v6922
      %v7025 = vunpack.c.l.b16 %v6923
      %v7026 = vunpack.c.h.b16 %v6923
      %v7027 = vunpack.c.l.b16 %v6924
      %v7028 = vunpack.c.h.b16 %v6924
      %v7029 = vunpack.c.l.b16 %v6925
      %v7030 = vunpack.c.h.b16 %v6925
      %v7031 = vunpack.c.l.b16 %v6926
      %v7032 = vunpack.c.h.b16 %v6926
      %v7033 = vunpack.c.l.b16 %v6927
      %v7034 = vunpack.c.h.b16 %v6927
      %v7035 = vunpack.c.l.b16 %v6928
      %v7036 = vunpack.c.h.b16 %v6928
      %v7037 = vunpack.c.l.b16 %v6929
      %v7038 = vunpack.c.h.b16 %v6929
      %v7039 = vunpack.c.l.b16 %v6930
      %v7040 = vunpack.c.h.b16 %v6930
      %v7041 = vunpack.c.l.b16 %v6931
      %v7042 = vunpack.c.h.b16 %v6931
      %v7043 = vunpack.c.l.b16 %v6932
      %v7044 = vunpack.c.h.b16 %v6932
      %v7045 = vunpack.c.l.b16 %v6933
      %v7046 = vunpack.c.h.b16 %v6933
      %v7047 = vunpack.c.l.b16 %v6934
      %v7048 = vunpack.c.h.b16 %v6934
      %v7049 = vunpack.c.l.b16 %v6935
      %v7050 = vunpack.c.h.b16 %v6935
      %v7051 = vunpack.c.l.b16 %v6936
      %v7052 = vunpack.c.h.b16 %v6936
      %v7053 = vunpack.c.l.b16 %v6937
      %v7054 = vunpack.c.h.b16 %v6937
      %v7055 = vunpack.c.l.b16 %v6938
      %v7056 = vunpack.c.h.b16 %v6938
      %v7057 = vpack.c.b16 %v6997, %v6993
      %v7058 = vpack.c.b16 %v6998, %v6994
      %v7059 = vpack.c.b16 %v6999, %v6995
      %v7060 = vpack.c.b16 %v7000, %v6996
      %v7061 = vpack.c.b16 %v7005, %v7001
      %v7062 = vpack.c.b16 %v7006, %v7002
      %v7063 = vpack.c.b16 %v7007, %v7003
      %v7064 = vpack.c.b16 %v7008, %v7004
      %v7065 = vpack.c.b16 %v7013, %v7009
      %v7066 = vpack.c.b16 %v7014, %v7010
      %v7067 = vpack.c.b16 %v7015, %v7011
      %v7068 = vpack.c.b16 %v7016, %v7012
      %v7069 = vpack.c.b16 %v7021, %v7017
      %v7070 = vpack.c.b16 %v7022, %v7018
      %v7071 = vpack.c.b16 %v7023, %v7019
      %v7072 = vpack.c.b16 %v7024, %v7020
      %v7073 = vpack.c.b16 %v7029, %v7025
      %v7074 = vpack.c.b16 %v7030, %v7026
      %v7075 = vpack.c.b16 %v7031, %v7027
      %v7076 = vpack.c.b16 %v7032, %v7028
      %v7077 = vpack.c.b16 %v7037, %v7033
      %v7078 = vpack.c.b16 %v7038, %v7034
      %v7079 = vpack.c.b16 %v7039, %v7035
      %v7080 = vpack.c.b16 %v7040, %v7036
      %v7081 = vpack.c.b16 %v7045, %v7041
      %v7082 = vpack.c.b16 %v7046, %v7042
      %v7083 = vpack.c.b16 %v7047, %v7043
      %v7084 = vpack.c.b16 %v7048, %v7044
      %v7085 = vpack.c.b16 %v7053, %v7049
      %v7086 = vpack.c.b16 %v7054, %v7050
      %v7087 = vpack.c.b16 %v7055, %v7051
      %v7088 = vpack.c.b16 %v7056, %v7052
      %7121 = vmatprep.subr.bf16.mxu0 %v7086
      %7122 = vmatpush1.bf16.msra.mxu0 %v7085
      %7123 = vmatprep.subr.bf16.mxu0 %v7082
      %7124 = vmatpush1.bf16.msra.mxu0 %v7081
      %7125 = vmatprep.subr.bf16.mxu0 %v7078
      %7126 = vmatpush1.bf16.msra.mxu0 %v7077
      %7127 = vmatprep.subr.bf16.mxu0 %v7074
      %7128 = vmatpush1.bf16.msra.mxu0 %v7073
      %7129 = vmatprep.subr.bf16.mxu0 %v7070
      %7130 = vmatpush1.bf16.msra.mxu0 %v7069
      %7131 = vmatprep.subr.bf16.mxu0 %v7066
      %7132 = vmatpush1.bf16.msra.mxu0 %v7065
      %7133 = vmatprep.subr.bf16.mxu0 %v7062
      %7134 = vmatpush1.bf16.msra.mxu0 %v7061
      %7135 = vmatprep.subr.bf16.mxu0 %v7058
      %7136 = vmatpush1.bf16.msra.mxu0 %v7057
      %7137 = vmatprep.subr.bf16.mxu0 0
      %7138 = vmatpush2.bf16.msra.mxu0 0
      %7139 = vmatprep.subr.bf16.mxu0 0
      %7140 = vmatpush2.bf16.msra.mxu0 0
      %7141 = vmatprep.subr.bf16.mxu0 0
      %7142 = vmatpush2.bf16.msra.mxu0 0
      %7143 = vmatprep.subr.bf16.mxu0 0
      %7144 = vmatpush2.bf16.msra.mxu0 0
      %7145 = vmatprep.subr.bf16.mxu0 0
      %7146 = vmatpush2.bf16.msra.mxu0 0
      %7147 = vmatprep.subr.bf16.mxu0 0
      %7148 = vmatpush2.bf16.msra.mxu0 0
      %7149 = vmatprep.subr.bf16.mxu0 0
      %7150 = vmatpush2.bf16.msra.mxu0 0
      %7151 = vmatprep.subr.bf16.mxu0 0
      %7152 = vmatpush2.bf16.msra.mxu0 0
      %7153 = vmatprep.mubr.bf16.mxu0 0
      %7154 = vmatmul.mubr.bf16.gmra.mxu0 %v6903
      %v7155 = vpop.f32.mrf.mxu0
      %v7156 = vadd.f32 %v6944, %v7155
      %v7157 = vpop.f32.mrf.mxu0
      %v7158 = vadd.f32 %v6948, %v7157
      %v7159 = vpop.f32.mrf.mxu0
      %v7160 = vadd.f32 %v6944, %v7159
      %v7161 = vpop.f32.mrf.mxu0
      %v7162 = vadd.f32 %v6948, %v7161
      %7163 = vmatprep.mubr.bf16.mxu0 0
      %7164 = vmatmul.mubr.bf16.gmra.mxu0 %v6904
      %v7165 = vpop.f32.mrf.mxu0
      %v7166 = vadd.f32 %v6944, %v7165
      %v7167 = vpop.f32.mrf.mxu0
      %v7168 = vadd.f32 %v6948, %v7167
      %v7169 = vpop.f32.mrf.mxu0
      %v7170 = vadd.f32 %v6944, %v7169
      %v7171 = vpop.f32.mrf.mxu0
      %v7172 = vadd.f32 %v6948, %v7171
      %7173 = vmatprep.mubr.bf16.mxu0 0
      %7174 = vmatmul.mubr.bf16.gmra.mxu0 %v6905
      %v7175 = vpop.f32.mrf.mxu0
      %v7176 = vadd.f32 %v6944, %v7175
      %v7177 = vpop.f32.mrf.mxu0
      %v7178 = vadd.f32 %v6948, %v7177
      %v7179 = vpop.f32.mrf.mxu0
      %v7180 = vadd.f32 %v6944, %v7179
      %v7181 = vpop.f32.mrf.mxu0
      %v7182 = vadd.f32 %v6948, %v7181
      %7183 = vmatprep.mubr.bf16.mxu0 0
      %7184 = vmatmul.mubr.bf16.gmra.mxu0 %v6906
      %v7185 = vpop.f32.mrf.mxu0
      %v7186 = vadd.f32 %v6944, %v7185
      %v7187 = vpop.f32.mrf.mxu0
      %v7188 = vadd.f32 %v6948, %v7187
      %v7189 = vpop.f32.mrf.mxu0
      %v7190 = vadd.f32 %v6944, %v7189
      %v7191 = vpop.f32.mrf.mxu0
      %v7192 = vadd.f32 %v6948, %v7191
      %7193 = vdwg.mxu0
      %7194 = vmatprep.subr.bf16.mxu0 %v7088
      %7195 = vmatpush1.bf16.msra.mxu0 %v7087
      %7196 = vmatprep.subr.bf16.mxu0 %v7084
      %7197 = vmatpush1.bf16.msra.mxu0 %v7083
      %7198 = vmatprep.subr.bf16.mxu0 %v7080
      %7199 = vmatpush1.bf16.msra.mxu0 %v7079
      %7200 = vmatprep.subr.bf16.mxu0 %v7076
      %7201 = vmatpush1.bf16.msra.mxu0 %v7075
      %7202 = vmatprep.subr.bf16.mxu0 %v7072
      %7203 = vmatpush1.bf16.msra.mxu0 %v7071
      %7204 = vmatprep.subr.bf16.mxu0 %v7068
      %7205 = vmatpush1.bf16.msra.mxu0 %v7067
      %7206 = vmatprep.subr.bf16.mxu0 %v7064
      %7207 = vmatpush1.bf16.msra.mxu0 %v7063
      %7208 = vmatprep.subr.bf16.mxu0 %v7060
      %7209 = vmatpush1.bf16.msra.mxu0 %v7059
      %7210 = vmatprep.subr.bf16.mxu0 0
      %7211 = vmatpush2.bf16.msra.mxu0 0
      %7212 = vmatprep.subr.bf16.mxu0 0
      %7213 = vmatpush2.bf16.msra.mxu0 0
      %7214 = vmatprep.subr.bf16.mxu0 0
      %7215 = vmatpush2.bf16.msra.mxu0 0
      %7216 = vmatprep.subr.bf16.mxu0 0
      %7217 = vmatpush2.bf16.msra.mxu0 0
      %7218 = vmatprep.subr.bf16.mxu0 0
      %7219 = vmatpush2.bf16.msra.mxu0 0
      %7220 = vmatprep.subr.bf16.mxu0 0
      %7221 = vmatpush2.bf16.msra.mxu0 0
      %7222 = vmatprep.subr.bf16.mxu0 0
      %7223 = vmatpush2.bf16.msra.mxu0 0
      %7224 = vmatprep.subr.bf16.mxu0 0
      %7225 = vmatpush2.bf16.msra.mxu0 0
      %7226 = vmatprep.mubr.bf16.mxu0 0
      %7227 = vmatmul.mubr.bf16.gmra.mxu0 %v6903
      %v7228 = vpop.f32.mrf.mxu0
      %v7229 = vadd.f32 %v6952, %v7228
      %v7230 = vpop.f32.mrf.mxu0
      %v7231 = vadd.f32 %v6956, %v7230
      %v7232 = vpop.f32.mrf.mxu0
      %v7233 = vadd.f32 %v6952, %v7232
      %v7234 = vpop.f32.mrf.mxu0
      %v7235 = vadd.f32 %v6956, %v7234
      %7236 = vmatprep.mubr.bf16.mxu0 0
      %7237 = vmatmul.mubr.bf16.gmra.mxu0 %v6904
      %v7238 = vpop.f32.mrf.mxu0
      %v7239 = vadd.f32 %v6952, %v7238
      %v7240 = vpop.f32.mrf.mxu0
      %v7241 = vadd.f32 %v6956, %v7240
      %v7242 = vpop.f32.mrf.mxu0
      %v7243 = vadd.f32 %v6952, %v7242
      %v7244 = vpop.f32.mrf.mxu0
      %v7245 = vadd.f32 %v6956, %v7244
      %7246 = vmatprep.mubr.bf16.mxu0 0
      %7247 = vmatmul.mubr.bf16.gmra.mxu0 %v6905
      %v7248 = vpop.f32.mrf.mxu0
      %v7249 = vadd.f32 %v6952, %v7248
      %v7250 = vpop.f32.mrf.mxu0
      %v7251 = vadd.f32 %v6956, %v7250
      %v7252 = vpop.f32.mrf.mxu0
      %v7253 = vadd.f32 %v6952, %v7252
      %v7254 = vpop.f32.mrf.mxu0
      %v7255 = vadd.f32 %v6956, %v7254
      %7256 = vmatprep.mubr.bf16.mxu0 0
      %7257 = vmatmul.mubr.bf16.gmra.mxu0 %v6906
      %v7258 = vpop.f32.mrf.mxu0
      %v7259 = vadd.f32 %v6952, %v7258
      %v7260 = vpop.f32.mrf.mxu0
      %v7261 = vadd.f32 %v6956, %v7260
      %v7262 = vpop.f32.mrf.mxu0
      %v7263 = vadd.f32 %v6952, %v7262
      %v7264 = vpop.f32.mrf.mxu0
      %v7265 = vadd.f32 %v6956, %v7264
      %7266 = vdwg.mxu0
      %v7267 = vmax.f32 %v7156, 0.0
      %v7268 = vmax.f32 %v7158, 0.0
      %v7269 = vmax.f32 %v7229, 0.0
      %v7270 = vmax.f32 %v7231, 0.0
      %v7271 = vmax.f32 %v7160, 0.0
      %v7272 = vmax.f32 %v7162, 0.0
      %v7273 = vmax.f32 %v7233, 0.0
      %v7274 = vmax.f32 %v7235, 0.0
      %v7275 = vmax.f32 %v7166, 0.0
      %v7276 = vmax.f32 %v7168, 0.0
      %v7277 = vmax.f32 %v7239, 0.0
      %v7278 = vmax.f32 %v7241, 0.0
      %v7279 = vmax.f32 %v7170, 0.0
      %v7280 = vmax.f32 %v7172, 0.0
      %v7281 = vmax.f32 %v7243, 0.0
      %v7282 = vmax.f32 %v7245, 0.0
      %v7283 = vmax.f32 %v7176, 0.0
      %v7284 = vmax.f32 %v7178, 0.0
      %v7285 = vmax.f32 %v7249, 0.0
      %v7286 = vmax.f32 %v7251, 0.0
      %v7287 = vmax.f32 %v7180, 0.0
      %v7288 = vmax.f32 %v7182, 0.0
      %v7289 = vmax.f32 %v7253, 0.0
      %v7290 = vmax.f32 %v7255, 0.0
      %v7291 = vmax.f32 %v7186, 0.0
      %v7292 = vmax.f32 %v7188, 0.0
      %v7293 = vmax.f32 %v7259, 0.0
      %v7294 = vmax.f32 %v7261, 0.0
      %v7295 = vmax.f32 %v7190, 0.0
      %v7296 = vmax.f32 %v7192, 0.0
      %v7297 = vmax.f32 %v7263, 0.0
      %v7298 = vmax.f32 %v7265, 0.0
      %v7299 = vpack.c.bf16 %v7271, %v7267
      %v7300 = vpack.c.bf16 %v7272, %v7268
      %v7301 = vpack.c.bf16 %v7273, %v7269
      %v7302 = vpack.c.bf16 %v7274, %v7270
      %v7303 = vpack.c.bf16 %v7279, %v7275
      %v7304 = vpack.c.bf16 %v7280, %v7276
      %v7305 = vpack.c.bf16 %v7281, %v7277
      %v7306 = vpack.c.bf16 %v7282, %v7278
      %v7307 = vpack.c.bf16 %v7287, %v7283
      %v7308 = vpack.c.bf16 %v7288, %v7284
      %v7309 = vpack.c.bf16 %v7289, %v7285
      %v7310 = vpack.c.bf16 %v7290, %v7286
      %v7311 = vpack.c.bf16 %v7295, %v7291
      %v7312 = vpack.c.bf16 %v7296, %v7292
      %v7313 = vpack.c.bf16 %v7297, %v7293
      %v7314 = vpack.c.bf16 %v7298, %v7294
      %v7315 = vld [vmem:[%s598] sm:$0xf]
      %v7316 = vld [vmem:[%s598 + $0x4] sm:$0xf]
      %v7317 = vld [vmem:[%s598 + $0x8] sm:$0xf]
      %v7318 = vld [vmem:[%s598 + $0xc] sm:$0xf]
      %v7319 = vld [vmem:[%s598 + $0x10] sm:$0xf]
      %v7320 = vld [vmem:[%s598 + $0x14] sm:$0xf]
      %v7321 = vld [vmem:[%s598 + $0x18] sm:$0xf]
      %v7322 = vld [vmem:[%s598 + $0x1c] sm:$0xf]
      %v7323 = vld [vmem:[%s598 + $0x20] sm:$0xf]
      %v7324 = vld [vmem:[%s598 + $0x24] sm:$0xf]
      %v7325 = vld [vmem:[%s598 + $0x28] sm:$0xf]
      %v7326 = vld [vmem:[%s598 + $0x2c] sm:$0xf]
      %v7327 = vld [vmem:[%s598 + $0x30] sm:$0xf]
      %v7328 = vld [vmem:[%s598 + $0x34] sm:$0xf]
      %v7329 = vld [vmem:[%s598 + $0x38] sm:$0xf]
      %v7330 = vld [vmem:[%s598 + $0x3c] sm:$0xf]
      %v7331 = vld [vmem:[%s598 + $0x40] sm:$0xf]
      %v7332 = vld [vmem:[%s598 + $0x44] sm:$0xf]
      %v7333 = vld [vmem:[%s598 + $0x48] sm:$0xf]
      %v7334 = vld [vmem:[%s598 + $0x4c] sm:$0xf]
      %v7335 = vld [vmem:[%s598 + $0x50] sm:$0xf]
      %v7336 = vld [vmem:[%s598 + $0x54] sm:$0xf]
      %v7337 = vld [vmem:[%s598 + $0x58] sm:$0xf]
      %v7338 = vld [vmem:[%s598 + $0x5c] sm:$0xf]
      %v7339 = vld [vmem:[%s598 + $0x60] sm:$0xf]
      %v7340 = vld [vmem:[%s598 + $0x64] sm:$0xf]
      %v7341 = vld [vmem:[%s598 + $0x68] sm:$0xf]
      %v7342 = vld [vmem:[%s598 + $0x6c] sm:$0xf]
      %v7343 = vld [vmem:[%s598 + $0x70] sm:$0xf]
      %v7344 = vld [vmem:[%s598 + $0x74] sm:$0xf]
      %v7345 = vld [vmem:[%s598 + $0x78] sm:$0xf]
      %v7346 = vld [vmem:[%s598 + $0x7c] sm:$0xf]
      %v7347 = vld [vmem:[%s598 + $0x80] sm:$0xf]
      %v7348 = vld [vmem:[%s598 + $0x84] sm:$0xf]
      %v7349 = vld [vmem:[%s598 + $0x88] sm:$0xf]
      %v7350 = vld [vmem:[%s598 + $0x8c] sm:$0xf]
      %v7351 = vld [vmem:[%s598 + $0x90] sm:$0xf]
      %v7352 = vld [vmem:[%s598 + $0x94] sm:$0xf]
      %v7353 = vld [vmem:[%s598 + $0x98] sm:$0xf]
      %v7354 = vld [vmem:[%s598 + $0x9c] sm:$0xf]
      %v7355 = vld [vmem:[%s598 + $0xa0] sm:$0xf]
      %v7356 = vld [vmem:[%s598 + $0xa4] sm:$0xf]
      %v7357 = vld [vmem:[%s598 + $0xa8] sm:$0xf]
      %v7358 = vld [vmem:[%s598 + $0xac] sm:$0xf]
      %v7359 = vld [vmem:[%s598 + $0xb0] sm:$0xf]
      %v7360 = vld [vmem:[%s598 + $0xb4] sm:$0xf]
      %v7361 = vld [vmem:[%s598 + $0xb8] sm:$0xf]
      %v7362 = vld [vmem:[%s598 + $0xbc] sm:$0xf]
      %v7363 = vld [vmem:[%s598 + $0xc0] sm:$0xf]
      %v7364 = vld [vmem:[%s598 + $0xc4] sm:$0xf]
      %v7365 = vld [vmem:[%s598 + $0xc8] sm:$0xf]
      %v7366 = vld [vmem:[%s598 + $0xcc] sm:$0xf]
      %v7367 = vld [vmem:[%s598 + $0xd0] sm:$0xf]
      %v7368 = vld [vmem:[%s598 + $0xd4] sm:$0xf]
      %v7369 = vld [vmem:[%s598 + $0xd8] sm:$0xf]
      %v7370 = vld [vmem:[%s598 + $0xdc] sm:$0xf]
      %v7371 = vld [vmem:[%s598 + $0xe0] sm:$0xf]
      %v7372 = vld [vmem:[%s598 + $0xe4] sm:$0xf]
      %v7373 = vld [vmem:[%s598 + $0xe8] sm:$0xf]
      %v7374 = vld [vmem:[%s598 + $0xec] sm:$0xf]
      %v7375 = vld [vmem:[%s598 + $0xf0] sm:$0xf]
      %v7376 = vld [vmem:[%s598 + $0xf4] sm:$0xf]
      %v7377 = vld [vmem:[%s598 + $0xf8] sm:$0xf]
      %v7378 = vld [vmem:[%s598 + $0xfc] sm:$0xf]
      %v7379 = vld [vmem:[%s601] sm:$0x1]
      %v7381 = vlaneseq
      %v7382 = vshrl.u32 %v7381, 7
      %v7383 = vsub.s32 0, %v7382
      %v7384 = vrot.slane %v7379, %v7383
      %v7450 = vunpack.c.l.b16 %v7315
      %v7451 = vunpack.c.l.b16 %v7316
      %v7452 = vunpack.c.l.b16 %v7317
      %v7453 = vunpack.c.l.b16 %v7318
      %v7454 = vunpack.c.l.b16 %v7319
      %v7455 = vunpack.c.l.b16 %v7320
      %v7456 = vunpack.c.l.b16 %v7321
      %v7457 = vunpack.c.l.b16 %v7322
      %v7458 = vunpack.c.l.b16 %v7323
      %v7459 = vunpack.c.l.b16 %v7324
      %v7460 = vunpack.c.l.b16 %v7325
      %v7461 = vunpack.c.l.b16 %v7326
      %v7462 = vunpack.c.l.b16 %v7327
      %v7463 = vunpack.c.l.b16 %v7328
      %v7464 = vunpack.c.l.b16 %v7329
      %v7465 = vunpack.c.l.b16 %v7330
      %v7466 = vunpack.c.l.b16 %v7331
      %v7467 = vunpack.c.l.b16 %v7332
      %v7468 = vunpack.c.l.b16 %v7333
      %v7469 = vunpack.c.l.b16 %v7334
      %v7470 = vunpack.c.l.b16 %v7335
      %v7471 = vunpack.c.l.b16 %v7336
      %v7472 = vunpack.c.l.b16 %v7337
      %v7473 = vunpack.c.l.b16 %v7338
      %v7474 = vunpack.c.l.b16 %v7339
      %v7475 = vunpack.c.l.b16 %v7340
      %v7476 = vunpack.c.l.b16 %v7341
      %v7477 = vunpack.c.l.b16 %v7342
      %v7478 = vunpack.c.l.b16 %v7343
      %v7479 = vunpack.c.l.b16 %v7344
      %v7480 = vunpack.c.l.b16 %v7345
      %v7481 = vunpack.c.l.b16 %v7346
      %v7482 = vunpack.c.l.b16 %v7347
      %v7483 = vunpack.c.l.b16 %v7348
      %v7484 = vunpack.c.l.b16 %v7349
      %v7485 = vunpack.c.l.b16 %v7350
      %v7486 = vunpack.c.l.b16 %v7351
      %v7487 = vunpack.c.l.b16 %v7352
      %v7488 = vunpack.c.l.b16 %v7353
      %v7489 = vunpack.c.l.b16 %v7354
      %v7490 = vunpack.c.l.b16 %v7355
      %v7491 = vunpack.c.l.b16 %v7356
      %v7492 = vunpack.c.l.b16 %v7357
      %v7493 = vunpack.c.l.b16 %v7358
      %v7494 = vunpack.c.l.b16 %v7359
      %v7495 = vunpack.c.l.b16 %v7360
      %v7496 = vunpack.c.l.b16 %v7361
      %v7497 = vunpack.c.l.b16 %v7362
      %v7498 = vunpack.c.l.b16 %v7363
      %v7499 = vunpack.c.l.b16 %v7364
      %v7500 = vunpack.c.l.b16 %v7365
      %v7501 = vunpack.c.l.b16 %v7366
      %v7502 = vunpack.c.l.b16 %v7367
      %v7503 = vunpack.c.l.b16 %v7368
      %v7504 = vunpack.c.l.b16 %v7369
      %v7505 = vunpack.c.l.b16 %v7370
      %v7506 = vunpack.c.l.b16 %v7371
      %v7507 = vunpack.c.l.b16 %v7372
      %v7508 = vunpack.c.l.b16 %v7373
      %v7509 = vunpack.c.l.b16 %v7374
      %v7510 = vunpack.c.l.b16 %v7375
      %v7511 = vunpack.c.l.b16 %v7376
      %v7512 = vunpack.c.l.b16 %v7377
      %v7513 = vunpack.c.l.b16 %v7378
      %v7514 = vpack.c.b16 %v7451, %v7450
      %v7515 = vpack.c.b16 %v7453, %v7452
      %v7516 = vpack.c.b16 %v7455, %v7454
      %v7517 = vpack.c.b16 %v7457, %v7456
      %v7518 = vpack.c.b16 %v7459, %v7458
      %v7519 = vpack.c.b16 %v7461, %v7460
      %v7520 = vpack.c.b16 %v7463, %v7462
      %v7521 = vpack.c.b16 %v7465, %v7464
      %v7522 = vpack.c.b16 %v7467, %v7466
      %v7523 = vpack.c.b16 %v7469, %v7468
      %v7524 = vpack.c.b16 %v7471, %v7470
      %v7525 = vpack.c.b16 %v7473, %v7472
      %v7526 = vpack.c.b16 %v7475, %v7474
      %v7527 = vpack.c.b16 %v7477, %v7476
      %v7528 = vpack.c.b16 %v7479, %v7478
      %v7529 = vpack.c.b16 %v7481, %v7480
      %v7530 = vpack.c.b16 %v7483, %v7482
      %v7531 = vpack.c.b16 %v7485, %v7484
      %v7532 = vpack.c.b16 %v7487, %v7486
      %v7533 = vpack.c.b16 %v7489, %v7488
      %v7534 = vpack.c.b16 %v7491, %v7490
      %v7535 = vpack.c.b16 %v7493, %v7492
      %v7536 = vpack.c.b16 %v7495, %v7494
      %v7537 = vpack.c.b16 %v7497, %v7496
      %v7538 = vpack.c.b16 %v7499, %v7498
      %v7539 = vpack.c.b16 %v7501, %v7500
      %v7540 = vpack.c.b16 %v7503, %v7502
      %v7541 = vpack.c.b16 %v7505, %v7504
      %v7542 = vpack.c.b16 %v7507, %v7506
      %v7543 = vpack.c.b16 %v7509, %v7508
      %v7544 = vpack.c.b16 %v7511, %v7510
      %v7545 = vpack.c.b16 %v7513, %v7512
      %7578 = vmatprep.subr.bf16.mxu0 0
      %7579 = vmatpush1.bf16.msra.mxu0 %v7521
      %7580 = vmatprep.subr.bf16.mxu0 0
      %7581 = vmatpush1.bf16.msra.mxu0 %v7520
      %7582 = vmatprep.subr.bf16.mxu0 0
      %7583 = vmatpush1.bf16.msra.mxu0 %v7519
      %7584 = vmatprep.subr.bf16.mxu0 0
      %7585 = vmatpush1.bf16.msra.mxu0 %v7518
      %7586 = vmatprep.subr.bf16.mxu0 0
      %7587 = vmatpush1.bf16.msra.mxu0 %v7517
      %7588 = vmatprep.subr.bf16.mxu0 0
      %7589 = vmatpush1.bf16.msra.mxu0 %v7516
      %7590 = vmatprep.subr.bf16.mxu0 0
      %7591 = vmatpush1.bf16.msra.mxu0 %v7515
      %7592 = vmatprep.subr.bf16.mxu0 0
      %7593 = vmatpush1.bf16.msra.mxu0 %v7514
      %7594 = vmatprep.subr.bf16.mxu0 0
      %7595 = vmatpush2.bf16.msra.mxu0 %v7529
      %7596 = vmatprep.subr.bf16.mxu0 0
      %7597 = vmatpush2.bf16.msra.mxu0 %v7528
      %7598 = vmatprep.subr.bf16.mxu0 0
      %7599 = vmatpush2.bf16.msra.mxu0 %v7527
      %7600 = vmatprep.subr.bf16.mxu0 0
      %7601 = vmatpush2.bf16.msra.mxu0 %v7526
      %7602 = vmatprep.subr.bf16.mxu0 0
      %7603 = vmatpush2.bf16.msra.mxu0 %v7525
      %7604 = vmatprep.subr.bf16.mxu0 0
      %7605 = vmatpush2.bf16.msra.mxu0 %v7524
      %7606 = vmatprep.subr.bf16.mxu0 0
      %7607 = vmatpush2.bf16.msra.mxu0 %v7523
      %7608 = vmatprep.subr.bf16.mxu0 0
      %7609 = vmatpush2.bf16.msra.mxu0 %v7522
      %7610 = vmatprep.mubr.bf16.mxu0 %v7300
      %7611 = vmatmul.mubr.bf16.gmra.mxu0 %v7299
      %v7612 = vpop.f32.mrf.mxu0
      %v7613 = vadd.f32 %v7384, %v7612
      %v7614 = vpop.f32.mrf.mxu0
      %v7615 = vpop.f32.mrf.mxu0
      %v7616 = vadd.f32 %v7384, %v7615
      %v7617 = vpop.f32.mrf.mxu0
      %7618 = vmatprep.mubr.bf16.mxu0 %v7304
      %7619 = vmatmul.mubr.bf16.gmra.mxu0 %v7303
      %v7620 = vpop.f32.mrf.mxu0
      %v7621 = vadd.f32 %v7384, %v7620
      %v7622 = vpop.f32.mrf.mxu0
      %v7623 = vpop.f32.mrf.mxu0
      %v7624 = vadd.f32 %v7384, %v7623
      %v7625 = vpop.f32.mrf.mxu0
      %7626 = vmatprep.mubr.bf16.mxu0 %v7308
      %7627 = vmatmul.mubr.bf16.gmra.mxu0 %v7307
      %v7628 = vpop.f32.mrf.mxu0
      %v7629 = vadd.f32 %v7384, %v7628
      %v7630 = vpop.f32.mrf.mxu0
      %v7631 = vpop.f32.mrf.mxu0
      %v7632 = vadd.f32 %v7384, %v7631
      %v7633 = vpop.f32.mrf.mxu0
      %7634 = vmatprep.mubr.bf16.mxu0 %v7312
      %7635 = vmatmul.mubr.bf16.gmra.mxu0 %v7311
      %v7636 = vpop.f32.mrf.mxu0
      %v7637 = vadd.f32 %v7384, %v7636
      %v7638 = vpop.f32.mrf.mxu0
      %v7639 = vpop.f32.mrf.mxu0
      %v7640 = vadd.f32 %v7384, %v7639
      %v7641 = vpop.f32.mrf.mxu0
      %7642 = vdwg.mxu0
      %7643 = vmatprep.subr.bf16.mxu0 0
      %7644 = vmatpush1.bf16.msra.mxu0 %v7537
      %7645 = vmatprep.subr.bf16.mxu0 0
      %7646 = vmatpush1.bf16.msra.mxu0 %v7536
      %7647 = vmatprep.subr.bf16.mxu0 0
      %7648 = vmatpush1.bf16.msra.mxu0 %v7535
      %7649 = vmatprep.subr.bf16.mxu0 0
      %7650 = vmatpush1.bf16.msra.mxu0 %v7534
      %7651 = vmatprep.subr.bf16.mxu0 0
      %7652 = vmatpush1.bf16.msra.mxu0 %v7533
      %7653 = vmatprep.subr.bf16.mxu0 0
      %7654 = vmatpush1.bf16.msra.mxu0 %v7532
      %7655 = vmatprep.subr.bf16.mxu0 0
      %7656 = vmatpush1.bf16.msra.mxu0 %v7531
      %7657 = vmatprep.subr.bf16.mxu0 0
      %7658 = vmatpush1.bf16.msra.mxu0 %v7530
      %7659 = vmatprep.subr.bf16.mxu0 0
      %7660 = vmatpush2.bf16.msra.mxu0 %v7545
      %7661 = vmatprep.subr.bf16.mxu0 0
      %7662 = vmatpush2.bf16.msra.mxu0 %v7544
      %7663 = vmatprep.subr.bf16.mxu0 0
      %7664 = vmatpush2.bf16.msra.mxu0 %v7543
      %7665 = vmatprep.subr.bf16.mxu0 0
      %7666 = vmatpush2.bf16.msra.mxu0 %v7542
      %7667 = vmatprep.subr.bf16.mxu0 0
      %7668 = vmatpush2.bf16.msra.mxu0 %v7541
      %7669 = vmatprep.subr.bf16.mxu0 0
      %7670 = vmatpush2.bf16.msra.mxu0 %v7540
      %7671 = vmatprep.subr.bf16.mxu0 0
      %7672 = vmatpush2.bf16.msra.mxu0 %v7539
      %7673 = vmatprep.subr.bf16.mxu0 0
      %7674 = vmatpush2.bf16.msra.mxu0 %v7538
      %7675 = vmatprep.mubr.bf16.mxu0 %v7302
      %7676 = vmatmul.mubr.bf16.gmra.mxu0 %v7301
      %v7677 = vpop.f32.mrf.mxu0
      %v7678 = vadd.f32 %v7613, %v7677
      %v7679 = vpop.f32.mrf.mxu0
      %v7680 = vpop.f32.mrf.mxu0
      %v7681 = vadd.f32 %v7616, %v7680
      %v7682 = vpop.f32.mrf.mxu0
      %7683 = vmatprep.mubr.bf16.mxu0 %v7306
      %7684 = vmatmul.mubr.bf16.gmra.mxu0 %v7305
      %v7685 = vpop.f32.mrf.mxu0
      %v7686 = vadd.f32 %v7621, %v7685
      %v7687 = vpop.f32.mrf.mxu0
      %v7688 = vpop.f32.mrf.mxu0
      %v7689 = vadd.f32 %v7624, %v7688
      %v7690 = vpop.f32.mrf.mxu0
      %7691 = vmatprep.mubr.bf16.mxu0 %v7310
      %7692 = vmatmul.mubr.bf16.gmra.mxu0 %v7309
      %v7693 = vpop.f32.mrf.mxu0
      %v7694 = vadd.f32 %v7629, %v7693
      %v7695 = vpop.f32.mrf.mxu0
      %v7696 = vpop.f32.mrf.mxu0
      %v7697 = vadd.f32 %v7632, %v7696
      %v7698 = vpop.f32.mrf.mxu0
      %7699 = vmatprep.mubr.bf16.mxu0 %v7314
      %7700 = vmatmul.mubr.bf16.gmra.mxu0 %v7313
      %v7701 = vpop.f32.mrf.mxu0
      %v7702 = vadd.f32 %v7637, %v7701
      %v7703 = vpop.f32.mrf.mxu0
      %v7704 = vpop.f32.mrf.mxu0
      %v7705 = vadd.f32 %v7640, %v7704
      %v7706 = vpop.f32.mrf.mxu0
      %7707 = vdwg.mxu0
      %v7708 = vadd.f32 %v6777, %v7678
      %v7709 = vadd.f32 %v6778, %v7681
      %v7710 = vadd.f32 %v6779, %v7686
      %v7711 = vadd.f32 %v6780, %v7689
      %v7712 = vadd.f32 %v6781, %v7694
      %v7713 = vadd.f32 %v6782, %v7697
      %v7714 = vadd.f32 %v6783, %v7702
      %v7715 = vadd.f32 %v6784, %v7705
      %7716 = vst [vmem:[#allocation2] sm:$0xff] %v7708
      %7717 = vst [vmem:[#allocation2 + $0x8] sm:$0xff] %v7709
      %7718 = vst [vmem:[#allocation2 + $0x10] sm:$0xff] %v7710
      %7719 = vst [vmem:[#allocation2 + $0x18] sm:$0xff] %v7711
      %7720 = vst [vmem:[#allocation2 + $0x20] sm:$0xff] %v7712
      %7721 = vst [vmem:[#allocation2 + $0x28] sm:$0xff] %v7713
      %7722 = vst [vmem:[#allocation2 + $0x30] sm:$0xff] %v7714
      %7723 = vst [vmem:[#allocation2 + $0x38] sm:$0xff] %v7715
      %p7724 = scmp.eq.s32.totalorder %s28, 1
      // Predicated region
      $region73: #{gpt_forward.2} parent=67 // pred_check
        %p7725 = pneg %p7724
      $region74: #{gpt_forward.2} parent=67 // pred_check_branch
        %7727 = sbr.rel (%p7725) target = $region76
      $region75: #{gpt_forward.2} parent=67 // pred_region
        %7728 = vst [vmem:[%s606] sm:$0xff] %v7708
        %7729 = vst [vmem:[%s606 + $0x8] sm:$0xff] %v7709
        %7730 = vst [vmem:[%s606 + $0x10] sm:$0xff] %v7710
        %7731 = vst [vmem:[%s606 + $0x18] sm:$0xff] %v7711
        %7732 = vst [vmem:[%s606 + $0x20] sm:$0xff] %v7712
        %7733 = vst [vmem:[%s606 + $0x28] sm:$0xff] %v7713
        %7734 = vst [vmem:[%s606 + $0x30] sm:$0xff] %v7714
        %7735 = vst [vmem:[%s606 + $0x38] sm:$0xff] %v7715
      $region76: #{gpt_forward.2} parent=67 // pred_fallthru
        _
      %p7736 = scmp.lt.s32.totalorder %s27, 1
      %s7737 = scalar_select %p7736, %s27, 1
      %s7738 = smul.addr %s7737, 8
      %s7739 = smul.addr %s7738, 8
      %s7740 = scalar_lea.vmem %s12, %s7739
      // Predicated region
      $region77: #{gpt_forward.2} parent=67 // pred_check
        %p7741 = pneg %p365
      $region78: #{gpt_forward.2} parent=67 // pred_check_branch
        %7743 = sbr.rel (%p7741) target = $region80
      $region79: #{gpt_forward.2} parent=67 // pred_region
        _
      $region80: #{gpt_forward.2} parent=67 // pred_fallthru
        _
    $region68: #{gpt_forward.2} parent=5 // pred_fallthru
      _
    %p7744 = scmp.le.s32.totalorder 2, %s18
    // Predicated region
    $region81: #{gpt_forward.2} parent=5 // pred_check
      %p7745 = pneg %p7744
    $region82: #{gpt_forward.2} parent=5 // pred_check_branch
      %7747 = sbr.rel (%p7745) target = $region84
    $region83: #{gpt_forward.2} parent=5 // pred_region
      %s7748 = ssub.s32 %s18, 2
      // Predicated region
      $region85: #{gpt_forward.2} parent=83 // pred_check
        %p7749 = pneg %p371
      $region86: #{gpt_forward.2} parent=83 // pred_check_branch
        %7751 = sbr.rel (%p7749) target = $region88
      $region87: #{gpt_forward.2} parent=83 // pred_region
        %p7752 = scmp.lt.s32.totalorder %s29, 1
        %s7753 = scalar_select %p7752, %s29, 1
        %s7754 = smul.addr %s7753, 8
        %s7755 = smul.addr %s7754, 8
        %s7756 = scalar_lea.vmem %s12, %s7755
      $region88: #{gpt_forward.2} parent=83 // pred_fallthru
        _
    $region84: #{gpt_forward.2} parent=5 // pred_fallthru
      _
  $region6: #{gpt_forward.2} parent=0 // loop_footer
    %s22 = sadd.s32 1, %s18
  $region7: #{gpt_forward.2} parent=0 // loop_footer_branch
    %17 = sbr.rel target = $region3
  $region8: #{gpt_forward.2} parent=0 // loop_exit
    _

</llo_original>
